<compile_context>
chip_gen: v7x
topology: tpu7x:2x2x1
jax: 0.10.0
libtpu: 0.0.40
codegen_flags: <defaults>
</compile_context>

<pallas_src>
import math
from functools import partial

import jax
import jax.numpy as jnp
from jax.experimental import pallas as pl
from jax.experimental.pallas import tpu as pltpu

DT = jnp.bfloat16                       # storage / MXU dtype for activations & weights
_VMEM_LIMIT = 48 * 1024 * 1024          # explicit scoped-VMEM budget (safe on v5e/v6e/v7x)


# ----------------------------------------------------------------------------
# helpers
# ----------------------------------------------------------------------------
def _round_up(v, m):
    return ((v + m - 1) // m) * m


def _pick_tile(dim, pref, align):
    """Largest tile <= pref that divides dim and is a multiple of align.
    Full dim if dim <= pref (always a legal block). 0 => caller must pad."""
    if dim <= pref:
        return dim
    t = (pref // align) * align
    while t >= align:
        if dim % t == 0:
            return t
        t -= align
    return 0


def _gelu_f32(x):
    # exact GELU (PyTorch nn.GELU default)
    return 0.5 * x * (1.0 + jax.lax.erf(x * (1.0 / math.sqrt(2.0))))


# ----------------------------------------------------------------------------
# Pallas kernels
# ----------------------------------------------------------------------------
def _mm_kernel(*refs, activation, has_residual):
    """Tiled (M,N,K) matmul: bf16 MXU operands, f32 accumulator, fused bias/GELU/residual."""
    if has_residual:
        x_ref, w_ref, b_ref, r_ref, o_ref, acc_ref = refs
    else:
        x_ref, w_ref, b_ref, o_ref, acc_ref = refs
        r_ref = None
    k = pl.program_id(2)

    @pl.when(k == 0)
    def _():
        acc_ref[...] = jnp.zeros_like(acc_ref)

    acc_ref[...] += jnp.dot(x_ref[...], w_ref[...], preferred_element_type=jnp.float32)

    @pl.when(k == pl.num_programs(2) - 1)
    def _():
        y = acc_ref[...] + b_ref[...].astype(jnp.float32)
        if activation == "gelu":
            y = _gelu_f32(y)
        if has_residual:
            y = y + r_ref[...].astype(jnp.float32)
        o_ref[...] = y.astype(o_ref.dtype)


def pallas_linear(x2d, w, b, activation=None, residual=None):
    """(M,K) @ (K,N) + b, optional fused GELU and residual add.  bf16 in/out, f32 acc."""
    M, K = x2d.shape
    N = w.shape[1]
    tm = _pick_tile(M, 256, 16)       # 16: bf16 sublane packing
    tn = _pick_tile(N, 512, 128)
    tk = _pick_tile(K, 1024, 128)

    # Hardening: pad any dimension for which no aligned divisor exists.
    Mp, Np, Kp = M, N, K
    if tm == 0:
        tm, Mp = 256, _round_up(M, 256)
    if tn == 0:
        tn, Np = 256, _round_up(N, 256)
    if tk == 0:
        tk, Kp = 512, _round_up(K, 512)
    if (Mp, Kp) != (M, K):
        x2d = jnp.pad(x2d, ((0, Mp - M), (0, Kp - K)))
    if (Kp, Np) != (K, N):
        w = jnp.pad(w, ((0, Kp - K), (0, Np - N)))
    if Np != N:
        b = jnp.pad(b, (0, Np - N))
    if residual is not None and (Mp, Np) != (M, N):
        residual = jnp.pad(residual, ((0, Mp - M), (0, Np - N)))

    grid = (Mp // tm, Np // tn, Kp // tk)
    in_specs = [pl.BlockSpec((tm, tk), lambda i, j, k: (i, k)),
                pl.BlockSpec((tk, tn), lambda i, j, k: (k, j)),
                pl.BlockSpec((1, tn), lambda i, j, k: (0, j))]
    args = [x2d, w, b.reshape(1, Np)]
    if residual is not None:
        in_specs.append(pl.BlockSpec((tm, tn), lambda i, j, k: (i, j)))
        args.append(residual)

    out = pl.pallas_call(
        partial(_mm_kernel, activation=activation, has_residual=residual is not None),
        out_shape=jax.ShapeDtypeStruct((Mp, Np), x2d.dtype),
        grid=grid,
        in_specs=in_specs,
        out_specs=pl.BlockSpec((tm, tn), lambda i, j, k: (i, j)),
        scratch_shapes=[pltpu.VMEM((tm, tn), jnp.float32)],
        compiler_params=pltpu.CompilerParams(
            dimension_semantics=("parallel", "parallel", "arbitrary"),
            vmem_limit_bytes=_VMEM_LIMIT),
    )(*args)
    if (Mp, Np) != (M, N):
        out = out[:M, :N]
    return out


def _layernorm_kernel(x_ref, g_ref, b_ref, o_ref, *, eps):
    x = x_ref[...].astype(jnp.float32)          # stats in f32
    mu = jnp.mean(x, axis=-1, keepdims=True)
    xc = x - mu
    var = jnp.mean(xc * xc, axis=-1, keepdims=True)
    y = xc * jax.lax.rsqrt(var + eps)
    o_ref[...] = (y * g_ref[...].astype(jnp.float32)
                  + b_ref[...].astype(jnp.float32)).astype(o_ref.dtype)


def pallas_layernorm(x2d, g, b, eps=1e-5):      # nn.LayerNorm default eps
    M, C = x2d.shape
    tm = _pick_tile(M, 512, 16)
    Mp = M
    if tm == 0:
        tm, Mp = 128, _round_up(M, 128)
        x2d = jnp.pad(x2d, ((0, Mp - M), (0, 0)))
    out = pl.pallas_call(
        partial(_layernorm_kernel, eps=eps),
        out_shape=jax.ShapeDtypeStruct((Mp, C), x2d.dtype),
        grid=(Mp // tm,),
        in_specs=[pl.BlockSpec((tm, C), lambda i: (i, 0)),
                  pl.BlockSpec((1, C), lambda i: (0, 0)),
                  pl.BlockSpec((1, C), lambda i: (0, 0))],
        out_specs=pl.BlockSpec((tm, C), lambda i: (i, 0)),
        compiler_params=pltpu.CompilerParams(dimension_semantics=("parallel",),
                                             vmem_limit_bytes=_VMEM_LIMIT),
    )(x2d, g.reshape(1, C), b.reshape(1, C))
    return out[:M] if Mp != M else out


def _flash_attn_kernel(q_ref, k_ref, v_ref, o_ref, m_sc, l_sc, acc_sc):
    """Online-softmax attention; kv-tile axis is grid axis 3 ("arbitrary").
    The softmax scale is pre-folded into the q projection weights."""
    kv_step = pl.program_id(3)

    @pl.when(kv_step == 0)
    def _():
        m_sc[...] = jnp.full_like(m_sc, -jnp.inf)
        l_sc[...] = jnp.zeros_like(l_sc)
        acc_sc[...] = jnp.zeros_like(acc_sc)

    if len(q_ref.shape) == 3:                         # packed-head layout (1, t, dh)
        q, k, v = q_ref[0], k_ref[0], v_ref[0]
    else:                                             # per-head layout (1, t, 1, dh)
        q, k, v = q_ref[0, :, 0, :], k_ref[0, :, 0, :], v_ref[0, :, 0, :]

    s = jax.lax.dot_general(q, k, (((1,), (1,)), ((), ())),
                            preferred_element_type=jnp.float32)        # (tq, tkv)

    m_prev = m_sc[...]
    m_new = jnp.maximum(m_prev, jnp.max(s, axis=-1, keepdims=True))
    alpha = jnp.exp(m_prev - m_new)                   # f32 exp (v5e-safe)
    p = jnp.exp(s - m_new)
    l_sc[...] = alpha * l_sc[...] + jnp.sum(p, axis=-1, keepdims=True)
    acc_sc[...] = alpha * acc_sc[...] + jnp.dot(p.astype(v.dtype), v,
                                                preferred_element_type=jnp.float32)
    m_sc[...] = m_new

    @pl.when(kv_step == pl.num_programs(3) - 1)
    def _():
        out = (acc_sc[...] * pl.reciprocal(l_sc[...], approx=True)).astype(o_ref.dtype)
        if len(o_ref.shape) == 3:
            o_ref[0] = out
        else:
            o_ref[0, :, 0, :] = out


def pallas_mha(q, k, v, num_heads):
    """q: (B, N, C); k, v: (B, Nk, C) — bf16.  Returns (B, N, C) packed output."""
    B, N, C = q.shape
    Nk = k.shape[1]
    dh = C // num_heads
    tq = _pick_tile(N, 128, 16) or N          # small q tile: keeps s/p vreg-resident
    tkv = _pick_tile(Nk, 512, 16) or Nk

    packed = (num_heads == 1) or (dh % 128 == 0)
    if packed:
        # head slice taken directly by the BlockSpec out of the packed C layout.
        grid = (B, num_heads, N // tq, Nk // tkv)
        in_specs = [pl.BlockSpec((1, tq, dh), lambda b, h, iq, ik: (b, iq, h)),
                    pl.BlockSpec((1, tkv, dh), lambda b, h, iq, ik: (b, ik, h)),
                    pl.BlockSpec((1, tkv, dh), lambda b, h, iq, ik: (b, ik, h))]
        out_specs = pl.BlockSpec((1, tq, dh), lambda b, h, iq, ik: (b, iq, h))
        out_shape = jax.ShapeDtypeStruct((B, N, C), q.dtype)
        args = (q, k, v)
    else:
        # Non-lane-aligned dh: free reshape to (B, N, heads, dh); dh stays the full
        # lane dim, heads indexed with a size-1 second-minor block (no XLA transposes).
        q4 = q.reshape(B, N, num_heads, dh)
        k4 = k.reshape(B, Nk, num_heads, dh)
        v4 = v.reshape(B, Nk, num_heads, dh)
        grid = (B, num_heads, N // tq, Nk // tkv)
        in_specs = [pl.BlockSpec((1, tq, 1, dh), lambda b, h, iq, ik: (b, iq, h, 0)),
                    pl.BlockSpec((1, tkv, 1, dh), lambda b, h, iq, ik: (b, ik, h, 0)),
                    pl.BlockSpec((1, tkv, 1, dh), lambda b, h, iq, ik: (b, ik, h, 0))]
        out_specs = pl.BlockSpec((1, tq, 1, dh), lambda b, h, iq, ik: (b, iq, h, 0))
        out_shape = jax.ShapeDtypeStruct((B, N, num_heads, dh), q.dtype)
        args = (q4, k4, v4)

    o = pl.pallas_call(
        _flash_attn_kernel,
        out_shape=out_shape,
        grid=grid,
        in_specs=in_specs,
        out_specs=out_specs,
        scratch_shapes=[pltpu.VMEM((tq, 1), jnp.float32),
                        pltpu.VMEM((tq, 1), jnp.float32),
                        pltpu.VMEM((tq, dh), jnp.float32)],
        compiler_params=pltpu.CompilerParams(
            dimension_semantics=("parallel", "parallel", "parallel", "arbitrary"),
            vmem_limit_bytes=_VMEM_LIMIT),
    )(*args)
    return o.reshape(B, N, C)


def _dwconv_gelu_kernel(x_ref, w_ref, b_ref, o_ref, acc_ref, *, H, W):
    """3x3 depthwise conv + bias + GELU, NHWC, borders handled in-kernel (no HBM pad).
    Column shifts use pltpu.roll (XLU) + edge masks; row shifts are static ranges."""
    x = x_ref[0].astype(jnp.float32)             # (H, W, hid)
    wt = w_ref[...].astype(jnp.float32)          # (9, hid) tap-major
    col = jax.lax.broadcasted_iota(jnp.int32, (1, W, 1), 1)
    acc_ref[...] = jnp.zeros_like(acc_ref)
    for di in range(3):
        h0 = max(0, 1 - di)
        h1 = min(H, H + 1 - di)
        i0 = h0 + di - 1
        rows = x[i0:i0 + (h1 - h0)]              # (h1-h0, W, hid)
        for dj in range(3):
            tap = wt[di * 3 + dj, :]
            if dj == 1:
                xs = rows
            else:
                xs = pltpu.roll(rows, (1 - dj) % W, 1)     # like jnp.roll along W
                if dj == 0:
                    xs = jnp.where(col >= 1, xs, 0.0)      # wrapped col 0 is out of image
                else:
                    xs = jnp.where(col <= W - 2, xs, 0.0)  # wrapped col W-1 is out of image
            acc_ref[h0:h1] = acc_ref[h0:h1] + xs * tap
    y = acc_ref[...] + b_ref[...].astype(jnp.float32)
    o_ref[0] = _gelu_f32(y).astype(o_ref.dtype)


def pallas_dwconv_gelu(h2d, B, H, W, dw_w9, dw_b):
    """h2d: (B*H*W, hid) tokens in (b, h, w) order (bf16).  Returns same layout."""
    hid = h2d.shape[1]
    x = h2d.reshape(B, H, W, hid)
    # TODO(synk): for very large H*W*hid (v7x 64 MiB VMEM), row-tile with a 1-row halo
    #             via manual DMA; per-image bf16 blocks fit comfortably for stage-1 sizes.
    out = pl.pallas_call(
        partial(_dwconv_gelu_kernel, H=H, W=W),
        out_shape=jax.ShapeDtypeStruct((B, H, W, hid), h2d.dtype),
        grid=(B,),
        in_specs=[pl.BlockSpec((1, H, W, hid), lambda b: (b, 0, 0, 0)),
                  pl.BlockSpec((9, hid), lambda b: (0, 0)),
                  pl.BlockSpec((1, hid), lambda b: (0, 0))],
        out_specs=pl.BlockSpec((1, H, W, hid), lambda b: (b, 0, 0, 0)),
        scratch_shapes=[pltpu.VMEM((H, W, hid), jnp.float32)],
        compiler_params=pltpu.CompilerParams(dimension_semantics=("parallel",),
                                             vmem_limit_bytes=_VMEM_LIMIT),
    )(x, dw_w9, dw_b.reshape(1, hid))
    return out.reshape(B * H * W, hid)


# ----------------------------------------------------------------------------
# Convs as matmuls (NHWC, contiguous layout)
# ----------------------------------------------------------------------------
def conv2d_nhwc_matmul(x_nhwc, wmat, b, kh, kw, stride, pad):
    """Generic im2col conv. x: (B,H,W,Cin) bf16; wmat: (kh*kw*Cin, Cout) bf16."""
    B, H, W, Cin = x_nhwc.shape
    xp = jnp.pad(x_nhwc, ((0, 0), (pad, pad), (pad, pad), (0, 0)))
    Ho = (H + 2 * pad - kh) // stride + 1
    Wo = (W + 2 * pad - kw) // stride + 1
    cols = []
    for i in range(kh):
        for j in range(kw):
            cols.append(xp[:, i:i + (Ho - 1) * stride + 1:stride,
                           j:j + (Wo - 1) * stride + 1:stride, :])
    pcols = jnp.stack(cols, axis=3).reshape(B * Ho * Wo, kh * kw * Cin)
    out = pallas_linear(pcols, wmat, b)
    return out, Ho, Wo


# ----------------------------------------------------------------------------
# Params (torch-like init, f32) and one-time prep into fast bf16 layouts
# ----------------------------------------------------------------------------
def trunc_normal(key, shape, std=0.02):
    return std * jax.random.truncated_normal(key, -2.0, 2.0, shape, jnp.float32)


def init_params(key, in_chans, embed_dim, num_heads, mlp_ratio, depth, sr_ratio,
                patch_size=7):
    keys = iter(jax.random.split(key, 8 + 16 * depth))
    nk = lambda: next(keys)
    hid = embed_dim * mlp_ratio
    p = {}
    fan_out = patch_size * patch_size * embed_dim
    p['patch_proj_w'] = (jax.random.normal(nk(), (embed_dim, in_chans, patch_size, patch_size),
                                           jnp.float32) * math.sqrt(2.0 / fan_out))
    p['patch_proj_b'] = jnp.zeros((embed_dim,), jnp.float32)
    p['patch_norm_g'] = jnp.ones((embed_dim,), jnp.float32)
    p['patch_norm_b'] = jnp.zeros((embed_dim,), jnp.float32)

    blocks = []
    for _ in range(depth):
        b = {}
        b['norm1_g'] = jnp.ones((embed_dim,), jnp.float32)
        b['norm1_b'] = jnp.zeros((embed_dim,), jnp.float32)
        b['q_w'] = trunc_normal(nk(), (embed_dim, embed_dim))
        b['q_b'] = jnp.zeros((embed_dim,), jnp.float32)       # qkv_bias=False default
        b['kv_w'] = trunc_normal(nk(), (embed_dim, 2 * embed_dim))
        b['kv_b'] = jnp.zeros((2 * embed_dim,), jnp.float32)
        if sr_ratio > 1:
            b['sr_w'] = (jax.random.normal(nk(), (embed_dim, embed_dim, sr_ratio, sr_ratio),
                                           jnp.float32)
                         * math.sqrt(2.0 / (sr_ratio * sr_ratio * embed_dim)))
            b['sr_b'] = jnp.zeros((embed_dim,), jnp.float32)
            b['sr_norm_g'] = jnp.ones((embed_dim,), jnp.float32)
            b['sr_norm_b'] = jnp.zeros((embed_dim,), jnp.float32)
        b['proj_w'] = trunc_normal(nk(), (embed_dim, embed_dim))
        b['proj_b'] = jnp.zeros((embed_dim,), jnp.float32)
        b['norm2_g'] = jnp.ones((embed_dim,), jnp.float32)
        b['norm2_b'] = jnp.zeros((embed_dim,), jnp.float32)
        b['fc1_w'] = trunc_normal(nk(), (embed_dim, hid))
        b['fc1_b'] = jnp.zeros((hid,), jnp.float32)
        b['dw_w'] = jax.random.normal(nk(), (hid, 1, 3, 3), jnp.float32) * math.sqrt(2.0 / 9.0)
        b['dw_b'] = jnp.zeros((hid,), jnp.float32)
        b['fc2_w'] = trunc_normal(nk(), (hid, embed_dim))
        b['fc2_b'] = jnp.zeros((embed_dim,), jnp.float32)
        blocks.append(b)
    p['blocks'] = blocks
    p['norm_g'] = jnp.ones((embed_dim,), jnp.float32)
    p['norm_b'] = jnp.zeros((embed_dim,), jnp.float32)
    return p


def prepare_params(params, num_heads, sr_ratio):
    """One-time prep: bf16 matmul weights, kv split into k/v, softmax scale folded into q,
    conv weights pre-laid-out for im2col matmuls.  Bias / LN params stay f32."""
    C = params['patch_norm_g'].shape[0]
    dh = C // num_heads
    scale = dh ** -0.5

    def conv_wmat(w):   # torch (Cout, Cin, kh, kw) -> (kh*kw*Cin, Cout)
        return jnp.transpose(w, (2, 3, 1, 0)).reshape(-1, w.shape[0]).astype(DT)

    p = {
        'patch_wm': conv_wmat(params['patch_proj_w']),
        'patch_b': params['patch_proj_b'],
        'patch_norm_g': params['patch_norm_g'], 'patch_norm_b': params['patch_norm_b'],
        'norm_g': params['norm_g'], 'norm_b': params['norm_b'],
    }
    blocks = []
    for b in params['blocks']:
        hid = b['dw_w'].shape[0]
        nb = {
            'norm1_g': b['norm1_g'], 'norm1_b': b['norm1_b'],
            'q_w': (b['q_w'] * scale).astype(DT), 'q_b': b['q_b'] * scale,
            'k_w': b['kv_w'][:, :C].astype(DT), 'k_b': b['kv_b'][:C],
            'v_w': b['kv_w'][:, C:].astype(DT), 'v_b': b['kv_b'][C:],
            'proj_w': b['proj_w'].astype(DT), 'proj_b': b['proj_b'],
            'norm2_g': b['norm2_g'], 'norm2_b': b['norm2_b'],
            'fc1_w': b['fc1_w'].astype(DT), 'fc1_b': b['fc1_b'],
            'dw_w9': jnp.transpose(b['dw_w'].reshape(hid, 3, 3), (1, 2, 0)).reshape(9, hid),
            'dw_b': b['dw_b'],
            'fc2_w': b['fc2_w'].astype(DT), 'fc2_b': b['fc2_b'],
        }
        if sr_ratio > 1:
            nb['sr_wm'] = conv_wmat(b['sr_w'])
            nb['sr_b'] = b['sr_b']
            nb['sr_norm_g'] = b['sr_norm_g']
            nb['sr_norm_b'] = b['sr_norm_b']
        blocks.append(nb)
    p['blocks'] = blocks
    return p


# ----------------------------------------------------------------------------
# Model wiring (stage 1)
# ----------------------------------------------------------------------------
def attention_forward(xn2d, p, B, N, C, H, W, num_heads, sr_ratio, residual2d):
    q = pallas_linear(xn2d, p['q_w'], p['q_b']).reshape(B, N, C)   # scale pre-folded

    if sr_ratio > 1:
        if H % sr_ratio == 0 and W % sr_ratio == 0:
            # stride == kernel, pad == 0 -> non-overlapping patch regroup (no im2col loop)
            Hs, Ws = H // sr_ratio, W // sr_ratio
            xsr = xn2d.reshape(B, Hs, sr_ratio, Ws, sr_ratio, C)
            xsr = jnp.transpose(xsr, (0, 1, 3, 2, 4, 5)).reshape(
                B * Hs * Ws, sr_ratio * sr_ratio * C)
            xr = pallas_linear(xsr, p['sr_wm'], p['sr_b'])
        else:
            xr, Hs, Ws = conv2d_nhwc_matmul(xn2d.reshape(B, H, W, C), p['sr_wm'], p['sr_b'],
                                            kh=sr_ratio, kw=sr_ratio, stride=sr_ratio, pad=0)
        xr = pallas_layernorm(xr, p['sr_norm_g'], p['sr_norm_b'])
        Nk = Hs * Ws
        xkv = xr
    else:
        Nk = N
        xkv = xn2d

    k = pallas_linear(xkv, p['k_w'], p['k_b']).reshape(B, Nk, C)
    v = pallas_linear(xkv, p['v_w'], p['v_b']).reshape(B, Nk, C)

    o = pallas_mha(q, k, v, num_heads)                 # (B, N, C)
    # proj with the residual add fused into the matmul epilogue
    return pallas_linear(o.reshape(B * N, C), p['proj_w'], p['proj_b'], residual=residual2d)


def mlp_forward(xn2d, p, B, H, W, residual2d):
    h = pallas_linear(xn2d, p['fc1_w'], p['fc1_b'])                 # (B*N, hid)
    h = pallas_dwconv_gelu(h, B, H, W, p['dw_w9'], p['dw_b'])       # dwconv + GELU fused
    return pallas_linear(h, p['fc2_w'], p['fc2_b'], residual=residual2d)


def block_forward(x2d, p, B, N, C, H, W, num_heads, sr_ratio):
    # drop_path rate 0 -> identity; residual adds fused into proj / fc2 epilogues
    # TODO(synk): LayerNorm could additionally be fused into the preceding matmul epilogue
    #             (dual-output kernel) to save one activation pass per LN.
    xn = pallas_layernorm(x2d, p['norm1_g'], p['norm1_b'])
    x2d = attention_forward(xn, p, B, N, C, H, W, num_heads, sr_ratio, residual2d=x2d)
    xn = pallas_layernorm(x2d, p['norm2_g'], p['norm2_b'])
    x2d = mlp_forward(xn, p, B, H, W, residual2d=x2d)
    return x2d


def get_grid_loc(B, H, W):
    y_g = 2.0 * ((jnp.arange(H, dtype=jnp.float32) + 0.5) / H) - 1.0
    x_g = 2.0 * ((jnp.arange(W, dtype=jnp.float32) + 0.5) / W) - 1.0
    y_map, x_map = jnp.meshgrid(y_g, x_g, indexing='ij')
    xy_map = jnp.stack((x_map, y_map), axis=-1)
    return jnp.broadcast_to(xy_map.reshape(-1, 2)[None, ...], (B, H * W, 2))


def tcformer_forward(x, params, *, num_heads, sr_ratio):
    """Stage-1 of TCFormer.forward_features; x is NCHW f32."""
    B = x.shape[0]
    C = params['patch_norm_g'].shape[0]
    x_nhwc = jnp.transpose(x, (0, 2, 3, 1)).astype(DT)   # one small NCHW->NHWC transpose
    # OverlapPatchEmbed: Conv2d(k=7, s=4, p=3) -> flatten -> LayerNorm
    t, H, W = conv2d_nhwc_matmul(x_nhwc, params['patch_wm'], params['patch_b'],
                                 kh=7, kw=7, stride=4, pad=3)
    t = pallas_layernorm(t, params['patch_norm_g'], params['patch_norm_b'])
    N = H * W
    x2d = t                                               # (B*N, C) bf16, rows in (b,h,w) order

    for blk in params['blocks']:
        x2d = block_forward(x2d, blk, B, N, C, H, W, num_heads, sr_ratio)

    x2d = pallas_layernorm(x2d, params['norm_g'], params['norm_b'])
    xt = x2d.reshape(B, N, C).astype(jnp.float32)

    idx_agg = jnp.broadcast_to(jnp.arange(N, dtype=jnp.int32)[None, :], (B, N))  # torch: int64
    agg_weight = jnp.ones((B, N, 1), xt.dtype)
    loc_orig = get_grid_loc(B, H, W)

    outs = [{'x': xt, 'map_size': [H, W], 'loc_orig': loc_orig,
             'idx_agg': idx_agg, 'agg_weight': agg_weight}]
    # TODO(synk): CTM / TCBlock stages 2..4 and get_initial_loc_neighbor not reproduced
    #             (definitions absent from the reference snippet).
    return outs


# ----------------------------------------------------------------------------
if __name__ == "__main__":
    key = jax.random.PRNGKey(0)
    kp, kx = jax.random.split(key)

    # small shapes: B=2, in_chans=3, img 32x32, embed_dim=32, 1 head, mlp_ratio=4,
    # depth=2, sr_ratio=4 -> 8x8 = 64 tokens after the stride-4 patch embed.
    B, Cin, Himg, Wimg = 2, 3, 32, 32
    embed_dim, num_heads, mlp_ratio, depth, sr_ratio = 32, 1, 4, 2, 4

    raw_params = init_params(kp, Cin, embed_dim, num_heads, mlp_ratio, depth, sr_ratio)
    params = prepare_params(raw_params, num_heads, sr_ratio)
    x = jax.random.normal(kx, (B, Cin, Himg, Wimg), jnp.float32)

    fwd = jax.jit(partial(tcformer_forward, num_heads=num_heads, sr_ratio=sr_ratio))
    outs = fwd(x, params)
    jax.block_until_ready(outs[0]['x'])
    assert outs[0]['x'].shape == (B, (Himg // 4) * (Wimg // 4), embed_dim)
    print("KERNEL_OK")
</pallas_src>

<mosaic_0001>
module attributes {stable_mosaic.version = 11 : i64} {
  func.func @_mm_kernel(%arg0: i32, %arg1: i32, %arg2: i32, %arg3: memref<128x147xbf16, #tpu.memory_space<vmem>>, %arg4: memref<147x32xbf16, #tpu.memory_space<vmem>>, %arg5: memref<1x32xf32, #tpu.memory_space<vmem>>, %arg6: memref<128x32xbf16, #tpu.memory_space<vmem>>, %arg7: memref<128x32xf32, #tpu.memory_space<vmem>>) attributes {dimension_semantics = [#tpu.dimension_semantics<parallel>, #tpu.dimension_semantics<parallel>, #tpu.dimension_semantics<arbitrary>], iteration_bounds = array<i64: 1, 1, 1>, scalar_prefetch = 0 : i64, scratch_operands = 1 : i64, tpu.core_type = #tpu.core_type<tc>, window_params = [{transform_indices = @transform_0, window_bounds = array<i64: 128, 147>}, {transform_indices = @transform_1, window_bounds = array<i64: 147, 32>}, {transform_indices = @transform_2, window_bounds = array<i64: 1, 32>}, {transform_indices = @transform_3, window_bounds = array<i64: 128, 32>}]} {
    %c0_i32 = arith.constant 0 : i32
    %0 = arith.cmpi eq, %arg2, %c0_i32 : i32
    %1 = arith.extui %0 : i1 to i32
    %c0_i32_0 = arith.constant 0 : i32
    %2 = arith.cmpi ne, %1, %c0_i32_0 : i32
    scf.if %2 {
      %cst_10 = arith.constant 0.000000e+00 : f32
      %12 = vector.broadcast %cst_10 : f32 to vector<128x32xf32>
      %c0_11 = arith.constant 0 : index
      %c0_12 = arith.constant 0 : index
      %13 = vector.load %arg7[%c0_11, %c0_12] : memref<128x32xf32, #tpu.memory_space<vmem>>, vector<128x32xf32>
      tpu.vector_store %arg7[%c0_11, %c0_12], %12 {strides = array<i32>} : memref<128x32xf32, #tpu.memory_space<vmem>>, vector<128x32xf32>,
    } else {
    }
    %c0 = arith.constant 0 : index
    %c0_1 = arith.constant 0 : index
    %3 = vector.load %arg7[%c0, %c0_1] : memref<128x32xf32, #tpu.memory_space<vmem>>, vector<128x32xf32>
    %c0_2 = arith.constant 0 : index
    %c0_3 = arith.constant 0 : index
    %4 = vector.load %arg3[%c0_2, %c0_3] : memref<128x147xbf16, #tpu.memory_space<vmem>>, vector<128x147xbf16>
    %c0_4 = arith.constant 0 : index
    %c0_5 = arith.constant 0 : index
    %5 = vector.load %arg4[%c0_4, %c0_5] : memref<147x32xbf16, #tpu.memory_space<vmem>>, vector<147x32xbf16>
    %cst = arith.constant dense<0.000000e+00> : vector<128x32xf32>
    %6 = tpu.matmul %4, %5, %cst {dimension_numbers = #tpu.dot_dimension_numbers<[1], [0], [0], [1], [0, 0, 1, 1], [], []>} : vector<128x147xbf16>, vector<147x32xbf16>, vector<128x32xf32> -> vector<128x32xf32>
    %7 = arith.addf %3, %6 : vector<128x32xf32>
    %c0_6 = arith.constant 0 : index
    %c0_7 = arith.constant 0 : index
    %8 = vector.load %arg7[%c0_6, %c0_7] : memref<128x32xf32, #tpu.memory_space<vmem>>, vector<128x32xf32>
    tpu.vector_store %arg7[%c0_6, %c0_7], %7 {strides = array<i32>} : memref<128x32xf32, #tpu.memory_space<vmem>>, vector<128x32xf32>,
    %c0_i32_8 = arith.constant 0 : i32
    %9 = arith.cmpi eq, %arg2, %c0_i32_8 : i32
    %10 = arith.extui %9 : i1 to i32
    %c0_i32_9 = arith.constant 0 : i32
    %11 = arith.cmpi ne, %10, %c0_i32_9 : i32
    scf.if %11 {
      %c0_10 = arith.constant 0 : index
      %c0_11 = arith.constant 0 : index
      %12 = vector.load %arg7[%c0_10, %c0_11] : memref<128x32xf32, #tpu.memory_space<vmem>>, vector<128x32xf32>
      %c0_12 = arith.constant 0 : index
      %c0_13 = arith.constant 0 : index
      %13 = vector.load %arg5[%c0_12, %c0_13] : memref<1x32xf32, #tpu.memory_space<vmem>>, vector<1x32xf32>
      %14 = vector.broadcast %13 : vector<1x32xf32> to vector<128x32xf32>
      %15 = arith.addf %12, %14 : vector<128x32xf32>
      %16 = arith.truncf %15 : vector<128x32xf32> to vector<128x32xbf16>
      %c0_14 = arith.constant 0 : index
      %c0_15 = arith.constant 0 : index
      %17 = vector.load %arg6[%c0_14, %c0_15] : memref<128x32xbf16, #tpu.memory_space<vmem>>, vector<128x32xbf16>
      tpu.vector_store %arg6[%c0_14, %c0_15], %16 {strides = array<i32>} : memref<128x32xbf16, #tpu.memory_space<vmem>>, vector<128x32xbf16>,
    } else {
    }
    return
  }
  func.func @transform_0(%arg0: i32, %arg1: i32, %arg2: i32) -> (i32, i32) {
    %c0_i32 = arith.constant 0 : i32
    return %arg0, %arg2 : i32, i32
  }
  func.func @transform_1(%arg0: i32, %arg1: i32, %arg2: i32) -> (i32, i32) {
    %c0_i32 = arith.constant 0 : i32
    return %arg2, %arg1 : i32, i32
  }
  func.func @transform_2(%arg0: i32, %arg1: i32, %arg2: i32) -> (i32, i32) {
    %c0_i32 = arith.constant 0 : i32
    %c0_i32_0 = arith.constant 0 : i32
    return %c0_i32, %arg1 : i32, i32
  }
  func.func @transform_3(%arg0: i32, %arg1: i32, %arg2: i32) -> (i32, i32) {
    %c0_i32 = arith.constant 0 : i32
    return %arg0, %arg1 : i32, i32
  }
}

module attributes {stable_mosaic.version = 11 : i64} {
  func.func @_layernorm_kernel(%arg0: i32, %arg1: memref<128x32xbf16, #tpu.memory_space<vmem>>, %arg2: memref<1x32xf32, #tpu.memory_space<vmem>>, %arg3: memref<1x32xf32, #tpu.memory_space<vmem>>, %arg4: memref<128x32xbf16, #tpu.memory_space<vmem>>) attributes {dimension_semantics = [#tpu.dimension_semantics<parallel>], iteration_bounds = array<i64: 1>, scalar_prefetch = 0 : i64, scratch_operands = 0 : i64, tpu.core_type = #tpu.core_type<tc>, window_params = [{transform_indices = @transform_0, window_bounds = array<i64: 128, 32>}, {pipeline_mode = #tpu.pipeline_mode<synchronous>, transform_indices = @transform_1, window_bounds = array<i64: 1, 32>}, {pipeline_mode = #tpu.pipeline_mode<synchronous>, transform_indices = @transform_2, window_bounds = array<i64: 1, 32>}, {transform_indices = @transform_3, window_bounds = array<i64: 128, 32>}]} {
    %c0 = arith.constant 0 : index
    %c0_0 = arith.constant 0 : index
    %0 = vector.load %arg1[%c0, %c0_0] : memref<128x32xbf16, #tpu.memory_space<vmem>>, vector<128x32xbf16>
    %1 = arith.extf %0 : vector<128x32xbf16> to vector<128x32xf32>
    %cst = arith.constant dense<0.000000e+00> : vector<128xf32>
    %2 = vector.multi_reduction <add>, %1, %cst [1] : vector<128x32xf32> to vector<128xf32>
    %3 = vector.shape_cast %2 : vector<128xf32> to vector<128x1xf32>
    %cst_1 = arith.constant 3.200000e+01 : f32
    %4 = vector.broadcast %cst_1 : f32 to vector<128x1xf32>
    %5 = arith.divf %3, %4 : vector<128x1xf32>
    %6 = vector.broadcast %5 : vector<128x1xf32> to vector<128x32xf32>
    %7 = arith.subf %1, %6 : vector<128x32xf32>
    %8 = arith.mulf %7, %7 : vector<128x32xf32>
    %cst_2 = arith.constant dense<0.000000e+00> : vector<128xf32>
    %9 = vector.multi_reduction <add>, %8, %cst_2 [1] : vector<128x32xf32> to vector<128xf32>
    %10 = vector.shape_cast %9 : vector<128xf32> to vector<128x1xf32>
    %cst_3 = arith.constant 3.200000e+01 : f32
    %11 = vector.broadcast %cst_3 : f32 to vector<128x1xf32>
    %12 = arith.divf %10, %11 : vector<128x1xf32>
    %cst_4 = arith.constant 9.99999974E-6 : f32
    %13 = vector.broadcast %cst_4 : f32 to vector<128x1xf32>
    %14 = arith.addf %12, %13 : vector<128x1xf32>
    %15 = math.rsqrt %14 : vector<128x1xf32>
    %16 = vector.broadcast %15 : vector<128x1xf32> to vector<128x32xf32>
    %17 = arith.mulf %7, %16 : vector<128x32xf32>
    %c0_5 = arith.constant 0 : index
    %c0_6 = arith.constant 0 : index
    %18 = vector.load %arg2[%c0_5, %c0_6] : memref<1x32xf32, #tpu.memory_space<vmem>>, vector<1x32xf32>
    %19 = vector.broadcast %18 : vector<1x32xf32> to vector<128x32xf32>
    %20 = arith.mulf %17, %19 : vector<128x32xf32>
    %c0_7 = arith.constant 0 : index
    %c0_8 = arith.constant 0 : index
    %21 = vector.load %arg3[%c0_7, %c0_8] : memref<1x32xf32, #tpu.memory_space<vmem>>, vector<1x32xf32>
    %22 = vector.broadcast %21 : vector<1x32xf32> to vector<128x32xf32>
    %23 = arith.addf %20, %22 : vector<128x32xf32>
    %24 = arith.truncf %23 : vector<128x32xf32> to vector<128x32xbf16>
    %c0_9 = arith.constant 0 : index
    %c0_10 = arith.constant 0 : index
    %25 = vector.load %arg4[%c0_9, %c0_10] : memref<128x32xbf16, #tpu.memory_space<vmem>>, vector<128x32xbf16>
    tpu.vector_store %arg4[%c0_9, %c0_10], %24 {strides = array<i32>} : memref<128x32xbf16, #tpu.memory_space<vmem>>, vector<128x32xbf16>,
    return
  }
  func.func @transform_0(%arg0: i32) -> (i32, i32) {
    %c0_i32 = arith.constant 0 : i32
    %c0_i32_0 = arith.constant 0 : i32
    return %arg0, %c0_i32 : i32, i32
  }
  func.func @transform_1(%arg0: i32) -> (i32, i32) {
    %c0_i32 = arith.constant 0 : i32
    %c0_i32_0 = arith.constant 0 : i32
    %c0_i32_1 = arith.constant 0 : i32
    return %c0_i32, %c0_i32_0 : i32, i32
  }
  func.func @transform_2(%arg0: i32) -> (i32, i32) {
    %c0_i32 = arith.constant 0 : i32
    %c0_i32_0 = arith.constant 0 : i32
    %c0_i32_1 = arith.constant 0 : i32
    return %c0_i32, %c0_i32_0 : i32, i32
  }
  func.func @transform_3(%arg0: i32) -> (i32, i32) {
    %c0_i32 = arith.constant 0 : i32
    %c0_i32_0 = arith.constant 0 : i32
    return %arg0, %c0_i32 : i32, i32
  }
}

module attributes {stable_mosaic.version = 11 : i64} {
  func.func @_layernorm_kernel(%arg0: i32, %arg1: memref<8x32xbf16, #tpu.memory_space<vmem>>, %arg2: memref<1x32xf32, #tpu.memory_space<vmem>>, %arg3: memref<1x32xf32, #tpu.memory_space<vmem>>, %arg4: memref<8x32xbf16, #tpu.memory_space<vmem>>) attributes {dimension_semantics = [#tpu.dimension_semantics<parallel>], iteration_bounds = array<i64: 1>, scalar_prefetch = 0 : i64, scratch_operands = 0 : i64, tpu.core_type = #tpu.core_type<tc>, window_params = [{transform_indices = @transform_0, window_bounds = array<i64: 8, 32>}, {pipeline_mode = #tpu.pipeline_mode<synchronous>, transform_indices = @transform_1, window_bounds = array<i64: 1, 32>}, {pipeline_mode = #tpu.pipeline_mode<synchronous>, transform_indices = @transform_2, window_bounds = array<i64: 1, 32>}, {transform_indices = @transform_3, window_bounds = array<i64: 8, 32>}]} {
    %c0 = arith.constant 0 : index
    %c0_0 = arith.constant 0 : index
    %0 = vector.load %arg1[%c0, %c0_0] : memref<8x32xbf16, #tpu.memory_space<vmem>>, vector<8x32xbf16>
    %1 = arith.extf %0 : vector<8x32xbf16> to vector<8x32xf32>
    %cst = arith.constant dense<0.000000e+00> : vector<8xf32>
    %2 = vector.multi_reduction <add>, %1, %cst [1] : vector<8x32xf32> to vector<8xf32>
    %3 = vector.shape_cast %2 : vector<8xf32> to vector<8x1xf32>
    %cst_1 = arith.constant 3.200000e+01 : f32
    %4 = vector.broadcast %cst_1 : f32 to vector<8x1xf32>
    %5 = arith.divf %3, %4 : vector<8x1xf32>
    %6 = vector.broadcast %5 : vector<8x1xf32> to vector<8x32xf32>
    %7 = arith.subf %1, %6 : vector<8x32xf32>
    %8 = arith.mulf %7, %7 : vector<8x32xf32>
    %cst_2 = arith.constant dense<0.000000e+00> : vector<8xf32>
    %9 = vector.multi_reduction <add>, %8, %cst_2 [1] : vector<8x32xf32> to vector<8xf32>
    %10 = vector.shape_cast %9 : vector<8xf32> to vector<8x1xf32>
    %cst_3 = arith.constant 3.200000e+01 : f32
    %11 = vector.broadcast %cst_3 : f32 to vector<8x1xf32>
    %12 = arith.divf %10, %11 : vector<8x1xf32>
    %cst_4 = arith.constant 9.99999974E-6 : f32
    %13 = vector.broadcast %cst_4 : f32 to vector<8x1xf32>
    %14 = arith.addf %12, %13 : vector<8x1xf32>
    %15 = math.rsqrt %14 : vector<8x1xf32>
    %16 = vector.broadcast %15 : vector<8x1xf32> to vector<8x32xf32>
    %17 = arith.mulf %7, %16 : vector<8x32xf32>
    %c0_5 = arith.constant 0 : index
    %c0_6 = arith.constant 0 : index
    %18 = vector.load %arg2[%c0_5, %c0_6] : memref<1x32xf32, #tpu.memory_space<vmem>>, vector<1x32xf32>
    %19 = vector.broadcast %18 : vector<1x32xf32> to vector<8x32xf32>
    %20 = arith.mulf %17, %19 : vector<8x32xf32>
    %c0_7 = arith.constant 0 : index
    %c0_8 = arith.constant 0 : index
    %21 = vector.load %arg3[%c0_7, %c0_8] : memref<1x32xf32, #tpu.memory_space<vmem>>, vector<1x32xf32>
    %22 = vector.broadcast %21 : vector<1x32xf32> to vector<8x32xf32>
    %23 = arith.addf %20, %22 : vector<8x32xf32>
    %24 = arith.truncf %23 : vector<8x32xf32> to vector<8x32xbf16>
    %c0_9 = arith.constant 0 : index
    %c0_10 = arith.constant 0 : index
    %25 = vector.load %arg4[%c0_9, %c0_10] : memref<8x32xbf16, #tpu.memory_space<vmem>>, vector<8x32xbf16>
    tpu.vector_store %arg4[%c0_9, %c0_10], %24 {strides = array<i32>} : memref<8x32xbf16, #tpu.memory_space<vmem>>, vector<8x32xbf16>,
    return
  }
  func.func @transform_0(%arg0: i32) -> (i32, i32) {
    %c0_i32 = arith.constant 0 : i32
    %c0_i32_0 = arith.constant 0 : i32
    return %arg0, %c0_i32 : i32, i32
  }
  func.func @transform_1(%arg0: i32) -> (i32, i32) {
    %c0_i32 = arith.constant 0 : i32
    %c0_i32_0 = arith.constant 0 : i32
    %c0_i32_1 = arith.constant 0 : i32
    return %c0_i32, %c0_i32_0 : i32, i32
  }
  func.func @transform_2(%arg0: i32) -> (i32, i32) {
    %c0_i32 = arith.constant 0 : i32
    %c0_i32_0 = arith.constant 0 : i32
    %c0_i32_1 = arith.constant 0 : i32
    return %c0_i32, %c0_i32_0 : i32, i32
  }
  func.func @transform_3(%arg0: i32) -> (i32, i32) {
    %c0_i32 = arith.constant 0 : i32
    %c0_i32_0 = arith.constant 0 : i32
    return %arg0, %c0_i32 : i32, i32
  }
}

module attributes {stable_mosaic.version = 11 : i64} {
  func.func @_mm_kernel(%arg0: i32, %arg1: i32, %arg2: i32, %arg3: memref<8x512xbf16, #tpu.memory_space<vmem>>, %arg4: memref<512x32xbf16, #tpu.memory_space<vmem>>, %arg5: memref<1x32xf32, #tpu.memory_space<vmem>>, %arg6: memref<8x32xbf16, #tpu.memory_space<vmem>>, %arg7: memref<8x32xf32, #tpu.memory_space<vmem>>) attributes {dimension_semantics = [#tpu.dimension_semantics<parallel>, #tpu.dimension_semantics<parallel>, #tpu.dimension_semantics<arbitrary>], iteration_bounds = array<i64: 1, 1, 1>, scalar_prefetch = 0 : i64, scratch_operands = 1 : i64, tpu.core_type = #tpu.core_type<tc>, window_params = [{transform_indices = @transform_0, window_bounds = array<i64: 8, 512>}, {transform_indices = @transform_1, window_bounds = array<i64: 512, 32>}, {transform_indices = @transform_2, window_bounds = array<i64: 1, 32>}, {transform_indices = @transform_3, window_bounds = array<i64: 8, 32>}]} {
    %c0_i32 = arith.constant 0 : i32
    %0 = arith.cmpi eq, %arg2, %c0_i32 : i32
    %1 = arith.extui %0 : i1 to i32
    %c0_i32_0 = arith.constant 0 : i32
    %2 = arith.cmpi ne, %1, %c0_i32_0 : i32
    scf.if %2 {
      %cst_10 = arith.constant 0.000000e+00 : f32
      %12 = vector.broadcast %cst_10 : f32 to vector<8x32xf32>
      %c0_11 = arith.constant 0 : index
      %c0_12 = arith.constant 0 : index
      %13 = vector.load %arg7[%c0_11, %c0_12] : memref<8x32xf32, #tpu.memory_space<vmem>>, vector<8x32xf32>
      tpu.vector_store %arg7[%c0_11, %c0_12], %12 {strides = array<i32>} : memref<8x32xf32, #tpu.memory_space<vmem>>, vector<8x32xf32>,
    } else {
    }
    %c0 = arith.constant 0 : index
    %c0_1 = arith.constant 0 : index
    %3 = vector.load %arg7[%c0, %c0_1] : memref<8x32xf32, #tpu.memory_space<vmem>>, vector<8x32xf32>
    %c0_2 = arith.constant 0 : index
    %c0_3 = arith.constant 0 : index
    %4 = vector.load %arg3[%c0_2, %c0_3] : memref<8x512xbf16, #tpu.memory_space<vmem>>, vector<8x512xbf16>
    %c0_4 = arith.constant 0 : index
    %c0_5 = arith.constant 0 : index
    %5 = vector.load %arg4[%c0_4, %c0_5] : memref<512x32xbf16, #tpu.memory_space<vmem>>, vector<512x32xbf16>
    %cst = arith.constant dense<0.000000e+00> : vector<8x32xf32>
    %6 = tpu.matmul %4, %5, %cst {dimension_numbers = #tpu.dot_dimension_numbers<[1], [0], [0], [1], [0, 0, 1, 1], [], []>} : vector<8x512xbf16>, vector<512x32xbf16>, vector<8x32xf32> -> vector<8x32xf32>
    %7 = arith.addf %3, %6 : vector<8x32xf32>
    %c0_6 = arith.constant 0 : index
    %c0_7 = arith.constant 0 : index
    %8 = vector.load %arg7[%c0_6, %c0_7] : memref<8x32xf32, #tpu.memory_space<vmem>>, vector<8x32xf32>
    tpu.vector_store %arg7[%c0_6, %c0_7], %7 {strides = array<i32>} : memref<8x32xf32, #tpu.memory_space<vmem>>, vector<8x32xf32>,
    %c0_i32_8 = arith.constant 0 : i32
    %9 = arith.cmpi eq, %arg2, %c0_i32_8 : i32
    %10 = arith.extui %9 : i1 to i32
    %c0_i32_9 = arith.constant 0 : i32
    %11 = arith.cmpi ne, %10, %c0_i32_9 : i32
    scf.if %11 {
      %c0_10 = arith.constant 0 : index
      %c0_11 = arith.constant 0 : index
      %12 = vector.load %arg7[%c0_10, %c0_11] : memref<8x32xf32, #tpu.memory_space<vmem>>, vector<8x32xf32>
      %c0_12 = arith.constant 0 : index
      %c0_13 = arith.constant 0 : index
      %13 = vector.load %arg5[%c0_12, %c0_13] : memref<1x32xf32, #tpu.memory_space<vmem>>, vector<1x32xf32>
      %14 = vector.broadcast %13 : vector<1x32xf32> to vector<8x32xf32>
      %15 = arith.addf %12, %14 : vector<8x32xf32>
      %16 = arith.truncf %15 : vector<8x32xf32> to vector<8x32xbf16>
      %c0_14 = arith.constant 0 : index
      %c0_15 = arith.constant 0 : index
      %17 = vector.load %arg6[%c0_14, %c0_15] : memref<8x32xbf16, #tpu.memory_space<vmem>>, vector<8x32xbf16>
      tpu.vector_store %arg6[%c0_14, %c0_15], %16 {strides = array<i32>} : memref<8x32xbf16, #tpu.memory_space<vmem>>, vector<8x32xbf16>,
    } else {
    }
    return
  }
  func.func @transform_0(%arg0: i32, %arg1: i32, %arg2: i32) -> (i32, i32) {
    %c0_i32 = arith.constant 0 : i32
    return %arg0, %arg2 : i32, i32
  }
  func.func @transform_1(%arg0: i32, %arg1: i32, %arg2: i32) -> (i32, i32) {
    %c0_i32 = arith.constant 0 : i32
    return %arg2, %arg1 : i32, i32
  }
  func.func @transform_2(%arg0: i32, %arg1: i32, %arg2: i32) -> (i32, i32) {
    %c0_i32 = arith.constant 0 : i32
    %c0_i32_0 = arith.constant 0 : i32
    return %c0_i32, %arg1 : i32, i32
  }
  func.func @transform_3(%arg0: i32, %arg1: i32, %arg2: i32) -> (i32, i32) {
    %c0_i32 = arith.constant 0 : i32
    return %arg0, %arg1 : i32, i32
  }
}

module attributes {stable_mosaic.version = 11 : i64} {
  func.func @_mm_kernel(%arg0: i32, %arg1: i32, %arg2: i32, %arg3: memref<8x32xbf16, #tpu.memory_space<vmem>>, %arg4: memref<32x32xbf16, #tpu.memory_space<vmem>>, %arg5: memref<1x32xf32, #tpu.memory_space<vmem>>, %arg6: memref<8x32xbf16, #tpu.memory_space<vmem>>, %arg7: memref<8x32xf32, #tpu.memory_space<vmem>>) attributes {dimension_semantics = [#tpu.dimension_semantics<parallel>, #tpu.dimension_semantics<parallel>, #tpu.dimension_semantics<arbitrary>], iteration_bounds = array<i64: 1, 1, 1>, scalar_prefetch = 0 : i64, scratch_operands = 1 : i64, tpu.core_type = #tpu.core_type<tc>, window_params = [{transform_indices = @transform_0, window_bounds = array<i64: 8, 32>}, {transform_indices = @transform_1, window_bounds = array<i64: 32, 32>}, {transform_indices = @transform_2, window_bounds = array<i64: 1, 32>}, {transform_indices = @transform_3, window_bounds = array<i64: 8, 32>}]} {
    %c0_i32 = arith.constant 0 : i32
    %0 = arith.cmpi eq, %arg2, %c0_i32 : i32
    %1 = arith.extui %0 : i1 to i32
    %c0_i32_0 = arith.constant 0 : i32
    %2 = arith.cmpi ne, %1, %c0_i32_0 : i32
    scf.if %2 {
      %cst_10 = arith.constant 0.000000e+00 : f32
      %12 = vector.broadcast %cst_10 : f32 to vector<8x32xf32>
      %c0_11 = arith.constant 0 : index
      %c0_12 = arith.constant 0 : index
      %13 = vector.load %arg7[%c0_11, %c0_12] : memref<8x32xf32, #tpu.memory_space<vmem>>, vector<8x32xf32>
      tpu.vector_store %arg7[%c0_11, %c0_12], %12 {strides = array<i32>} : memref<8x32xf32, #tpu.memory_space<vmem>>, vector<8x32xf32>,
    } else {
    }
    %c0 = arith.constant 0 : index
    %c0_1 = arith.constant 0 : index
    %3 = vector.load %arg7[%c0, %c0_1] : memref<8x32xf32, #tpu.memory_space<vmem>>, vector<8x32xf32>
    %c0_2 = arith.constant 0 : index
    %c0_3 = arith.constant 0 : index
    %4 = vector.load %arg3[%c0_2, %c0_3] : memref<8x32xbf16, #tpu.memory_space<vmem>>, vector<8x32xbf16>
    %c0_4 = arith.constant 0 : index
    %c0_5 = arith.constant 0 : index
    %5 = vector.load %arg4[%c0_4, %c0_5] : memref<32x32xbf16, #tpu.memory_space<vmem>>, vector<32x32xbf16>
    %cst = arith.constant dense<0.000000e+00> : vector<8x32xf32>
    %6 = tpu.matmul %4, %5, %cst {dimension_numbers = #tpu.dot_dimension_numbers<[1], [0], [0], [1], [0, 0, 1, 1], [], []>} : vector<8x32xbf16>, vector<32x32xbf16>, vector<8x32xf32> -> vector<8x32xf32>
    %7 = arith.addf %3, %6 : vector<8x32xf32>
    %c0_6 = arith.constant 0 : index
    %c0_7 = arith.constant 0 : index
    %8 = vector.load %arg7[%c0_6, %c0_7] : memref<8x32xf32, #tpu.memory_space<vmem>>, vector<8x32xf32>
    tpu.vector_store %arg7[%c0_6, %c0_7], %7 {strides = array<i32>} : memref<8x32xf32, #tpu.memory_space<vmem>>, vector<8x32xf32>,
    %c0_i32_8 = arith.constant 0 : i32
    %9 = arith.cmpi eq, %arg2, %c0_i32_8 : i32
    %10 = arith.extui %9 : i1 to i32
    %c0_i32_9 = arith.constant 0 : i32
    %11 = arith.cmpi ne, %10, %c0_i32_9 : i32
    scf.if %11 {
      %c0_10 = arith.constant 0 : index
      %c0_11 = arith.constant 0 : index
      %12 = vector.load %arg7[%c0_10, %c0_11] : memref<8x32xf32, #tpu.memory_space<vmem>>, vector<8x32xf32>
      %c0_12 = arith.constant 0 : index
      %c0_13 = arith.constant 0 : index
      %13 = vector.load %arg5[%c0_12, %c0_13] : memref<1x32xf32, #tpu.memory_space<vmem>>, vector<1x32xf32>
      %14 = vector.broadcast %13 : vector<1x32xf32> to vector<8x32xf32>
      %15 = arith.addf %12, %14 : vector<8x32xf32>
      %16 = arith.truncf %15 : vector<8x32xf32> to vector<8x32xbf16>
      %c0_14 = arith.constant 0 : index
      %c0_15 = arith.constant 0 : index
      %17 = vector.load %arg6[%c0_14, %c0_15] : memref<8x32xbf16, #tpu.memory_space<vmem>>, vector<8x32xbf16>
      tpu.vector_store %arg6[%c0_14, %c0_15], %16 {strides = array<i32>} : memref<8x32xbf16, #tpu.memory_space<vmem>>, vector<8x32xbf16>,
    } else {
    }
    return
  }
  func.func @transform_0(%arg0: i32, %arg1: i32, %arg2: i32) -> (i32, i32) {
    %c0_i32 = arith.constant 0 : i32
    return %arg0, %arg2 : i32, i32
  }
  func.func @transform_1(%arg0: i32, %arg1: i32, %arg2: i32) -> (i32, i32) {
    %c0_i32 = arith.constant 0 : i32
    return %arg2, %arg1 : i32, i32
  }
  func.func @transform_2(%arg0: i32, %arg1: i32, %arg2: i32) -> (i32, i32) {
    %c0_i32 = arith.constant 0 : i32
    %c0_i32_0 = arith.constant 0 : i32
    return %c0_i32, %arg1 : i32, i32
  }
  func.func @transform_3(%arg0: i32, %arg1: i32, %arg2: i32) -> (i32, i32) {
    %c0_i32 = arith.constant 0 : i32
    return %arg0, %arg1 : i32, i32
  }
}

module attributes {stable_mosaic.version = 11 : i64} {
  func.func @_mm_kernel(%arg0: i32, %arg1: i32, %arg2: i32, %arg3: memref<128x32xbf16, #tpu.memory_space<vmem>>, %arg4: memref<32x32xbf16, #tpu.memory_space<vmem>>, %arg5: memref<1x32xf32, #tpu.memory_space<vmem>>, %arg6: memref<128x32xbf16, #tpu.memory_space<vmem>>, %arg7: memref<128x32xf32, #tpu.memory_space<vmem>>) attributes {dimension_semantics = [#tpu.dimension_semantics<parallel>, #tpu.dimension_semantics<parallel>, #tpu.dimension_semantics<arbitrary>], iteration_bounds = array<i64: 1, 1, 1>, scalar_prefetch = 0 : i64, scratch_operands = 1 : i64, tpu.core_type = #tpu.core_type<tc>, window_params = [{transform_indices = @transform_0, window_bounds = array<i64: 128, 32>}, {transform_indices = @transform_1, window_bounds = array<i64: 32, 32>}, {transform_indices = @transform_2, window_bounds = array<i64: 1, 32>}, {transform_indices = @transform_3, window_bounds = array<i64: 128, 32>}]} {
    %c0_i32 = arith.constant 0 : i32
    %0 = arith.cmpi eq, %arg2, %c0_i32 : i32
    %1 = arith.extui %0 : i1 to i32
    %c0_i32_0 = arith.constant 0 : i32
    %2 = arith.cmpi ne, %1, %c0_i32_0 : i32
    scf.if %2 {
      %cst_10 = arith.constant 0.000000e+00 : f32
      %12 = vector.broadcast %cst_10 : f32 to vector<128x32xf32>
      %c0_11 = arith.constant 0 : index
      %c0_12 = arith.constant 0 : index
      %13 = vector.load %arg7[%c0_11, %c0_12] : memref<128x32xf32, #tpu.memory_space<vmem>>, vector<128x32xf32>
      tpu.vector_store %arg7[%c0_11, %c0_12], %12 {strides = array<i32>} : memref<128x32xf32, #tpu.memory_space<vmem>>, vector<128x32xf32>,
    } else {
    }
    %c0 = arith.constant 0 : index
    %c0_1 = arith.constant 0 : index
    %3 = vector.load %arg7[%c0, %c0_1] : memref<128x32xf32, #tpu.memory_space<vmem>>, vector<128x32xf32>
    %c0_2 = arith.constant 0 : index
    %c0_3 = arith.constant 0 : index
    %4 = vector.load %arg3[%c0_2, %c0_3] : memref<128x32xbf16, #tpu.memory_space<vmem>>, vector<128x32xbf16>
    %c0_4 = arith.constant 0 : index
    %c0_5 = arith.constant 0 : index
    %5 = vector.load %arg4[%c0_4, %c0_5] : memref<32x32xbf16, #tpu.memory_space<vmem>>, vector<32x32xbf16>
    %cst = arith.constant dense<0.000000e+00> : vector<128x32xf32>
    %6 = tpu.matmul %4, %5, %cst {dimension_numbers = #tpu.dot_dimension_numbers<[1], [0], [0], [1], [0, 0, 1, 1], [], []>} : vector<128x32xbf16>, vector<32x32xbf16>, vector<128x32xf32> -> vector<128x32xf32>
    %7 = arith.addf %3, %6 : vector<128x32xf32>
    %c0_6 = arith.constant 0 : index
    %c0_7 = arith.constant 0 : index
    %8 = vector.load %arg7[%c0_6, %c0_7] : memref<128x32xf32, #tpu.memory_space<vmem>>, vector<128x32xf32>
    tpu.vector_store %arg7[%c0_6, %c0_7], %7 {strides = array<i32>} : memref<128x32xf32, #tpu.memory_space<vmem>>, vector<128x32xf32>,
    %c0_i32_8 = arith.constant 0 : i32
    %9 = arith.cmpi eq, %arg2, %c0_i32_8 : i32
    %10 = arith.extui %9 : i1 to i32
    %c0_i32_9 = arith.constant 0 : i32
    %11 = arith.cmpi ne, %10, %c0_i32_9 : i32
    scf.if %11 {
      %c0_10 = arith.constant 0 : index
      %c0_11 = arith.constant 0 : index
      %12 = vector.load %arg7[%c0_10, %c0_11] : memref<128x32xf32, #tpu.memory_space<vmem>>, vector<128x32xf32>
      %c0_12 = arith.constant 0 : index
      %c0_13 = arith.constant 0 : index
      %13 = vector.load %arg5[%c0_12, %c0_13] : memref<1x32xf32, #tpu.memory_space<vmem>>, vector<1x32xf32>
      %14 = vector.broadcast %13 : vector<1x32xf32> to vector<128x32xf32>
      %15 = arith.addf %12, %14 : vector<128x32xf32>
      %16 = arith.truncf %15 : vector<128x32xf32> to vector<128x32xbf16>
      %c0_14 = arith.constant 0 : index
      %c0_15 = arith.constant 0 : index
      %17 = vector.load %arg6[%c0_14, %c0_15] : memref<128x32xbf16, #tpu.memory_space<vmem>>, vector<128x32xbf16>
      tpu.vector_store %arg6[%c0_14, %c0_15], %16 {strides = array<i32>} : memref<128x32xbf16, #tpu.memory_space<vmem>>, vector<128x32xbf16>,
    } else {
    }
    return
  }
  func.func @transform_0(%arg0: i32, %arg1: i32, %arg2: i32) -> (i32, i32) {
    %c0_i32 = arith.constant 0 : i32
    return %arg0, %arg2 : i32, i32
  }
  func.func @transform_1(%arg0: i32, %arg1: i32, %arg2: i32) -> (i32, i32) {
    %c0_i32 = arith.constant 0 : i32
    return %arg2, %arg1 : i32, i32
  }
  func.func @transform_2(%arg0: i32, %arg1: i32, %arg2: i32) -> (i32, i32) {
    %c0_i32 = arith.constant 0 : i32
    %c0_i32_0 = arith.constant 0 : i32
    return %c0_i32, %arg1 : i32, i32
  }
  func.func @transform_3(%arg0: i32, %arg1: i32, %arg2: i32) -> (i32, i32) {
    %c0_i32 = arith.constant 0 : i32
    return %arg0, %arg1 : i32, i32
  }
}

module attributes {stable_mosaic.version = 11 : i64} {
  func.func @_flash_attn_kernel(%arg0: i32, %arg1: i32, %arg2: i32, %arg3: i32, %arg4: memref<1x64x32xbf16, #tpu.memory_space<vmem>>, %arg5: memref<1x4x32xbf16, #tpu.memory_space<vmem>>, %arg6: memref<1x4x32xbf16, #tpu.memory_space<vmem>>, %arg7: memref<1x64x32xbf16, #tpu.memory_space<vmem>>, %arg8: memref<64x1xf32, #tpu.memory_space<vmem>>, %arg9: memref<64x1xf32, #tpu.memory_space<vmem>>, %arg10: memref<64x32xf32, #tpu.memory_space<vmem>>) attributes {dimension_semantics = [#tpu.dimension_semantics<parallel>, #tpu.dimension_semantics<parallel>, #tpu.dimension_semantics<parallel>, #tpu.dimension_semantics<arbitrary>], iteration_bounds = array<i64: 2, 1, 1, 1>, scalar_prefetch = 0 : i64, scratch_operands = 3 : i64, tpu.core_type = #tpu.core_type<tc>, window_params = [{transform_indices = @transform_0, window_bounds = array<i64: 1, 64, 32>}, {transform_indices = @transform_1, window_bounds = array<i64: 1, 4, 32>}, {transform_indices = @transform_2, window_bounds = array<i64: 1, 4, 32>}, {transform_indices = @transform_3, window_bounds = array<i64: 1, 64, 32>}]} {
    %c0_i32 = arith.constant 0 : i32
    %0 = arith.cmpi eq, %arg3, %c0_i32 : i32
    %1 = arith.extui %0 : i1 to i32
    %c0_i32_0 = arith.constant 0 : i32
    %2 = arith.cmpi ne, %1, %c0_i32_0 : i32
    scf.if %2 {
      %cst_26 = arith.constant 0xFF800000 : f32
      %36 = vector.broadcast %cst_26 : f32 to vector<64x1xf32>
      %c0_27 = arith.constant 0 : index
      %c0_28 = arith.constant 0 : index
      %37 = vector.load %arg8[%c0_27, %c0_28] : memref<64x1xf32, #tpu.memory_space<vmem>>, vector<64x1xf32>
      tpu.vector_store %arg8[%c0_27, %c0_28], %36 {strides = array<i32>} : memref<64x1xf32, #tpu.memory_space<vmem>>, vector<64x1xf32>,
      %cst_29 = arith.constant 0.000000e+00 : f32
      %38 = vector.broadcast %cst_29 : f32 to vector<64x1xf32>
      %c0_30 = arith.constant 0 : index
      %c0_31 = arith.constant 0 : index
      %39 = vector.load %arg9[%c0_30, %c0_31] : memref<64x1xf32, #tpu.memory_space<vmem>>, vector<64x1xf32>
      tpu.vector_store %arg9[%c0_30, %c0_31], %38 {strides = array<i32>} : memref<64x1xf32, #tpu.memory_space<vmem>>, vector<64x1xf32>,
      %cst_32 = arith.constant 0.000000e+00 : f32
      %40 = vector.broadcast %cst_32 : f32 to vector<64x32xf32>
      %c0_33 = arith.constant 0 : index
      %c0_34 = arith.constant 0 : index
      %41 = vector.load %arg10[%c0_33, %c0_34] : memref<64x32xf32, #tpu.memory_space<vmem>>, vector<64x32xf32>
      tpu.vector_store %arg10[%c0_33, %c0_34], %40 {strides = array<i32>} : memref<64x32xf32, #tpu.memory_space<vmem>>, vector<64x32xf32>,
    } else {
    }
    %c0 = arith.constant 0 : index
    %c0_1 = arith.constant 0 : index
    %c0_2 = arith.constant 0 : index
    %3 = vector.load %arg4[%c0, %c0_1, %c0_2] : memref<1x64x32xbf16, #tpu.memory_space<vmem>>, vector<1x64x32xbf16>
    %4 = vector.shape_cast %3 : vector<1x64x32xbf16> to vector<64x32xbf16>
    %c0_3 = arith.constant 0 : index
    %c0_4 = arith.constant 0 : index
    %c0_5 = arith.constant 0 : index
    %5 = vector.load %arg5[%c0_3, %c0_4, %c0_5] : memref<1x4x32xbf16, #tpu.memory_space<vmem>>, vector<1x4x32xbf16>
    %6 = vector.shape_cast %5 : vector<1x4x32xbf16> to vector<4x32xbf16>
    %c0_6 = arith.constant 0 : index
    %c0_7 = arith.constant 0 : index
    %c0_8 = arith.constant 0 : index
    %7 = vector.load %arg6[%c0_6, %c0_7, %c0_8] : memref<1x4x32xbf16, #tpu.memory_space<vmem>>, vector<1x4x32xbf16>
    %8 = vector.shape_cast %7 : vector<1x4x32xbf16> to vector<4x32xbf16>
    %cst = arith.constant dense<0.000000e+00> : vector<64x4xf32>
    %9 = tpu.matmul %4, %6, %cst {dimension_numbers = #tpu.dot_dimension_numbers<[1], [1], [0], [0], [0, 0, 1, 0], [], []>} : vector<64x32xbf16>, vector<4x32xbf16>, vector<64x4xf32> -> vector<64x4xf32>
    %c0_9 = arith.constant 0 : index
    %c0_10 = arith.constant 0 : index
    %10 = vector.load %arg8[%c0_9, %c0_10] : memref<64x1xf32, #tpu.memory_space<vmem>>, vector<64x1xf32>
    %cst_11 = arith.constant dense<0xFF800000> : vector<64xf32>
    %11 = vector.multi_reduction <maximumf>, %9, %cst_11 [1] : vector<64x4xf32> to vector<64xf32>
    %12 = vector.shape_cast %11 : vector<64xf32> to vector<64x1xf32>
    %13 = arith.maximumf %10, %12 : vector<64x1xf32>
    %14 = arith.subf %10, %13 : vector<64x1xf32>
    %15 = math.exp %14 : vector<64x1xf32>
    %16 = vector.broadcast %13 : vector<64x1xf32> to vector<64x4xf32>
    %17 = arith.subf %9, %16 : vector<64x4xf32>
    %18 = math.exp %17 : vector<64x4xf32>
    %c0_12 = arith.constant 0 : index
    %c0_13 = arith.constant 0 : index
    %19 = vector.load %arg9[%c0_12, %c0_13] : memref<64x1xf32, #tpu.memory_space<vmem>>, vector<64x1xf32>
    %20 = arith.mulf %15, %19 : vector<64x1xf32>
    %cst_14 = arith.constant dense<0.000000e+00> : vector<64xf32>
    %21 = vector.multi_reduction <add>, %18, %cst_14 [1] : vector<64x4xf32> to vector<64xf32>
    %22 = vector.shape_cast %21 : vector<64xf32> to vector<64x1xf32>
    %23 = arith.addf %20, %22 : vector<64x1xf32>
    %c0_15 = arith.constant 0 : index
    %c0_16 = arith.constant 0 : index
    %24 = vector.load %arg9[%c0_15, %c0_16] : memref<64x1xf32, #tpu.memory_space<vmem>>, vector<64x1xf32>
    tpu.vector_store %arg9[%c0_15, %c0_16], %23 {strides = array<i32>} : memref<64x1xf32, #tpu.memory_space<vmem>>, vector<64x1xf32>,
    %c0_17 = arith.constant 0 : index
    %c0_18 = arith.constant 0 : index
    %25 = vector.load %arg10[%c0_17, %c0_18] : memref<64x32xf32, #tpu.memory_space<vmem>>, vector<64x32xf32>
    %26 = vector.broadcast %15 : vector<64x1xf32> to vector<64x32xf32>
    %27 = arith.mulf %26, %25 : vector<64x32xf32>
    %28 = arith.truncf %18 : vector<64x4xf32> to vector<64x4xbf16>
    %cst_19 = arith.constant dense<0.000000e+00> : vector<64x32xf32>
    %29 = tpu.matmul %28, %8, %cst_19 {dimension_numbers = #tpu.dot_dimension_numbers<[1], [0], [0], [1], [0, 0, 1, 1], [], []>} : vector<64x4xbf16>, vector<4x32xbf16>, vector<64x32xf32> -> vector<64x32xf32>
    %30 = arith.addf %27, %29 : vector<64x32xf32>
    %c0_20 = arith.constant 0 : index
    %c0_21 = arith.constant 0 : index
    %31 = vector.load %arg10[%c0_20, %c0_21] : memref<64x32xf32, #tpu.memory_space<vmem>>, vector<64x32xf32>
    tpu.vector_store %arg10[%c0_20, %c0_21], %30 {strides = array<i32>} : memref<64x32xf32, #tpu.memory_space<vmem>>, vector<64x32xf32>,
    %c0_22 = arith.constant 0 : index
    %c0_23 = arith.constant 0 : index
    %32 = vector.load %arg8[%c0_22, %c0_23] : memref<64x1xf32, #tpu.memory_space<vmem>>, vector<64x1xf32>
    tpu.vector_store %arg8[%c0_22, %c0_23], %13 {strides = array<i32>} : memref<64x1xf32, #tpu.memory_space<vmem>>, vector<64x1xf32>,
    %c0_i32_24 = arith.constant 0 : i32
    %33 = arith.cmpi eq, %arg3, %c0_i32_24 : i32
    %34 = arith.extui %33 : i1 to i32
    %c0_i32_25 = arith.constant 0 : i32
    %35 = arith.cmpi ne, %34, %c0_i32_25 : i32
    scf.if %35 {
      %c0_26 = arith.constant 0 : index
      %c0_27 = arith.constant 0 : index
      %36 = vector.load %arg10[%c0_26, %c0_27] : memref<64x32xf32, #tpu.memory_space<vmem>>, vector<64x32xf32>
      %c0_28 = arith.constant 0 : index
      %c0_29 = arith.constant 0 : index
      %37 = vector.load %arg9[%c0_28, %c0_29] : memref<64x1xf32, #tpu.memory_space<vmem>>, vector<64x1xf32>
      %38 = tpu.reciprocal %37 {approx = true} : vector<64x1xf32> -> vector<64x1xf32>
      %39 = vector.broadcast %38 : vector<64x1xf32> to vector<64x32xf32>
      %40 = arith.mulf %36, %39 : vector<64x32xf32>
      %41 = arith.truncf %40 : vector<64x32xf32> to vector<64x32xbf16>
      %c0_30 = arith.constant 0 : index
      %c0_31 = arith.constant 0 : index
      %c0_32 = arith.constant 0 : index
      %42 = vector.load %arg7[%c0_30, %c0_31, %c0_32] : memref<1x64x32xbf16, #tpu.memory_space<vmem>>, vector<1x64x32xbf16>
      %43 = vector.shape_cast %42 : vector<1x64x32xbf16> to vector<64x32xbf16>
      %44 = vector.shape_cast %41 : vector<64x32xbf16> to vector<1x64x32xbf16>
      tpu.vector_store %arg7[%c0_30, %c0_31, %c0_32], %44 {strides = array<i32>} : memref<1x64x32xbf16, #tpu.memory_space<vmem>>, vector<1x64x32xbf16>,
    } else {
    }
    return
  }
  func.func @transform_0(%arg0: i32, %arg1: i32, %arg2: i32, %arg3: i32) -> (i32, i32, i32) {
    %c0_i32 = arith.constant 0 : i32
    return %arg0, %arg2, %arg1 : i32, i32, i32
  }
  func.func @transform_1(%arg0: i32, %arg1: i32, %arg2: i32, %arg3: i32) -> (i32, i32, i32) {
    %c0_i32 = arith.constant 0 : i32
    return %arg0, %arg3, %arg1 : i32, i32, i32
  }
  func.func @transform_2(%arg0: i32, %arg1: i32, %arg2: i32, %arg3: i32) -> (i32, i32, i32) {
    %c0_i32 = arith.constant 0 : i32
    return %arg0, %arg3, %arg1 : i32, i32, i32
  }
  func.func @transform_3(%arg0: i32, %arg1: i32, %arg2: i32, %arg3: i32) -> (i32, i32, i32) {
    %c0_i32 = arith.constant 0 : i32
    return %arg0, %arg2, %arg1 : i32, i32, i32
  }
}

module attributes {stable_mosaic.version = 11 : i64} {
  func.func @_mm_kernel(%arg0: i32, %arg1: i32, %arg2: i32, %arg3: memref<128x32xbf16, #tpu.memory_space<vmem>>, %arg4: memref<32x32xbf16, #tpu.memory_space<vmem>>, %arg5: memref<1x32xf32, #tpu.memory_space<vmem>>, %arg6: memref<128x32xbf16, #tpu.memory_space<vmem>>, %arg7: memref<128x32xbf16, #tpu.memory_space<vmem>>, %arg8: memref<128x32xf32, #tpu.memory_space<vmem>>) attributes {dimension_semantics = [#tpu.dimension_semantics<parallel>, #tpu.dimension_semantics<parallel>, #tpu.dimension_semantics<arbitrary>], iteration_bounds = array<i64: 1, 1, 1>, scalar_prefetch = 0 : i64, scratch_operands = 1 : i64, tpu.core_type = #tpu.core_type<tc>, window_params = [{transform_indices = @transform_0, window_bounds = array<i64: 128, 32>}, {transform_indices = @transform_1, window_bounds = array<i64: 32, 32>}, {transform_indices = @transform_2, window_bounds = array<i64: 1, 32>}, {transform_indices = @transform_3, window_bounds = array<i64: 128, 32>}, {transform_indices = @transform_4, window_bounds = array<i64: 128, 32>}]} {
    %c0_i32 = arith.constant 0 : i32
    %0 = arith.cmpi eq, %arg2, %c0_i32 : i32
    %1 = arith.extui %0 : i1 to i32
    %c0_i32_0 = arith.constant 0 : i32
    %2 = arith.cmpi ne, %1, %c0_i32_0 : i32
    scf.if %2 {
      %cst_10 = arith.constant 0.000000e+00 : f32
      %12 = vector.broadcast %cst_10 : f32 to vector<128x32xf32>
      %c0_11 = arith.constant 0 : index
      %c0_12 = arith.constant 0 : index
      %13 = vector.load %arg8[%c0_11, %c0_12] : memref<128x32xf32, #tpu.memory_space<vmem>>, vector<128x32xf32>
      tpu.vector_store %arg8[%c0_11, %c0_12], %12 {strides = array<i32>} : memref<128x32xf32, #tpu.memory_space<vmem>>, vector<128x32xf32>,
    } else {
    }
    %c0 = arith.constant 0 : index
    %c0_1 = arith.constant 0 : index
    %3 = vector.load %arg8[%c0, %c0_1] : memref<128x32xf32, #tpu.memory_space<vmem>>, vector<128x32xf32>
    %c0_2 = arith.constant 0 : index
    %c0_3 = arith.constant 0 : index
    %4 = vector.load %arg3[%c0_2, %c0_3] : memref<128x32xbf16, #tpu.memory_space<vmem>>, vector<128x32xbf16>
    %c0_4 = arith.constant 0 : index
    %c0_5 = arith.constant 0 : index
    %5 = vector.load %arg4[%c0_4, %c0_5] : memref<32x32xbf16, #tpu.memory_space<vmem>>, vector<32x32xbf16>
    %cst = arith.constant dense<0.000000e+00> : vector<128x32xf32>
    %6 = tpu.matmul %4, %5, %cst {dimension_numbers = #tpu.dot_dimension_numbers<[1], [0], [0], [1], [0, 0, 1, 1], [], []>} : vector<128x32xbf16>, vector<32x32xbf16>, vector<128x32xf32> -> vector<128x32xf32>
    %7 = arith.addf %3, %6 : vector<128x32xf32>
    %c0_6 = arith.constant 0 : index
    %c0_7 = arith.constant 0 : index
    %8 = vector.load %arg8[%c0_6, %c0_7] : memref<128x32xf32, #tpu.memory_space<vmem>>, vector<128x32xf32>
    tpu.vector_store %arg8[%c0_6, %c0_7], %7 {strides = array<i32>} : memref<128x32xf32, #tpu.memory_space<vmem>>, vector<128x32xf32>,
    %c0_i32_8 = arith.constant 0 : i32
    %9 = arith.cmpi eq, %arg2, %c0_i32_8 : i32
    %10 = arith.extui %9 : i1 to i32
    %c0_i32_9 = arith.constant 0 : i32
    %11 = arith.cmpi ne, %10, %c0_i32_9 : i32
    scf.if %11 {
      %c0_10 = arith.constant 0 : index
      %c0_11 = arith.constant 0 : index
      %12 = vector.load %arg8[%c0_10, %c0_11] : memref<128x32xf32, #tpu.memory_space<vmem>>, vector<128x32xf32>
      %c0_12 = arith.constant 0 : index
      %c0_13 = arith.constant 0 : index
      %13 = vector.load %arg5[%c0_12, %c0_13] : memref<1x32xf32, #tpu.memory_space<vmem>>, vector<1x32xf32>
      %14 = vector.broadcast %13 : vector<1x32xf32> to vector<128x32xf32>
      %15 = arith.addf %12, %14 : vector<128x32xf32>
      %c0_14 = arith.constant 0 : index
      %c0_15 = arith.constant 0 : index
      %16 = vector.load %arg6[%c0_14, %c0_15] : memref<128x32xbf16, #tpu.memory_space<vmem>>, vector<128x32xbf16>
      %17 = arith.extf %16 : vector<128x32xbf16> to vector<128x32xf32>
      %18 = arith.addf %15, %17 : vector<128x32xf32>
      %19 = arith.truncf %18 : vector<128x32xf32> to vector<128x32xbf16>
      %c0_16 = arith.constant 0 : index
      %c0_17 = arith.constant 0 : index
      %20 = vector.load %arg7[%c0_16, %c0_17] : memref<128x32xbf16, #tpu.memory_space<vmem>>, vector<128x32xbf16>
      tpu.vector_store %arg7[%c0_16, %c0_17], %19 {strides = array<i32>} : memref<128x32xbf16, #tpu.memory_space<vmem>>, vector<128x32xbf16>,
    } else {
    }
    return
  }
  func.func @transform_0(%arg0: i32, %arg1: i32, %arg2: i32) -> (i32, i32) {
    %c0_i32 = arith.constant 0 : i32
    return %arg0, %arg2 : i32, i32
  }
  func.func @transform_1(%arg0: i32, %arg1: i32, %arg2: i32) -> (i32, i32) {
    %c0_i32 = arith.constant 0 : i32
    return %arg2, %arg1 : i32, i32
  }
  func.func @transform_2(%arg0: i32, %arg1: i32, %arg2: i32) -> (i32, i32) {
    %c0_i32 = arith.constant 0 : i32
    %c0_i32_0 = arith.constant 0 : i32
    return %c0_i32, %arg1 : i32, i32
  }
  func.func @transform_3(%arg0: i32, %arg1: i32, %arg2: i32) -> (i32, i32) {
    %c0_i32 = arith.constant 0 : i32
    return %arg0, %arg1 : i32, i32
  }
  func.func @transform_4(%arg0: i32, %arg1: i32, %arg2: i32) -> (i32, i32) {
    %c0_i32 = arith.constant 0 : i32
    return %arg0, %arg1 : i32, i32
  }
}

module attributes {stable_mosaic.version = 11 : i64} {
  func.func @_mm_kernel(%arg0: i32, %arg1: i32, %arg2: i32, %arg3: memref<128x32xbf16, #tpu.memory_space<vmem>>, %arg4: memref<32x128xbf16, #tpu.memory_space<vmem>>, %arg5: memref<1x128xf32, #tpu.memory_space<vmem>>, %arg6: memref<128x128xbf16, #tpu.memory_space<vmem>>, %arg7: memref<128x128xf32, #tpu.memory_space<vmem>>) attributes {dimension_semantics = [#tpu.dimension_semantics<parallel>, #tpu.dimension_semantics<parallel>, #tpu.dimension_semantics<arbitrary>], iteration_bounds = array<i64: 1, 1, 1>, scalar_prefetch = 0 : i64, scratch_operands = 1 : i64, tpu.core_type = #tpu.core_type<tc>, window_params = [{transform_indices = @transform_0, window_bounds = array<i64: 128, 32>}, {transform_indices = @transform_1, window_bounds = array<i64: 32, 128>}, {transform_indices = @transform_2, window_bounds = array<i64: 1, 128>}, {transform_indices = @transform_3, window_bounds = array<i64: 128, 128>}]} {
    %c0_i32 = arith.constant 0 : i32
    %0 = arith.cmpi eq, %arg2, %c0_i32 : i32
    %1 = arith.extui %0 : i1 to i32
    %c0_i32_0 = arith.constant 0 : i32
    %2 = arith.cmpi ne, %1, %c0_i32_0 : i32
    scf.if %2 {
      %cst_10 = arith.constant 0.000000e+00 : f32
      %12 = vector.broadcast %cst_10 : f32 to vector<128x128xf32>
      %c0_11 = arith.constant 0 : index
      %c0_12 = arith.constant 0 : index
      %13 = vector.load %arg7[%c0_11, %c0_12] : memref<128x128xf32, #tpu.memory_space<vmem>>, vector<128x128xf32>
      tpu.vector_store %arg7[%c0_11, %c0_12], %12 {strides = array<i32>} : memref<128x128xf32, #tpu.memory_space<vmem>>, vector<128x128xf32>,
    } else {
    }
    %c0 = arith.constant 0 : index
    %c0_1 = arith.constant 0 : index
    %3 = vector.load %arg7[%c0, %c0_1] : memref<128x128xf32, #tpu.memory_space<vmem>>, vector<128x128xf32>
    %c0_2 = arith.constant 0 : index
    %c0_3 = arith.constant 0 : index
    %4 = vector.load %arg3[%c0_2, %c0_3] : memref<128x32xbf16, #tpu.memory_space<vmem>>, vector<128x32xbf16>
    %c0_4 = arith.constant 0 : index
    %c0_5 = arith.constant 0 : index
    %5 = vector.load %arg4[%c0_4, %c0_5] : memref<32x128xbf16, #tpu.memory_space<vmem>>, vector<32x128xbf16>
    %cst = arith.constant dense<0.000000e+00> : vector<128x128xf32>
    %6 = tpu.matmul %4, %5, %cst {dimension_numbers = #tpu.dot_dimension_numbers<[1], [0], [0], [1], [0, 0, 1, 1], [], []>} : vector<128x32xbf16>, vector<32x128xbf16>, vector<128x128xf32> -> vector<128x128xf32>
    %7 = arith.addf %3, %6 : vector<128x128xf32>
    %c0_6 = arith.constant 0 : index
    %c0_7 = arith.constant 0 : index
    %8 = vector.load %arg7[%c0_6, %c0_7] : memref<128x128xf32, #tpu.memory_space<vmem>>, vector<128x128xf32>
    tpu.vector_store %arg7[%c0_6, %c0_7], %7 {strides = array<i32>} : memref<128x128xf32, #tpu.memory_space<vmem>>, vector<128x128xf32>,
    %c0_i32_8 = arith.constant 0 : i32
    %9 = arith.cmpi eq, %arg2, %c0_i32_8 : i32
    %10 = arith.extui %9 : i1 to i32
    %c0_i32_9 = arith.constant 0 : i32
    %11 = arith.cmpi ne, %10, %c0_i32_9 : i32
    scf.if %11 {
      %c0_10 = arith.constant 0 : index
      %c0_11 = arith.constant 0 : index
      %12 = vector.load %arg7[%c0_10, %c0_11] : memref<128x128xf32, #tpu.memory_space<vmem>>, vector<128x128xf32>
      %c0_12 = arith.constant 0 : index
      %c0_13 = arith.constant 0 : index
      %13 = vector.load %arg5[%c0_12, %c0_13] : memref<1x128xf32, #tpu.memory_space<vmem>>, vector<1x128xf32>
      %14 = vector.broadcast %13 : vector<1x128xf32> to vector<128x128xf32>
      %15 = arith.addf %12, %14 : vector<128x128xf32>
      %16 = arith.truncf %15 : vector<128x128xf32> to vector<128x128xbf16>
      %c0_14 = arith.constant 0 : index
      %c0_15 = arith.constant 0 : index
      %17 = vector.load %arg6[%c0_14, %c0_15] : memref<128x128xbf16, #tpu.memory_space<vmem>>, vector<128x128xbf16>
      tpu.vector_store %arg6[%c0_14, %c0_15], %16 {strides = array<i32>} : memref<128x128xbf16, #tpu.memory_space<vmem>>, vector<128x128xbf16>,
    } else {
    }
    return
  }
  func.func @transform_0(%arg0: i32, %arg1: i32, %arg2: i32) -> (i32, i32) {
    %c0_i32 = arith.constant 0 : i32
    return %arg0, %arg2 : i32, i32
  }
  func.func @transform_1(%arg0: i32, %arg1: i32, %arg2: i32) -> (i32, i32) {
    %c0_i32 = arith.constant 0 : i32
    return %arg2, %arg1 : i32, i32
  }
  func.func @transform_2(%arg0: i32, %arg1: i32, %arg2: i32) -> (i32, i32) {
    %c0_i32 = arith.constant 0 : i32
    %c0_i32_0 = arith.constant 0 : i32
    return %c0_i32, %arg1 : i32, i32
  }
  func.func @transform_3(%arg0: i32, %arg1: i32, %arg2: i32) -> (i32, i32) {
    %c0_i32 = arith.constant 0 : i32
    return %arg0, %arg1 : i32, i32
  }
}

module attributes {stable_mosaic.version = 11 : i64} {
  func.func @_dwconv_gelu_kernel(%arg0: i32, %arg1: memref<1x8x8x128xbf16, #tpu.memory_space<vmem>>, %arg2: memref<9x128xf32, #tpu.memory_space<vmem>>, %arg3: memref<1x128xf32, #tpu.memory_space<vmem>>, %arg4: memref<1x8x8x128xbf16, #tpu.memory_space<vmem>>, %arg5: memref<8x8x128xf32, #tpu.memory_space<vmem>>) attributes {dimension_semantics = [#tpu.dimension_semantics<parallel>], iteration_bounds = array<i64: 2>, scalar_prefetch = 0 : i64, scratch_operands = 1 : i64, tpu.core_type = #tpu.core_type<tc>, window_params = [{transform_indices = @transform_0, window_bounds = array<i64: 1, 8, 8, 128>}, {pipeline_mode = #tpu.pipeline_mode<synchronous>, transform_indices = @transform_1, window_bounds = array<i64: 9, 128>}, {pipeline_mode = #tpu.pipeline_mode<synchronous>, transform_indices = @transform_2, window_bounds = array<i64: 1, 128>}, {transform_indices = @transform_3, window_bounds = array<i64: 1, 8, 8, 128>}]} {
    %c0 = arith.constant 0 : index
    %c0_0 = arith.constant 0 : index
    %c0_1 = arith.constant 0 : index
    %c0_2 = arith.constant 0 : index
    %0 = vector.load %arg1[%c0, %c0_0, %c0_1, %c0_2] : memref<1x8x8x128xbf16, #tpu.memory_space<vmem>>, vector<1x8x8x128xbf16>
    %1 = vector.shape_cast %0 : vector<1x8x8x128xbf16> to vector<8x8x128xbf16>
    %2 = arith.extf %1 : vector<8x8x128xbf16> to vector<8x8x128xf32>
    %c0_3 = arith.constant 0 : index
    %c0_4 = arith.constant 0 : index
    %3 = vector.load %arg2[%c0_3, %c0_4] : memref<9x128xf32, #tpu.memory_space<vmem>>, vector<9x128xf32>
    %4 = tpu.iota {dimensions = array<i32: 1>} : vector<1x8x1xi32>
    %cst = arith.constant 0.000000e+00 : f32
    %5 = vector.broadcast %cst : f32 to vector<8x8x128xf32>
    %c0_5 = arith.constant 0 : index
    %c0_6 = arith.constant 0 : index
    %c0_7 = arith.constant 0 : index
    %6 = vector.load %arg5[%c0_5, %c0_6, %c0_7] : memref<8x8x128xf32, #tpu.memory_space<vmem>>, vector<8x8x128xf32>
    tpu.vector_store %arg5[%c0_5, %c0_6, %c0_7], %5 {strides = array<i32>} : memref<8x8x128xf32, #tpu.memory_space<vmem>>, vector<8x8x128xf32>,
    %7 = vector.extract_strided_slice %2 {offsets = [0, 0, 0], sizes = [7, 8, 128], strides = [1, 1, 1]} : vector<8x8x128xf32> to vector<7x8x128xf32>
    %8 = vector.extract_strided_slice %3 {offsets = [0, 0], sizes = [1, 128], strides = [1, 1]} : vector<9x128xf32> to vector<1x128xf32>
    %9 = vector.shape_cast %8 : vector<1x128xf32> to vector<128xf32>
    %c1_i32 = arith.constant 1 : i32
    %10 = tpu.dynamic_rotate %7 by %c1_i32 dim 1 : vector<7x8x128xf32>, i32 -> vector<7x8x128xf32>
    %c1_i32_8 = arith.constant 1 : i32
    %11 = vector.broadcast %c1_i32_8 : i32 to vector<1x8x1xi32>
    %12 = arith.cmpi sge, %4, %11 : vector<1x8x1xi32>
    %cst_9 = arith.constant 0.000000e+00 : f32
    %13 = vector.shape_cast %12 : vector<1x8x1xi1> to vector<1x8x1xi1>
    %14 = vector.broadcast %13 : vector<1x8x1xi1> to vector<7x8x128xi1>
    %15 = vector.broadcast %cst_9 : f32 to vector<7x8x128xf32>
    %16 = arith.select %14, %10, %15 : vector<7x8x128xi1>, vector<7x8x128xf32>
    %c1 = arith.constant 1 : index
    %c0_10 = arith.constant 0 : index
    %c0_11 = arith.constant 0 : index
    %17 = vector.load %arg5[%c1, %c0_10, %c0_11] : memref<8x8x128xf32, #tpu.memory_space<vmem>>, vector<7x8x128xf32>
    %18 = vector.shape_cast %9 : vector<128xf32> to vector<1x1x128xf32>
    %19 = vector.broadcast %18 : vector<1x1x128xf32> to vector<7x8x128xf32>
    %20 = arith.mulf %16, %19 : vector<7x8x128xf32>
    %21 = arith.addf %17, %20 : vector<7x8x128xf32>
    %c1_12 = arith.constant 1 : index
    %c0_13 = arith.constant 0 : index
    %c0_14 = arith.constant 0 : index
    %22 = vector.load %arg5[%c1_12, %c0_13, %c0_14] : memref<8x8x128xf32, #tpu.memory_space<vmem>>, vector<7x8x128xf32>
    tpu.vector_store %arg5[%c1_12, %c0_13, %c0_14], %21 {strides = array<i32>} : memref<8x8x128xf32, #tpu.memory_space<vmem>>, vector<7x8x128xf32>,
    %23 = vector.extract_strided_slice %3 {offsets = [1, 0], sizes = [1, 128], strides = [1, 1]} : vector<9x128xf32> to vector<1x128xf32>
    %24 = vector.shape_cast %23 : vector<1x128xf32> to vector<128xf32>
    %c1_15 = arith.constant 1 : index
    %c0_16 = arith.constant 0 : index
    %c0_17 = arith.constant 0 : index
    %25 = vector.load %arg5[%c1_15, %c0_16, %c0_17] : memref<8x8x128xf32, #tpu.memory_space<vmem>>, vector<7x8x128xf32>
    %26 = vector.shape_cast %24 : vector<128xf32> to vector<1x1x128xf32>
    %27 = vector.broadcast %26 : vector<1x1x128xf32> to vector<7x8x128xf32>
    %28 = arith.mulf %7, %27 : vector<7x8x128xf32>
    %29 = arith.addf %25, %28 : vector<7x8x128xf32>
    %c1_18 = arith.constant 1 : index
    %c0_19 = arith.constant 0 : index
    %c0_20 = arith.constant 0 : index
    %30 = vector.load %arg5[%c1_18, %c0_19, %c0_20] : memref<8x8x128xf32, #tpu.memory_space<vmem>>, vector<7x8x128xf32>
    tpu.vector_store %arg5[%c1_18, %c0_19, %c0_20], %29 {strides = array<i32>} : memref<8x8x128xf32, #tpu.memory_space<vmem>>, vector<7x8x128xf32>,
    %31 = vector.extract_strided_slice %3 {offsets = [2, 0], sizes = [1, 128], strides = [1, 1]} : vector<9x128xf32> to vector<1x128xf32>
    %32 = vector.shape_cast %31 : vector<1x128xf32> to vector<128xf32>
    %c7_i32 = arith.constant 7 : i32
    %33 = tpu.dynamic_rotate %7 by %c7_i32 dim 1 : vector<7x8x128xf32>, i32 -> vector<7x8x128xf32>
    %c6_i32 = arith.constant 6 : i32
    %34 = vector.broadcast %c6_i32 : i32 to vector<1x8x1xi32>
    %35 = arith.cmpi sle, %4, %34 : vector<1x8x1xi32>
    %cst_21 = arith.constant 0.000000e+00 : f32
    %36 = vector.shape_cast %35 : vector<1x8x1xi1> to vector<1x8x1xi1>
    %37 = vector.broadcast %36 : vector<1x8x1xi1> to vector<7x8x128xi1>
    %38 = vector.broadcast %cst_21 : f32 to vector<7x8x128xf32>
    %39 = arith.select %37, %33, %38 : vector<7x8x128xi1>, vector<7x8x128xf32>
    %c1_22 = arith.constant 1 : index
    %c0_23 = arith.constant 0 : index
    %c0_24 = arith.constant 0 : index
    %40 = vector.load %arg5[%c1_22, %c0_23, %c0_24] : memref<8x8x128xf32, #tpu.memory_space<vmem>>, vector<7x8x128xf32>
    %41 = vector.shape_cast %32 : vector<128xf32> to vector<1x1x128xf32>
    %42 = vector.broadcast %41 : vector<1x1x128xf32> to vector<7x8x128xf32>
    %43 = arith.mulf %39, %42 : vector<7x8x128xf32>
    %44 = arith.addf %40, %43 : vector<7x8x128xf32>
    %c1_25 = arith.constant 1 : index
    %c0_26 = arith.constant 0 : index
    %c0_27 = arith.constant 0 : index
    %45 = vector.load %arg5[%c1_25, %c0_26, %c0_27] : memref<8x8x128xf32, #tpu.memory_space<vmem>>, vector<7x8x128xf32>
    tpu.vector_store %arg5[%c1_25, %c0_26, %c0_27], %44 {strides = array<i32>} : memref<8x8x128xf32, #tpu.memory_space<vmem>>, vector<7x8x128xf32>,
    %46 = vector.extract_strided_slice %3 {offsets = [3, 0], sizes = [1, 128], strides = [1, 1]} : vector<9x128xf32> to vector<1x128xf32>
    %47 = vector.shape_cast %46 : vector<1x128xf32> to vector<128xf32>
    %c1_i32_28 = arith.constant 1 : i32
    %48 = tpu.dynamic_rotate %2 by %c1_i32_28 dim 1 : vector<8x8x128xf32>, i32 -> vector<8x8x128xf32>
    %c1_i32_29 = arith.constant 1 : i32
    %49 = vector.broadcast %c1_i32_29 : i32 to vector<1x8x1xi32>
    %50 = arith.cmpi sge, %4, %49 : vector<1x8x1xi32>
    %cst_30 = arith.constant 0.000000e+00 : f32
    %51 = vector.shape_cast %50 : vector<1x8x1xi1> to vector<1x8x1xi1>
    %52 = vector.broadcast %51 : vector<1x8x1xi1> to vector<8x8x128xi1>
    %53 = vector.broadcast %cst_30 : f32 to vector<8x8x128xf32>
    %54 = arith.select %52, %48, %53 : vector<8x8x128xi1>, vector<8x8x128xf32>
    %c0_31 = arith.constant 0 : index
    %c0_32 = arith.constant 0 : index
    %c0_33 = arith.constant 0 : index
    %55 = vector.load %arg5[%c0_31, %c0_32, %c0_33] : memref<8x8x128xf32, #tpu.memory_space<vmem>>, vector<8x8x128xf32>
    %56 = vector.shape_cast %47 : vector<128xf32> to vector<1x1x128xf32>
    %57 = vector.broadcast %56 : vector<1x1x128xf32> to vector<8x8x128xf32>
    %58 = arith.mulf %54, %57 : vector<8x8x128xf32>
    %59 = arith.addf %55, %58 : vector<8x8x128xf32>
    %c0_34 = arith.constant 0 : index
    %c0_35 = arith.constant 0 : index
    %c0_36 = arith.constant 0 : index
    %60 = vector.load %arg5[%c0_34, %c0_35, %c0_36] : memref<8x8x128xf32, #tpu.memory_space<vmem>>, vector<8x8x128xf32>
    tpu.vector_store %arg5[%c0_34, %c0_35, %c0_36], %59 {strides = array<i32>} : memref<8x8x128xf32, #tpu.memory_space<vmem>>, vector<8x8x128xf32>,
    %61 = vector.extract_strided_slice %3 {offsets = [4, 0], sizes = [1, 128], strides = [1, 1]} : vector<9x128xf32> to vector<1x128xf32>
    %62 = vector.shape_cast %61 : vector<1x128xf32> to vector<128xf32>
    %c0_37 = arith.constant 0 : index
    %c0_38 = arith.constant 0 : index
    %c0_39 = arith.constant 0 : index
    %63 = vector.load %arg5[%c0_37, %c0_38, %c0_39] : memref<8x8x128xf32, #tpu.memory_space<vmem>>, vector<8x8x128xf32>
    %64 = vector.shape_cast %62 : vector<128xf32> to vector<1x1x128xf32>
    %65 = vector.broadcast %64 : vector<1x1x128xf32> to vector<8x8x128xf32>
    %66 = arith.mulf %2, %65 : vector<8x8x128xf32>
    %67 = arith.addf %63, %66 : vector<8x8x128xf32>
    %c0_40 = arith.constant 0 : index
    %c0_41 = arith.constant 0 : index
    %c0_42 = arith.constant 0 : index
    %68 = vector.load %arg5[%c0_40, %c0_41, %c0_42] : memref<8x8x128xf32, #tpu.memory_space<vmem>>, vector<8x8x128xf32>
    tpu.vector_store %arg5[%c0_40, %c0_41, %c0_42], %67 {strides = array<i32>} : memref<8x8x128xf32, #tpu.memory_space<vmem>>, vector<8x8x128xf32>,
    %69 = vector.extract_strided_slice %3 {offsets = [5, 0], sizes = [1, 128], strides = [1, 1]} : vector<9x128xf32> to vector<1x128xf32>
    %70 = vector.shape_cast %69 : vector<1x128xf32> to vector<128xf32>
    %c7_i32_43 = arith.constant 7 : i32
    %71 = tpu.dynamic_rotate %2 by %c7_i32_43 dim 1 : vector<8x8x128xf32>, i32 -> vector<8x8x128xf32>
    %c6_i32_44 = arith.constant 6 : i32
    %72 = vector.broadcast %c6_i32_44 : i32 to vector<1x8x1xi32>
    %73 = arith.cmpi sle, %4, %72 : vector<1x8x1xi32>
    %cst_45 = arith.constant 0.000000e+00 : f32
    %74 = vector.shape_cast %73 : vector<1x8x1xi1> to vector<1x8x1xi1>
    %75 = vector.broadcast %74 : vector<1x8x1xi1> to vector<8x8x128xi1>
    %76 = vector.broadcast %cst_45 : f32 to vector<8x8x128xf32>
    %77 = arith.select %75, %71, %76 : vector<8x8x128xi1>, vector<8x8x128xf32>
    %c0_46 = arith.constant 0 : index
    %c0_47 = arith.constant 0 : index
    %c0_48 = arith.constant 0 : index
    %78 = vector.load %arg5[%c0_46, %c0_47, %c0_48] : memref<8x8x128xf32, #tpu.memory_space<vmem>>, vector<8x8x128xf32>
    %79 = vector.shape_cast %70 : vector<128xf32> to vector<1x1x128xf32>
    %80 = vector.broadcast %79 : vector<1x1x128xf32> to vector<8x8x128xf32>
    %81 = arith.mulf %77, %80 : vector<8x8x128xf32>
    %82 = arith.addf %78, %81 : vector<8x8x128xf32>
    %c0_49 = arith.constant 0 : index
    %c0_50 = arith.constant 0 : index
    %c0_51 = arith.constant 0 : index
    %83 = vector.load %arg5[%c0_49, %c0_50, %c0_51] : memref<8x8x128xf32, #tpu.memory_space<vmem>>, vector<8x8x128xf32>
    tpu.vector_store %arg5[%c0_49, %c0_50, %c0_51], %82 {strides = array<i32>} : memref<8x8x128xf32, #tpu.memory_space<vmem>>, vector<8x8x128xf32>,
    %84 = vector.extract_strided_slice %2 {offsets = [1, 0, 0], sizes = [7, 8, 128], strides = [1, 1, 1]} : vector<8x8x128xf32> to vector<7x8x128xf32>
    %85 = vector.extract_strided_slice %3 {offsets = [6, 0], sizes = [1, 128], strides = [1, 1]} : vector<9x128xf32> to vector<1x128xf32>
    %86 = vector.shape_cast %85 : vector<1x128xf32> to vector<128xf32>
    %c1_i32_52 = arith.constant 1 : i32
    %87 = tpu.dynamic_rotate %84 by %c1_i32_52 dim 1 : vector<7x8x128xf32>, i32 -> vector<7x8x128xf32>
    %c1_i32_53 = arith.constant 1 : i32
    %88 = vector.broadcast %c1_i32_53 : i32 to vector<1x8x1xi32>
    %89 = arith.cmpi sge, %4, %88 : vector<1x8x1xi32>
    %cst_54 = arith.constant 0.000000e+00 : f32
    %90 = vector.shape_cast %89 : vector<1x8x1xi1> to vector<1x8x1xi1>
    %91 = vector.broadcast %90 : vector<1x8x1xi1> to vector<7x8x128xi1>
    %92 = vector.broadcast %cst_54 : f32 to vector<7x8x128xf32>
    %93 = arith.select %91, %87, %92 : vector<7x8x128xi1>, vector<7x8x128xf32>
    %c0_55 = arith.constant 0 : index
    %c0_56 = arith.constant 0 : index
    %c0_57 = arith.constant 0 : index
    %94 = vector.load %arg5[%c0_55, %c0_56, %c0_57] : memref<8x8x128xf32, #tpu.memory_space<vmem>>, vector<7x8x128xf32>
    %95 = vector.shape_cast %86 : vector<128xf32> to vector<1x1x128xf32>
    %96 = vector.broadcast %95 : vector<1x1x128xf32> to vector<7x8x128xf32>
    %97 = arith.mulf %93, %96 : vector<7x8x128xf32>
    %98 = arith.addf %94, %97 : vector<7x8x128xf32>
    %c0_58 = arith.constant 0 : index
    %c0_59 = arith.constant 0 : index
    %c0_60 = arith.constant 0 : index
    %99 = vector.load %arg5[%c0_58, %c0_59, %c0_60] : memref<8x8x128xf32, #tpu.memory_space<vmem>>, vector<7x8x128xf32>
    tpu.vector_store %arg5[%c0_58, %c0_59, %c0_60], %98 {strides = array<i32>} : memref<8x8x128xf32, #tpu.memory_space<vmem>>, vector<7x8x128xf32>,
    %100 = vector.extract_strided_slice %3 {offsets = [7, 0], sizes = [1, 128], strides = [1, 1]} : vector<9x128xf32> to vector<1x128xf32>
    %101 = vector.shape_cast %100 : vector<1x128xf32> to vector<128xf32>
    %c0_61 = arith.constant 0 : index
    %c0_62 = arith.constant 0 : index
    %c0_63 = arith.constant 0 : index
    %102 = vector.load %arg5[%c0_61, %c0_62, %c0_63] : memref<8x8x128xf32, #tpu.memory_space<vmem>>, vector<7x8x128xf32>
    %103 = vector.shape_cast %101 : vector<128xf32> to vector<1x1x128xf32>
    %104 = vector.broadcast %103 : vector<1x1x128xf32> to vector<7x8x128xf32>
    %105 = arith.mulf %84, %104 : vector<7x8x128xf32>
    %106 = arith.addf %102, %105 : vector<7x8x128xf32>
    %c0_64 = arith.constant 0 : index
    %c0_65 = arith.constant 0 : index
    %c0_66 = arith.constant 0 : index
    %107 = vector.load %arg5[%c0_64, %c0_65, %c0_66] : memref<8x8x128xf32, #tpu.memory_space<vmem>>, vector<7x8x128xf32>
    tpu.vector_store %arg5[%c0_64, %c0_65, %c0_66], %106 {strides = array<i32>} : memref<8x8x128xf32, #tpu.memory_space<vmem>>, vector<7x8x128xf32>,
    %108 = vector.extract_strided_slice %3 {offsets = [8, 0], sizes = [1, 128], strides = [1, 1]} : vector<9x128xf32> to vector<1x128xf32>
    %109 = vector.shape_cast %108 : vector<1x128xf32> to vector<128xf32>
    %c7_i32_67 = arith.constant 7 : i32
    %110 = tpu.dynamic_rotate %84 by %c7_i32_67 dim 1 : vector<7x8x128xf32>, i32 -> vector<7x8x128xf32>
    %c6_i32_68 = arith.constant 6 : i32
    %111 = vector.broadcast %c6_i32_68 : i32 to vector<1x8x1xi32>
    %112 = arith.cmpi sle, %4, %111 : vector<1x8x1xi32>
    %cst_69 = arith.constant 0.000000e+00 : f32
    %113 = vector.shape_cast %112 : vector<1x8x1xi1> to vector<1x8x1xi1>
    %114 = vector.broadcast %113 : vector<1x8x1xi1> to vector<7x8x128xi1>
    %115 = vector.broadcast %cst_69 : f32 to vector<7x8x128xf32>
    %116 = arith.select %114, %110, %115 : vector<7x8x128xi1>, vector<7x8x128xf32>
    %c0_70 = arith.constant 0 : index
    %c0_71 = arith.constant 0 : index
    %c0_72 = arith.constant 0 : index
    %117 = vector.load %arg5[%c0_70, %c0_71, %c0_72] : memref<8x8x128xf32, #tpu.memory_space<vmem>>, vector<7x8x128xf32>
    %118 = vector.shape_cast %109 : vector<128xf32> to vector<1x1x128xf32>
    %119 = vector.broadcast %118 : vector<1x1x128xf32> to vector<7x8x128xf32>
    %120 = arith.mulf %116, %119 : vector<7x8x128xf32>
    %121 = arith.addf %117, %120 : vector<7x8x128xf32>
    %c0_73 = arith.constant 0 : index
    %c0_74 = arith.constant 0 : index
    %c0_75 = arith.constant 0 : index
    %122 = vector.load %arg5[%c0_73, %c0_74, %c0_75] : memref<8x8x128xf32, #tpu.memory_space<vmem>>, vector<7x8x128xf32>
    tpu.vector_store %arg5[%c0_73, %c0_74, %c0_75], %121 {strides = array<i32>} : memref<8x8x128xf32, #tpu.memory_space<vmem>>, vector<7x8x128xf32>,
    %c0_76 = arith.constant 0 : index
    %c0_77 = arith.constant 0 : index
    %c0_78 = arith.constant 0 : index
    %123 = vector.load %arg5[%c0_76, %c0_77, %c0_78] : memref<8x8x128xf32, #tpu.memory_space<vmem>>, vector<8x8x128xf32>
    %c0_79 = arith.constant 0 : index
    %c0_80 = arith.constant 0 : index
    %124 = vector.load %arg3[%c0_79, %c0_80] : memref<1x128xf32, #tpu.memory_space<vmem>>, vector<1x128xf32>
    %125 = vector.shape_cast %124 : vector<1x128xf32> to vector<1x1x128xf32>
    %126 = vector.broadcast %125 : vector<1x1x128xf32> to vector<8x8x128xf32>
    %127 = arith.addf %123, %126 : vector<8x8x128xf32>
    %cst_81 = arith.constant 5.000000e-01 : f32
    %128 = vector.broadcast %cst_81 : f32 to vector<8x8x128xf32>
    %129 = arith.mulf %128, %127 : vector<8x8x128xf32>
    %cst_82 = arith.constant 0.707106769 : f32
    %130 = vector.broadcast %cst_82 : f32 to vector<8x8x128xf32>
    %131 = arith.mulf %127, %130 : vector<8x8x128xf32>
    %132 = math.erf %131 : vector<8x8x128xf32>
    %cst_83 = arith.constant 1.000000e+00 : f32
    %133 = vector.broadcast %cst_83 : f32 to vector<8x8x128xf32>
    %134 = arith.addf %133, %132 : vector<8x8x128xf32>
    %135 = arith.mulf %129, %134 : vector<8x8x128xf32>
    %136 = arith.truncf %135 : vector<8x8x128xf32> to vector<8x8x128xbf16>
    %c0_84 = arith.constant 0 : index
    %c0_85 = arith.constant 0 : index
    %c0_86 = arith.constant 0 : index
    %c0_87 = arith.constant 0 : index
    %137 = vector.load %arg4[%c0_84, %c0_85, %c0_86, %c0_87] : memref<1x8x8x128xbf16, #tpu.memory_space<vmem>>, vector<1x8x8x128xbf16>
    %138 = vector.shape_cast %137 : vector<1x8x8x128xbf16> to vector<8x8x128xbf16>
    %139 = vector.shape_cast %136 : vector<8x8x128xbf16> to vector<1x8x8x128xbf16>
    tpu.vector_store %arg4[%c0_84, %c0_85, %c0_86, %c0_87], %139 {strides = array<i32>} : memref<1x8x8x128xbf16, #tpu.memory_space<vmem>>, vector<1x8x8x128xbf16>,
    return
  }
  func.func @transform_0(%arg0: i32) -> (i32, i32, i32, i32) {
    %c0_i32 = arith.constant 0 : i32
    %c0_i32_0 = arith.constant 0 : i32
    %c0_i32_1 = arith.constant 0 : i32
    %c0_i32_2 = arith.constant 0 : i32
    return %arg0, %c0_i32, %c0_i32_0, %c0_i32_1 : i32, i32, i32, i32
  }
  func.func @transform_1(%arg0: i32) -> (i32, i32) {
    %c0_i32 = arith.constant 0 : i32
    %c0_i32_0 = arith.constant 0 : i32
    %c0_i32_1 = arith.constant 0 : i32
    return %c0_i32, %c0_i32_0 : i32, i32
  }
  func.func @transform_2(%arg0: i32) -> (i32, i32) {
    %c0_i32 = arith.constant 0 : i32
    %c0_i32_0 = arith.constant 0 : i32
    %c0_i32_1 = arith.constant 0 : i32
    return %c0_i32, %c0_i32_0 : i32, i32
  }
  func.func @transform_3(%arg0: i32) -> (i32, i32, i32, i32) {
    %c0_i32 = arith.constant 0 : i32
    %c0_i32_0 = arith.constant 0 : i32
    %c0_i32_1 = arith.constant 0 : i32
    %c0_i32_2 = arith.constant 0 : i32
    return %arg0, %c0_i32, %c0_i32_0, %c0_i32_1 : i32, i32, i32, i32
  }
}

module attributes {stable_mosaic.version = 11 : i64} {
  func.func @_mm_kernel(%arg0: i32, %arg1: i32, %arg2: i32, %arg3: memref<128x128xbf16, #tpu.memory_space<vmem>>, %arg4: memref<128x32xbf16, #tpu.memory_space<vmem>>, %arg5: memref<1x32xf32, #tpu.memory_space<vmem>>, %arg6: memref<128x32xbf16, #tpu.memory_space<vmem>>, %arg7: memref<128x32xbf16, #tpu.memory_space<vmem>>, %arg8: memref<128x32xf32, #tpu.memory_space<vmem>>) attributes {dimension_semantics = [#tpu.dimension_semantics<parallel>, #tpu.dimension_semantics<parallel>, #tpu.dimension_semantics<arbitrary>], iteration_bounds = array<i64: 1, 1, 1>, scalar_prefetch = 0 : i64, scratch_operands = 1 : i64, tpu.core_type = #tpu.core_type<tc>, window_params = [{transform_indices = @transform_0, window_bounds = array<i64: 128, 128>}, {transform_indices = @transform_1, window_bounds = array<i64: 128, 32>}, {transform_indices = @transform_2, window_bounds = array<i64: 1, 32>}, {transform_indices = @transform_3, window_bounds = array<i64: 128, 32>}, {transform_indices = @transform_4, window_bounds = array<i64: 128, 32>}]} {
    %c0_i32 = arith.constant 0 : i32
    %0 = arith.cmpi eq, %arg2, %c0_i32 : i32
    %1 = arith.extui %0 : i1 to i32
    %c0_i32_0 = arith.constant 0 : i32
    %2 = arith.cmpi ne, %1, %c0_i32_0 : i32
    scf.if %2 {
      %cst_10 = arith.constant 0.000000e+00 : f32
      %12 = vector.broadcast %cst_10 : f32 to vector<128x32xf32>
      %c0_11 = arith.constant 0 : index
      %c0_12 = arith.constant 0 : index
      %13 = vector.load %arg8[%c0_11, %c0_12] : memref<128x32xf32, #tpu.memory_space<vmem>>, vector<128x32xf32>
      tpu.vector_store %arg8[%c0_11, %c0_12], %12 {strides = array<i32>} : memref<128x32xf32, #tpu.memory_space<vmem>>, vector<128x32xf32>,
    } else {
    }
    %c0 = arith.constant 0 : index
    %c0_1 = arith.constant 0 : index
    %3 = vector.load %arg8[%c0, %c0_1] : memref<128x32xf32, #tpu.memory_space<vmem>>, vector<128x32xf32>
    %c0_2 = arith.constant 0 : index
    %c0_3 = arith.constant 0 : index
    %4 = vector.load %arg3[%c0_2, %c0_3] : memref<128x128xbf16, #tpu.memory_space<vmem>>, vector<128x128xbf16>
    %c0_4 = arith.constant 0 : index
    %c0_5 = arith.constant 0 : index
    %5 = vector.load %arg4[%c0_4, %c0_5] : memref<128x32xbf16, #tpu.memory_space<vmem>>, vector<128x32xbf16>
    %cst = arith.constant dense<0.000000e+00> : vector<128x32xf32>
    %6 = tpu.matmul %4, %5, %cst {dimension_numbers = #tpu.dot_dimension_numbers<[1], [0], [0], [1], [0, 0, 1, 1], [], []>} : vector<128x128xbf16>, vector<128x32xbf16>, vector<128x32xf32> -> vector<128x32xf32>
    %7 = arith.addf %3, %6 : vector<128x32xf32>
    %c0_6 = arith.constant 0 : index
    %c0_7 = arith.constant 0 : index
    %8 = vector.load %arg8[%c0_6, %c0_7] : memref<128x32xf32, #tpu.memory_space<vmem>>, vector<128x32xf32>
    tpu.vector_store %arg8[%c0_6, %c0_7], %7 {strides = array<i32>} : memref<128x32xf32, #tpu.memory_space<vmem>>, vector<128x32xf32>,
    %c0_i32_8 = arith.constant 0 : i32
    %9 = arith.cmpi eq, %arg2, %c0_i32_8 : i32
    %10 = arith.extui %9 : i1 to i32
    %c0_i32_9 = arith.constant 0 : i32
    %11 = arith.cmpi ne, %10, %c0_i32_9 : i32
    scf.if %11 {
      %c0_10 = arith.constant 0 : index
      %c0_11 = arith.constant 0 : index
      %12 = vector.load %arg8[%c0_10, %c0_11] : memref<128x32xf32, #tpu.memory_space<vmem>>, vector<128x32xf32>
      %c0_12 = arith.constant 0 : index
      %c0_13 = arith.constant 0 : index
      %13 = vector.load %arg5[%c0_12, %c0_13] : memref<1x32xf32, #tpu.memory_space<vmem>>, vector<1x32xf32>
      %14 = vector.broadcast %13 : vector<1x32xf32> to vector<128x32xf32>
      %15 = arith.addf %12, %14 : vector<128x32xf32>
      %c0_14 = arith.constant 0 : index
      %c0_15 = arith.constant 0 : index
      %16 = vector.load %arg6[%c0_14, %c0_15] : memref<128x32xbf16, #tpu.memory_space<vmem>>, vector<128x32xbf16>
      %17 = arith.extf %16 : vector<128x32xbf16> to vector<128x32xf32>
      %18 = arith.addf %15, %17 : vector<128x32xf32>
      %19 = arith.truncf %18 : vector<128x32xf32> to vector<128x32xbf16>
      %c0_16 = arith.constant 0 : index
      %c0_17 = arith.constant 0 : index
      %20 = vector.load %arg7[%c0_16, %c0_17] : memref<128x32xbf16, #tpu.memory_space<vmem>>, vector<128x32xbf16>
      tpu.vector_store %arg7[%c0_16, %c0_17], %19 {strides = array<i32>} : memref<128x32xbf16, #tpu.memory_space<vmem>>, vector<128x32xbf16>,
    } else {
    }
    return
  }
  func.func @transform_0(%arg0: i32, %arg1: i32, %arg2: i32) -> (i32, i32) {
    %c0_i32 = arith.constant 0 : i32
    return %arg0, %arg2 : i32, i32
  }
  func.func @transform_1(%arg0: i32, %arg1: i32, %arg2: i32) -> (i32, i32) {
    %c0_i32 = arith.constant 0 : i32
    return %arg2, %arg1 : i32, i32
  }
  func.func @transform_2(%arg0: i32, %arg1: i32, %arg2: i32) -> (i32, i32) {
    %c0_i32 = arith.constant 0 : i32
    %c0_i32_0 = arith.constant 0 : i32
    return %c0_i32, %arg1 : i32, i32
  }
  func.func @transform_3(%arg0: i32, %arg1: i32, %arg2: i32) -> (i32, i32) {
    %c0_i32 = arith.constant 0 : i32
    return %arg0, %arg1 : i32, i32
  }
  func.func @transform_4(%arg0: i32, %arg1: i32, %arg2: i32) -> (i32, i32) {
    %c0_i32 = arith.constant 0 : i32
    return %arg0, %arg1 : i32, i32
  }
}

</mosaic_0001>

<llo_original>
// kernel: tcformer_forward.28
$region0: #{tcformer_forward.28}
  #allocation0 [shape = 'u32[]', space=smem, size = 0x4, offset = 0x4, fixed_abs, tag = 'smem constant byte address 0x4 - core index']
  #allocation1 [shape = 'u32[144,128]{1,0:T(1,128)}', space=vmem, size = 0x12000, scoped, tag = 'internal scratch']
  %s0 = inlined_call_operand.vmem [shape: bf16[128,32], index: 0, kind: input, shape index: {}]
  %s1 = inlined_call_operand.vmem [shape: f32[1,32], index: 1, kind: input, shape index: {}]
  %s2 = inlined_call_operand.vmem [shape: f32[1,32], index: 2, kind: input, shape index: {}]
  %s3 = inlined_call_operand.vmem [shape: bf16[128,32], index: 3, kind: output, shape index: {}]
  %s4 = sld [smem:[#allocation0]]
  $region22: #{tcformer_forward.28} parent=0
    _
  %s6 = ssub.s32 1, %s4
  %s7 = scalar_select 0, %s6, %s4
  // Predicated region
  $region2: #{tcformer_forward.28} parent=0 // pred_check
    _
  $region3: #{tcformer_forward.28} parent=0 // pred_check_branch
    %9 = sbr.rel (0) target = $region5
  $region4: #{tcformer_forward.28} parent=0 // pred_region
    _
  $region5: #{tcformer_forward.28} parent=0 // pred_fallthru
    _
  // Predicated region
  $region6: #{tcformer_forward.28} parent=0 // pred_check
    _
  $region7: #{tcformer_forward.28} parent=0 // pred_check_branch
    %11 = sbr.rel (0) target = $region9
  $region8: #{tcformer_forward.28} parent=0 // pred_region
    _
  $region9: #{tcformer_forward.28} parent=0 // pred_fallthru
    _
  // Predicated region
  $region10: #{tcformer_forward.28} parent=0 // pred_check
    _
  $region11: #{tcformer_forward.28} parent=0 // pred_check_branch
    %13 = sbr.rel (0) target = $region13
  $region12: #{tcformer_forward.28} parent=0 // pred_region
    _
  $region13: #{tcformer_forward.28} parent=0 // pred_fallthru
    _
  %v14 = vld [vmem:[%s0] sm:$0xf]
  %v15 = vld [vmem:[%s0 + $0x4] sm:$0xf]
  %v16 = vld [vmem:[%s0 + $0x8] sm:$0xf]
  %v17 = vld [vmem:[%s0 + $0xc] sm:$0xf]
  %v18 = vld [vmem:[%s0 + $0x10] sm:$0xf]
  %v19 = vld [vmem:[%s0 + $0x14] sm:$0xf]
  %v20 = vld [vmem:[%s0 + $0x18] sm:$0xf]
  %v21 = vld [vmem:[%s0 + $0x1c] sm:$0xf]
  %v22 = vld [vmem:[%s0 + $0x20] sm:$0xf]
  %v23 = vld [vmem:[%s0 + $0x24] sm:$0xf]
  %v24 = vld [vmem:[%s0 + $0x28] sm:$0xf]
  %v25 = vld [vmem:[%s0 + $0x2c] sm:$0xf]
  %v26 = vld [vmem:[%s0 + $0x30] sm:$0xf]
  %v27 = vld [vmem:[%s0 + $0x34] sm:$0xf]
  %v28 = vld [vmem:[%s0 + $0x38] sm:$0xf]
  %v29 = vld [vmem:[%s0 + $0x3c] sm:$0xf]
  %v30 = vunpack.c.l.bf16 %v14
  %v31 = vunpack.c.l.bf16 %v15
  %v32 = vunpack.c.l.bf16 %v16
  %v33 = vunpack.c.l.bf16 %v17
  %v34 = vunpack.c.l.bf16 %v18
  %v35 = vunpack.c.l.bf16 %v19
  %v36 = vunpack.c.l.bf16 %v20
  %v37 = vunpack.c.l.bf16 %v21
  %v38 = vunpack.c.l.bf16 %v22
  %v39 = vunpack.c.l.bf16 %v23
  %v40 = vunpack.c.l.bf16 %v24
  %v41 = vunpack.c.l.bf16 %v25
  %v42 = vunpack.c.l.bf16 %v26
  %v43 = vunpack.c.l.bf16 %v27
  %v44 = vunpack.c.l.bf16 %v28
  %v45 = vunpack.c.l.bf16 %v29
  %vm46 = vcmask 261120
  %v47 = vsel %vm46, %v30, 0.0
  %48 = vadd.xlane.f32.xlu0 %v47
  %v49 = vpop.xlane.xlu0 %48
  %v50 = vsel %vm46, %v31, 0.0
  %51 = vadd.xlane.f32.xlu0 %v50
  %v52 = vpop.xlane.xlu0 %51
  %v53 = vsel %vm46, %v32, 0.0
  %54 = vadd.xlane.f32.xlu0 %v53
  %v55 = vpop.xlane.xlu0 %54
  %v56 = vsel %vm46, %v33, 0.0
  %57 = vadd.xlane.f32.xlu0 %v56
  %v58 = vpop.xlane.xlu0 %57
  %v59 = vsel %vm46, %v34, 0.0
  %60 = vadd.xlane.f32.xlu0 %v59
  %v61 = vpop.xlane.xlu0 %60
  %v62 = vsel %vm46, %v35, 0.0
  %63 = vadd.xlane.f32.xlu0 %v62
  %v64 = vpop.xlane.xlu0 %63
  %v65 = vsel %vm46, %v36, 0.0
  %66 = vadd.xlane.f32.xlu0 %v65
  %v67 = vpop.xlane.xlu0 %66
  %v68 = vsel %vm46, %v37, 0.0
  %69 = vadd.xlane.f32.xlu0 %v68
  %v70 = vpop.xlane.xlu0 %69
  %v71 = vsel %vm46, %v38, 0.0
  %72 = vadd.xlane.f32.xlu0 %v71
  %v73 = vpop.xlane.xlu0 %72
  %v74 = vsel %vm46, %v39, 0.0
  %75 = vadd.xlane.f32.xlu0 %v74
  %v76 = vpop.xlane.xlu0 %75
  %v77 = vsel %vm46, %v40, 0.0
  %78 = vadd.xlane.f32.xlu0 %v77
  %v79 = vpop.xlane.xlu0 %78
  %v80 = vsel %vm46, %v41, 0.0
  %81 = vadd.xlane.f32.xlu0 %v80
  %v82 = vpop.xlane.xlu0 %81
  %v83 = vsel %vm46, %v42, 0.0
  %84 = vadd.xlane.f32.xlu0 %v83
  %v85 = vpop.xlane.xlu0 %84
  %v86 = vsel %vm46, %v43, 0.0
  %87 = vadd.xlane.f32.xlu0 %v86
  %v88 = vpop.xlane.xlu0 %87
  %v89 = vsel %vm46, %v44, 0.0
  %90 = vadd.xlane.f32.xlu0 %v89
  %v91 = vpop.xlane.xlu0 %90
  %v92 = vsel %vm46, %v45, 0.0
  %93 = vadd.xlane.f32.xlu0 %v92
  %v94 = vpop.xlane.xlu0 %93
  %v95 = vrcp.pop 32.0
  %v96 = vmul.f32 %v49, %v95
  %v97 = vmul.f32 %v52, %v95
  %v98 = vmul.f32 %v55, %v95
  %v99 = vmul.f32 %v58, %v95
  %v100 = vmul.f32 %v61, %v95
  %v101 = vmul.f32 %v64, %v95
  %v102 = vmul.f32 %v67, %v95
  %v103 = vmul.f32 %v70, %v95
  %v104 = vmul.f32 %v73, %v95
  %v105 = vmul.f32 %v76, %v95
  %v106 = vmul.f32 %v79, %v95
  %v107 = vmul.f32 %v82, %v95
  %v108 = vmul.f32 %v85, %v95
  %v109 = vmul.f32 %v88, %v95
  %v110 = vmul.f32 %v91, %v95
  %v111 = vmul.f32 %v94, %v95
  %v112 = vsub.f32 %v30, %v96
  %v113 = vsub.f32 %v31, %v97
  %v114 = vsub.f32 %v32, %v98
  %v115 = vsub.f32 %v33, %v99
  %v116 = vsub.f32 %v34, %v100
  %v117 = vsub.f32 %v35, %v101
  %v118 = vsub.f32 %v36, %v102
  %v119 = vsub.f32 %v37, %v103
  %v120 = vsub.f32 %v38, %v104
  %v121 = vsub.f32 %v39, %v105
  %v122 = vsub.f32 %v40, %v106
  %v123 = vsub.f32 %v41, %v107
  %v124 = vsub.f32 %v42, %v108
  %v125 = vsub.f32 %v43, %v109
  %v126 = vsub.f32 %v44, %v110
  %v127 = vsub.f32 %v45, %v111
  %v128 = vmul.f32 %v112, %v112
  %v129 = vmul.f32 %v113, %v113
  %v130 = vmul.f32 %v114, %v114
  %v131 = vmul.f32 %v115, %v115
  %v132 = vmul.f32 %v116, %v116
  %v133 = vmul.f32 %v117, %v117
  %v134 = vmul.f32 %v118, %v118
  %v135 = vmul.f32 %v119, %v119
  %v136 = vmul.f32 %v120, %v120
  %v137 = vmul.f32 %v121, %v121
  %v138 = vmul.f32 %v122, %v122
  %v139 = vmul.f32 %v123, %v123
  %v140 = vmul.f32 %v124, %v124
  %v141 = vmul.f32 %v125, %v125
  %v142 = vmul.f32 %v126, %v126
  %v143 = vmul.f32 %v127, %v127
  %v144 = vsel %vm46, %v128, 0.0
  %145 = vadd.xlane.f32.xlu0 %v144
  %v146 = vpop.xlane.xlu0 %145
  %v147 = vsel %vm46, %v129, 0.0
  %148 = vadd.xlane.f32.xlu0 %v147
  %v149 = vpop.xlane.xlu0 %148
  %v150 = vsel %vm46, %v130, 0.0
  %151 = vadd.xlane.f32.xlu0 %v150
  %v152 = vpop.xlane.xlu0 %151
  %v153 = vsel %vm46, %v131, 0.0
  %154 = vadd.xlane.f32.xlu0 %v153
  %v155 = vpop.xlane.xlu0 %154
  %v156 = vsel %vm46, %v132, 0.0
  %157 = vadd.xlane.f32.xlu0 %v156
  %v158 = vpop.xlane.xlu0 %157
  %v159 = vsel %vm46, %v133, 0.0
  %160 = vadd.xlane.f32.xlu0 %v159
  %v161 = vpop.xlane.xlu0 %160
  %v162 = vsel %vm46, %v134, 0.0
  %163 = vadd.xlane.f32.xlu0 %v162
  %v164 = vpop.xlane.xlu0 %163
  %v165 = vsel %vm46, %v135, 0.0
  %166 = vadd.xlane.f32.xlu0 %v165
  %v167 = vpop.xlane.xlu0 %166
  %v168 = vsel %vm46, %v136, 0.0
  %169 = vadd.xlane.f32.xlu0 %v168
  %v170 = vpop.xlane.xlu0 %169
  %v171 = vsel %vm46, %v137, 0.0
  %172 = vadd.xlane.f32.xlu0 %v171
  %v173 = vpop.xlane.xlu0 %172
  %v174 = vsel %vm46, %v138, 0.0
  %175 = vadd.xlane.f32.xlu0 %v174
  %v176 = vpop.xlane.xlu0 %175
  %v177 = vsel %vm46, %v139, 0.0
  %178 = vadd.xlane.f32.xlu0 %v177
  %v179 = vpop.xlane.xlu0 %178
  %v180 = vsel %vm46, %v140, 0.0
  %181 = vadd.xlane.f32.xlu0 %v180
  %v182 = vpop.xlane.xlu0 %181
  %v183 = vsel %vm46, %v141, 0.0
  %184 = vadd.xlane.f32.xlu0 %v183
  %v185 = vpop.xlane.xlu0 %184
  %v186 = vsel %vm46, %v142, 0.0
  %187 = vadd.xlane.f32.xlu0 %v186
  %v188 = vpop.xlane.xlu0 %187
  %v189 = vsel %vm46, %v143, 0.0
  %190 = vadd.xlane.f32.xlu0 %v189
  %v191 = vpop.xlane.xlu0 %190
  %v192 = vmul.f32 %v146, %v95
  %v193 = vmul.f32 %v149, %v95
  %v194 = vmul.f32 %v152, %v95
  %v195 = vmul.f32 %v155, %v95
  %v196 = vmul.f32 %v158, %v95
  %v197 = vmul.f32 %v161, %v95
  %v198 = vmul.f32 %v164, %v95
  %v199 = vmul.f32 %v167, %v95
  %v200 = vmul.f32 %v170, %v95
  %v201 = vmul.f32 %v173, %v95
  %v202 = vmul.f32 %v176, %v95
  %v203 = vmul.f32 %v179, %v95
  %v204 = vmul.f32 %v182, %v95
  %v205 = vmul.f32 %v185, %v95
  %v206 = vmul.f32 %v188, %v95
  %v207 = vmul.f32 %v191, %v95
  %v208 = vadd.f32 %v192, 1e-05
  %v209 = vadd.f32 %v193, 1e-05
  %v210 = vadd.f32 %v194, 1e-05
  %v211 = vadd.f32 %v195, 1e-05
  %v212 = vadd.f32 %v196, 1e-05
  %v213 = vadd.f32 %v197, 1e-05
  %v214 = vadd.f32 %v198, 1e-05
  %v215 = vadd.f32 %v199, 1e-05
  %v216 = vadd.f32 %v200, 1e-05
  %v217 = vadd.f32 %v201, 1e-05
  %v218 = vadd.f32 %v202, 1e-05
  %v219 = vadd.f32 %v203, 1e-05
  %v220 = vadd.f32 %v204, 1e-05
  %v221 = vadd.f32 %v205, 1e-05
  %v222 = vadd.f32 %v206, 1e-05
  %v223 = vadd.f32 %v207, 1e-05
  %v224 = vrsqrt.pop %v208
  %v225 = vrsqrt.pop %v209
  %v226 = vrsqrt.pop %v210
  %v227 = vrsqrt.pop %v211
  %v228 = vrsqrt.pop %v212
  %v229 = vrsqrt.pop %v213
  %v230 = vrsqrt.pop %v214
  %v231 = vrsqrt.pop %v215
  %v232 = vrsqrt.pop %v216
  %v233 = vrsqrt.pop %v217
  %v234 = vrsqrt.pop %v218
  %v235 = vrsqrt.pop %v219
  %v236 = vrsqrt.pop %v220
  %v237 = vrsqrt.pop %v221
  %v238 = vrsqrt.pop %v222
  %v239 = vrsqrt.pop %v223
  %v240 = vmul.f32 %v112, %v224
  %v241 = vmul.f32 %v113, %v225
  %v242 = vmul.f32 %v114, %v226
  %v243 = vmul.f32 %v115, %v227
  %v244 = vmul.f32 %v116, %v228
  %v245 = vmul.f32 %v117, %v229
  %v246 = vmul.f32 %v118, %v230
  %v247 = vmul.f32 %v119, %v231
  %v248 = vmul.f32 %v120, %v232
  %v249 = vmul.f32 %v121, %v233
  %v250 = vmul.f32 %v122, %v234
  %v251 = vmul.f32 %v123, %v235
  %v252 = vmul.f32 %v124, %v236
  %v253 = vmul.f32 %v125, %v237
  %v254 = vmul.f32 %v126, %v238
  %v255 = vmul.f32 %v127, %v239
  %v256 = vld [vmem:[%s1] sm:$0x1]
  %v258 = vlaneseq
  %v259 = vshrl.u32 %v258, 7
  %v260 = vsub.s32 0, %v259
  %v261 = vrot.slane %v256, %v260
  %v263 = vmul.f32 %v240, %v261
  %v264 = vmul.f32 %v241, %v261
  %v265 = vmul.f32 %v242, %v261
  %v266 = vmul.f32 %v243, %v261
  %v267 = vmul.f32 %v244, %v261
  %v268 = vmul.f32 %v245, %v261
  %v269 = vmul.f32 %v246, %v261
  %v270 = vmul.f32 %v247, %v261
  %v271 = vmul.f32 %v248, %v261
  %v272 = vmul.f32 %v249, %v261
  %v273 = vmul.f32 %v250, %v261
  %v274 = vmul.f32 %v251, %v261
  %v275 = vmul.f32 %v252, %v261
  %v276 = vmul.f32 %v253, %v261
  %v277 = vmul.f32 %v254, %v261
  %v278 = vmul.f32 %v255, %v261
  %v279 = vld [vmem:[%s2] sm:$0x1]
  %v281 = vlaneseq
  %v282 = vshrl.u32 %v281, 7
  %v283 = vsub.s32 0, %v282
  %v284 = vrot.slane %v279, %v283
  %v286 = vadd.f32 %v263, %v284
  %v287 = vadd.f32 %v264, %v284
  %v288 = vadd.f32 %v265, %v284
  %v289 = vadd.f32 %v266, %v284
  %v290 = vadd.f32 %v267, %v284
  %v291 = vadd.f32 %v268, %v284
  %v292 = vadd.f32 %v269, %v284
  %v293 = vadd.f32 %v270, %v284
  %v294 = vadd.f32 %v271, %v284
  %v295 = vadd.f32 %v272, %v284
  %v296 = vadd.f32 %v273, %v284
  %v297 = vadd.f32 %v274, %v284
  %v298 = vadd.f32 %v275, %v284
  %v299 = vadd.f32 %v276, %v284
  %v300 = vadd.f32 %v277, %v284
  %v301 = vadd.f32 %v278, %v284
  %v302 = vpack.c.bf16 %v287, %v286
  %v303 = vpack.c.bf16 %v289, %v288
  %v304 = vpack.c.bf16 %v291, %v290
  %v305 = vpack.c.bf16 %v293, %v292
  %v306 = vpack.c.bf16 %v295, %v294
  %v307 = vpack.c.bf16 %v297, %v296
  %v308 = vpack.c.bf16 %v299, %v298
  %v309 = vpack.c.bf16 %v301, %v300
  %v318 = vunpack.c.l.b16 %v302
  %v319 = vunpack.c.h.b16 %v302
  %v320 = vunpack.c.l.b16 %v303
  %v321 = vunpack.c.h.b16 %v303
  %v322 = vunpack.c.l.b16 %v304
  %v323 = vunpack.c.h.b16 %v304
  %v324 = vunpack.c.l.b16 %v305
  %v325 = vunpack.c.h.b16 %v305
  %v326 = vunpack.c.l.b16 %v306
  %v327 = vunpack.c.h.b16 %v306
  %v328 = vunpack.c.l.b16 %v307
  %v329 = vunpack.c.h.b16 %v307
  %v330 = vunpack.c.l.b16 %v308
  %v331 = vunpack.c.h.b16 %v308
  %v332 = vunpack.c.l.b16 %v309
  %v333 = vunpack.c.h.b16 %v309
  %v334 = vpack.c.b16 %v318, %v318
  %v335 = vpack.c.b16 %v319, %v319
  %v336 = vpack.c.b16 %v320, %v320
  %v337 = vpack.c.b16 %v321, %v321
  %v338 = vpack.c.b16 %v322, %v322
  %v339 = vpack.c.b16 %v323, %v323
  %v340 = vpack.c.b16 %v324, %v324
  %v341 = vpack.c.b16 %v325, %v325
  %v342 = vpack.c.b16 %v326, %v326
  %v343 = vpack.c.b16 %v327, %v327
  %v344 = vpack.c.b16 %v328, %v328
  %v345 = vpack.c.b16 %v329, %v329
  %v346 = vpack.c.b16 %v330, %v330
  %v347 = vpack.c.b16 %v331, %v331
  %v348 = vpack.c.b16 %v332, %v332
  %v349 = vpack.c.b16 %v333, %v333
  %vm366 = vcmask 257024
  %367 = vst.msk [vmem:[%s3] sm:$0xf] %vm366, %v334
  %368 = vst.msk [vmem:[%s3 + $0x4] sm:$0xf] %vm366, %v335
  %369 = vst.msk [vmem:[%s3 + $0x8] sm:$0xf] %vm366, %v336
  %370 = vst.msk [vmem:[%s3 + $0xc] sm:$0xf] %vm366, %v337
  %371 = vst.msk [vmem:[%s3 + $0x10] sm:$0xf] %vm366, %v338
  %372 = vst.msk [vmem:[%s3 + $0x14] sm:$0xf] %vm366, %v339
  %373 = vst.msk [vmem:[%s3 + $0x18] sm:$0xf] %vm366, %v340
  %374 = vst.msk [vmem:[%s3 + $0x1c] sm:$0xf] %vm366, %v341
  %375 = vst.msk [vmem:[%s3 + $0x20] sm:$0xf] %vm366, %v342
  %376 = vst.msk [vmem:[%s3 + $0x24] sm:$0xf] %vm366, %v343
  %377 = vst.msk [vmem:[%s3 + $0x28] sm:$0xf] %vm366, %v344
  %378 = vst.msk [vmem:[%s3 + $0x2c] sm:$0xf] %vm366, %v345
  %379 = vst.msk [vmem:[%s3 + $0x30] sm:$0xf] %vm366, %v346
  %380 = vst.msk [vmem:[%s3 + $0x34] sm:$0xf] %vm366, %v347
  %381 = vst.msk [vmem:[%s3 + $0x38] sm:$0xf] %vm366, %v348
  %382 = vst.msk [vmem:[%s3 + $0x3c] sm:$0xf] %vm366, %v349
  // Predicated region
  $region14: #{tcformer_forward.28} parent=0 // pred_check
    _
  $region15: #{tcformer_forward.28} parent=0 // pred_check_branch
    %384 = sbr.rel (0) target = $region17
  $region16: #{tcformer_forward.28} parent=0 // pred_region
    _
  $region17: #{tcformer_forward.28} parent=0 // pred_fallthru
    _
  // Predicated region
  $region18: #{tcformer_forward.28} parent=0 // pred_check
    _
  $region19: #{tcformer_forward.28} parent=0 // pred_check_branch
    %386 = sbr.rel (0) target = $region21
  $region20: #{tcformer_forward.28} parent=0 // pred_region
    _
  $region21: #{tcformer_forward.28} parent=0 // pred_fallthru
    _

// kernel: tcformer_forward.27
$region0: #{tcformer_forward.27}
  #allocation0 [shape = 'u32[]', space=smem, size = 0x4, offset = 0x4, fixed_abs, tag = 'smem constant byte address 0x4 - core index']
  #allocation1 [shape = 'u32[144,128]{1,0:T(1,128)}', space=vmem, size = 0x12000, scoped, tag = 'internal scratch']
  #allocation2 [shape = 'f32[128,32]{1,0:T(8,128)}', space=vmem, size = 0x10000, scoped, tag = 'scratch operand']
  %s0 = inlined_call_operand.vmem [shape: bf16[128,147], index: 0, kind: input, shape index: {}]
  %s1 = inlined_call_operand.vmem [shape: bf16[147,32], index: 1, kind: input, shape index: {}]
  %s2 = inlined_call_operand.vmem [shape: f32[1,32], index: 2, kind: input, shape index: {}]
  %s3 = inlined_call_operand.vmem [shape: bf16[128,32], index: 3, kind: output, shape index: {}]
  %s4 = sld [smem:[#allocation0]]
  $region30: #{tcformer_forward.27} parent=0
    _
  %s6 = ssub.s32 1, %s4
  %s7 = scalar_select 0, %s6, %s4
  // Predicated region
  $region2: #{tcformer_forward.27} parent=0 // pred_check
    _
  $region3: #{tcformer_forward.27} parent=0 // pred_check_branch
    %9 = sbr.rel (0) target = $region5
  $region4: #{tcformer_forward.27} parent=0 // pred_region
    _
  $region5: #{tcformer_forward.27} parent=0 // pred_fallthru
    _
  // Predicated region
  $region6: #{tcformer_forward.27} parent=0 // pred_check
    _
  $region7: #{tcformer_forward.27} parent=0 // pred_check_branch
    %11 = sbr.rel (0) target = $region9
  $region8: #{tcformer_forward.27} parent=0 // pred_region
    _
  $region9: #{tcformer_forward.27} parent=0 // pred_fallthru
    _
  // Predicated region
  $region10: #{tcformer_forward.27} parent=0 // pred_check
    _
  $region11: #{tcformer_forward.27} parent=0 // pred_check_branch
    %13 = sbr.rel (0) target = $region13
  $region12: #{tcformer_forward.27} parent=0 // pred_region
    _
  $region13: #{tcformer_forward.27} parent=0 // pred_fallthru
    _
  %p15 = scmp.eq.s32.totalorder 0, 0
  // Predicated region
  $region14: #{tcformer_forward.27} parent=0 // pred_check
    %p16 = pneg %p15
  $region15: #{tcformer_forward.27} parent=0 // pred_check_branch
    %18 = sbr.rel (%p16) target = $region17
  $region16: #{tcformer_forward.27} parent=0 // pred_region
    %vm19 = vcmask 261120
    %20 = vst.msk [vmem:[#allocation2] sm:$0xff] %vm19, 0.0
    %21 = vst.msk [vmem:[#allocation2 + $0x8] sm:$0xff] %vm19, 0.0
    %22 = vst.msk [vmem:[#allocation2 + $0x10] sm:$0xff] %vm19, 0.0
    %23 = vst.msk [vmem:[#allocation2 + $0x18] sm:$0xff] %vm19, 0.0
    %24 = vst.msk [vmem:[#allocation2 + $0x20] sm:$0xff] %vm19, 0.0
    %25 = vst.msk [vmem:[#allocation2 + $0x28] sm:$0xff] %vm19, 0.0
    %26 = vst.msk [vmem:[#allocation2 + $0x30] sm:$0xff] %vm19, 0.0
    %27 = vst.msk [vmem:[#allocation2 + $0x38] sm:$0xff] %vm19, 0.0
    %28 = vst.msk [vmem:[#allocation2 + $0x40] sm:$0xff] %vm19, 0.0
    %29 = vst.msk [vmem:[#allocation2 + $0x48] sm:$0xff] %vm19, 0.0
    %30 = vst.msk [vmem:[#allocation2 + $0x50] sm:$0xff] %vm19, 0.0
    %31 = vst.msk [vmem:[#allocation2 + $0x58] sm:$0xff] %vm19, 0.0
    %32 = vst.msk [vmem:[#allocation2 + $0x60] sm:$0xff] %vm19, 0.0
    %33 = vst.msk [vmem:[#allocation2 + $0x68] sm:$0xff] %vm19, 0.0
    %34 = vst.msk [vmem:[#allocation2 + $0x70] sm:$0xff] %vm19, 0.0
    %35 = vst.msk [vmem:[#allocation2 + $0x78] sm:$0xff] %vm19, 0.0
  $region17: #{tcformer_forward.27} parent=0 // pred_fallthru
    _
  %v36 = vld [vmem:[#allocation2] sm:$0xff]
  %v37 = vld [vmem:[#allocation2 + $0x8] sm:$0xff]
  %v38 = vld [vmem:[#allocation2 + $0x10] sm:$0xff]
  %v39 = vld [vmem:[#allocation2 + $0x18] sm:$0xff]
  %v40 = vld [vmem:[#allocation2 + $0x20] sm:$0xff]
  %v41 = vld [vmem:[#allocation2 + $0x28] sm:$0xff]
  %v42 = vld [vmem:[#allocation2 + $0x30] sm:$0xff]
  %v43 = vld [vmem:[#allocation2 + $0x38] sm:$0xff]
  %v44 = vld [vmem:[#allocation2 + $0x40] sm:$0xff]
  %v45 = vld [vmem:[#allocation2 + $0x48] sm:$0xff]
  %v46 = vld [vmem:[#allocation2 + $0x50] sm:$0xff]
  %v47 = vld [vmem:[#allocation2 + $0x58] sm:$0xff]
  %v48 = vld [vmem:[#allocation2 + $0x60] sm:$0xff]
  %v49 = vld [vmem:[#allocation2 + $0x68] sm:$0xff]
  %v50 = vld [vmem:[#allocation2 + $0x70] sm:$0xff]
  %v51 = vld [vmem:[#allocation2 + $0x78] sm:$0xff]
  %v52 = vld [vmem:[%s0] sm:$0xff]
  %v53 = vld [vmem:[%s0 + $0x8] sm:$0xff]
  %v54 = vld [vmem:[%s0 + $0x10] sm:$0xff]
  %v55 = vld [vmem:[%s0 + $0x18] sm:$0xff]
  %v56 = vld [vmem:[%s0 + $0x20] sm:$0xff]
  %v57 = vld [vmem:[%s0 + $0x28] sm:$0xff]
  %v58 = vld [vmem:[%s0 + $0x30] sm:$0xff]
  %v59 = vld [vmem:[%s0 + $0x38] sm:$0xff]
  %v60 = vld [vmem:[%s0 + $0x40] sm:$0xff]
  %v61 = vld [vmem:[%s0 + $0x48] sm:$0xff]
  %v62 = vld [vmem:[%s0 + $0x50] sm:$0xff]
  %v63 = vld [vmem:[%s0 + $0x58] sm:$0xff]
  %v64 = vld [vmem:[%s0 + $0x60] sm:$0xff]
  %v65 = vld [vmem:[%s0 + $0x68] sm:$0xff]
  %v66 = vld [vmem:[%s0 + $0x70] sm:$0xff]
  %v67 = vld [vmem:[%s0 + $0x78] sm:$0xff]
  %v68 = vld [vmem:[%s1] sm:$0xf]
  %v69 = vld [vmem:[%s1 + $0x4] sm:$0xf]
  %v70 = vld [vmem:[%s1 + $0x8] sm:$0xf]
  %v71 = vld [vmem:[%s1 + $0xc] sm:$0xf]
  %v72 = vld [vmem:[%s1 + $0x10] sm:$0xf]
  %v73 = vld [vmem:[%s1 + $0x14] sm:$0xf]
  %v74 = vld [vmem:[%s1 + $0x18] sm:$0xf]
  %v75 = vld [vmem:[%s1 + $0x1c] sm:$0xf]
  %v76 = vld [vmem:[%s1 + $0x20] sm:$0xf]
  %v77 = vld [vmem:[%s1 + $0x24] sm:$0xf]
  %v78 = vld [vmem:[%s1 + $0x28] sm:$0xf]
  %v79 = vld [vmem:[%s1 + $0x2c] sm:$0xf]
  %v80 = vld [vmem:[%s1 + $0x30] sm:$0xf]
  %v81 = vld [vmem:[%s1 + $0x34] sm:$0xf]
  %v82 = vld [vmem:[%s1 + $0x38] sm:$0xf]
  %v83 = vld [vmem:[%s1 + $0x3c] sm:$0xf]
  %v84 = vld [vmem:[%s1 + $0x40] sm:$0xf]
  %v85 = vld [vmem:[%s1 + $0x44] sm:$0xf]
  %v86 = vld [vmem:[%s1 + $0x48] sm:$0x3]
  %v103 = vunpack.c.l.b16 %v52
  %v104 = vunpack.c.h.b16 %v52
  %v105 = vunpack.c.l.b16 %v53
  %v106 = vunpack.c.h.b16 %v53
  %v107 = vunpack.c.l.b16 %v54
  %v108 = vunpack.c.h.b16 %v54
  %v109 = vunpack.c.l.b16 %v55
  %v110 = vunpack.c.h.b16 %v55
  %v111 = vunpack.c.l.b16 %v56
  %v112 = vunpack.c.h.b16 %v56
  %v113 = vunpack.c.l.b16 %v57
  %v114 = vunpack.c.h.b16 %v57
  %v115 = vunpack.c.l.b16 %v58
  %v116 = vunpack.c.h.b16 %v58
  %v117 = vunpack.c.l.b16 %v59
  %v118 = vunpack.c.h.b16 %v59
  %v119 = vunpack.c.l.b16 %v60
  %v120 = vunpack.c.h.b16 %v60
  %v121 = vunpack.c.l.b16 %v61
  %v122 = vunpack.c.h.b16 %v61
  %v123 = vunpack.c.l.b16 %v62
  %v124 = vunpack.c.h.b16 %v62
  %v125 = vunpack.c.l.b16 %v63
  %v126 = vunpack.c.h.b16 %v63
  %v127 = vunpack.c.l.b16 %v64
  %v128 = vunpack.c.h.b16 %v64
  %v129 = vunpack.c.l.b16 %v65
  %v130 = vunpack.c.h.b16 %v65
  %v131 = vunpack.c.l.b16 %v66
  %v132 = vunpack.c.h.b16 %v66
  %v133 = vunpack.c.l.b16 %v67
  %v134 = vunpack.c.h.b16 %v67
  %v135 = vpack.c.b16 %v105, %v103
  %v136 = vpack.c.b16 %v106, %v104
  %v137 = vpack.c.b16 %v109, %v107
  %v138 = vpack.c.b16 %v110, %v108
  %v139 = vpack.c.b16 %v113, %v111
  %v140 = vpack.c.b16 %v114, %v112
  %v141 = vpack.c.b16 %v117, %v115
  %v142 = vpack.c.b16 %v118, %v116
  %v143 = vpack.c.b16 %v121, %v119
  %v144 = vpack.c.b16 %v122, %v120
  %v145 = vpack.c.b16 %v125, %v123
  %v146 = vpack.c.b16 %v126, %v124
  %v147 = vpack.c.b16 %v129, %v127
  %v148 = vpack.c.b16 %v130, %v128
  %v149 = vpack.c.b16 %v133, %v131
  %v150 = vpack.c.b16 %v134, %v132
  %v178 = vunpack.c.l.b16 %v68
  %v179 = vunpack.c.l.b16 %v69
  %v180 = vunpack.c.l.b16 %v70
  %v181 = vunpack.c.l.b16 %v71
  %v182 = vunpack.c.l.b16 %v72
  %v183 = vunpack.c.l.b16 %v73
  %v184 = vunpack.c.l.b16 %v74
  %v185 = vunpack.c.l.b16 %v75
  %v186 = vunpack.c.l.b16 %v76
  %v187 = vunpack.c.l.b16 %v77
  %v188 = vunpack.c.l.b16 %v78
  %v189 = vunpack.c.l.b16 %v79
  %v190 = vunpack.c.l.b16 %v80
  %v191 = vunpack.c.l.b16 %v81
  %v192 = vunpack.c.l.b16 %v82
  %v193 = vunpack.c.l.b16 %v83
  %v194 = vunpack.c.l.b16 %v84
  %v195 = vunpack.c.l.b16 %v85
  %v196 = vunpack.c.l.b16 %v86
  %v197 = vpack.c.b16 %v179, %v178
  %v198 = vpack.c.b16 %v181, %v180
  %v199 = vpack.c.b16 %v183, %v182
  %v200 = vpack.c.b16 %v185, %v184
  %v201 = vpack.c.b16 %v187, %v186
  %v202 = vpack.c.b16 %v189, %v188
  %v203 = vpack.c.b16 %v191, %v190
  %v204 = vpack.c.b16 %v193, %v192
  %v205 = vpack.c.b16 %v195, %v194
  %v206 = vpack.c.b16 %v196, %v196
  %vm216 = vcmask 154624
  %v218 = vsel %vm216, %v136, 0
  %v221 = vsel %vm216, %v138, 0
  %v224 = vsel %vm216, %v140, 0
  %v227 = vsel %vm216, %v142, 0
  %v230 = vsel %vm216, %v144, 0
  %v233 = vsel %vm216, %v146, 0
  %v236 = vsel %vm216, %v148, 0
  %v239 = vsel %vm216, %v150, 0
  %vm241 = vcmask 1040384
  %vm242 = vcmask 1041408
  %v243 = vsel %vm241, 4294967295, 65535
  %v244 = vsel %vm242, %v243, 0
  %v246 = vand.u32 %v206, %v244
  %248 = vmatprep.subr.bf16.mxu0 0
  %249 = vmatpush1.bf16.msra.mxu0 %v197
  %250 = vmatprep.subr.bf16.mxu0 0
  %251 = vmatpush1.bf16.msra.mxu0 %v198
  %252 = vmatprep.subr.bf16.mxu0 0
  %253 = vmatpush1.bf16.msra.mxu0 %v199
  %254 = vmatprep.subr.bf16.mxu0 0
  %255 = vmatpush1.bf16.msra.mxu0 %v200
  %256 = vmatprep.subr.bf16.mxu0 0
  %257 = vmatpush1.bf16.msra.mxu0 %v201
  %258 = vmatprep.subr.bf16.mxu0 0
  %259 = vmatpush1.bf16.msra.mxu0 %v202
  %260 = vmatprep.subr.bf16.mxu0 0
  %261 = vmatpush1.bf16.msra.mxu0 %v203
  %262 = vmatprep.subr.bf16.mxu0 0
  %263 = vmatpush1.bf16.msra.mxu0 %v204
  %264 = vmatprep.subr.bf16.mxu0 0
  %265 = vmatpush1.bf16.msra.mxu0 %v205
  %266 = vmatprep.subr.bf16.mxu0 0
  %267 = vmatpush1.bf16.msra.mxu0 %v246
  %268 = vmatprep.subr.bf16.mxu0 0
  %269 = vmatpush1.bf16.msra.mxu0 0
  %270 = vmatprep.subr.bf16.mxu0 0
  %271 = vmatpush1.bf16.msra.mxu0 0
  %272 = vmatprep.subr.bf16.mxu0 0
  %273 = vmatpush1.bf16.msra.mxu0 0
  %274 = vmatprep.subr.bf16.mxu0 0
  %275 = vmatpush1.bf16.msra.mxu0 0
  %276 = vmatprep.subr.bf16.mxu0 0
  %277 = vmatpush1.bf16.msra.mxu0 0
  %278 = vmatprep.subr.bf16.mxu0 0
  %279 = vmatpush1.bf16.msra.mxu0 0
  %280 = vmatprep.mubr.bf16.mxu0 %v218
  %281 = vmatmul.mubr.bf16.gmra.mrb[0].mxu0 %v135
  %v282 = vpop.f32.mrb[0].mxu0
  %v283 = vadd.f32 0.0, %v282
  %v284 = vpop.f32.mrb[0].mxu0
  %v285 = vpop.f32.mrb[0].mxu0
  %v286 = vadd.f32 0.0, %v285
  %v287 = vpop.f32.mrb[0].mxu0
  %288 = vmatprep.mubr.bf16.mxu0 %v221
  %289 = vmatmul.mubr.bf16.gmra.mrb[0].mxu0 %v137
  %v290 = vpop.f32.mrb[0].mxu0
  %v291 = vadd.f32 0.0, %v290
  %v292 = vpop.f32.mrb[0].mxu0
  %v293 = vpop.f32.mrb[0].mxu0
  %v294 = vadd.f32 0.0, %v293
  %v295 = vpop.f32.mrb[0].mxu0
  %296 = vmatprep.mubr.bf16.mxu0 %v224
  %297 = vmatmul.mubr.bf16.gmra.mrb[0].mxu0 %v139
  %v298 = vpop.f32.mrb[0].mxu0
  %v299 = vadd.f32 0.0, %v298
  %v300 = vpop.f32.mrb[0].mxu0
  %v301 = vpop.f32.mrb[0].mxu0
  %v302 = vadd.f32 0.0, %v301
  %v303 = vpop.f32.mrb[0].mxu0
  %304 = vmatprep.mubr.bf16.mxu0 %v227
  %305 = vmatmul.mubr.bf16.gmra.mrb[0].mxu0 %v141
  %v306 = vpop.f32.mrb[0].mxu0
  %v307 = vadd.f32 0.0, %v306
  %v308 = vpop.f32.mrb[0].mxu0
  %v309 = vpop.f32.mrb[0].mxu0
  %v310 = vadd.f32 0.0, %v309
  %v311 = vpop.f32.mrb[0].mxu0
  %312 = vmatprep.mubr.bf16.mxu0 %v230
  %313 = vmatmul.mubr.bf16.gmra.mrb[0].mxu0 %v143
  %v314 = vpop.f32.mrb[0].mxu0
  %v315 = vadd.f32 0.0, %v314
  %v316 = vpop.f32.mrb[0].mxu0
  %v317 = vpop.f32.mrb[0].mxu0
  %v318 = vadd.f32 0.0, %v317
  %v319 = vpop.f32.mrb[0].mxu0
  %320 = vmatprep.mubr.bf16.mxu0 %v233
  %321 = vmatmul.mubr.bf16.gmra.mrb[0].mxu0 %v145
  %v322 = vpop.f32.mrb[0].mxu0
  %v323 = vadd.f32 0.0, %v322
  %v324 = vpop.f32.mrb[0].mxu0
  %v325 = vpop.f32.mrb[0].mxu0
  %v326 = vadd.f32 0.0, %v325
  %v327 = vpop.f32.mrb[0].mxu0
  %328 = vmatprep.mubr.bf16.mxu0 %v236
  %329 = vmatmul.mubr.bf16.gmra.mrb[0].mxu0 %v147
  %v330 = vpop.f32.mrb[0].mxu0
  %v331 = vadd.f32 0.0, %v330
  %v332 = vpop.f32.mrb[0].mxu0
  %v333 = vpop.f32.mrb[0].mxu0
  %v334 = vadd.f32 0.0, %v333
  %v335 = vpop.f32.mrb[0].mxu0
  %336 = vmatprep.mubr.bf16.mxu0 %v239
  %337 = vmatmul.mubr.bf16.gmra.mrb[0].mxu0 %v149
  %v338 = vpop.f32.mrb[0].mxu0
  %v339 = vadd.f32 0.0, %v338
  %v340 = vpop.f32.mrb[0].mxu0
  %v341 = vpop.f32.mrb[0].mxu0
  %v342 = vadd.f32 0.0, %v341
  %v343 = vpop.f32.mrb[0].mxu0
  %344 = vdwg.mxu0
  %v345 = vadd.f32 %v36, %v283
  %v346 = vadd.f32 %v37, %v286
  %v347 = vadd.f32 %v38, %v291
  %v348 = vadd.f32 %v39, %v294
  %v349 = vadd.f32 %v40, %v299
  %v350 = vadd.f32 %v41, %v302
  %v351 = vadd.f32 %v42, %v307
  %v352 = vadd.f32 %v43, %v310
  %v353 = vadd.f32 %v44, %v315
  %v354 = vadd.f32 %v45, %v318
  %v355 = vadd.f32 %v46, %v323
  %v356 = vadd.f32 %v47, %v326
  %v357 = vadd.f32 %v48, %v331
  %v358 = vadd.f32 %v49, %v334
  %v359 = vadd.f32 %v50, %v339
  %v360 = vadd.f32 %v51, %v342
  %vm361 = vcmask 261120
  %362 = vst.msk [vmem:[#allocation2] sm:$0xff] %vm361, %v345
  %363 = vst.msk [vmem:[#allocation2 + $0x8] sm:$0xff] %vm361, %v346
  %364 = vst.msk [vmem:[#allocation2 + $0x10] sm:$0xff] %vm361, %v347
  %365 = vst.msk [vmem:[#allocation2 + $0x18] sm:$0xff] %vm361, %v348
  %366 = vst.msk [vmem:[#allocation2 + $0x20] sm:$0xff] %vm361, %v349
  %367 = vst.msk [vmem:[#allocation2 + $0x28] sm:$0xff] %vm361, %v350
  %368 = vst.msk [vmem:[#allocation2 + $0x30] sm:$0xff] %vm361, %v351
  %369 = vst.msk [vmem:[#allocation2 + $0x38] sm:$0xff] %vm361, %v352
  %370 = vst.msk [vmem:[#allocation2 + $0x40] sm:$0xff] %vm361, %v353
  %371 = vst.msk [vmem:[#allocation2 + $0x48] sm:$0xff] %vm361, %v354
  %372 = vst.msk [vmem:[#allocation2 + $0x50] sm:$0xff] %vm361, %v355
  %373 = vst.msk [vmem:[#allocation2 + $0x58] sm:$0xff] %vm361, %v356
  %374 = vst.msk [vmem:[#allocation2 + $0x60] sm:$0xff] %vm361, %v357
  %375 = vst.msk [vmem:[#allocation2 + $0x68] sm:$0xff] %vm361, %v358
  %376 = vst.msk [vmem:[#allocation2 + $0x70] sm:$0xff] %vm361, %v359
  %377 = vst.msk [vmem:[#allocation2 + $0x78] sm:$0xff] %vm361, %v360
  // Predicated region
  $region18: #{tcformer_forward.27} parent=0 // pred_check
    %p378 = pneg %p15
  $region19: #{tcformer_forward.27} parent=0 // pred_check_branch
    %380 = sbr.rel (%p378) target = $region21
  $region20: #{tcformer_forward.27} parent=0 // pred_region
    %v381 = vld [vmem:[#allocation2] sm:$0xff]
    %v382 = vld [vmem:[#allocation2 + $0x8] sm:$0xff]
    %v383 = vld [vmem:[#allocation2 + $0x10] sm:$0xff]
    %v384 = vld [vmem:[#allocation2 + $0x18] sm:$0xff]
    %v385 = vld [vmem:[#allocation2 + $0x20] sm:$0xff]
    %v386 = vld [vmem:[#allocation2 + $0x28] sm:$0xff]
    %v387 = vld [vmem:[#allocation2 + $0x30] sm:$0xff]
    %v388 = vld [vmem:[#allocation2 + $0x38] sm:$0xff]
    %v389 = vld [vmem:[#allocation2 + $0x40] sm:$0xff]
    %v390 = vld [vmem:[#allocation2 + $0x48] sm:$0xff]
    %v391 = vld [vmem:[#allocation2 + $0x50] sm:$0xff]
    %v392 = vld [vmem:[#allocation2 + $0x58] sm:$0xff]
    %v393 = vld [vmem:[#allocation2 + $0x60] sm:$0xff]
    %v394 = vld [vmem:[#allocation2 + $0x68] sm:$0xff]
    %v395 = vld [vmem:[#allocation2 + $0x70] sm:$0xff]
    %v396 = vld [vmem:[#allocation2 + $0x78] sm:$0xff]
    %v397 = vld [vmem:[%s2] sm:$0x1]
    %v399 = vlaneseq
    %v400 = vshrl.u32 %v399, 7
    %v401 = vsub.s32 0, %v400
    %v402 = vrot.slane %v397, %v401
    %v404 = vadd.f32 %v381, %v402
    %v405 = vadd.f32 %v382, %v402
    %v406 = vadd.f32 %v383, %v402
    %v407 = vadd.f32 %v384, %v402
    %v408 = vadd.f32 %v385, %v402
    %v409 = vadd.f32 %v386, %v402
    %v410 = vadd.f32 %v387, %v402
    %v411 = vadd.f32 %v388, %v402
    %v412 = vadd.f32 %v389, %v402
    %v413 = vadd.f32 %v390, %v402
    %v414 = vadd.f32 %v391, %v402
    %v415 = vadd.f32 %v392, %v402
    %v416 = vadd.f32 %v393, %v402
    %v417 = vadd.f32 %v394, %v402
    %v418 = vadd.f32 %v395, %v402
    %v419 = vadd.f32 %v396, %v402
    %v420 = vpack.c.bf16 %v405, %v404
    %v421 = vpack.c.bf16 %v407, %v406
    %v422 = vpack.c.bf16 %v409, %v408
    %v423 = vpack.c.bf16 %v411, %v410
    %v424 = vpack.c.bf16 %v413, %v412
    %v425 = vpack.c.bf16 %v415, %v414
    %v426 = vpack.c.bf16 %v417, %v416
    %v427 = vpack.c.bf16 %v419, %v418
    %v436 = vunpack.c.l.b16 %v420
    %v437 = vunpack.c.h.b16 %v420
    %v438 = vunpack.c.l.b16 %v421
    %v439 = vunpack.c.h.b16 %v421
    %v440 = vunpack.c.l.b16 %v422
    %v441 = vunpack.c.h.b16 %v422
    %v442 = vunpack.c.l.b16 %v423
    %v443 = vunpack.c.h.b16 %v423
    %v444 = vunpack.c.l.b16 %v424
    %v445 = vunpack.c.h.b16 %v424
    %v446 = vunpack.c.l.b16 %v425
    %v447 = vunpack.c.h.b16 %v425
    %v448 = vunpack.c.l.b16 %v426
    %v449 = vunpack.c.h.b16 %v426
    %v450 = vunpack.c.l.b16 %v427
    %v451 = vunpack.c.h.b16 %v427
    %v452 = vpack.c.b16 %v436, %v436
    %v453 = vpack.c.b16 %v437, %v437
    %v454 = vpack.c.b16 %v438, %v438
    %v455 = vpack.c.b16 %v439, %v439
    %v456 = vpack.c.b16 %v440, %v440
    %v457 = vpack.c.b16 %v441, %v441
    %v458 = vpack.c.b16 %v442, %v442
    %v459 = vpack.c.b16 %v443, %v443
    %v460 = vpack.c.b16 %v444, %v444
    %v461 = vpack.c.b16 %v445, %v445
    %v462 = vpack.c.b16 %v446, %v446
    %v463 = vpack.c.b16 %v447, %v447
    %v464 = vpack.c.b16 %v448, %v448
    %v465 = vpack.c.b16 %v449, %v449
    %v466 = vpack.c.b16 %v450, %v450
    %v467 = vpack.c.b16 %v451, %v451
    %vm484 = vcmask 257024
    %485 = vst.msk [vmem:[%s3] sm:$0xf] %vm484, %v452
    %486 = vst.msk [vmem:[%s3 + $0x4] sm:$0xf] %vm484, %v453
    %487 = vst.msk [vmem:[%s3 + $0x8] sm:$0xf] %vm484, %v454
    %488 = vst.msk [vmem:[%s3 + $0xc] sm:$0xf] %vm484, %v455
    %489 = vst.msk [vmem:[%s3 + $0x10] sm:$0xf] %vm484, %v456
    %490 = vst.msk [vmem:[%s3 + $0x14] sm:$0xf] %vm484, %v457
    %491 = vst.msk [vmem:[%s3 + $0x18] sm:$0xf] %vm484, %v458
    %492 = vst.msk [vmem:[%s3 + $0x1c] sm:$0xf] %vm484, %v459
    %493 = vst.msk [vmem:[%s3 + $0x20] sm:$0xf] %vm484, %v460
    %494 = vst.msk [vmem:[%s3 + $0x24] sm:$0xf] %vm484, %v461
    %495 = vst.msk [vmem:[%s3 + $0x28] sm:$0xf] %vm484, %v462
    %496 = vst.msk [vmem:[%s3 + $0x2c] sm:$0xf] %vm484, %v463
    %497 = vst.msk [vmem:[%s3 + $0x30] sm:$0xf] %vm484, %v464
    %498 = vst.msk [vmem:[%s3 + $0x34] sm:$0xf] %vm484, %v465
    %499 = vst.msk [vmem:[%s3 + $0x38] sm:$0xf] %vm484, %v466
    %500 = vst.msk [vmem:[%s3 + $0x3c] sm:$0xf] %vm484, %v467
  $region21: #{tcformer_forward.27} parent=0 // pred_fallthru
    _
  // Predicated region
  $region22: #{tcformer_forward.27} parent=0 // pred_check
    _
  $region23: #{tcformer_forward.27} parent=0 // pred_check_branch
    %502 = sbr.rel (0) target = $region25
  $region24: #{tcformer_forward.27} parent=0 // pred_region
    _
  $region25: #{tcformer_forward.27} parent=0 // pred_fallthru
    _
  // Predicated region
  $region26: #{tcformer_forward.27} parent=0 // pred_check
    _
  $region27: #{tcformer_forward.27} parent=0 // pred_check_branch
    %504 = sbr.rel (0) target = $region29
  $region28: #{tcformer_forward.27} parent=0 // pred_region
    _
  $region29: #{tcformer_forward.27} parent=0 // pred_fallthru
    _

// kernel: tcformer_forward.32
$region0: #{tcformer_forward.32}
  #allocation0 [shape = 'u32[]', space=smem, size = 0x4, offset = 0x4, fixed_abs, tag = 'smem constant byte address 0x4 - core index']
  #allocation1 [shape = 'u32[144,128]{1,0:T(1,128)}', space=vmem, size = 0x12000, scoped, tag = 'internal scratch']
  %s0 = inlined_call_operand.vmem [shape: bf16[8,32], index: 0, kind: input, shape index: {}]
  %s1 = inlined_call_operand.vmem [shape: f32[1,32], index: 1, kind: input, shape index: {}]
  %s2 = inlined_call_operand.vmem [shape: f32[1,32], index: 2, kind: input, shape index: {}]
  %s3 = inlined_call_operand.vmem [shape: bf16[8,32], index: 3, kind: output, shape index: {}]
  %s4 = sld [smem:[#allocation0]]
  $region22: #{tcformer_forward.32} parent=0
    _
  %s6 = ssub.s32 1, %s4
  %s7 = scalar_select 0, %s6, %s4
  // Predicated region
  $region2: #{tcformer_forward.32} parent=0 // pred_check
    _
  $region3: #{tcformer_forward.32} parent=0 // pred_check_branch
    %9 = sbr.rel (0) target = $region5
  $region4: #{tcformer_forward.32} parent=0 // pred_region
    _
  $region5: #{tcformer_forward.32} parent=0 // pred_fallthru
    _
  // Predicated region
  $region6: #{tcformer_forward.32} parent=0 // pred_check
    _
  $region7: #{tcformer_forward.32} parent=0 // pred_check_branch
    %11 = sbr.rel (0) target = $region9
  $region8: #{tcformer_forward.32} parent=0 // pred_region
    _
  $region9: #{tcformer_forward.32} parent=0 // pred_fallthru
    _
  // Predicated region
  $region10: #{tcformer_forward.32} parent=0 // pred_check
    _
  $region11: #{tcformer_forward.32} parent=0 // pred_check_branch
    %13 = sbr.rel (0) target = $region13
  $region12: #{tcformer_forward.32} parent=0 // pred_region
    _
  $region13: #{tcformer_forward.32} parent=0 // pred_fallthru
    _
  %v14 = vld [vmem:[%s0] sm:$0xf]
  %v15 = vunpack.c.l.bf16 %v14
  %vm16 = vcmask 261120
  %v17 = vsel %vm16, %v15, 0.0
  %18 = vadd.xlane.f32.xlu0 %v17
  %v19 = vpop.xlane.xlu0 %18
  %v20 = vrcp.pop 32.0
  %v21 = vmul.f32 %v19, %v20
  %v22 = vsub.f32 %v15, %v21
  %v23 = vmul.f32 %v22, %v22
  %v24 = vsel %vm16, %v23, 0.0
  %25 = vadd.xlane.f32.xlu0 %v24
  %v26 = vpop.xlane.xlu0 %25
  %v27 = vmul.f32 %v26, %v20
  %v28 = vadd.f32 %v27, 1e-05
  %v29 = vrsqrt.pop %v28
  %v30 = vmul.f32 %v22, %v29
  %v31 = vld [vmem:[%s1] sm:$0x1]
  %v33 = vlaneseq
  %v34 = vshrl.u32 %v33, 7
  %v35 = vsub.s32 0, %v34
  %v36 = vrot.slane %v31, %v35
  %v38 = vmul.f32 %v30, %v36
  %v39 = vld [vmem:[%s2] sm:$0x1]
  %v41 = vlaneseq
  %v42 = vshrl.u32 %v41, 7
  %v43 = vsub.s32 0, %v42
  %v44 = vrot.slane %v39, %v43
  %v46 = vadd.f32 %v38, %v44
  %v47 = vpack.c.bf16 %v46, %v46
  %vm48 = vcmask 257024
  %49 = vst.msk [vmem:[%s3] sm:$0xf] %vm48, %v47
  // Predicated region
  $region14: #{tcformer_forward.32} parent=0 // pred_check
    _
  $region15: #{tcformer_forward.32} parent=0 // pred_check_branch
    %51 = sbr.rel (0) target = $region17
  $region16: #{tcformer_forward.32} parent=0 // pred_region
    _
  $region17: #{tcformer_forward.32} parent=0 // pred_fallthru
    _
  // Predicated region
  $region18: #{tcformer_forward.32} parent=0 // pred_check
    _
  $region19: #{tcformer_forward.32} parent=0 // pred_check_branch
    %53 = sbr.rel (0) target = $region21
  $region20: #{tcformer_forward.32} parent=0 // pred_region
    _
  $region21: #{tcformer_forward.32} parent=0 // pred_fallthru
    _

// kernel: tcformer_forward.33
$region0: #{tcformer_forward.33}
  #allocation0 [shape = 'u32[]', space=smem, size = 0x4, offset = 0x4, fixed_abs, tag = 'smem constant byte address 0x4 - core index']
  #allocation1 [shape = 'u32[144,128]{1,0:T(1,128)}', space=vmem, size = 0x12000, scoped, tag = 'internal scratch']
  #allocation2 [shape = 'f32[8,32]{1,0:T(8,128)}', space=vmem, size = 0x1000, scoped, tag = 'scratch operand']
  %s0 = inlined_call_operand.vmem [shape: bf16[8,32], index: 0, kind: input, shape index: {}]
  %s1 = inlined_call_operand.vmem [shape: bf16[32,32], index: 1, kind: input, shape index: {}]
  %s2 = inlined_call_operand.vmem [shape: f32[1,32], index: 2, kind: input, shape index: {}]
  %s3 = inlined_call_operand.vmem [shape: bf16[8,32], index: 3, kind: output, shape index: {}]
  %s4 = sld [smem:[#allocation0]]
  $region30: #{tcformer_forward.33} parent=0
    _
  %s6 = ssub.s32 1, %s4
  %s7 = scalar_select 0, %s6, %s4
  // Predicated region
  $region2: #{tcformer_forward.33} parent=0 // pred_check
    _
  $region3: #{tcformer_forward.33} parent=0 // pred_check_branch
    %9 = sbr.rel (0) target = $region5
  $region4: #{tcformer_forward.33} parent=0 // pred_region
    _
  $region5: #{tcformer_forward.33} parent=0 // pred_fallthru
    _
  // Predicated region
  $region6: #{tcformer_forward.33} parent=0 // pred_check
    _
  $region7: #{tcformer_forward.33} parent=0 // pred_check_branch
    %11 = sbr.rel (0) target = $region9
  $region8: #{tcformer_forward.33} parent=0 // pred_region
    _
  $region9: #{tcformer_forward.33} parent=0 // pred_fallthru
    _
  // Predicated region
  $region10: #{tcformer_forward.33} parent=0 // pred_check
    _
  $region11: #{tcformer_forward.33} parent=0 // pred_check_branch
    %13 = sbr.rel (0) target = $region13
  $region12: #{tcformer_forward.33} parent=0 // pred_region
    _
  $region13: #{tcformer_forward.33} parent=0 // pred_fallthru
    _
  %p15 = scmp.eq.s32.totalorder 0, 0
  // Predicated region
  $region14: #{tcformer_forward.33} parent=0 // pred_check
    %p16 = pneg %p15
  $region15: #{tcformer_forward.33} parent=0 // pred_check_branch
    %18 = sbr.rel (%p16) target = $region17
  $region16: #{tcformer_forward.33} parent=0 // pred_region
    %vm19 = vcmask 261120
    %20 = vst.msk [vmem:[#allocation2] sm:$0xff] %vm19, 0.0
  $region17: #{tcformer_forward.33} parent=0 // pred_fallthru
    _
  %v21 = vld [vmem:[#allocation2] sm:$0xff]
  %v22 = vld [vmem:[%s0] sm:$0xf]
  %v23 = vld [vmem:[%s1] sm:$0xf]
  %v24 = vld [vmem:[%s1 + $0x4] sm:$0xf]
  %v25 = vld [vmem:[%s1 + $0x8] sm:$0xf]
  %v26 = vld [vmem:[%s1 + $0xc] sm:$0xf]
  %v31 = vunpack.c.l.b16 %v23
  %v32 = vunpack.c.l.b16 %v24
  %v33 = vunpack.c.l.b16 %v25
  %v34 = vunpack.c.l.b16 %v26
  %v35 = vpack.c.b16 %v32, %v31
  %v36 = vpack.c.b16 %v34, %v33
  %vm39 = vcmask 261120
  %v41 = vsel %vm39, %v22, 0
  %43 = vmatprep.subr.bf16.mxu0 0
  %44 = vmatpush1.bf16.msra.mxu0 %v35
  %45 = vmatprep.subr.bf16.mxu0 0
  %46 = vmatpush1.bf16.msra.mxu0 %v36
  %47 = vmatprep.subr.bf16.mxu0 0
  %48 = vmatpush1.bf16.msra.mxu0 0
  %49 = vmatprep.subr.bf16.mxu0 0
  %50 = vmatpush1.bf16.msra.mxu0 0
  %51 = vmatprep.subr.bf16.mxu0 0
  %52 = vmatpush1.bf16.msra.mxu0 0
  %53 = vmatprep.subr.bf16.mxu0 0
  %54 = vmatpush1.bf16.msra.mxu0 0
  %55 = vmatprep.subr.bf16.mxu0 0
  %56 = vmatpush1.bf16.msra.mxu0 0
  %57 = vmatprep.subr.bf16.mxu0 0
  %58 = vmatpush1.bf16.msra.mxu0 0
  %59 = vmatprep.subr.bf16.mxu0 0
  %60 = vmatpush1.bf16.msra.mxu0 0
  %61 = vmatprep.subr.bf16.mxu0 0
  %62 = vmatpush1.bf16.msra.mxu0 0
  %63 = vmatprep.subr.bf16.mxu0 0
  %64 = vmatpush1.bf16.msra.mxu0 0
  %65 = vmatprep.subr.bf16.mxu0 0
  %66 = vmatpush1.bf16.msra.mxu0 0
  %67 = vmatprep.subr.bf16.mxu0 0
  %68 = vmatpush1.bf16.msra.mxu0 0
  %69 = vmatprep.subr.bf16.mxu0 0
  %70 = vmatpush1.bf16.msra.mxu0 0
  %71 = vmatprep.subr.bf16.mxu0 0
  %72 = vmatpush1.bf16.msra.mxu0 0
  %73 = vmatprep.subr.bf16.mxu0 0
  %74 = vmatpush1.bf16.msra.mxu0 0
  %75 = vmatprep.mubr.bf16.mxu0 0
  %76 = vmatmul.mubr.bf16.gmra.mrb[0].mxu0 %v41
  %v77 = vpop.f32.mrb[0].mxu0
  %v78 = vadd.f32 0.0, %v77
  %v79 = vpop.f32.mrb[0].mxu0
  %v80 = vpop.f32.mrb[0].mxu0
  %v81 = vpop.f32.mrb[0].mxu0
  %82 = vdwg.mxu0
  %v83 = vadd.f32 %v21, %v78
  %84 = vst.msk [vmem:[#allocation2] sm:$0xff] %vm39, %v83
  // Predicated region
  $region18: #{tcformer_forward.33} parent=0 // pred_check
    %p85 = pneg %p15
  $region19: #{tcformer_forward.33} parent=0 // pred_check_branch
    %87 = sbr.rel (%p85) target = $region21
  $region20: #{tcformer_forward.33} parent=0 // pred_region
    %v88 = vld [vmem:[#allocation2] sm:$0xff]
    %v89 = vld [vmem:[%s2] sm:$0x1]
    %v91 = vlaneseq
    %v92 = vshrl.u32 %v91, 7
    %v93 = vsub.s32 0, %v92
    %v94 = vrot.slane %v89, %v93
    %v96 = vadd.f32 %v88, %v94
    %v97 = vpack.c.bf16 %v96, %v96
    %vm98 = vcmask 257024
    %99 = vst.msk [vmem:[%s3] sm:$0xf] %vm98, %v97
  $region21: #{tcformer_forward.33} parent=0 // pred_fallthru
    _
  // Predicated region
  $region22: #{tcformer_forward.33} parent=0 // pred_check
    _
  $region23: #{tcformer_forward.33} parent=0 // pred_check_branch
    %101 = sbr.rel (0) target = $region25
  $region24: #{tcformer_forward.33} parent=0 // pred_region
    _
  $region25: #{tcformer_forward.33} parent=0 // pred_fallthru
    _
  // Predicated region
  $region26: #{tcformer_forward.33} parent=0 // pred_check
    _
  $region27: #{tcformer_forward.33} parent=0 // pred_check_branch
    %103 = sbr.rel (0) target = $region29
  $region28: #{tcformer_forward.33} parent=0 // pred_region
    _
  $region29: #{tcformer_forward.33} parent=0 // pred_fallthru
    _

// kernel: tcformer_forward.31
$region0: #{tcformer_forward.31}
  #allocation0 [shape = 'u32[]', space=smem, size = 0x4, offset = 0x4, fixed_abs, tag = 'smem constant byte address 0x4 - core index']
  #allocation1 [shape = 'u32[144,128]{1,0:T(1,128)}', space=vmem, size = 0x12000, scoped, tag = 'internal scratch']
  #allocation2 [shape = 'f32[8,32]{1,0:T(8,128)}', space=vmem, size = 0x1000, scoped, tag = 'scratch operand']
  %s0 = inlined_call_operand.vmem [shape: bf16[8,512], index: 0, kind: input, shape index: {}]
  %s1 = inlined_call_operand.vmem [shape: bf16[512,32], index: 1, kind: input, shape index: {}]
  %s2 = inlined_call_operand.vmem [shape: f32[1,32], index: 2, kind: input, shape index: {}]
  %s3 = inlined_call_operand.vmem [shape: bf16[8,32], index: 3, kind: output, shape index: {}]
  %s4 = sld [smem:[#allocation0]]
  $region30: #{tcformer_forward.31} parent=0
    _
  %s6 = ssub.s32 1, %s4
  %s7 = scalar_select 0, %s6, %s4
  // Predicated region
  $region2: #{tcformer_forward.31} parent=0 // pred_check
    _
  $region3: #{tcformer_forward.31} parent=0 // pred_check_branch
    %9 = sbr.rel (0) target = $region5
  $region4: #{tcformer_forward.31} parent=0 // pred_region
    _
  $region5: #{tcformer_forward.31} parent=0 // pred_fallthru
    _
  // Predicated region
  $region6: #{tcformer_forward.31} parent=0 // pred_check
    _
  $region7: #{tcformer_forward.31} parent=0 // pred_check_branch
    %11 = sbr.rel (0) target = $region9
  $region8: #{tcformer_forward.31} parent=0 // pred_region
    _
  $region9: #{tcformer_forward.31} parent=0 // pred_fallthru
    _
  // Predicated region
  $region10: #{tcformer_forward.31} parent=0 // pred_check
    _
  $region11: #{tcformer_forward.31} parent=0 // pred_check_branch
    %13 = sbr.rel (0) target = $region13
  $region12: #{tcformer_forward.31} parent=0 // pred_region
    _
  $region13: #{tcformer_forward.31} parent=0 // pred_fallthru
    _
  %p15 = scmp.eq.s32.totalorder 0, 0
  // Predicated region
  $region14: #{tcformer_forward.31} parent=0 // pred_check
    %p16 = pneg %p15
  $region15: #{tcformer_forward.31} parent=0 // pred_check_branch
    %18 = sbr.rel (%p16) target = $region17
  $region16: #{tcformer_forward.31} parent=0 // pred_region
    %vm19 = vcmask 261120
    %20 = vst.msk [vmem:[#allocation2] sm:$0xff] %vm19, 0.0
  $region17: #{tcformer_forward.31} parent=0 // pred_fallthru
    _
  %v21 = vld [vmem:[#allocation2] sm:$0xff]
  %v22 = vld [vmem:[%s0] sm:$0xff]
  %v23 = vld [vmem:[%s0 + $0x8] sm:$0xff]
  %v24 = vld [vmem:[%s1] sm:$0xf]
  %v25 = vld [vmem:[%s1 + $0x4] sm:$0xf]
  %v26 = vld [vmem:[%s1 + $0x8] sm:$0xf]
  %v27 = vld [vmem:[%s1 + $0xc] sm:$0xf]
  %v28 = vld [vmem:[%s1 + $0x10] sm:$0xf]
  %v29 = vld [vmem:[%s1 + $0x14] sm:$0xf]
  %v30 = vld [vmem:[%s1 + $0x18] sm:$0xf]
  %v31 = vld [vmem:[%s1 + $0x1c] sm:$0xf]
  %v32 = vld [vmem:[%s1 + $0x20] sm:$0xf]
  %v33 = vld [vmem:[%s1 + $0x24] sm:$0xf]
  %v34 = vld [vmem:[%s1 + $0x28] sm:$0xf]
  %v35 = vld [vmem:[%s1 + $0x2c] sm:$0xf]
  %v36 = vld [vmem:[%s1 + $0x30] sm:$0xf]
  %v37 = vld [vmem:[%s1 + $0x34] sm:$0xf]
  %v38 = vld [vmem:[%s1 + $0x38] sm:$0xf]
  %v39 = vld [vmem:[%s1 + $0x3c] sm:$0xf]
  %v40 = vld [vmem:[%s1 + $0x40] sm:$0xf]
  %v41 = vld [vmem:[%s1 + $0x44] sm:$0xf]
  %v42 = vld [vmem:[%s1 + $0x48] sm:$0xf]
  %v43 = vld [vmem:[%s1 + $0x4c] sm:$0xf]
  %v44 = vld [vmem:[%s1 + $0x50] sm:$0xf]
  %v45 = vld [vmem:[%s1 + $0x54] sm:$0xf]
  %v46 = vld [vmem:[%s1 + $0x58] sm:$0xf]
  %v47 = vld [vmem:[%s1 + $0x5c] sm:$0xf]
  %v48 = vld [vmem:[%s1 + $0x60] sm:$0xf]
  %v49 = vld [vmem:[%s1 + $0x64] sm:$0xf]
  %v50 = vld [vmem:[%s1 + $0x68] sm:$0xf]
  %v51 = vld [vmem:[%s1 + $0x6c] sm:$0xf]
  %v52 = vld [vmem:[%s1 + $0x70] sm:$0xf]
  %v53 = vld [vmem:[%s1 + $0x74] sm:$0xf]
  %v54 = vld [vmem:[%s1 + $0x78] sm:$0xf]
  %v55 = vld [vmem:[%s1 + $0x7c] sm:$0xf]
  %v56 = vld [vmem:[%s1 + $0x80] sm:$0xf]
  %v57 = vld [vmem:[%s1 + $0x84] sm:$0xf]
  %v58 = vld [vmem:[%s1 + $0x88] sm:$0xf]
  %v59 = vld [vmem:[%s1 + $0x8c] sm:$0xf]
  %v60 = vld [vmem:[%s1 + $0x90] sm:$0xf]
  %v61 = vld [vmem:[%s1 + $0x94] sm:$0xf]
  %v62 = vld [vmem:[%s1 + $0x98] sm:$0xf]
  %v63 = vld [vmem:[%s1 + $0x9c] sm:$0xf]
  %v64 = vld [vmem:[%s1 + $0xa0] sm:$0xf]
  %v65 = vld [vmem:[%s1 + $0xa4] sm:$0xf]
  %v66 = vld [vmem:[%s1 + $0xa8] sm:$0xf]
  %v67 = vld [vmem:[%s1 + $0xac] sm:$0xf]
  %v68 = vld [vmem:[%s1 + $0xb0] sm:$0xf]
  %v69 = vld [vmem:[%s1 + $0xb4] sm:$0xf]
  %v70 = vld [vmem:[%s1 + $0xb8] sm:$0xf]
  %v71 = vld [vmem:[%s1 + $0xbc] sm:$0xf]
  %v72 = vld [vmem:[%s1 + $0xc0] sm:$0xf]
  %v73 = vld [vmem:[%s1 + $0xc4] sm:$0xf]
  %v74 = vld [vmem:[%s1 + $0xc8] sm:$0xf]
  %v75 = vld [vmem:[%s1 + $0xcc] sm:$0xf]
  %v76 = vld [vmem:[%s1 + $0xd0] sm:$0xf]
  %v77 = vld [vmem:[%s1 + $0xd4] sm:$0xf]
  %v78 = vld [vmem:[%s1 + $0xd8] sm:$0xf]
  %v79 = vld [vmem:[%s1 + $0xdc] sm:$0xf]
  %v80 = vld [vmem:[%s1 + $0xe0] sm:$0xf]
  %v81 = vld [vmem:[%s1 + $0xe4] sm:$0xf]
  %v82 = vld [vmem:[%s1 + $0xe8] sm:$0xf]
  %v83 = vld [vmem:[%s1 + $0xec] sm:$0xf]
  %v84 = vld [vmem:[%s1 + $0xf0] sm:$0xf]
  %v85 = vld [vmem:[%s1 + $0xf4] sm:$0xf]
  %v86 = vld [vmem:[%s1 + $0xf8] sm:$0xf]
  %v87 = vld [vmem:[%s1 + $0xfc] sm:$0xf]
  %v90 = vunpack.c.l.b16 %v22
  %v91 = vunpack.c.h.b16 %v22
  %v92 = vunpack.c.l.b16 %v23
  %v93 = vunpack.c.h.b16 %v23
  %v94 = vpack.c.b16 %v90, %v90
  %v95 = vpack.c.b16 %v91, %v91
  %v96 = vpack.c.b16 %v92, %v92
  %v97 = vpack.c.b16 %v93, %v93
  %v166 = vunpack.c.l.b16 %v24
  %v167 = vunpack.c.l.b16 %v25
  %v168 = vunpack.c.l.b16 %v26
  %v169 = vunpack.c.l.b16 %v27
  %v170 = vunpack.c.l.b16 %v28
  %v171 = vunpack.c.l.b16 %v29
  %v172 = vunpack.c.l.b16 %v30
  %v173 = vunpack.c.l.b16 %v31
  %v174 = vunpack.c.l.b16 %v32
  %v175 = vunpack.c.l.b16 %v33
  %v176 = vunpack.c.l.b16 %v34
  %v177 = vunpack.c.l.b16 %v35
  %v178 = vunpack.c.l.b16 %v36
  %v179 = vunpack.c.l.b16 %v37
  %v180 = vunpack.c.l.b16 %v38
  %v181 = vunpack.c.l.b16 %v39
  %v182 = vunpack.c.l.b16 %v40
  %v183 = vunpack.c.l.b16 %v41
  %v184 = vunpack.c.l.b16 %v42
  %v185 = vunpack.c.l.b16 %v43
  %v186 = vunpack.c.l.b16 %v44
  %v187 = vunpack.c.l.b16 %v45
  %v188 = vunpack.c.l.b16 %v46
  %v189 = vunpack.c.l.b16 %v47
  %v190 = vunpack.c.l.b16 %v48
  %v191 = vunpack.c.l.b16 %v49
  %v192 = vunpack.c.l.b16 %v50
  %v193 = vunpack.c.l.b16 %v51
  %v194 = vunpack.c.l.b16 %v52
  %v195 = vunpack.c.l.b16 %v53
  %v196 = vunpack.c.l.b16 %v54
  %v197 = vunpack.c.l.b16 %v55
  %v198 = vunpack.c.l.b16 %v56
  %v199 = vunpack.c.l.b16 %v57
  %v200 = vunpack.c.l.b16 %v58
  %v201 = vunpack.c.l.b16 %v59
  %v202 = vunpack.c.l.b16 %v60
  %v203 = vunpack.c.l.b16 %v61
  %v204 = vunpack.c.l.b16 %v62
  %v205 = vunpack.c.l.b16 %v63
  %v206 = vunpack.c.l.b16 %v64
  %v207 = vunpack.c.l.b16 %v65
  %v208 = vunpack.c.l.b16 %v66
  %v209 = vunpack.c.l.b16 %v67
  %v210 = vunpack.c.l.b16 %v68
  %v211 = vunpack.c.l.b16 %v69
  %v212 = vunpack.c.l.b16 %v70
  %v213 = vunpack.c.l.b16 %v71
  %v214 = vunpack.c.l.b16 %v72
  %v215 = vunpack.c.l.b16 %v73
  %v216 = vunpack.c.l.b16 %v74
  %v217 = vunpack.c.l.b16 %v75
  %v218 = vunpack.c.l.b16 %v76
  %v219 = vunpack.c.l.b16 %v77
  %v220 = vunpack.c.l.b16 %v78
  %v221 = vunpack.c.l.b16 %v79
  %v222 = vunpack.c.l.b16 %v80
  %v223 = vunpack.c.l.b16 %v81
  %v224 = vunpack.c.l.b16 %v82
  %v225 = vunpack.c.l.b16 %v83
  %v226 = vunpack.c.l.b16 %v84
  %v227 = vunpack.c.l.b16 %v85
  %v228 = vunpack.c.l.b16 %v86
  %v229 = vunpack.c.l.b16 %v87
  %v230 = vpack.c.b16 %v167, %v166
  %v231 = vpack.c.b16 %v169, %v168
  %v232 = vpack.c.b16 %v171, %v170
  %v233 = vpack.c.b16 %v173, %v172
  %v234 = vpack.c.b16 %v175, %v174
  %v235 = vpack.c.b16 %v177, %v176
  %v236 = vpack.c.b16 %v179, %v178
  %v237 = vpack.c.b16 %v181, %v180
  %v238 = vpack.c.b16 %v183, %v182
  %v239 = vpack.c.b16 %v185, %v184
  %v240 = vpack.c.b16 %v187, %v186
  %v241 = vpack.c.b16 %v189, %v188
  %v242 = vpack.c.b16 %v191, %v190
  %v243 = vpack.c.b16 %v193, %v192
  %v244 = vpack.c.b16 %v195, %v194
  %v245 = vpack.c.b16 %v197, %v196
  %v246 = vpack.c.b16 %v199, %v198
  %v247 = vpack.c.b16 %v201, %v200
  %v248 = vpack.c.b16 %v203, %v202
  %v249 = vpack.c.b16 %v205, %v204
  %v250 = vpack.c.b16 %v207, %v206
  %v251 = vpack.c.b16 %v209, %v208
  %v252 = vpack.c.b16 %v211, %v210
  %v253 = vpack.c.b16 %v213, %v212
  %v254 = vpack.c.b16 %v215, %v214
  %v255 = vpack.c.b16 %v217, %v216
  %v256 = vpack.c.b16 %v219, %v218
  %v257 = vpack.c.b16 %v221, %v220
  %v258 = vpack.c.b16 %v223, %v222
  %v259 = vpack.c.b16 %v225, %v224
  %v260 = vpack.c.b16 %v227, %v226
  %v261 = vpack.c.b16 %v229, %v228
  %294 = vmatprep.subr.bf16.mxu0 0
  %295 = vmatpush1.bf16.msra.mxu0 %v230
  %296 = vmatprep.subr.bf16.mxu0 0
  %297 = vmatpush1.bf16.msra.mxu0 %v231
  %298 = vmatprep.subr.bf16.mxu0 0
  %299 = vmatpush1.bf16.msra.mxu0 %v232
  %300 = vmatprep.subr.bf16.mxu0 0
  %301 = vmatpush1.bf16.msra.mxu0 %v233
  %302 = vmatprep.subr.bf16.mxu0 0
  %303 = vmatpush1.bf16.msra.mxu0 %v234
  %304 = vmatprep.subr.bf16.mxu0 0
  %305 = vmatpush1.bf16.msra.mxu0 %v235
  %306 = vmatprep.subr.bf16.mxu0 0
  %307 = vmatpush1.bf16.msra.mxu0 %v236
  %308 = vmatprep.subr.bf16.mxu0 0
  %309 = vmatpush1.bf16.msra.mxu0 %v237
  %310 = vmatprep.subr.bf16.mxu0 0
  %311 = vmatpush1.bf16.msra.mxu0 %v238
  %312 = vmatprep.subr.bf16.mxu0 0
  %313 = vmatpush1.bf16.msra.mxu0 %v239
  %314 = vmatprep.subr.bf16.mxu0 0
  %315 = vmatpush1.bf16.msra.mxu0 %v240
  %316 = vmatprep.subr.bf16.mxu0 0
  %317 = vmatpush1.bf16.msra.mxu0 %v241
  %318 = vmatprep.subr.bf16.mxu0 0
  %319 = vmatpush1.bf16.msra.mxu0 %v242
  %320 = vmatprep.subr.bf16.mxu0 0
  %321 = vmatpush1.bf16.msra.mxu0 %v243
  %322 = vmatprep.subr.bf16.mxu0 0
  %323 = vmatpush1.bf16.msra.mxu0 %v244
  %324 = vmatprep.subr.bf16.mxu0 0
  %325 = vmatpush1.bf16.msra.mxu0 %v245
  %326 = vmatprep.mubr.bf16.mxu0 %v95
  %327 = vmatmul.mubr.bf16.gmra.mrb[0].mxu0 %v94
  %v328 = vpop.f32.mrb[0].mxu0
  %v329 = vadd.f32 0.0, %v328
  %v330 = vpop.f32.mrb[0].mxu0
  %v331 = vpop.f32.mrb[0].mxu0
  %v332 = vpop.f32.mrb[0].mxu0
  %333 = vdwg.mxu0
  %334 = vmatprep.subr.bf16.mxu0 0
  %335 = vmatpush1.bf16.msra.mxu0 %v246
  %336 = vmatprep.subr.bf16.mxu0 0
  %337 = vmatpush1.bf16.msra.mxu0 %v247
  %338 = vmatprep.subr.bf16.mxu0 0
  %339 = vmatpush1.bf16.msra.mxu0 %v248
  %340 = vmatprep.subr.bf16.mxu0 0
  %341 = vmatpush1.bf16.msra.mxu0 %v249
  %342 = vmatprep.subr.bf16.mxu0 0
  %343 = vmatpush1.bf16.msra.mxu0 %v250
  %344 = vmatprep.subr.bf16.mxu0 0
  %345 = vmatpush1.bf16.msra.mxu0 %v251
  %346 = vmatprep.subr.bf16.mxu0 0
  %347 = vmatpush1.bf16.msra.mxu0 %v252
  %348 = vmatprep.subr.bf16.mxu0 0
  %349 = vmatpush1.bf16.msra.mxu0 %v253
  %350 = vmatprep.subr.bf16.mxu0 0
  %351 = vmatpush1.bf16.msra.mxu0 %v254
  %352 = vmatprep.subr.bf16.mxu0 0
  %353 = vmatpush1.bf16.msra.mxu0 %v255
  %354 = vmatprep.subr.bf16.mxu0 0
  %355 = vmatpush1.bf16.msra.mxu0 %v256
  %356 = vmatprep.subr.bf16.mxu0 0
  %357 = vmatpush1.bf16.msra.mxu0 %v257
  %358 = vmatprep.subr.bf16.mxu0 0
  %359 = vmatpush1.bf16.msra.mxu0 %v258
  %360 = vmatprep.subr.bf16.mxu0 0
  %361 = vmatpush1.bf16.msra.mxu0 %v259
  %362 = vmatprep.subr.bf16.mxu0 0
  %363 = vmatpush1.bf16.msra.mxu0 %v260
  %364 = vmatprep.subr.bf16.mxu0 0
  %365 = vmatpush1.bf16.msra.mxu0 %v261
  %366 = vmatprep.mubr.bf16.mxu0 %v97
  %367 = vmatmul.mubr.bf16.gmra.mrb[0].mxu0 %v96
  %v368 = vpop.f32.mrb[0].mxu0
  %v369 = vadd.f32 %v329, %v368
  %v370 = vpop.f32.mrb[0].mxu0
  %v371 = vpop.f32.mrb[0].mxu0
  %v372 = vpop.f32.mrb[0].mxu0
  %373 = vdwg.mxu0
  %v374 = vadd.f32 %v21, %v369
  %vm375 = vcmask 261120
  %376 = vst.msk [vmem:[#allocation2] sm:$0xff] %vm375, %v374
  // Predicated region
  $region18: #{tcformer_forward.31} parent=0 // pred_check
    %p377 = pneg %p15
  $region19: #{tcformer_forward.31} parent=0 // pred_check_branch
    %379 = sbr.rel (%p377) target = $region21
  $region20: #{tcformer_forward.31} parent=0 // pred_region
    %v380 = vld [vmem:[#allocation2] sm:$0xff]
    %v381 = vld [vmem:[%s2] sm:$0x1]
    %v383 = vlaneseq
    %v384 = vshrl.u32 %v383, 7
    %v385 = vsub.s32 0, %v384
    %v386 = vrot.slane %v381, %v385
    %v388 = vadd.f32 %v380, %v386
    %v389 = vpack.c.bf16 %v388, %v388
    %vm390 = vcmask 257024
    %391 = vst.msk [vmem:[%s3] sm:$0xf] %vm390, %v389
  $region21: #{tcformer_forward.31} parent=0 // pred_fallthru
    _
  // Predicated region
  $region22: #{tcformer_forward.31} parent=0 // pred_check
    _
  $region23: #{tcformer_forward.31} parent=0 // pred_check_branch
    %393 = sbr.rel (0) target = $region25
  $region24: #{tcformer_forward.31} parent=0 // pred_region
    _
  $region25: #{tcformer_forward.31} parent=0 // pred_fallthru
    _
  // Predicated region
  $region26: #{tcformer_forward.31} parent=0 // pred_check
    _
  $region27: #{tcformer_forward.31} parent=0 // pred_check_branch
    %395 = sbr.rel (0) target = $region29
  $region28: #{tcformer_forward.31} parent=0 // pred_region
    _
  $region29: #{tcformer_forward.31} parent=0 // pred_fallthru
    _

// kernel: tcformer_forward.30
$region0: #{tcformer_forward.30}
  #allocation0 [shape = 'u32[]', space=smem, size = 0x4, offset = 0x4, fixed_abs, tag = 'smem constant byte address 0x4 - core index']
  #allocation1 [shape = 'u32[144,128]{1,0:T(1,128)}', space=vmem, size = 0x12000, scoped, tag = 'internal scratch']
  #allocation2 [shape = 'f32[128,32]{1,0:T(8,128)}', space=vmem, size = 0x10000, scoped, tag = 'scratch operand']
  %s0 = inlined_call_operand.vmem [shape: bf16[128,32], index: 0, kind: input, shape index: {}]
  %s1 = inlined_call_operand.vmem [shape: bf16[32,32], index: 1, kind: input, shape index: {}]
  %s2 = inlined_call_operand.vmem [shape: f32[1,32], index: 2, kind: input, shape index: {}]
  %s3 = inlined_call_operand.vmem [shape: bf16[128,32], index: 3, kind: output, shape index: {}]
  %s4 = sld [smem:[#allocation0]]
  $region30: #{tcformer_forward.30} parent=0
    _
  %s6 = ssub.s32 1, %s4
  %s7 = scalar_select 0, %s6, %s4
  // Predicated region
  $region2: #{tcformer_forward.30} parent=0 // pred_check
    _
  $region3: #{tcformer_forward.30} parent=0 // pred_check_branch
    %9 = sbr.rel (0) target = $region5
  $region4: #{tcformer_forward.30} parent=0 // pred_region
    _
  $region5: #{tcformer_forward.30} parent=0 // pred_fallthru
    _
  // Predicated region
  $region6: #{tcformer_forward.30} parent=0 // pred_check
    _
  $region7: #{tcformer_forward.30} parent=0 // pred_check_branch
    %11 = sbr.rel (0) target = $region9
  $region8: #{tcformer_forward.30} parent=0 // pred_region
    _
  $region9: #{tcformer_forward.30} parent=0 // pred_fallthru
    _
  // Predicated region
  $region10: #{tcformer_forward.30} parent=0 // pred_check
    _
  $region11: #{tcformer_forward.30} parent=0 // pred_check_branch
    %13 = sbr.rel (0) target = $region13
  $region12: #{tcformer_forward.30} parent=0 // pred_region
    _
  $region13: #{tcformer_forward.30} parent=0 // pred_fallthru
    _
  %p15 = scmp.eq.s32.totalorder 0, 0
  // Predicated region
  $region14: #{tcformer_forward.30} parent=0 // pred_check
    %p16 = pneg %p15
  $region15: #{tcformer_forward.30} parent=0 // pred_check_branch
    %18 = sbr.rel (%p16) target = $region17
  $region16: #{tcformer_forward.30} parent=0 // pred_region
    %vm19 = vcmask 261120
    %20 = vst.msk [vmem:[#allocation2] sm:$0xff] %vm19, 0.0
    %21 = vst.msk [vmem:[#allocation2 + $0x8] sm:$0xff] %vm19, 0.0
    %22 = vst.msk [vmem:[#allocation2 + $0x10] sm:$0xff] %vm19, 0.0
    %23 = vst.msk [vmem:[#allocation2 + $0x18] sm:$0xff] %vm19, 0.0
    %24 = vst.msk [vmem:[#allocation2 + $0x20] sm:$0xff] %vm19, 0.0
    %25 = vst.msk [vmem:[#allocation2 + $0x28] sm:$0xff] %vm19, 0.0
    %26 = vst.msk [vmem:[#allocation2 + $0x30] sm:$0xff] %vm19, 0.0
    %27 = vst.msk [vmem:[#allocation2 + $0x38] sm:$0xff] %vm19, 0.0
    %28 = vst.msk [vmem:[#allocation2 + $0x40] sm:$0xff] %vm19, 0.0
    %29 = vst.msk [vmem:[#allocation2 + $0x48] sm:$0xff] %vm19, 0.0
    %30 = vst.msk [vmem:[#allocation2 + $0x50] sm:$0xff] %vm19, 0.0
    %31 = vst.msk [vmem:[#allocation2 + $0x58] sm:$0xff] %vm19, 0.0
    %32 = vst.msk [vmem:[#allocation2 + $0x60] sm:$0xff] %vm19, 0.0
    %33 = vst.msk [vmem:[#allocation2 + $0x68] sm:$0xff] %vm19, 0.0
    %34 = vst.msk [vmem:[#allocation2 + $0x70] sm:$0xff] %vm19, 0.0
    %35 = vst.msk [vmem:[#allocation2 + $0x78] sm:$0xff] %vm19, 0.0
  $region17: #{tcformer_forward.30} parent=0 // pred_fallthru
    _
  %v36 = vld [vmem:[#allocation2] sm:$0xff]
  %v37 = vld [vmem:[#allocation2 + $0x8] sm:$0xff]
  %v38 = vld [vmem:[#allocation2 + $0x10] sm:$0xff]
  %v39 = vld [vmem:[#allocation2 + $0x18] sm:$0xff]
  %v40 = vld [vmem:[#allocation2 + $0x20] sm:$0xff]
  %v41 = vld [vmem:[#allocation2 + $0x28] sm:$0xff]
  %v42 = vld [vmem:[#allocation2 + $0x30] sm:$0xff]
  %v43 = vld [vmem:[#allocation2 + $0x38] sm:$0xff]
  %v44 = vld [vmem:[#allocation2 + $0x40] sm:$0xff]
  %v45 = vld [vmem:[#allocation2 + $0x48] sm:$0xff]
  %v46 = vld [vmem:[#allocation2 + $0x50] sm:$0xff]
  %v47 = vld [vmem:[#allocation2 + $0x58] sm:$0xff]
  %v48 = vld [vmem:[#allocation2 + $0x60] sm:$0xff]
  %v49 = vld [vmem:[#allocation2 + $0x68] sm:$0xff]
  %v50 = vld [vmem:[#allocation2 + $0x70] sm:$0xff]
  %v51 = vld [vmem:[#allocation2 + $0x78] sm:$0xff]
  %v52 = vld [vmem:[%s0] sm:$0xf]
  %v53 = vld [vmem:[%s0 + $0x4] sm:$0xf]
  %v54 = vld [vmem:[%s0 + $0x8] sm:$0xf]
  %v55 = vld [vmem:[%s0 + $0xc] sm:$0xf]
  %v56 = vld [vmem:[%s0 + $0x10] sm:$0xf]
  %v57 = vld [vmem:[%s0 + $0x14] sm:$0xf]
  %v58 = vld [vmem:[%s0 + $0x18] sm:$0xf]
  %v59 = vld [vmem:[%s0 + $0x1c] sm:$0xf]
  %v60 = vld [vmem:[%s0 + $0x20] sm:$0xf]
  %v61 = vld [vmem:[%s0 + $0x24] sm:$0xf]
  %v62 = vld [vmem:[%s0 + $0x28] sm:$0xf]
  %v63 = vld [vmem:[%s0 + $0x2c] sm:$0xf]
  %v64 = vld [vmem:[%s0 + $0x30] sm:$0xf]
  %v65 = vld [vmem:[%s0 + $0x34] sm:$0xf]
  %v66 = vld [vmem:[%s0 + $0x38] sm:$0xf]
  %v67 = vld [vmem:[%s0 + $0x3c] sm:$0xf]
  %v68 = vld [vmem:[%s1] sm:$0xf]
  %v69 = vld [vmem:[%s1 + $0x4] sm:$0xf]
  %v70 = vld [vmem:[%s1 + $0x8] sm:$0xf]
  %v71 = vld [vmem:[%s1 + $0xc] sm:$0xf]
  %v88 = vunpack.c.l.b16 %v52
  %v89 = vunpack.c.l.b16 %v53
  %v90 = vunpack.c.l.b16 %v54
  %v91 = vunpack.c.l.b16 %v55
  %v92 = vunpack.c.l.b16 %v56
  %v93 = vunpack.c.l.b16 %v57
  %v94 = vunpack.c.l.b16 %v58
  %v95 = vunpack.c.l.b16 %v59
  %v96 = vunpack.c.l.b16 %v60
  %v97 = vunpack.c.l.b16 %v61
  %v98 = vunpack.c.l.b16 %v62
  %v99 = vunpack.c.l.b16 %v63
  %v100 = vunpack.c.l.b16 %v64
  %v101 = vunpack.c.l.b16 %v65
  %v102 = vunpack.c.l.b16 %v66
  %v103 = vunpack.c.l.b16 %v67
  %v104 = vpack.c.b16 %v89, %v88
  %v105 = vpack.c.b16 %v91, %v90
  %v106 = vpack.c.b16 %v93, %v92
  %v107 = vpack.c.b16 %v95, %v94
  %v108 = vpack.c.b16 %v97, %v96
  %v109 = vpack.c.b16 %v99, %v98
  %v110 = vpack.c.b16 %v101, %v100
  %v111 = vpack.c.b16 %v103, %v102
  %v116 = vunpack.c.l.b16 %v68
  %v117 = vunpack.c.l.b16 %v69
  %v118 = vunpack.c.l.b16 %v70
  %v119 = vunpack.c.l.b16 %v71
  %v120 = vpack.c.b16 %v117, %v116
  %v121 = vpack.c.b16 %v119, %v118
  %vm124 = vcmask 261120
  %v126 = vsel %vm124, %v104, 0
  %v129 = vsel %vm124, %v105, 0
  %v132 = vsel %vm124, %v106, 0
  %v135 = vsel %vm124, %v107, 0
  %v138 = vsel %vm124, %v108, 0
  %v141 = vsel %vm124, %v109, 0
  %v144 = vsel %vm124, %v110, 0
  %v147 = vsel %vm124, %v111, 0
  %149 = vmatprep.subr.bf16.mxu0 0
  %150 = vmatpush1.bf16.msra.mxu0 %v120
  %151 = vmatprep.subr.bf16.mxu0 0
  %152 = vmatpush1.bf16.msra.mxu0 %v121
  %153 = vmatprep.subr.bf16.mxu0 0
  %154 = vmatpush1.bf16.msra.mxu0 0
  %155 = vmatprep.subr.bf16.mxu0 0
  %156 = vmatpush1.bf16.msra.mxu0 0
  %157 = vmatprep.subr.bf16.mxu0 0
  %158 = vmatpush1.bf16.msra.mxu0 0
  %159 = vmatprep.subr.bf16.mxu0 0
  %160 = vmatpush1.bf16.msra.mxu0 0
  %161 = vmatprep.subr.bf16.mxu0 0
  %162 = vmatpush1.bf16.msra.mxu0 0
  %163 = vmatprep.subr.bf16.mxu0 0
  %164 = vmatpush1.bf16.msra.mxu0 0
  %165 = vmatprep.subr.bf16.mxu0 0
  %166 = vmatpush1.bf16.msra.mxu0 0
  %167 = vmatprep.subr.bf16.mxu0 0
  %168 = vmatpush1.bf16.msra.mxu0 0
  %169 = vmatprep.subr.bf16.mxu0 0
  %170 = vmatpush1.bf16.msra.mxu0 0
  %171 = vmatprep.subr.bf16.mxu0 0
  %172 = vmatpush1.bf16.msra.mxu0 0
  %173 = vmatprep.subr.bf16.mxu0 0
  %174 = vmatpush1.bf16.msra.mxu0 0
  %175 = vmatprep.subr.bf16.mxu0 0
  %176 = vmatpush1.bf16.msra.mxu0 0
  %177 = vmatprep.subr.bf16.mxu0 0
  %178 = vmatpush1.bf16.msra.mxu0 0
  %179 = vmatprep.subr.bf16.mxu0 0
  %180 = vmatpush1.bf16.msra.mxu0 0
  %181 = vmatprep.mubr.bf16.mxu0 0
  %182 = vmatmul.mubr.bf16.gmra.mrb[0].mxu0 %v126
  %v183 = vpop.f32.mrb[0].mxu0
  %v184 = vadd.f32 0.0, %v183
  %v185 = vpop.f32.mrb[0].mxu0
  %v186 = vpop.f32.mrb[0].mxu0
  %v187 = vadd.f32 0.0, %v186
  %v188 = vpop.f32.mrb[0].mxu0
  %189 = vmatprep.mubr.bf16.mxu0 0
  %190 = vmatmul.mubr.bf16.gmra.mrb[0].mxu0 %v129
  %v191 = vpop.f32.mrb[0].mxu0
  %v192 = vadd.f32 0.0, %v191
  %v193 = vpop.f32.mrb[0].mxu0
  %v194 = vpop.f32.mrb[0].mxu0
  %v195 = vadd.f32 0.0, %v194
  %v196 = vpop.f32.mrb[0].mxu0
  %197 = vmatprep.mubr.bf16.mxu0 0
  %198 = vmatmul.mubr.bf16.gmra.mrb[0].mxu0 %v132
  %v199 = vpop.f32.mrb[0].mxu0
  %v200 = vadd.f32 0.0, %v199
  %v201 = vpop.f32.mrb[0].mxu0
  %v202 = vpop.f32.mrb[0].mxu0
  %v203 = vadd.f32 0.0, %v202
  %v204 = vpop.f32.mrb[0].mxu0
  %205 = vmatprep.mubr.bf16.mxu0 0
  %206 = vmatmul.mubr.bf16.gmra.mrb[0].mxu0 %v135
  %v207 = vpop.f32.mrb[0].mxu0
  %v208 = vadd.f32 0.0, %v207
  %v209 = vpop.f32.mrb[0].mxu0
  %v210 = vpop.f32.mrb[0].mxu0
  %v211 = vadd.f32 0.0, %v210
  %v212 = vpop.f32.mrb[0].mxu0
  %213 = vmatprep.mubr.bf16.mxu0 0
  %214 = vmatmul.mubr.bf16.gmra.mrb[0].mxu0 %v138
  %v215 = vpop.f32.mrb[0].mxu0
  %v216 = vadd.f32 0.0, %v215
  %v217 = vpop.f32.mrb[0].mxu0
  %v218 = vpop.f32.mrb[0].mxu0
  %v219 = vadd.f32 0.0, %v218
  %v220 = vpop.f32.mrb[0].mxu0
  %221 = vmatprep.mubr.bf16.mxu0 0
  %222 = vmatmul.mubr.bf16.gmra.mrb[0].mxu0 %v141
  %v223 = vpop.f32.mrb[0].mxu0
  %v224 = vadd.f32 0.0, %v223
  %v225 = vpop.f32.mrb[0].mxu0
  %v226 = vpop.f32.mrb[0].mxu0
  %v227 = vadd.f32 0.0, %v226
  %v228 = vpop.f32.mrb[0].mxu0
  %229 = vmatprep.mubr.bf16.mxu0 0
  %230 = vmatmul.mubr.bf16.gmra.mrb[0].mxu0 %v144
  %v231 = vpop.f32.mrb[0].mxu0
  %v232 = vadd.f32 0.0, %v231
  %v233 = vpop.f32.mrb[0].mxu0
  %v234 = vpop.f32.mrb[0].mxu0
  %v235 = vadd.f32 0.0, %v234
  %v236 = vpop.f32.mrb[0].mxu0
  %237 = vmatprep.mubr.bf16.mxu0 0
  %238 = vmatmul.mubr.bf16.gmra.mrb[0].mxu0 %v147
  %v239 = vpop.f32.mrb[0].mxu0
  %v240 = vadd.f32 0.0, %v239
  %v241 = vpop.f32.mrb[0].mxu0
  %v242 = vpop.f32.mrb[0].mxu0
  %v243 = vadd.f32 0.0, %v242
  %v244 = vpop.f32.mrb[0].mxu0
  %245 = vdwg.mxu0
  %v246 = vadd.f32 %v36, %v184
  %v247 = vadd.f32 %v37, %v187
  %v248 = vadd.f32 %v38, %v192
  %v249 = vadd.f32 %v39, %v195
  %v250 = vadd.f32 %v40, %v200
  %v251 = vadd.f32 %v41, %v203
  %v252 = vadd.f32 %v42, %v208
  %v253 = vadd.f32 %v43, %v211
  %v254 = vadd.f32 %v44, %v216
  %v255 = vadd.f32 %v45, %v219
  %v256 = vadd.f32 %v46, %v224
  %v257 = vadd.f32 %v47, %v227
  %v258 = vadd.f32 %v48, %v232
  %v259 = vadd.f32 %v49, %v235
  %v260 = vadd.f32 %v50, %v240
  %v261 = vadd.f32 %v51, %v243
  %262 = vst.msk [vmem:[#allocation2] sm:$0xff] %vm124, %v246
  %263 = vst.msk [vmem:[#allocation2 + $0x8] sm:$0xff] %vm124, %v247
  %264 = vst.msk [vmem:[#allocation2 + $0x10] sm:$0xff] %vm124, %v248
  %265 = vst.msk [vmem:[#allocation2 + $0x18] sm:$0xff] %vm124, %v249
  %266 = vst.msk [vmem:[#allocation2 + $0x20] sm:$0xff] %vm124, %v250
  %267 = vst.msk [vmem:[#allocation2 + $0x28] sm:$0xff] %vm124, %v251
  %268 = vst.msk [vmem:[#allocation2 + $0x30] sm:$0xff] %vm124, %v252
  %269 = vst.msk [vmem:[#allocation2 + $0x38] sm:$0xff] %vm124, %v253
  %270 = vst.msk [vmem:[#allocation2 + $0x40] sm:$0xff] %vm124, %v254
  %271 = vst.msk [vmem:[#allocation2 + $0x48] sm:$0xff] %vm124, %v255
  %272 = vst.msk [vmem:[#allocation2 + $0x50] sm:$0xff] %vm124, %v256
  %273 = vst.msk [vmem:[#allocation2 + $0x58] sm:$0xff] %vm124, %v257
  %274 = vst.msk [vmem:[#allocation2 + $0x60] sm:$0xff] %vm124, %v258
  %275 = vst.msk [vmem:[#allocation2 + $0x68] sm:$0xff] %vm124, %v259
  %276 = vst.msk [vmem:[#allocation2 + $0x70] sm:$0xff] %vm124, %v260
  %277 = vst.msk [vmem:[#allocation2 + $0x78] sm:$0xff] %vm124, %v261
  // Predicated region
  $region18: #{tcformer_forward.30} parent=0 // pred_check
    %p278 = pneg %p15
  $region19: #{tcformer_forward.30} parent=0 // pred_check_branch
    %280 = sbr.rel (%p278) target = $region21
  $region20: #{tcformer_forward.30} parent=0 // pred_region
    %v281 = vld [vmem:[#allocation2] sm:$0xff]
    %v282 = vld [vmem:[#allocation2 + $0x8] sm:$0xff]
    %v283 = vld [vmem:[#allocation2 + $0x10] sm:$0xff]
    %v284 = vld [vmem:[#allocation2 + $0x18] sm:$0xff]
    %v285 = vld [vmem:[#allocation2 + $0x20] sm:$0xff]
    %v286 = vld [vmem:[#allocation2 + $0x28] sm:$0xff]
    %v287 = vld [vmem:[#allocation2 + $0x30] sm:$0xff]
    %v288 = vld [vmem:[#allocation2 + $0x38] sm:$0xff]
    %v289 = vld [vmem:[#allocation2 + $0x40] sm:$0xff]
    %v290 = vld [vmem:[#allocation2 + $0x48] sm:$0xff]
    %v291 = vld [vmem:[#allocation2 + $0x50] sm:$0xff]
    %v292 = vld [vmem:[#allocation2 + $0x58] sm:$0xff]
    %v293 = vld [vmem:[#allocation2 + $0x60] sm:$0xff]
    %v294 = vld [vmem:[#allocation2 + $0x68] sm:$0xff]
    %v295 = vld [vmem:[#allocation2 + $0x70] sm:$0xff]
    %v296 = vld [vmem:[#allocation2 + $0x78] sm:$0xff]
    %v297 = vld [vmem:[%s2] sm:$0x1]
    %v299 = vlaneseq
    %v300 = vshrl.u32 %v299, 7
    %v301 = vsub.s32 0, %v300
    %v302 = vrot.slane %v297, %v301
    %v304 = vadd.f32 %v281, %v302
    %v305 = vadd.f32 %v282, %v302
    %v306 = vadd.f32 %v283, %v302
    %v307 = vadd.f32 %v284, %v302
    %v308 = vadd.f32 %v285, %v302
    %v309 = vadd.f32 %v286, %v302
    %v310 = vadd.f32 %v287, %v302
    %v311 = vadd.f32 %v288, %v302
    %v312 = vadd.f32 %v289, %v302
    %v313 = vadd.f32 %v290, %v302
    %v314 = vadd.f32 %v291, %v302
    %v315 = vadd.f32 %v292, %v302
    %v316 = vadd.f32 %v293, %v302
    %v317 = vadd.f32 %v294, %v302
    %v318 = vadd.f32 %v295, %v302
    %v319 = vadd.f32 %v296, %v302
    %v320 = vpack.c.bf16 %v305, %v304
    %v321 = vpack.c.bf16 %v307, %v306
    %v322 = vpack.c.bf16 %v309, %v308
    %v323 = vpack.c.bf16 %v311, %v310
    %v324 = vpack.c.bf16 %v313, %v312
    %v325 = vpack.c.bf16 %v315, %v314
    %v326 = vpack.c.bf16 %v317, %v316
    %v327 = vpack.c.bf16 %v319, %v318
    %v336 = vunpack.c.l.b16 %v320
    %v337 = vunpack.c.h.b16 %v320
    %v338 = vunpack.c.l.b16 %v321
    %v339 = vunpack.c.h.b16 %v321
    %v340 = vunpack.c.l.b16 %v322
    %v341 = vunpack.c.h.b16 %v322
    %v342 = vunpack.c.l.b16 %v323
    %v343 = vunpack.c.h.b16 %v323
    %v344 = vunpack.c.l.b16 %v324
    %v345 = vunpack.c.h.b16 %v324
    %v346 = vunpack.c.l.b16 %v325
    %v347 = vunpack.c.h.b16 %v325
    %v348 = vunpack.c.l.b16 %v326
    %v349 = vunpack.c.h.b16 %v326
    %v350 = vunpack.c.l.b16 %v327
    %v351 = vunpack.c.h.b16 %v327
    %v352 = vpack.c.b16 %v336, %v336
    %v353 = vpack.c.b16 %v337, %v337
    %v354 = vpack.c.b16 %v338, %v338
    %v355 = vpack.c.b16 %v339, %v339
    %v356 = vpack.c.b16 %v340, %v340
    %v357 = vpack.c.b16 %v341, %v341
    %v358 = vpack.c.b16 %v342, %v342
    %v359 = vpack.c.b16 %v343, %v343
    %v360 = vpack.c.b16 %v344, %v344
    %v361 = vpack.c.b16 %v345, %v345
    %v362 = vpack.c.b16 %v346, %v346
    %v363 = vpack.c.b16 %v347, %v347
    %v364 = vpack.c.b16 %v348, %v348
    %v365 = vpack.c.b16 %v349, %v349
    %v366 = vpack.c.b16 %v350, %v350
    %v367 = vpack.c.b16 %v351, %v351
    %vm384 = vcmask 257024
    %385 = vst.msk [vmem:[%s3] sm:$0xf] %vm384, %v352
    %386 = vst.msk [vmem:[%s3 + $0x4] sm:$0xf] %vm384, %v353
    %387 = vst.msk [vmem:[%s3 + $0x8] sm:$0xf] %vm384, %v354
    %388 = vst.msk [vmem:[%s3 + $0xc] sm:$0xf] %vm384, %v355
    %389 = vst.msk [vmem:[%s3 + $0x10] sm:$0xf] %vm384, %v356
    %390 = vst.msk [vmem:[%s3 + $0x14] sm:$0xf] %vm384, %v357
    %391 = vst.msk [vmem:[%s3 + $0x18] sm:$0xf] %vm384, %v358
    %392 = vst.msk [vmem:[%s3 + $0x1c] sm:$0xf] %vm384, %v359
    %393 = vst.msk [vmem:[%s3 + $0x20] sm:$0xf] %vm384, %v360
    %394 = vst.msk [vmem:[%s3 + $0x24] sm:$0xf] %vm384, %v361
    %395 = vst.msk [vmem:[%s3 + $0x28] sm:$0xf] %vm384, %v362
    %396 = vst.msk [vmem:[%s3 + $0x2c] sm:$0xf] %vm384, %v363
    %397 = vst.msk [vmem:[%s3 + $0x30] sm:$0xf] %vm384, %v364
    %398 = vst.msk [vmem:[%s3 + $0x34] sm:$0xf] %vm384, %v365
    %399 = vst.msk [vmem:[%s3 + $0x38] sm:$0xf] %vm384, %v366
    %400 = vst.msk [vmem:[%s3 + $0x3c] sm:$0xf] %vm384, %v367
  $region21: #{tcformer_forward.30} parent=0 // pred_fallthru
    _
  // Predicated region
  $region22: #{tcformer_forward.30} parent=0 // pred_check
    _
  $region23: #{tcformer_forward.30} parent=0 // pred_check_branch
    %402 = sbr.rel (0) target = $region25
  $region24: #{tcformer_forward.30} parent=0 // pred_region
    _
  $region25: #{tcformer_forward.30} parent=0 // pred_fallthru
    _
  // Predicated region
  $region26: #{tcformer_forward.30} parent=0 // pred_check
    _
  $region27: #{tcformer_forward.30} parent=0 // pred_check_branch
    %404 = sbr.rel (0) target = $region29
  $region28: #{tcformer_forward.30} parent=0 // pred_region
    _
  $region29: #{tcformer_forward.30} parent=0 // pred_fallthru
    _

// kernel: tcformer_forward.35
$region0: #{tcformer_forward.35}
  #allocation0 [shape = 'u32[]', space=smem, size = 0x4, offset = 0x4, fixed_abs, tag = 'smem constant byte address 0x4 - core index']
  #allocation1 [shape = 'u32[144,128]{1,0:T(1,128)}', space=vmem, size = 0x12000, scoped, tag = 'internal scratch']
  #allocation2 [shape = 'f32[64,1]{1,0:T(8,128)}', space=vmem, size = 0x8000, scoped, tag = 'scratch operand']
  #allocation3 [shape = 'f32[64,1]{1,0:T(8,128)}', space=vmem, size = 0x8000, scoped, tag = 'scratch operand']
  #allocation4 [shape = 'f32[64,32]{1,0:T(8,128)}', space=vmem, size = 0x8000, scoped, tag = 'scratch operand']
  %s0 = inlined_call_operand.vmem [shape: bf16[2,64,32], index: 0, kind: input, shape index: {}]
  %s1 = inlined_call_operand.vmem [shape: bf16[2,4,32], index: 1, kind: input, shape index: {}]
  %s2 = inlined_call_operand.vmem [shape: bf16[2,4,32], index: 2, kind: input, shape index: {}]
  %s3 = inlined_call_operand.vmem [shape: bf16[2,64,32], index: 3, kind: output, shape index: {}]
  %s4 = sld [smem:[#allocation0]]
  $region53: #{tcformer_forward.35} parent=0
    _
  %s6 = ssub.s32 1, %s4
  %s7 = scalar_select 0, %s6, %s4
  loop: start=0, step=1, limit=4
  $region2: #{tcformer_forward.35} parent=0 // loop_pre_header
    _
  $region3: #{tcformer_forward.35} parent=0 // loop_header
    %s9 = sphi 0, %s13
    %p10 = scmp.ge.s32.totalorder %s9, 4
    %s16 = sphi 0, %s42
    %s17 = sphi 0, %s38
    %s18 = sphi 0, %s34
    %s19 = sphi 0, %s30
    %s20 = sphi 0, %s16
    %s21 = sphi 0, %s17
    %s22 = sphi 0, %s18
    %s23 = sphi 0, %s19
    %s24 = sphi 0, %s20
    %s25 = sphi 0, %s21
    %s26 = sphi 0, %s22
    %s27 = sphi 0, %s23
    %s49 = sphi 0, %s51
    %s52 = sphi 0, %s49
    %s53 = sphi 0, %s52
    %s69 = sphi 0, %s53
    %s79 = sphi 0, %s81
    %s82 = sphi 0, %s79
    %s83 = sphi 0, %s82
    %s99 = sphi 0, %s83
    %s109 = sphi 0, %s111
    %s112 = sphi 0, %s109
    %s113 = sphi 0, %s112
    %s129 = sphi 0, %s113
    %s139 = sphi 0, %s141
    %s142 = sphi 0, %s139
    %s143 = sphi 0, %s142
    %s159 = sphi 0, %s143
  $region4: #{tcformer_forward.35} parent=0 // loop_header_branch
    %12 = sbr.rel (%p10) target = $region8
  $region5: #{tcformer_forward.35} parent=0 // loop_body
    %s14 = ssub.s32 %s9, 1
    %s15 = ssub.s32 %s9, 2
    %s28 = sadd.s32 1, %s19
    %p29 = scmp.ge.s32.totalorder %s28, 1
    %s30 = scalar_select %p29, 0, %s28
    %s31 = sadd.s32 1, %s18
    %s32 = scalar_select %p29, %s31, %s18
    %p33 = scmp.ge.s32.totalorder %s32, 1
    %s34 = scalar_select %p33, 0, %s32
    %s35 = sadd.s32 1, %s17
    %s36 = scalar_select %p33, %s35, %s17
    %p37 = scmp.ge.s32.totalorder %s36, 1
    %s38 = scalar_select %p37, 0, %s36
    %s39 = sadd.s32 1, %s16
    %s40 = scalar_select %p37, %s39, %s16
    %p41 = scmp.ge.s32.totalorder %s40, 2
    %s42 = scalar_select %p41, 0, %s40
    %s43 = ssub.s32 %s16, %s42
    %s44 = ssub.s32 %s18, %s34
    %s45 = sor.u32 %s43, %s44
    %s46 = ssub.s32 %s17, %s38
    %s47 = sor.u32 %s45, %s46
    %p48 = scmp.eq.s32.totalorder %s47, 0
    %s50 = sadd.s32 %s49, 1
    %s51 = scalar_select %p48, %s49, %s50
    %p54 = pneg %p48
    %p55 = scmp.eq.s32.totalorder %s9, 1
    %p56 = por %p54, %p55
    %p57 = scmp.ne.s32.totalorder %s49, %s52
    %p58 = scmp.eq.s32.totalorder %s9, 0
    %p59 = por %p57, %p58
    %p60 = scmp.ne.s32.totalorder %s49, %s52
    %p61 = scmp.eq.s32.totalorder %s14, 1
    %p62 = por %p60, %p61
    %p63 = scmp.ne.s32.totalorder %s52, %s53
    %p64 = scmp.eq.s32.totalorder %s14, 0
    %p65 = por %p63, %p64
    %p66 = scmp.ne.s32.totalorder %s52, %s53
    %p67 = scmp.eq.s32.totalorder %s15, 1
    %p68 = por %p66, %p67
    %p70 = scmp.ne.s32.totalorder %s53, %s69
    %p71 = scmp.eq.s32.totalorder %s15, 0
    %p72 = por %p70, %p71
    %s73 = ssub.s32 %s16, %s42
    %s74 = ssub.s32 %s19, %s30
    %s75 = sor.u32 %s73, %s74
    %s76 = ssub.s32 %s17, %s38
    %s77 = sor.u32 %s75, %s76
    %p78 = scmp.eq.s32.totalorder %s77, 0
    %s80 = sadd.s32 %s79, 1
    %s81 = scalar_select %p78, %s79, %s80
    %p84 = pneg %p78
    %p85 = scmp.eq.s32.totalorder %s9, 1
    %p86 = por %p84, %p85
    %p87 = scmp.ne.s32.totalorder %s79, %s82
    %p88 = scmp.eq.s32.totalorder %s9, 0
    %p89 = por %p87, %p88
    %p90 = scmp.ne.s32.totalorder %s79, %s82
    %p91 = scmp.eq.s32.totalorder %s14, 1
    %p92 = por %p90, %p91
    %p93 = scmp.ne.s32.totalorder %s82, %s83
    %p94 = scmp.eq.s32.totalorder %s14, 0
    %p95 = por %p93, %p94
    %p96 = scmp.ne.s32.totalorder %s82, %s83
    %p97 = scmp.eq.s32.totalorder %s15, 1
    %p98 = por %p96, %p97
    %p100 = scmp.ne.s32.totalorder %s83, %s99
    %p101 = scmp.eq.s32.totalorder %s15, 0
    %p102 = por %p100, %p101
    %s103 = ssub.s32 %s16, %s42
    %s104 = ssub.s32 %s19, %s30
    %s105 = sor.u32 %s103, %s104
    %s106 = ssub.s32 %s17, %s38
    %s107 = sor.u32 %s105, %s106
    %p108 = scmp.eq.s32.totalorder %s107, 0
    %s110 = sadd.s32 %s109, 1
    %s111 = scalar_select %p108, %s109, %s110
    %p114 = pneg %p108
    %p115 = scmp.eq.s32.totalorder %s9, 1
    %p116 = por %p114, %p115
    %p117 = scmp.ne.s32.totalorder %s109, %s112
    %p118 = scmp.eq.s32.totalorder %s9, 0
    %p119 = por %p117, %p118
    %p120 = scmp.ne.s32.totalorder %s109, %s112
    %p121 = scmp.eq.s32.totalorder %s14, 1
    %p122 = por %p120, %p121
    %p123 = scmp.ne.s32.totalorder %s112, %s113
    %p124 = scmp.eq.s32.totalorder %s14, 0
    %p125 = por %p123, %p124
    %p126 = scmp.ne.s32.totalorder %s112, %s113
    %p127 = scmp.eq.s32.totalorder %s15, 1
    %p128 = por %p126, %p127
    %p130 = scmp.ne.s32.totalorder %s113, %s129
    %p131 = scmp.eq.s32.totalorder %s15, 0
    %p132 = por %p130, %p131
    %s133 = ssub.s32 %s16, %s42
    %s134 = ssub.s32 %s18, %s34
    %s135 = sor.u32 %s133, %s134
    %s136 = ssub.s32 %s17, %s38
    %s137 = sor.u32 %s135, %s136
    %p138 = scmp.eq.s32.totalorder %s137, 0
    %s140 = sadd.s32 %s139, 1
    %s141 = scalar_select %p138, %s139, %s140
    %p144 = pneg %p138
    %p145 = scmp.eq.s32.totalorder %s9, 1
    %p146 = por %p144, %p145
    %p147 = scmp.ne.s32.totalorder %s139, %s142
    %p148 = scmp.eq.s32.totalorder %s9, 0
    %p149 = por %p147, %p148
    %p150 = scmp.ne.s32.totalorder %s139, %s142
    %p151 = scmp.eq.s32.totalorder %s14, 1
    %p152 = por %p150, %p151
    %p153 = scmp.ne.s32.totalorder %s142, %s143
    %p154 = scmp.eq.s32.totalorder %s14, 0
    %p155 = por %p153, %p154
    %p156 = scmp.ne.s32.totalorder %s142, %s143
    %p157 = scmp.eq.s32.totalorder %s15, 1
    %p158 = por %p156, %p157
    %p160 = scmp.ne.s32.totalorder %s143, %s159
    %p161 = scmp.eq.s32.totalorder %s15, 0
    %p162 = por %p160, %p161
    %p163 = scmp.le.s32.totalorder 1, %s9
    %p164 = scmp.lt.s32.totalorder %s9, 3
    %p165 = pnand %p163, %p164
    %p166 = pneg %p165
    // Predicated region
    $region9: #{tcformer_forward.35} parent=5 // pred_check
      _
    $region10: #{tcformer_forward.35} parent=5 // pred_check_branch
      %168 = sbr.rel (%p165) target = $region12
    $region11: #{tcformer_forward.35} parent=5 // pred_region
      %s169 = ssub.s32 %s9, 1
    $region12: #{tcformer_forward.35} parent=5 // pred_fallthru
      _
    %p170 = scmp.lt.s32.totalorder %s9, 2
    // Predicated region
    $region13: #{tcformer_forward.35} parent=5 // pred_check
      %p171 = pneg %p170
    $region14: #{tcformer_forward.35} parent=5 // pred_check_branch
      %173 = sbr.rel (%p171) target = $region16
    $region15: #{tcformer_forward.35} parent=5 // pred_region
      // Predicated region
      $region17: #{tcformer_forward.35} parent=15 // pred_check
        %p174 = pneg %p59
      $region18: #{tcformer_forward.35} parent=15 // pred_check_branch
        %176 = sbr.rel (%p174) target = $region20
      $region19: #{tcformer_forward.35} parent=15 // pred_region
        %s177 = smul.u32 8, %s18
        %p178 = scmp.lt.s32.totalorder %s16, 1
        %s179 = scalar_select %p178, %s16, 1
        %p180 = scmp.lt.s32.totalorder %s177, 7
        %s181 = scalar_select %p180, %s177, 7
        %p182 = scmp.lt.s32.totalorder %s17, 0
        %s183 = scalar_select %p182, %s17, 0
        %s184 = sadd.s32 %s183, %s181
        %s185 = smul.addr %s179, 8
        %s186 = sadd.s32 %s184, %s185
        %s187 = smul.addr %s186, 4
        %s188 = scalar_lea.vmem %s0, %s187
        %s189 = smul.u32 8, %s18
      $region20: #{tcformer_forward.35} parent=15 // pred_fallthru
        _
      // Predicated region
      $region21: #{tcformer_forward.35} parent=15 // pred_check
        %p190 = pneg %p89
      $region22: #{tcformer_forward.35} parent=15 // pred_check_branch
        %192 = sbr.rel (%p190) target = $region24
      $region23: #{tcformer_forward.35} parent=15 // pred_region
        %p193 = scmp.lt.s32.totalorder %s16, 1
        %s194 = scalar_select %p193, %s16, 1
        %p195 = scmp.lt.s32.totalorder %s19, 0
        %s196 = scalar_select %p195, %s19, 0
        %p197 = scmp.lt.s32.totalorder %s17, 0
        %s198 = scalar_select %p197, %s17, 0
        %s199 = sadd.s32 %s198, %s196
        %s200 = sadd.s32 %s199, %s194
        %s201 = smul.addr %s200, 2
        %s202 = scalar_lea.vmem %s1, %s201
      $region24: #{tcformer_forward.35} parent=15 // pred_fallthru
        _
      // Predicated region
      $region25: #{tcformer_forward.35} parent=15 // pred_check
        %p203 = pneg %p119
      $region26: #{tcformer_forward.35} parent=15 // pred_check_branch
        %205 = sbr.rel (%p203) target = $region28
      $region27: #{tcformer_forward.35} parent=15 // pred_region
        %p206 = scmp.lt.s32.totalorder %s16, 1
        %s207 = scalar_select %p206, %s16, 1
        %p208 = scmp.lt.s32.totalorder %s19, 0
        %s209 = scalar_select %p208, %s19, 0
        %p210 = scmp.lt.s32.totalorder %s17, 0
        %s211 = scalar_select %p210, %s17, 0
        %s212 = sadd.s32 %s211, %s209
        %s213 = sadd.s32 %s212, %s207
        %s214 = smul.addr %s213, 2
        %s215 = scalar_lea.vmem %s2, %s214
      $region28: #{tcformer_forward.35} parent=15 // pred_fallthru
        _
    $region16: #{tcformer_forward.35} parent=5 // pred_fallthru
      _
    %p216 = scmp.le.s32.totalorder 1, %s9
    %p217 = scmp.lt.s32.totalorder %s9, 3
    %p218 = pnand %p216, %p217
    %p219 = pneg %p218
    // Predicated region
    $region29: #{tcformer_forward.35} parent=5 // pred_check
      _
    $region30: #{tcformer_forward.35} parent=5 // pred_check_branch
      %221 = sbr.rel (%p218) target = $region32
    $region31: #{tcformer_forward.35} parent=5 // pred_region
      %s222 = ssub.s32 %s9, 1
      %s223 = smul.u32 8, %s22
      %p224 = scmp.lt.s32.totalorder %s20, 1
      %s225 = scalar_select %p224, %s20, 1
      %p226 = scmp.lt.s32.totalorder %s223, 7
      %s227 = scalar_select %p226, %s223, 7
      %p228 = scmp.lt.s32.totalorder %s21, 0
      %s229 = scalar_select %p228, %s21, 0
      %s230 = sadd.s32 %s229, %s227
      %s231 = smul.addr %s225, 8
      %s232 = sadd.s32 %s230, %s231
      %s233 = smul.addr %s232, 4
      %s234 = scalar_lea.vmem %s0, %s233
      %p235 = pneg %p65
      %p236 = pneg %p62
      %p237 = scmp.lt.s32.totalorder %s20, 1
      %s238 = scalar_select %p237, %s20, 1
      %p239 = scmp.lt.s32.totalorder %s23, 0
      %s240 = scalar_select %p239, %s23, 0
      %p241 = scmp.lt.s32.totalorder %s21, 0
      %s242 = scalar_select %p241, %s21, 0
      %s243 = sadd.s32 %s242, %s240
      %s244 = sadd.s32 %s243, %s238
      %s245 = smul.addr %s244, 2
      %s246 = scalar_lea.vmem %s1, %s245
      %p247 = pneg %p95
      %p248 = pneg %p92
      %p249 = scmp.lt.s32.totalorder %s20, 1
      %s250 = scalar_select %p249, %s20, 1
      %p251 = scmp.lt.s32.totalorder %s23, 0
      %s252 = scalar_select %p251, %s23, 0
      %p253 = scmp.lt.s32.totalorder %s21, 0
      %s254 = scalar_select %p253, %s21, 0
      %s255 = sadd.s32 %s254, %s252
      %s256 = sadd.s32 %s255, %s250
      %s257 = smul.addr %s256, 2
      %s258 = scalar_lea.vmem %s2, %s257
      %p259 = pneg %p125
      %p260 = pneg %p122
      %p261 = pneg %p155
      %p262 = pneg %p152
      %s263 = smul.u32 8, %s22
      %p264 = scmp.lt.s32.totalorder %s20, 1
      %s265 = scalar_select %p264, %s20, 1
      %p266 = scmp.lt.s32.totalorder %s263, 7
      %s267 = scalar_select %p266, %s263, 7
      %p268 = scmp.lt.s32.totalorder %s21, 0
      %s269 = scalar_select %p268, %s21, 0
      %s270 = sadd.s32 %s269, %s267
      %s271 = smul.addr %s265, 8
      %s272 = sadd.s32 %s270, %s271
      %s273 = smul.addr %s272, 4
      %s274 = scalar_lea.vmem %s3, %s273
      %s275 = smul.u32 8, %s22
      %p276 = scmp.lt.s32.totalorder %s20, 1
      %s277 = scalar_select %p276, %s20, 1
      %p278 = scmp.lt.s32.totalorder %s275, 7
      %s279 = scalar_select %p278, %s275, 7
      %p280 = scmp.lt.s32.totalorder %s21, 0
      %s281 = scalar_select %p280, %s21, 0
      %s282 = sadd.s32 %s281, %s279
      %s283 = smul.addr %s277, 8
      %s284 = sadd.s32 %s282, %s283
      %s285 = smul.addr %s284, 4
      %s286 = scalar_lea.vmem %s0, %s285
      %s287 = smul.u32 8, %s22
      %p288 = scmp.lt.s32.totalorder %s20, 1
      %s289 = scalar_select %p288, %s20, 1
      %p290 = scmp.lt.s32.totalorder %s23, 0
      %s291 = scalar_select %p290, %s23, 0
      %p292 = scmp.lt.s32.totalorder %s21, 0
      %s293 = scalar_select %p292, %s21, 0
      %s294 = sadd.s32 %s293, %s291
      %s295 = sadd.s32 %s294, %s289
      %s296 = smul.addr %s295, 2
      %s297 = scalar_lea.vmem %s1, %s296
      %p298 = scmp.lt.s32.totalorder %s20, 1
      %s299 = scalar_select %p298, %s20, 1
      %p300 = scmp.lt.s32.totalorder %s23, 0
      %s301 = scalar_select %p300, %s23, 0
      %p302 = scmp.lt.s32.totalorder %s21, 0
      %s303 = scalar_select %p302, %s21, 0
      %s304 = sadd.s32 %s303, %s301
      %s305 = sadd.s32 %s304, %s299
      %s306 = smul.addr %s305, 2
      %s307 = scalar_lea.vmem %s2, %s306
      %s308 = smul.u32 8, %s22
      %p309 = scmp.lt.s32.totalorder %s20, 1
      %s310 = scalar_select %p309, %s20, 1
      %p311 = scmp.lt.s32.totalorder %s308, 7
      %s312 = scalar_select %p311, %s308, 7
      %p313 = scmp.lt.s32.totalorder %s21, 0
      %s314 = scalar_select %p313, %s21, 0
      %s315 = sadd.s32 %s314, %s312
      %s316 = smul.addr %s310, 8
      %s317 = sadd.s32 %s315, %s316
      %s318 = smul.addr %s317, 4
      %s319 = scalar_lea.vmem %s3, %s318
      %s320 = smul.u32 8, %s22
      %p322 = scmp.eq.s32.totalorder %s23, 0
      // Predicated region
      $region33: #{tcformer_forward.35} parent=31 // pred_check
        %p323 = pneg %p322
      $region34: #{tcformer_forward.35} parent=31 // pred_check_branch
        %325 = sbr.rel (%p323) target = $region36
      $region35: #{tcformer_forward.35} parent=31 // pred_region
        %vm326 = vcmask 7168
        %327 = vst.msk [vmem:[#allocation2] sm:$0xff] %vm326, -inf
        %328 = vst.msk [vmem:[#allocation2 + $0x8] sm:$0xff] %vm326, -inf
        %329 = vst.msk [vmem:[#allocation2 + $0x10] sm:$0xff] %vm326, -inf
        %330 = vst.msk [vmem:[#allocation2 + $0x18] sm:$0xff] %vm326, -inf
        %331 = vst.msk [vmem:[#allocation2 + $0x20] sm:$0xff] %vm326, -inf
        %332 = vst.msk [vmem:[#allocation2 + $0x28] sm:$0xff] %vm326, -inf
        %333 = vst.msk [vmem:[#allocation2 + $0x30] sm:$0xff] %vm326, -inf
        %334 = vst.msk [vmem:[#allocation2 + $0x38] sm:$0xff] %vm326, -inf
        %335 = vst.msk [vmem:[#allocation3] sm:$0xff] %vm326, 0.0
        %336 = vst.msk [vmem:[#allocation3 + $0x8] sm:$0xff] %vm326, 0.0
        %337 = vst.msk [vmem:[#allocation3 + $0x10] sm:$0xff] %vm326, 0.0
        %338 = vst.msk [vmem:[#allocation3 + $0x18] sm:$0xff] %vm326, 0.0
        %339 = vst.msk [vmem:[#allocation3 + $0x20] sm:$0xff] %vm326, 0.0
        %340 = vst.msk [vmem:[#allocation3 + $0x28] sm:$0xff] %vm326, 0.0
        %341 = vst.msk [vmem:[#allocation3 + $0x30] sm:$0xff] %vm326, 0.0
        %342 = vst.msk [vmem:[#allocation3 + $0x38] sm:$0xff] %vm326, 0.0
        %vm343 = vcmask 261120
        %344 = vst.msk [vmem:[#allocation4] sm:$0xff] %vm343, 0.0
        %345 = vst.msk [vmem:[#allocation4 + $0x8] sm:$0xff] %vm343, 0.0
        %346 = vst.msk [vmem:[#allocation4 + $0x10] sm:$0xff] %vm343, 0.0
        %347 = vst.msk [vmem:[#allocation4 + $0x18] sm:$0xff] %vm343, 0.0
        %348 = vst.msk [vmem:[#allocation4 + $0x20] sm:$0xff] %vm343, 0.0
        %349 = vst.msk [vmem:[#allocation4 + $0x28] sm:$0xff] %vm343, 0.0
        %350 = vst.msk [vmem:[#allocation4 + $0x30] sm:$0xff] %vm343, 0.0
        %351 = vst.msk [vmem:[#allocation4 + $0x38] sm:$0xff] %vm343, 0.0
      $region36: #{tcformer_forward.35} parent=31 // pred_fallthru
        _
      %v352 = vld [vmem:[%s286] sm:$0xf]
      %v353 = vld [vmem:[%s286 + $0x4] sm:$0xf]
      %v354 = vld [vmem:[%s286 + $0x8] sm:$0xf]
      %v355 = vld [vmem:[%s286 + $0xc] sm:$0xf]
      %v356 = vld [vmem:[%s286 + $0x10] sm:$0xf]
      %v357 = vld [vmem:[%s286 + $0x14] sm:$0xf]
      %v358 = vld [vmem:[%s286 + $0x18] sm:$0xf]
      %v359 = vld [vmem:[%s286 + $0x1c] sm:$0xf]
      %v360 = vld [vmem:[%s297] sm:$0x3]
      %v361 = vld [vmem:[%s307] sm:$0x3]
      %v370 = vunpack.c.l.b16 %v352
      %v371 = vunpack.c.l.b16 %v353
      %v372 = vunpack.c.l.b16 %v354
      %v373 = vunpack.c.l.b16 %v355
      %v374 = vunpack.c.l.b16 %v356
      %v375 = vunpack.c.l.b16 %v357
      %v376 = vunpack.c.l.b16 %v358
      %v377 = vunpack.c.l.b16 %v359
      %v378 = vpack.c.b16 %v371, %v370
      %v379 = vpack.c.b16 %v373, %v372
      %v380 = vpack.c.b16 %v375, %v374
      %v381 = vpack.c.b16 %v377, %v376
      %vm382 = vcmask 261120
      %v384 = vsel %vm382, %v378, 0
      %v387 = vsel %vm382, %v379, 0
      %v390 = vsel %vm382, %v380, 0
      %v393 = vsel %vm382, %v381, 0
      %v396 = vsel %vm382, %v360, 0
      %398 = vmatprep.subr.bf16.mxu0 0
      %399 = vmatpush1.bf16.xpose.msra.mxu0 %v396
      %400 = vmatprep.subr.bf16.mxu0 0
      %401 = vmatpush1.bf16.xpose.msra.mxu0 0
      %402 = vmatprep.subr.bf16.mxu0 0
      %403 = vmatpush1.bf16.xpose.msra.mxu0 0
      %404 = vmatprep.subr.bf16.mxu0 0
      %405 = vmatpush1.bf16.xpose.msra.mxu0 0
      %406 = vmatprep.subr.bf16.mxu0 0
      %407 = vmatpush1.bf16.xpose.msra.mxu0 0
      %408 = vmatprep.subr.bf16.mxu0 0
      %409 = vmatpush1.bf16.xpose.msra.mxu0 0
      %410 = vmatprep.subr.bf16.mxu0 0
      %411 = vmatpush1.bf16.xpose.msra.mxu0 0
      %412 = vmatprep.subr.bf16.mxu0 0
      %413 = vmatpush1.bf16.xpose.msra.mxu0 0
      %414 = vmatprep.subr.bf16.mxu0 0
      %415 = vmatpush1.bf16.xpose.msra.mxu0 0
      %416 = vmatprep.subr.bf16.mxu0 0
      %417 = vmatpush1.bf16.xpose.msra.mxu0 0
      %418 = vmatprep.subr.bf16.mxu0 0
      %419 = vmatpush1.bf16.xpose.msra.mxu0 0
      %420 = vmatprep.subr.bf16.mxu0 0
      %421 = vmatpush1.bf16.xpose.msra.mxu0 0
      %422 = vmatprep.subr.bf16.mxu0 0
      %423 = vmatpush1.bf16.xpose.msra.mxu0 0
      %424 = vmatprep.subr.bf16.mxu0 0
      %425 = vmatpush1.bf16.xpose.msra.mxu0 0
      %426 = vmatprep.subr.bf16.mxu0 0
      %427 = vmatpush1.bf16.xpose.msra.mxu0 0
      %428 = vmatprep.subr.bf16.mxu0 0
      %429 = vmatpush1.bf16.xpose.msra.mxu0 0
      %430 = vmatprep.mubr.bf16.mxu0 0
      %431 = vmatmul.mubr.bf16.gmra.mrb[0].mxu0 %v384
      %v432 = vpop.f32.mrb[0].mxu0
      %v433 = vadd.f32 0.0, %v432
      %v434 = vpop.f32.mrb[0].mxu0
      %v435 = vpop.f32.mrb[0].mxu0
      %v436 = vadd.f32 0.0, %v435
      %v437 = vpop.f32.mrb[0].mxu0
      %438 = vmatprep.mubr.bf16.mxu0 0
      %439 = vmatmul.mubr.bf16.gmra.mrb[0].mxu0 %v387
      %v440 = vpop.f32.mrb[0].mxu0
      %v441 = vadd.f32 0.0, %v440
      %v442 = vpop.f32.mrb[0].mxu0
      %v443 = vpop.f32.mrb[0].mxu0
      %v444 = vadd.f32 0.0, %v443
      %v445 = vpop.f32.mrb[0].mxu0
      %446 = vmatprep.mubr.bf16.mxu0 0
      %447 = vmatmul.mubr.bf16.gmra.mrb[0].mxu0 %v390
      %v448 = vpop.f32.mrb[0].mxu0
      %v449 = vadd.f32 0.0, %v448
      %v450 = vpop.f32.mrb[0].mxu0
      %v451 = vpop.f32.mrb[0].mxu0
      %v452 = vadd.f32 0.0, %v451
      %v453 = vpop.f32.mrb[0].mxu0
      %454 = vmatprep.mubr.bf16.mxu0 0
      %455 = vmatmul.mubr.bf16.gmra.mrb[0].mxu0 %v393
      %v456 = vpop.f32.mrb[0].mxu0
      %v457 = vadd.f32 0.0, %v456
      %v458 = vpop.f32.mrb[0].mxu0
      %v459 = vpop.f32.mrb[0].mxu0
      %v460 = vadd.f32 0.0, %v459
      %v461 = vpop.f32.mrb[0].mxu0
      %462 = vdwg.mxu0
      %v463 = vld [vmem:[#allocation2] sm:$0xff]
      %v464 = vld [vmem:[#allocation2 + $0x8] sm:$0xff]
      %v465 = vld [vmem:[#allocation2 + $0x10] sm:$0xff]
      %v466 = vld [vmem:[#allocation2 + $0x18] sm:$0xff]
      %v467 = vld [vmem:[#allocation2 + $0x20] sm:$0xff]
      %v468 = vld [vmem:[#allocation2 + $0x28] sm:$0xff]
      %v469 = vld [vmem:[#allocation2 + $0x30] sm:$0xff]
      %v470 = vld [vmem:[#allocation2 + $0x38] sm:$0xff]
      %vm471 = vcmask 31744
      %v472 = vsel %vm471, %v433, -inf
      %473 = vmax.xlane.f32.xlu0 %v472
      %v474 = vpop.xlane.xlu0 %473
      %v475 = vsel %vm471, %v436, -inf
      %476 = vmax.xlane.f32.xlu0 %v475
      %v477 = vpop.xlane.xlu0 %476
      %v478 = vsel %vm471, %v441, -inf
      %479 = vmax.xlane.f32.xlu0 %v478
      %v480 = vpop.xlane.xlu0 %479
      %v481 = vsel %vm471, %v444, -inf
      %482 = vmax.xlane.f32.xlu0 %v481
      %v483 = vpop.xlane.xlu0 %482
      %v484 = vsel %vm471, %v449, -inf
      %485 = vmax.xlane.f32.xlu0 %v484
      %v486 = vpop.xlane.xlu0 %485
      %v487 = vsel %vm471, %v452, -inf
      %488 = vmax.xlane.f32.xlu0 %v487
      %v489 = vpop.xlane.xlu0 %488
      %v490 = vsel %vm471, %v457, -inf
      %491 = vmax.xlane.f32.xlu0 %v490
      %v492 = vpop.xlane.xlu0 %491
      %v493 = vsel %vm471, %v460, -inf
      %494 = vmax.xlane.f32.xlu0 %v493
      %v495 = vpop.xlane.xlu0 %494
      %v496 = vmax.f32 %v463, %v474
      %v497 = vmax.f32 %v464, %v477
      %v498 = vmax.f32 %v465, %v480
      %v499 = vmax.f32 %v466, %v483
      %v500 = vmax.f32 %v467, %v486
      %v501 = vmax.f32 %v468, %v489
      %v502 = vmax.f32 %v469, %v492
      %v503 = vmax.f32 %v470, %v495
      %v504 = vsub.f32 %v463, %v496
      %v505 = vsub.f32 %v464, %v497
      %v506 = vsub.f32 %v465, %v498
      %v507 = vsub.f32 %v466, %v499
      %v508 = vsub.f32 %v467, %v500
      %v509 = vsub.f32 %v468, %v501
      %v510 = vsub.f32 %v469, %v502
      %v511 = vsub.f32 %v470, %v503
      %v512 = vmul.f32 %v504, 1.442695
      %v513 = vpow.pop %v512
      %v514 = vmul.f32 %v505, 1.442695
      %v515 = vpow.pop %v514
      %v516 = vmul.f32 %v506, 1.442695
      %v517 = vpow.pop %v516
      %v518 = vmul.f32 %v507, 1.442695
      %v519 = vpow.pop %v518
      %v520 = vmul.f32 %v508, 1.442695
      %v521 = vpow.pop %v520
      %v522 = vmul.f32 %v509, 1.442695
      %v523 = vpow.pop %v522
      %v524 = vmul.f32 %v510, 1.442695
      %v525 = vpow.pop %v524
      %v526 = vmul.f32 %v511, 1.442695
      %v527 = vpow.pop %v526
      %529 = vset.pattern.permute.xlu0 0
      %530 = vperm.xlu0 %529, %v496
      %v531 = vpop.permute.xlu0 %530
      %534 = vset.pattern.permute.xlu0 0
      %535 = vperm.xlu0 %534, %v497
      %v536 = vpop.permute.xlu0 %535
      %539 = vset.pattern.permute.xlu0 0
      %540 = vperm.xlu0 %539, %v498
      %v541 = vpop.permute.xlu0 %540
      %544 = vset.pattern.permute.xlu0 0
      %545 = vperm.xlu0 %544, %v499
      %v546 = vpop.permute.xlu0 %545
      %549 = vset.pattern.permute.xlu0 0
      %550 = vperm.xlu0 %549, %v500
      %v551 = vpop.permute.xlu0 %550
      %554 = vset.pattern.permute.xlu0 0
      %555 = vperm.xlu0 %554, %v501
      %v556 = vpop.permute.xlu0 %555
      %559 = vset.pattern.permute.xlu0 0
      %560 = vperm.xlu0 %559, %v502
      %v561 = vpop.permute.xlu0 %560
      %564 = vset.pattern.permute.xlu0 0
      %565 = vperm.xlu0 %564, %v503
      %v566 = vpop.permute.xlu0 %565
      %v568 = vsub.f32 %v433, %v531
      %v569 = vsub.f32 %v436, %v536
      %v570 = vsub.f32 %v441, %v541
      %v571 = vsub.f32 %v444, %v546
      %v572 = vsub.f32 %v449, %v551
      %v573 = vsub.f32 %v452, %v556
      %v574 = vsub.f32 %v457, %v561
      %v575 = vsub.f32 %v460, %v566
      %v576 = vmul.f32 %v568, 1.442695
      %v577 = vpow.pop %v576
      %v578 = vmul.f32 %v569, 1.442695
      %v579 = vpow.pop %v578
      %v580 = vmul.f32 %v570, 1.442695
      %v581 = vpow.pop %v580
      %v582 = vmul.f32 %v571, 1.442695
      %v583 = vpow.pop %v582
      %v584 = vmul.f32 %v572, 1.442695
      %v585 = vpow.pop %v584
      %v586 = vmul.f32 %v573, 1.442695
      %v587 = vpow.pop %v586
      %v588 = vmul.f32 %v574, 1.442695
      %v589 = vpow.pop %v588
      %v590 = vmul.f32 %v575, 1.442695
      %v591 = vpow.pop %v590
      %v592 = vld [vmem:[#allocation3] sm:$0xff]
      %v593 = vld [vmem:[#allocation3 + $0x8] sm:$0xff]
      %v594 = vld [vmem:[#allocation3 + $0x10] sm:$0xff]
      %v595 = vld [vmem:[#allocation3 + $0x18] sm:$0xff]
      %v596 = vld [vmem:[#allocation3 + $0x20] sm:$0xff]
      %v597 = vld [vmem:[#allocation3 + $0x28] sm:$0xff]
      %v598 = vld [vmem:[#allocation3 + $0x30] sm:$0xff]
      %v599 = vld [vmem:[#allocation3 + $0x38] sm:$0xff]
      %v600 = vmul.f32 %v513, %v592
      %v601 = vmul.f32 %v515, %v593
      %v602 = vmul.f32 %v517, %v594
      %v603 = vmul.f32 %v519, %v595
      %v604 = vmul.f32 %v521, %v596
      %v605 = vmul.f32 %v523, %v597
      %v606 = vmul.f32 %v525, %v598
      %v607 = vmul.f32 %v527, %v599
      %v608 = vsel %vm471, %v577, 0.0
      %609 = vadd.xlane.f32.xlu0 %v608
      %v610 = vpop.xlane.xlu0 %609
      %v611 = vsel %vm471, %v579, 0.0
      %612 = vadd.xlane.f32.xlu0 %v611
      %v613 = vpop.xlane.xlu0 %612
      %v614 = vsel %vm471, %v581, 0.0
      %615 = vadd.xlane.f32.xlu0 %v614
      %v616 = vpop.xlane.xlu0 %615
      %v617 = vsel %vm471, %v583, 0.0
      %618 = vadd.xlane.f32.xlu0 %v617
      %v619 = vpop.xlane.xlu0 %618
      %v620 = vsel %vm471, %v585, 0.0
      %621 = vadd.xlane.f32.xlu0 %v620
      %v622 = vpop.xlane.xlu0 %621
      %v623 = vsel %vm471, %v587, 0.0
      %624 = vadd.xlane.f32.xlu0 %v623
      %v625 = vpop.xlane.xlu0 %624
      %v626 = vsel %vm471, %v589, 0.0
      %627 = vadd.xlane.f32.xlu0 %v626
      %v628 = vpop.xlane.xlu0 %627
      %v629 = vsel %vm471, %v591, 0.0
      %630 = vadd.xlane.f32.xlu0 %v629
      %v631 = vpop.xlane.xlu0 %630
      %v632 = vadd.f32 %v600, %v610
      %v633 = vadd.f32 %v601, %v613
      %v634 = vadd.f32 %v602, %v616
      %v635 = vadd.f32 %v603, %v619
      %v636 = vadd.f32 %v604, %v622
      %v637 = vadd.f32 %v605, %v625
      %v638 = vadd.f32 %v606, %v628
      %v639 = vadd.f32 %v607, %v631
      %vm640 = vcmask 7168
      %641 = vst.msk [vmem:[#allocation3] sm:$0xff] %vm640, %v632
      %642 = vst.msk [vmem:[#allocation3 + $0x8] sm:$0xff] %vm640, %v633
      %643 = vst.msk [vmem:[#allocation3 + $0x10] sm:$0xff] %vm640, %v634
      %644 = vst.msk [vmem:[#allocation3 + $0x18] sm:$0xff] %vm640, %v635
      %645 = vst.msk [vmem:[#allocation3 + $0x20] sm:$0xff] %vm640, %v636
      %646 = vst.msk [vmem:[#allocation3 + $0x28] sm:$0xff] %vm640, %v637
      %647 = vst.msk [vmem:[#allocation3 + $0x30] sm:$0xff] %vm640, %v638
      %648 = vst.msk [vmem:[#allocation3 + $0x38] sm:$0xff] %vm640, %v639
      %v649 = vld [vmem:[#allocation4] sm:$0xff]
      %v650 = vld [vmem:[#allocation4 + $0x8] sm:$0xff]
      %v651 = vld [vmem:[#allocation4 + $0x10] sm:$0xff]
      %v652 = vld [vmem:[#allocation4 + $0x18] sm:$0xff]
      %v653 = vld [vmem:[#allocation4 + $0x20] sm:$0xff]
      %v654 = vld [vmem:[#allocation4 + $0x28] sm:$0xff]
      %v655 = vld [vmem:[#allocation4 + $0x30] sm:$0xff]
      %v656 = vld [vmem:[#allocation4 + $0x38] sm:$0xff]
      %658 = vset.pattern.permute.xlu0 0
      %659 = vperm.xlu0 %658, %v513
      %v660 = vpop.permute.xlu0 %659
      %663 = vset.pattern.permute.xlu0 0
      %664 = vperm.xlu0 %663, %v515
      %v665 = vpop.permute.xlu0 %664
      %668 = vset.pattern.permute.xlu0 0
      %669 = vperm.xlu0 %668, %v517
      %v670 = vpop.permute.xlu0 %669
      %673 = vset.pattern.permute.xlu0 0
      %674 = vperm.xlu0 %673, %v519
      %v675 = vpop.permute.xlu0 %674
      %678 = vset.pattern.permute.xlu0 0
      %679 = vperm.xlu0 %678, %v521
      %v680 = vpop.permute.xlu0 %679
      %683 = vset.pattern.permute.xlu0 0
      %684 = vperm.xlu0 %683, %v523
      %v685 = vpop.permute.xlu0 %684
      %688 = vset.pattern.permute.xlu0 0
      %689 = vperm.xlu0 %688, %v525
      %v690 = vpop.permute.xlu0 %689
      %693 = vset.pattern.permute.xlu0 0
      %694 = vperm.xlu0 %693, %v527
      %v695 = vpop.permute.xlu0 %694
      %v697 = vmul.f32 %v660, %v649
      %v698 = vmul.f32 %v665, %v650
      %v699 = vmul.f32 %v670, %v651
      %v700 = vmul.f32 %v675, %v652
      %v701 = vmul.f32 %v680, %v653
      %v702 = vmul.f32 %v685, %v654
      %v703 = vmul.f32 %v690, %v655
      %v704 = vmul.f32 %v695, %v656
      %v705 = vpack.c.bf16 %v579, %v577
      %v706 = vpack.c.bf16 %v583, %v581
      %v707 = vpack.c.bf16 %v587, %v585
      %v708 = vpack.c.bf16 %v591, %v589
      %v710 = vsel %vm471, %v705, 0
      %v713 = vsel %vm471, %v706, 0
      %v716 = vsel %vm471, %v707, 0
      %v719 = vsel %vm471, %v708, 0
      %vm721 = vcmask 1041408
      %v723 = vsel %vm721, %v361, 0
      %725 = vmatprep.subr.bf16.mxu0 0
      %726 = vmatpush1.bf16.msra.mxu0 %v723
      %727 = vmatprep.subr.bf16.mxu0 0
      %728 = vmatpush1.bf16.msra.mxu0 0
      %729 = vmatprep.subr.bf16.mxu0 0
      %730 = vmatpush1.bf16.msra.mxu0 0
      %731 = vmatprep.subr.bf16.mxu0 0
      %732 = vmatpush1.bf16.msra.mxu0 0
      %733 = vmatprep.subr.bf16.mxu0 0
      %734 = vmatpush1.bf16.msra.mxu0 0
      %735 = vmatprep.subr.bf16.mxu0 0
      %736 = vmatpush1.bf16.msra.mxu0 0
      %737 = vmatprep.subr.bf16.mxu0 0
      %738 = vmatpush1.bf16.msra.mxu0 0
      %739 = vmatprep.subr.bf16.mxu0 0
      %740 = vmatpush1.bf16.msra.mxu0 0
      %741 = vmatprep.subr.bf16.mxu0 0
      %742 = vmatpush1.bf16.msra.mxu0 0
      %743 = vmatprep.subr.bf16.mxu0 0
      %744 = vmatpush1.bf16.msra.mxu0 0
      %745 = vmatprep.subr.bf16.mxu0 0
      %746 = vmatpush1.bf16.msra.mxu0 0
      %747 = vmatprep.subr.bf16.mxu0 0
      %748 = vmatpush1.bf16.msra.mxu0 0
      %749 = vmatprep.subr.bf16.mxu0 0
      %750 = vmatpush1.bf16.msra.mxu0 0
      %751 = vmatprep.subr.bf16.mxu0 0
      %752 = vmatpush1.bf16.msra.mxu0 0
      %753 = vmatprep.subr.bf16.mxu0 0
      %754 = vmatpush1.bf16.msra.mxu0 0
      %755 = vmatprep.subr.bf16.mxu0 0
      %756 = vmatpush1.bf16.msra.mxu0 0
      %757 = vmatprep.mubr.bf16.mxu0 0
      %758 = vmatmul.mubr.bf16.gmra.mrb[0].mxu0 %v710
      %v759 = vpop.f32.mrb[0].mxu0
      %v760 = vadd.f32 0.0, %v759
      %v761 = vpop.f32.mrb[0].mxu0
      %v762 = vpop.f32.mrb[0].mxu0
      %v763 = vadd.f32 0.0, %v762
      %v764 = vpop.f32.mrb[0].mxu0
      %765 = vmatprep.mubr.bf16.mxu0 0
      %766 = vmatmul.mubr.bf16.gmra.mrb[0].mxu0 %v713
      %v767 = vpop.f32.mrb[0].mxu0
      %v768 = vadd.f32 0.0, %v767
      %v769 = vpop.f32.mrb[0].mxu0
      %v770 = vpop.f32.mrb[0].mxu0
      %v771 = vadd.f32 0.0, %v770
      %v772 = vpop.f32.mrb[0].mxu0
      %773 = vmatprep.mubr.bf16.mxu0 0
      %774 = vmatmul.mubr.bf16.gmra.mrb[0].mxu0 %v716
      %v775 = vpop.f32.mrb[0].mxu0
      %v776 = vadd.f32 0.0, %v775
      %v777 = vpop.f32.mrb[0].mxu0
      %v778 = vpop.f32.mrb[0].mxu0
      %v779 = vadd.f32 0.0, %v778
      %v780 = vpop.f32.mrb[0].mxu0
      %781 = vmatprep.mubr.bf16.mxu0 0
      %782 = vmatmul.mubr.bf16.gmra.mrb[0].mxu0 %v719
      %v783 = vpop.f32.mrb[0].mxu0
      %v784 = vadd.f32 0.0, %v783
      %v785 = vpop.f32.mrb[0].mxu0
      %v786 = vpop.f32.mrb[0].mxu0
      %v787 = vadd.f32 0.0, %v786
      %v788 = vpop.f32.mrb[0].mxu0
      %789 = vdwg.mxu0
      %v790 = vadd.f32 %v697, %v760
      %v791 = vadd.f32 %v698, %v763
      %v792 = vadd.f32 %v699, %v768
      %v793 = vadd.f32 %v700, %v771
      %v794 = vadd.f32 %v701, %v776
      %v795 = vadd.f32 %v702, %v779
      %v796 = vadd.f32 %v703, %v784
      %v797 = vadd.f32 %v704, %v787
      %798 = vst.msk [vmem:[#allocation4] sm:$0xff] %vm382, %v790
      %799 = vst.msk [vmem:[#allocation4 + $0x8] sm:$0xff] %vm382, %v791
      %800 = vst.msk [vmem:[#allocation4 + $0x10] sm:$0xff] %vm382, %v792
      %801 = vst.msk [vmem:[#allocation4 + $0x18] sm:$0xff] %vm382, %v793
      %802 = vst.msk [vmem:[#allocation4 + $0x20] sm:$0xff] %vm382, %v794
      %803 = vst.msk [vmem:[#allocation4 + $0x28] sm:$0xff] %vm382, %v795
      %804 = vst.msk [vmem:[#allocation4 + $0x30] sm:$0xff] %vm382, %v796
      %805 = vst.msk [vmem:[#allocation4 + $0x38] sm:$0xff] %vm382, %v797
      %806 = vst.msk [vmem:[#allocation2] sm:$0xff] %vm640, %v496
      %807 = vst.msk [vmem:[#allocation2 + $0x8] sm:$0xff] %vm640, %v497
      %808 = vst.msk [vmem:[#allocation2 + $0x10] sm:$0xff] %vm640, %v498
      %809 = vst.msk [vmem:[#allocation2 + $0x18] sm:$0xff] %vm640, %v499
      %810 = vst.msk [vmem:[#allocation2 + $0x20] sm:$0xff] %vm640, %v500
      %811 = vst.msk [vmem:[#allocation2 + $0x28] sm:$0xff] %vm640, %v501
      %812 = vst.msk [vmem:[#allocation2 + $0x30] sm:$0xff] %vm640, %v502
      %813 = vst.msk [vmem:[#allocation2 + $0x38] sm:$0xff] %vm640, %v503
      // Predicated region
      $region37: #{tcformer_forward.35} parent=31 // pred_check
        %p814 = pneg %p322
      $region38: #{tcformer_forward.35} parent=31 // pred_check_branch
        %816 = sbr.rel (%p814) target = $region40
      $region39: #{tcformer_forward.35} parent=31 // pred_region
        %v817 = vld [vmem:[#allocation4] sm:$0xff]
        %v818 = vld [vmem:[#allocation4 + $0x8] sm:$0xff]
        %v819 = vld [vmem:[#allocation4 + $0x10] sm:$0xff]
        %v820 = vld [vmem:[#allocation4 + $0x18] sm:$0xff]
        %v821 = vld [vmem:[#allocation4 + $0x20] sm:$0xff]
        %v822 = vld [vmem:[#allocation4 + $0x28] sm:$0xff]
        %v823 = vld [vmem:[#allocation4 + $0x30] sm:$0xff]
        %v824 = vld [vmem:[#allocation4 + $0x38] sm:$0xff]
        %v825 = vld [vmem:[#allocation3] sm:$0xff]
        %v826 = vld [vmem:[#allocation3 + $0x8] sm:$0xff]
        %v827 = vld [vmem:[#allocation3 + $0x10] sm:$0xff]
        %v828 = vld [vmem:[#allocation3 + $0x18] sm:$0xff]
        %v829 = vld [vmem:[#allocation3 + $0x20] sm:$0xff]
        %v830 = vld [vmem:[#allocation3 + $0x28] sm:$0xff]
        %v831 = vld [vmem:[#allocation3 + $0x30] sm:$0xff]
        %v832 = vld [vmem:[#allocation3 + $0x38] sm:$0xff]
        %v833 = vrcp.pop %v825
        %v834 = vrcp.pop %v826
        %v835 = vrcp.pop %v827
        %v836 = vrcp.pop %v828
        %v837 = vrcp.pop %v829
        %v838 = vrcp.pop %v830
        %v839 = vrcp.pop %v831
        %v840 = vrcp.pop %v832
        %842 = vset.pattern.permute.xlu0 0
        %843 = vperm.xlu0 %842, %v833
        %v844 = vpop.permute.xlu0 %843
        %847 = vset.pattern.permute.xlu0 0
        %848 = vperm.xlu0 %847, %v834
        %v849 = vpop.permute.xlu0 %848
        %852 = vset.pattern.permute.xlu0 0
        %853 = vperm.xlu0 %852, %v835
        %v854 = vpop.permute.xlu0 %853
        %857 = vset.pattern.permute.xlu0 0
        %858 = vperm.xlu0 %857, %v836
        %v859 = vpop.permute.xlu0 %858
        %862 = vset.pattern.permute.xlu0 0
        %863 = vperm.xlu0 %862, %v837
        %v864 = vpop.permute.xlu0 %863
        %867 = vset.pattern.permute.xlu0 0
        %868 = vperm.xlu0 %867, %v838
        %v869 = vpop.permute.xlu0 %868
        %872 = vset.pattern.permute.xlu0 0
        %873 = vperm.xlu0 %872, %v839
        %v874 = vpop.permute.xlu0 %873
        %877 = vset.pattern.permute.xlu0 0
        %878 = vperm.xlu0 %877, %v840
        %v879 = vpop.permute.xlu0 %878
        %v881 = vmul.f32 %v817, %v844
        %v882 = vmul.f32 %v818, %v849
        %v883 = vmul.f32 %v819, %v854
        %v884 = vmul.f32 %v820, %v859
        %v885 = vmul.f32 %v821, %v864
        %v886 = vmul.f32 %v822, %v869
        %v887 = vmul.f32 %v823, %v874
        %v888 = vmul.f32 %v824, %v879
        %v889 = vpack.c.bf16 %v882, %v881
        %v890 = vpack.c.bf16 %v884, %v883
        %v891 = vpack.c.bf16 %v886, %v885
        %v892 = vpack.c.bf16 %v888, %v887
        %v897 = vunpack.c.l.b16 %v889
        %v898 = vunpack.c.h.b16 %v889
        %v899 = vunpack.c.l.b16 %v890
        %v900 = vunpack.c.h.b16 %v890
        %v901 = vunpack.c.l.b16 %v891
        %v902 = vunpack.c.h.b16 %v891
        %v903 = vunpack.c.l.b16 %v892
        %v904 = vunpack.c.h.b16 %v892
        %v905 = vpack.c.b16 %v897, %v897
        %v906 = vpack.c.b16 %v898, %v898
        %v907 = vpack.c.b16 %v899, %v899
        %v908 = vpack.c.b16 %v900, %v900
        %v909 = vpack.c.b16 %v901, %v901
        %v910 = vpack.c.b16 %v902, %v902
        %v911 = vpack.c.b16 %v903, %v903
        %v912 = vpack.c.b16 %v904, %v904
        %vm921 = vcmask 257024
        %922 = vst.msk [vmem:[%s319] sm:$0xf] %vm921, %v905
        %923 = vst.msk [vmem:[%s319 + $0x4] sm:$0xf] %vm921, %v906
        %924 = vst.msk [vmem:[%s319 + $0x8] sm:$0xf] %vm921, %v907
        %925 = vst.msk [vmem:[%s319 + $0xc] sm:$0xf] %vm921, %v908
        %926 = vst.msk [vmem:[%s319 + $0x10] sm:$0xf] %vm921, %v909
        %927 = vst.msk [vmem:[%s319 + $0x14] sm:$0xf] %vm921, %v910
        %928 = vst.msk [vmem:[%s319 + $0x18] sm:$0xf] %vm921, %v911
        %929 = vst.msk [vmem:[%s319 + $0x1c] sm:$0xf] %vm921, %v912
      $region40: #{tcformer_forward.35} parent=31 // pred_fallthru
        _
      %s930 = smul.u32 8, %s22
      %p931 = scmp.lt.s32.totalorder %s20, 1
      %s932 = scalar_select %p931, %s20, 1
      %p933 = scmp.lt.s32.totalorder %s930, 7
      %s934 = scalar_select %p933, %s930, 7
      %p935 = scmp.lt.s32.totalorder %s21, 0
      %s936 = scalar_select %p935, %s21, 0
      %s937 = sadd.s32 %s936, %s934
      %s938 = smul.addr %s932, 8
      %s939 = sadd.s32 %s937, %s938
      %s940 = smul.addr %s939, 4
      %s941 = scalar_lea.vmem %s3, %s940
      // Predicated region
      $region41: #{tcformer_forward.35} parent=31 // pred_check
        %p942 = pneg %p152
      $region42: #{tcformer_forward.35} parent=31 // pred_check_branch
        %944 = sbr.rel (%p942) target = $region44
      $region43: #{tcformer_forward.35} parent=31 // pred_region
        %s945 = smul.u32 8, %s22
      $region44: #{tcformer_forward.35} parent=31 // pred_fallthru
        _
    $region32: #{tcformer_forward.35} parent=5 // pred_fallthru
      _
    %p946 = scmp.le.s32.totalorder 2, %s9
    // Predicated region
    $region45: #{tcformer_forward.35} parent=5 // pred_check
      %p947 = pneg %p946
    $region46: #{tcformer_forward.35} parent=5 // pred_check_branch
      %949 = sbr.rel (%p947) target = $region48
    $region47: #{tcformer_forward.35} parent=5 // pred_region
      %s950 = ssub.s32 %s9, 2
      // Predicated region
      $region49: #{tcformer_forward.35} parent=47 // pred_check
        %p951 = pneg %p158
      $region50: #{tcformer_forward.35} parent=47 // pred_check_branch
        %953 = sbr.rel (%p951) target = $region52
      $region51: #{tcformer_forward.35} parent=47 // pred_region
        %s954 = smul.u32 8, %s26
        %p955 = scmp.lt.s32.totalorder %s24, 1
        %s956 = scalar_select %p955, %s24, 1
        %p957 = scmp.lt.s32.totalorder %s954, 7
        %s958 = scalar_select %p957, %s954, 7
        %p959 = scmp.lt.s32.totalorder %s25, 0
        %s960 = scalar_select %p959, %s25, 0
        %s961 = sadd.s32 %s960, %s958
        %s962 = smul.addr %s956, 8
        %s963 = sadd.s32 %s961, %s962
        %s964 = smul.addr %s963, 4
        %s965 = scalar_lea.vmem %s3, %s964
      $region52: #{tcformer_forward.35} parent=47 // pred_fallthru
        _
    $region48: #{tcformer_forward.35} parent=5 // pred_fallthru
      _
  $region6: #{tcformer_forward.35} parent=0 // loop_footer
    %s13 = sadd.s32 1, %s9
  $region7: #{tcformer_forward.35} parent=0 // loop_footer_branch
    %8 = sbr.rel target = $region3
  $region8: #{tcformer_forward.35} parent=0 // loop_exit
    _

// kernel: tcformer_forward.36
$region0: #{tcformer_forward.36}
  #allocation0 [shape = 'u32[]', space=smem, size = 0x4, offset = 0x4, fixed_abs, tag = 'smem constant byte address 0x4 - core index']
  #allocation1 [shape = 'u32[144,128]{1,0:T(1,128)}', space=vmem, size = 0x12000, scoped, tag = 'internal scratch']
  #allocation2 [shape = 'f32[128,32]{1,0:T(8,128)}', space=vmem, size = 0x10000, scoped, tag = 'scratch operand']
  %s0 = inlined_call_operand.vmem [shape: bf16[128,32], index: 0, kind: input, shape index: {}]
  %s1 = inlined_call_operand.vmem [shape: bf16[32,32], index: 1, kind: input, shape index: {}]
  %s2 = inlined_call_operand.vmem [shape: f32[1,32], index: 2, kind: input, shape index: {}]
  %s3 = inlined_call_operand.vmem [shape: bf16[128,32], index: 3, kind: input, shape index: {}]
  %s4 = inlined_call_operand.vmem [shape: bf16[128,32], index: 4, kind: output, shape index: {}]
  %s5 = sld [smem:[#allocation0]]
  $region34: #{tcformer_forward.36} parent=0
    _
  %s7 = ssub.s32 1, %s5
  %s8 = scalar_select 0, %s7, %s5
  // Predicated region
  $region2: #{tcformer_forward.36} parent=0 // pred_check
    _
  $region3: #{tcformer_forward.36} parent=0 // pred_check_branch
    %10 = sbr.rel (0) target = $region5
  $region4: #{tcformer_forward.36} parent=0 // pred_region
    _
  $region5: #{tcformer_forward.36} parent=0 // pred_fallthru
    _
  // Predicated region
  $region6: #{tcformer_forward.36} parent=0 // pred_check
    _
  $region7: #{tcformer_forward.36} parent=0 // pred_check_branch
    %12 = sbr.rel (0) target = $region9
  $region8: #{tcformer_forward.36} parent=0 // pred_region
    _
  $region9: #{tcformer_forward.36} parent=0 // pred_fallthru
    _
  // Predicated region
  $region10: #{tcformer_forward.36} parent=0 // pred_check
    _
  $region11: #{tcformer_forward.36} parent=0 // pred_check_branch
    %14 = sbr.rel (0) target = $region13
  $region12: #{tcformer_forward.36} parent=0 // pred_region
    _
  $region13: #{tcformer_forward.36} parent=0 // pred_fallthru
    _
  // Predicated region
  $region14: #{tcformer_forward.36} parent=0 // pred_check
    _
  $region15: #{tcformer_forward.36} parent=0 // pred_check_branch
    %16 = sbr.rel (0) target = $region17
  $region16: #{tcformer_forward.36} parent=0 // pred_region
    _
  $region17: #{tcformer_forward.36} parent=0 // pred_fallthru
    _
  %p18 = scmp.eq.s32.totalorder 0, 0
  // Predicated region
  $region18: #{tcformer_forward.36} parent=0 // pred_check
    %p19 = pneg %p18
  $region19: #{tcformer_forward.36} parent=0 // pred_check_branch
    %21 = sbr.rel (%p19) target = $region21
  $region20: #{tcformer_forward.36} parent=0 // pred_region
    %vm22 = vcmask 261120
    %23 = vst.msk [vmem:[#allocation2] sm:$0xff] %vm22, 0.0
    %24 = vst.msk [vmem:[#allocation2 + $0x8] sm:$0xff] %vm22, 0.0
    %25 = vst.msk [vmem:[#allocation2 + $0x10] sm:$0xff] %vm22, 0.0
    %26 = vst.msk [vmem:[#allocation2 + $0x18] sm:$0xff] %vm22, 0.0
    %27 = vst.msk [vmem:[#allocation2 + $0x20] sm:$0xff] %vm22, 0.0
    %28 = vst.msk [vmem:[#allocation2 + $0x28] sm:$0xff] %vm22, 0.0
    %29 = vst.msk [vmem:[#allocation2 + $0x30] sm:$0xff] %vm22, 0.0
    %30 = vst.msk [vmem:[#allocation2 + $0x38] sm:$0xff] %vm22, 0.0
    %31 = vst.msk [vmem:[#allocation2 + $0x40] sm:$0xff] %vm22, 0.0
    %32 = vst.msk [vmem:[#allocation2 + $0x48] sm:$0xff] %vm22, 0.0
    %33 = vst.msk [vmem:[#allocation2 + $0x50] sm:$0xff] %vm22, 0.0
    %34 = vst.msk [vmem:[#allocation2 + $0x58] sm:$0xff] %vm22, 0.0
    %35 = vst.msk [vmem:[#allocation2 + $0x60] sm:$0xff] %vm22, 0.0
    %36 = vst.msk [vmem:[#allocation2 + $0x68] sm:$0xff] %vm22, 0.0
    %37 = vst.msk [vmem:[#allocation2 + $0x70] sm:$0xff] %vm22, 0.0
    %38 = vst.msk [vmem:[#allocation2 + $0x78] sm:$0xff] %vm22, 0.0
  $region21: #{tcformer_forward.36} parent=0 // pred_fallthru
    _
  %v39 = vld [vmem:[#allocation2] sm:$0xff]
  %v40 = vld [vmem:[#allocation2 + $0x8] sm:$0xff]
  %v41 = vld [vmem:[#allocation2 + $0x10] sm:$0xff]
  %v42 = vld [vmem:[#allocation2 + $0x18] sm:$0xff]
  %v43 = vld [vmem:[#allocation2 + $0x20] sm:$0xff]
  %v44 = vld [vmem:[#allocation2 + $0x28] sm:$0xff]
  %v45 = vld [vmem:[#allocation2 + $0x30] sm:$0xff]
  %v46 = vld [vmem:[#allocation2 + $0x38] sm:$0xff]
  %v47 = vld [vmem:[#allocation2 + $0x40] sm:$0xff]
  %v48 = vld [vmem:[#allocation2 + $0x48] sm:$0xff]
  %v49 = vld [vmem:[#allocation2 + $0x50] sm:$0xff]
  %v50 = vld [vmem:[#allocation2 + $0x58] sm:$0xff]
  %v51 = vld [vmem:[#allocation2 + $0x60] sm:$0xff]
  %v52 = vld [vmem:[#allocation2 + $0x68] sm:$0xff]
  %v53 = vld [vmem:[#allocation2 + $0x70] sm:$0xff]
  %v54 = vld [vmem:[#allocation2 + $0x78] sm:$0xff]
  %v55 = vld [vmem:[%s0] sm:$0xf]
  %v56 = vld [vmem:[%s0 + $0x4] sm:$0xf]
  %v57 = vld [vmem:[%s0 + $0x8] sm:$0xf]
  %v58 = vld [vmem:[%s0 + $0xc] sm:$0xf]
  %v59 = vld [vmem:[%s0 + $0x10] sm:$0xf]
  %v60 = vld [vmem:[%s0 + $0x14] sm:$0xf]
  %v61 = vld [vmem:[%s0 + $0x18] sm:$0xf]
  %v62 = vld [vmem:[%s0 + $0x1c] sm:$0xf]
  %v63 = vld [vmem:[%s0 + $0x20] sm:$0xf]
  %v64 = vld [vmem:[%s0 + $0x24] sm:$0xf]
  %v65 = vld [vmem:[%s0 + $0x28] sm:$0xf]
  %v66 = vld [vmem:[%s0 + $0x2c] sm:$0xf]
  %v67 = vld [vmem:[%s0 + $0x30] sm:$0xf]
  %v68 = vld [vmem:[%s0 + $0x34] sm:$0xf]
  %v69 = vld [vmem:[%s0 + $0x38] sm:$0xf]
  %v70 = vld [vmem:[%s0 + $0x3c] sm:$0xf]
  %v71 = vld [vmem:[%s1] sm:$0xf]
  %v72 = vld [vmem:[%s1 + $0x4] sm:$0xf]
  %v73 = vld [vmem:[%s1 + $0x8] sm:$0xf]
  %v74 = vld [vmem:[%s1 + $0xc] sm:$0xf]
  %v91 = vunpack.c.l.b16 %v55
  %v92 = vunpack.c.l.b16 %v56
  %v93 = vunpack.c.l.b16 %v57
  %v94 = vunpack.c.l.b16 %v58
  %v95 = vunpack.c.l.b16 %v59
  %v96 = vunpack.c.l.b16 %v60
  %v97 = vunpack.c.l.b16 %v61
  %v98 = vunpack.c.l.b16 %v62
  %v99 = vunpack.c.l.b16 %v63
  %v100 = vunpack.c.l.b16 %v64
  %v101 = vunpack.c.l.b16 %v65
  %v102 = vunpack.c.l.b16 %v66
  %v103 = vunpack.c.l.b16 %v67
  %v104 = vunpack.c.l.b16 %v68
  %v105 = vunpack.c.l.b16 %v69
  %v106 = vunpack.c.l.b16 %v70
  %v107 = vpack.c.b16 %v92, %v91
  %v108 = vpack.c.b16 %v94, %v93
  %v109 = vpack.c.b16 %v96, %v95
  %v110 = vpack.c.b16 %v98, %v97
  %v111 = vpack.c.b16 %v100, %v99
  %v112 = vpack.c.b16 %v102, %v101
  %v113 = vpack.c.b16 %v104, %v103
  %v114 = vpack.c.b16 %v106, %v105
  %v119 = vunpack.c.l.b16 %v71
  %v120 = vunpack.c.l.b16 %v72
  %v121 = vunpack.c.l.b16 %v73
  %v122 = vunpack.c.l.b16 %v74
  %v123 = vpack.c.b16 %v120, %v119
  %v124 = vpack.c.b16 %v122, %v121
  %vm127 = vcmask 261120
  %v129 = vsel %vm127, %v107, 0
  %v132 = vsel %vm127, %v108, 0
  %v135 = vsel %vm127, %v109, 0
  %v138 = vsel %vm127, %v110, 0
  %v141 = vsel %vm127, %v111, 0
  %v144 = vsel %vm127, %v112, 0
  %v147 = vsel %vm127, %v113, 0
  %v150 = vsel %vm127, %v114, 0
  %152 = vmatprep.subr.bf16.mxu0 0
  %153 = vmatpush1.bf16.msra.mxu0 %v123
  %154 = vmatprep.subr.bf16.mxu0 0
  %155 = vmatpush1.bf16.msra.mxu0 %v124
  %156 = vmatprep.subr.bf16.mxu0 0
  %157 = vmatpush1.bf16.msra.mxu0 0
  %158 = vmatprep.subr.bf16.mxu0 0
  %159 = vmatpush1.bf16.msra.mxu0 0
  %160 = vmatprep.subr.bf16.mxu0 0
  %161 = vmatpush1.bf16.msra.mxu0 0
  %162 = vmatprep.subr.bf16.mxu0 0
  %163 = vmatpush1.bf16.msra.mxu0 0
  %164 = vmatprep.subr.bf16.mxu0 0
  %165 = vmatpush1.bf16.msra.mxu0 0
  %166 = vmatprep.subr.bf16.mxu0 0
  %167 = vmatpush1.bf16.msra.mxu0 0
  %168 = vmatprep.subr.bf16.mxu0 0
  %169 = vmatpush1.bf16.msra.mxu0 0
  %170 = vmatprep.subr.bf16.mxu0 0
  %171 = vmatpush1.bf16.msra.mxu0 0
  %172 = vmatprep.subr.bf16.mxu0 0
  %173 = vmatpush1.bf16.msra.mxu0 0
  %174 = vmatprep.subr.bf16.mxu0 0
  %175 = vmatpush1.bf16.msra.mxu0 0
  %176 = vmatprep.subr.bf16.mxu0 0
  %177 = vmatpush1.bf16.msra.mxu0 0
  %178 = vmatprep.subr.bf16.mxu0 0
  %179 = vmatpush1.bf16.msra.mxu0 0
  %180 = vmatprep.subr.bf16.mxu0 0
  %181 = vmatpush1.bf16.msra.mxu0 0
  %182 = vmatprep.subr.bf16.mxu0 0
  %183 = vmatpush1.bf16.msra.mxu0 0
  %184 = vmatprep.mubr.bf16.mxu0 0
  %185 = vmatmul.mubr.bf16.gmra.mrb[0].mxu0 %v129
  %v186 = vpop.f32.mrb[0].mxu0
  %v187 = vadd.f32 0.0, %v186
  %v188 = vpop.f32.mrb[0].mxu0
  %v189 = vpop.f32.mrb[0].mxu0
  %v190 = vadd.f32 0.0, %v189
  %v191 = vpop.f32.mrb[0].mxu0
  %192 = vmatprep.mubr.bf16.mxu0 0
  %193 = vmatmul.mubr.bf16.gmra.mrb[0].mxu0 %v132
  %v194 = vpop.f32.mrb[0].mxu0
  %v195 = vadd.f32 0.0, %v194
  %v196 = vpop.f32.mrb[0].mxu0
  %v197 = vpop.f32.mrb[0].mxu0
  %v198 = vadd.f32 0.0, %v197
  %v199 = vpop.f32.mrb[0].mxu0
  %200 = vmatprep.mubr.bf16.mxu0 0
  %201 = vmatmul.mubr.bf16.gmra.mrb[0].mxu0 %v135
  %v202 = vpop.f32.mrb[0].mxu0
  %v203 = vadd.f32 0.0, %v202
  %v204 = vpop.f32.mrb[0].mxu0
  %v205 = vpop.f32.mrb[0].mxu0
  %v206 = vadd.f32 0.0, %v205
  %v207 = vpop.f32.mrb[0].mxu0
  %208 = vmatprep.mubr.bf16.mxu0 0
  %209 = vmatmul.mubr.bf16.gmra.mrb[0].mxu0 %v138
  %v210 = vpop.f32.mrb[0].mxu0
  %v211 = vadd.f32 0.0, %v210
  %v212 = vpop.f32.mrb[0].mxu0
  %v213 = vpop.f32.mrb[0].mxu0
  %v214 = vadd.f32 0.0, %v213
  %v215 = vpop.f32.mrb[0].mxu0
  %216 = vmatprep.mubr.bf16.mxu0 0
  %217 = vmatmul.mubr.bf16.gmra.mrb[0].mxu0 %v141
  %v218 = vpop.f32.mrb[0].mxu0
  %v219 = vadd.f32 0.0, %v218
  %v220 = vpop.f32.mrb[0].mxu0
  %v221 = vpop.f32.mrb[0].mxu0
  %v222 = vadd.f32 0.0, %v221
  %v223 = vpop.f32.mrb[0].mxu0
  %224 = vmatprep.mubr.bf16.mxu0 0
  %225 = vmatmul.mubr.bf16.gmra.mrb[0].mxu0 %v144
  %v226 = vpop.f32.mrb[0].mxu0
  %v227 = vadd.f32 0.0, %v226
  %v228 = vpop.f32.mrb[0].mxu0
  %v229 = vpop.f32.mrb[0].mxu0
  %v230 = vadd.f32 0.0, %v229
  %v231 = vpop.f32.mrb[0].mxu0
  %232 = vmatprep.mubr.bf16.mxu0 0
  %233 = vmatmul.mubr.bf16.gmra.mrb[0].mxu0 %v147
  %v234 = vpop.f32.mrb[0].mxu0
  %v235 = vadd.f32 0.0, %v234
  %v236 = vpop.f32.mrb[0].mxu0
  %v237 = vpop.f32.mrb[0].mxu0
  %v238 = vadd.f32 0.0, %v237
  %v239 = vpop.f32.mrb[0].mxu0
  %240 = vmatprep.mubr.bf16.mxu0 0
  %241 = vmatmul.mubr.bf16.gmra.mrb[0].mxu0 %v150
  %v242 = vpop.f32.mrb[0].mxu0
  %v243 = vadd.f32 0.0, %v242
  %v244 = vpop.f32.mrb[0].mxu0
  %v245 = vpop.f32.mrb[0].mxu0
  %v246 = vadd.f32 0.0, %v245
  %v247 = vpop.f32.mrb[0].mxu0
  %248 = vdwg.mxu0
  %v249 = vadd.f32 %v39, %v187
  %v250 = vadd.f32 %v40, %v190
  %v251 = vadd.f32 %v41, %v195
  %v252 = vadd.f32 %v42, %v198
  %v253 = vadd.f32 %v43, %v203
  %v254 = vadd.f32 %v44, %v206
  %v255 = vadd.f32 %v45, %v211
  %v256 = vadd.f32 %v46, %v214
  %v257 = vadd.f32 %v47, %v219
  %v258 = vadd.f32 %v48, %v222
  %v259 = vadd.f32 %v49, %v227
  %v260 = vadd.f32 %v50, %v230
  %v261 = vadd.f32 %v51, %v235
  %v262 = vadd.f32 %v52, %v238
  %v263 = vadd.f32 %v53, %v243
  %v264 = vadd.f32 %v54, %v246
  %265 = vst.msk [vmem:[#allocation2] sm:$0xff] %vm127, %v249
  %266 = vst.msk [vmem:[#allocation2 + $0x8] sm:$0xff] %vm127, %v250
  %267 = vst.msk [vmem:[#allocation2 + $0x10] sm:$0xff] %vm127, %v251
  %268 = vst.msk [vmem:[#allocation2 + $0x18] sm:$0xff] %vm127, %v252
  %269 = vst.msk [vmem:[#allocation2 + $0x20] sm:$0xff] %vm127, %v253
  %270 = vst.msk [vmem:[#allocation2 + $0x28] sm:$0xff] %vm127, %v254
  %271 = vst.msk [vmem:[#allocation2 + $0x30] sm:$0xff] %vm127, %v255
  %272 = vst.msk [vmem:[#allocation2 + $0x38] sm:$0xff] %vm127, %v256
  %273 = vst.msk [vmem:[#allocation2 + $0x40] sm:$0xff] %vm127, %v257
  %274 = vst.msk [vmem:[#allocation2 + $0x48] sm:$0xff] %vm127, %v258
  %275 = vst.msk [vmem:[#allocation2 + $0x50] sm:$0xff] %vm127, %v259
  %276 = vst.msk [vmem:[#allocation2 + $0x58] sm:$0xff] %vm127, %v260
  %277 = vst.msk [vmem:[#allocation2 + $0x60] sm:$0xff] %vm127, %v261
  %278 = vst.msk [vmem:[#allocation2 + $0x68] sm:$0xff] %vm127, %v262
  %279 = vst.msk [vmem:[#allocation2 + $0x70] sm:$0xff] %vm127, %v263
  %280 = vst.msk [vmem:[#allocation2 + $0x78] sm:$0xff] %vm127, %v264
  // Predicated region
  $region22: #{tcformer_forward.36} parent=0 // pred_check
    %p281 = pneg %p18
  $region23: #{tcformer_forward.36} parent=0 // pred_check_branch
    %283 = sbr.rel (%p281) target = $region25
  $region24: #{tcformer_forward.36} parent=0 // pred_region
    %v284 = vld [vmem:[#allocation2] sm:$0xff]
    %v285 = vld [vmem:[#allocation2 + $0x8] sm:$0xff]
    %v286 = vld [vmem:[#allocation2 + $0x10] sm:$0xff]
    %v287 = vld [vmem:[#allocation2 + $0x18] sm:$0xff]
    %v288 = vld [vmem:[#allocation2 + $0x20] sm:$0xff]
    %v289 = vld [vmem:[#allocation2 + $0x28] sm:$0xff]
    %v290 = vld [vmem:[#allocation2 + $0x30] sm:$0xff]
    %v291 = vld [vmem:[#allocation2 + $0x38] sm:$0xff]
    %v292 = vld [vmem:[#allocation2 + $0x40] sm:$0xff]
    %v293 = vld [vmem:[#allocation2 + $0x48] sm:$0xff]
    %v294 = vld [vmem:[#allocation2 + $0x50] sm:$0xff]
    %v295 = vld [vmem:[#allocation2 + $0x58] sm:$0xff]
    %v296 = vld [vmem:[#allocation2 + $0x60] sm:$0xff]
    %v297 = vld [vmem:[#allocation2 + $0x68] sm:$0xff]
    %v298 = vld [vmem:[#allocation2 + $0x70] sm:$0xff]
    %v299 = vld [vmem:[#allocation2 + $0x78] sm:$0xff]
    %v300 = vld [vmem:[%s2] sm:$0x1]
    %v302 = vlaneseq
    %v303 = vshrl.u32 %v302, 7
    %v304 = vsub.s32 0, %v303
    %v305 = vrot.slane %v300, %v304
    %v307 = vadd.f32 %v284, %v305
    %v308 = vadd.f32 %v285, %v305
    %v309 = vadd.f32 %v286, %v305
    %v310 = vadd.f32 %v287, %v305
    %v311 = vadd.f32 %v288, %v305
    %v312 = vadd.f32 %v289, %v305
    %v313 = vadd.f32 %v290, %v305
    %v314 = vadd.f32 %v291, %v305
    %v315 = vadd.f32 %v292, %v305
    %v316 = vadd.f32 %v293, %v305
    %v317 = vadd.f32 %v294, %v305
    %v318 = vadd.f32 %v295, %v305
    %v319 = vadd.f32 %v296, %v305
    %v320 = vadd.f32 %v297, %v305
    %v321 = vadd.f32 %v298, %v305
    %v322 = vadd.f32 %v299, %v305
    %v323 = vld [vmem:[%s3] sm:$0xf]
    %v324 = vld [vmem:[%s3 + $0x4] sm:$0xf]
    %v325 = vld [vmem:[%s3 + $0x8] sm:$0xf]
    %v326 = vld [vmem:[%s3 + $0xc] sm:$0xf]
    %v327 = vld [vmem:[%s3 + $0x10] sm:$0xf]
    %v328 = vld [vmem:[%s3 + $0x14] sm:$0xf]
    %v329 = vld [vmem:[%s3 + $0x18] sm:$0xf]
    %v330 = vld [vmem:[%s3 + $0x1c] sm:$0xf]
    %v331 = vld [vmem:[%s3 + $0x20] sm:$0xf]
    %v332 = vld [vmem:[%s3 + $0x24] sm:$0xf]
    %v333 = vld [vmem:[%s3 + $0x28] sm:$0xf]
    %v334 = vld [vmem:[%s3 + $0x2c] sm:$0xf]
    %v335 = vld [vmem:[%s3 + $0x30] sm:$0xf]
    %v336 = vld [vmem:[%s3 + $0x34] sm:$0xf]
    %v337 = vld [vmem:[%s3 + $0x38] sm:$0xf]
    %v338 = vld [vmem:[%s3 + $0x3c] sm:$0xf]
    %v339 = vunpack.c.l.bf16 %v323
    %v340 = vunpack.c.l.bf16 %v324
    %v341 = vunpack.c.l.bf16 %v325
    %v342 = vunpack.c.l.bf16 %v326
    %v343 = vunpack.c.l.bf16 %v327
    %v344 = vunpack.c.l.bf16 %v328
    %v345 = vunpack.c.l.bf16 %v329
    %v346 = vunpack.c.l.bf16 %v330
    %v347 = vunpack.c.l.bf16 %v331
    %v348 = vunpack.c.l.bf16 %v332
    %v349 = vunpack.c.l.bf16 %v333
    %v350 = vunpack.c.l.bf16 %v334
    %v351 = vunpack.c.l.bf16 %v335
    %v352 = vunpack.c.l.bf16 %v336
    %v353 = vunpack.c.l.bf16 %v337
    %v354 = vunpack.c.l.bf16 %v338
    %v355 = vadd.f32 %v307, %v339
    %v356 = vadd.f32 %v308, %v340
    %v357 = vadd.f32 %v309, %v341
    %v358 = vadd.f32 %v310, %v342
    %v359 = vadd.f32 %v311, %v343
    %v360 = vadd.f32 %v312, %v344
    %v361 = vadd.f32 %v313, %v345
    %v362 = vadd.f32 %v314, %v346
    %v363 = vadd.f32 %v315, %v347
    %v364 = vadd.f32 %v316, %v348
    %v365 = vadd.f32 %v317, %v349
    %v366 = vadd.f32 %v318, %v350
    %v367 = vadd.f32 %v319, %v351
    %v368 = vadd.f32 %v320, %v352
    %v369 = vadd.f32 %v321, %v353
    %v370 = vadd.f32 %v322, %v354
    %v371 = vpack.c.bf16 %v356, %v355
    %v372 = vpack.c.bf16 %v358, %v357
    %v373 = vpack.c.bf16 %v360, %v359
    %v374 = vpack.c.bf16 %v362, %v361
    %v375 = vpack.c.bf16 %v364, %v363
    %v376 = vpack.c.bf16 %v366, %v365
    %v377 = vpack.c.bf16 %v368, %v367
    %v378 = vpack.c.bf16 %v370, %v369
    %v387 = vunpack.c.l.b16 %v371
    %v388 = vunpack.c.h.b16 %v371
    %v389 = vunpack.c.l.b16 %v372
    %v390 = vunpack.c.h.b16 %v372
    %v391 = vunpack.c.l.b16 %v373
    %v392 = vunpack.c.h.b16 %v373
    %v393 = vunpack.c.l.b16 %v374
    %v394 = vunpack.c.h.b16 %v374
    %v395 = vunpack.c.l.b16 %v375
    %v396 = vunpack.c.h.b16 %v375
    %v397 = vunpack.c.l.b16 %v376
    %v398 = vunpack.c.h.b16 %v376
    %v399 = vunpack.c.l.b16 %v377
    %v400 = vunpack.c.h.b16 %v377
    %v401 = vunpack.c.l.b16 %v378
    %v402 = vunpack.c.h.b16 %v378
    %v403 = vpack.c.b16 %v387, %v387
    %v404 = vpack.c.b16 %v388, %v388
    %v405 = vpack.c.b16 %v389, %v389
    %v406 = vpack.c.b16 %v390, %v390
    %v407 = vpack.c.b16 %v391, %v391
    %v408 = vpack.c.b16 %v392, %v392
    %v409 = vpack.c.b16 %v393, %v393
    %v410 = vpack.c.b16 %v394, %v394
    %v411 = vpack.c.b16 %v395, %v395
    %v412 = vpack.c.b16 %v396, %v396
    %v413 = vpack.c.b16 %v397, %v397
    %v414 = vpack.c.b16 %v398, %v398
    %v415 = vpack.c.b16 %v399, %v399
    %v416 = vpack.c.b16 %v400, %v400
    %v417 = vpack.c.b16 %v401, %v401
    %v418 = vpack.c.b16 %v402, %v402
    %vm435 = vcmask 257024
    %436 = vst.msk [vmem:[%s4] sm:$0xf] %vm435, %v403
    %437 = vst.msk [vmem:[%s4 + $0x4] sm:$0xf] %vm435, %v404
    %438 = vst.msk [vmem:[%s4 + $0x8] sm:$0xf] %vm435, %v405
    %439 = vst.msk [vmem:[%s4 + $0xc] sm:$0xf] %vm435, %v406
    %440 = vst.msk [vmem:[%s4 + $0x10] sm:$0xf] %vm435, %v407
    %441 = vst.msk [vmem:[%s4 + $0x14] sm:$0xf] %vm435, %v408
    %442 = vst.msk [vmem:[%s4 + $0x18] sm:$0xf] %vm435, %v409
    %443 = vst.msk [vmem:[%s4 + $0x1c] sm:$0xf] %vm435, %v410
    %444 = vst.msk [vmem:[%s4 + $0x20] sm:$0xf] %vm435, %v411
    %445 = vst.msk [vmem:[%s4 + $0x24] sm:$0xf] %vm435, %v412
    %446 = vst.msk [vmem:[%s4 + $0x28] sm:$0xf] %vm435, %v413
    %447 = vst.msk [vmem:[%s4 + $0x2c] sm:$0xf] %vm435, %v414
    %448 = vst.msk [vmem:[%s4 + $0x30] sm:$0xf] %vm435, %v415
    %449 = vst.msk [vmem:[%s4 + $0x34] sm:$0xf] %vm435, %v416
    %450 = vst.msk [vmem:[%s4 + $0x38] sm:$0xf] %vm435, %v417
    %451 = vst.msk [vmem:[%s4 + $0x3c] sm:$0xf] %vm435, %v418
  $region25: #{tcformer_forward.36} parent=0 // pred_fallthru
    _
  // Predicated region
  $region26: #{tcformer_forward.36} parent=0 // pred_check
    _
  $region27: #{tcformer_forward.36} parent=0 // pred_check_branch
    %453 = sbr.rel (0) target = $region29
  $region28: #{tcformer_forward.36} parent=0 // pred_region
    _
  $region29: #{tcformer_forward.36} parent=0 // pred_fallthru
    _
  // Predicated region
  $region30: #{tcformer_forward.36} parent=0 // pred_check
    _
  $region31: #{tcformer_forward.36} parent=0 // pred_check_branch
    %455 = sbr.rel (0) target = $region33
  $region32: #{tcformer_forward.36} parent=0 // pred_region
    _
  $region33: #{tcformer_forward.36} parent=0 // pred_fallthru
    _

// kernel: tcformer_forward.38
$region0: #{tcformer_forward.38}
  #allocation0 [shape = 'u32[]', space=smem, size = 0x4, offset = 0x4, fixed_abs, tag = 'smem constant byte address 0x4 - core index']
  #allocation1 [shape = 'u32[144,128]{1,0:T(1,128)}', space=vmem, size = 0x12000, scoped, tag = 'internal scratch']
  #allocation2 [shape = 'f32[128,128]{1,0:T(8,128)}', space=vmem, size = 0x10000, scoped, tag = 'scratch operand']
  %s0 = inlined_call_operand.vmem [shape: bf16[128,32], index: 0, kind: input, shape index: {}]
  %s1 = inlined_call_operand.vmem [shape: bf16[32,128], index: 1, kind: input, shape index: {}]
  %s2 = inlined_call_operand.vmem [shape: f32[1,128], index: 2, kind: input, shape index: {}]
  %s3 = inlined_call_operand.vmem [shape: bf16[128,128], index: 3, kind: output, shape index: {}]
  %s4 = sld [smem:[#allocation0]]
  $region30: #{tcformer_forward.38} parent=0
    _
  %s6 = ssub.s32 1, %s4
  %s7 = scalar_select 0, %s6, %s4
  // Predicated region
  $region2: #{tcformer_forward.38} parent=0 // pred_check
    _
  $region3: #{tcformer_forward.38} parent=0 // pred_check_branch
    %9 = sbr.rel (0) target = $region5
  $region4: #{tcformer_forward.38} parent=0 // pred_region
    _
  $region5: #{tcformer_forward.38} parent=0 // pred_fallthru
    _
  // Predicated region
  $region6: #{tcformer_forward.38} parent=0 // pred_check
    _
  $region7: #{tcformer_forward.38} parent=0 // pred_check_branch
    %11 = sbr.rel (0) target = $region9
  $region8: #{tcformer_forward.38} parent=0 // pred_region
    _
  $region9: #{tcformer_forward.38} parent=0 // pred_fallthru
    _
  // Predicated region
  $region10: #{tcformer_forward.38} parent=0 // pred_check
    _
  $region11: #{tcformer_forward.38} parent=0 // pred_check_branch
    %13 = sbr.rel (0) target = $region13
  $region12: #{tcformer_forward.38} parent=0 // pred_region
    _
  $region13: #{tcformer_forward.38} parent=0 // pred_fallthru
    _
  %p15 = scmp.eq.s32.totalorder 0, 0
  // Predicated region
  $region14: #{tcformer_forward.38} parent=0 // pred_check
    %p16 = pneg %p15
  $region15: #{tcformer_forward.38} parent=0 // pred_check_branch
    %18 = sbr.rel (%p16) target = $region17
  $region16: #{tcformer_forward.38} parent=0 // pred_region
    %19 = vst [vmem:[#allocation2] sm:$0xff] 0.0
    %20 = vst [vmem:[#allocation2 + $0x8] sm:$0xff] 0.0
    %21 = vst [vmem:[#allocation2 + $0x10] sm:$0xff] 0.0
    %22 = vst [vmem:[#allocation2 + $0x18] sm:$0xff] 0.0
    %23 = vst [vmem:[#allocation2 + $0x20] sm:$0xff] 0.0
    %24 = vst [vmem:[#allocation2 + $0x28] sm:$0xff] 0.0
    %25 = vst [vmem:[#allocation2 + $0x30] sm:$0xff] 0.0
    %26 = vst [vmem:[#allocation2 + $0x38] sm:$0xff] 0.0
    %27 = vst [vmem:[#allocation2 + $0x40] sm:$0xff] 0.0
    %28 = vst [vmem:[#allocation2 + $0x48] sm:$0xff] 0.0
    %29 = vst [vmem:[#allocation2 + $0x50] sm:$0xff] 0.0
    %30 = vst [vmem:[#allocation2 + $0x58] sm:$0xff] 0.0
    %31 = vst [vmem:[#allocation2 + $0x60] sm:$0xff] 0.0
    %32 = vst [vmem:[#allocation2 + $0x68] sm:$0xff] 0.0
    %33 = vst [vmem:[#allocation2 + $0x70] sm:$0xff] 0.0
    %34 = vst [vmem:[#allocation2 + $0x78] sm:$0xff] 0.0
  $region17: #{tcformer_forward.38} parent=0 // pred_fallthru
    _
  %v35 = vld [vmem:[#allocation2] sm:$0xff]
  %v36 = vld [vmem:[#allocation2 + $0x8] sm:$0xff]
  %v37 = vld [vmem:[#allocation2 + $0x10] sm:$0xff]
  %v38 = vld [vmem:[#allocation2 + $0x18] sm:$0xff]
  %v39 = vld [vmem:[#allocation2 + $0x20] sm:$0xff]
  %v40 = vld [vmem:[#allocation2 + $0x28] sm:$0xff]
  %v41 = vld [vmem:[#allocation2 + $0x30] sm:$0xff]
  %v42 = vld [vmem:[#allocation2 + $0x38] sm:$0xff]
  %v43 = vld [vmem:[#allocation2 + $0x40] sm:$0xff]
  %v44 = vld [vmem:[#allocation2 + $0x48] sm:$0xff]
  %v45 = vld [vmem:[#allocation2 + $0x50] sm:$0xff]
  %v46 = vld [vmem:[#allocation2 + $0x58] sm:$0xff]
  %v47 = vld [vmem:[#allocation2 + $0x60] sm:$0xff]
  %v48 = vld [vmem:[#allocation2 + $0x68] sm:$0xff]
  %v49 = vld [vmem:[#allocation2 + $0x70] sm:$0xff]
  %v50 = vld [vmem:[#allocation2 + $0x78] sm:$0xff]
  %v51 = vld [vmem:[%s0] sm:$0xf]
  %v52 = vld [vmem:[%s0 + $0x4] sm:$0xf]
  %v53 = vld [vmem:[%s0 + $0x8] sm:$0xf]
  %v54 = vld [vmem:[%s0 + $0xc] sm:$0xf]
  %v55 = vld [vmem:[%s0 + $0x10] sm:$0xf]
  %v56 = vld [vmem:[%s0 + $0x14] sm:$0xf]
  %v57 = vld [vmem:[%s0 + $0x18] sm:$0xf]
  %v58 = vld [vmem:[%s0 + $0x1c] sm:$0xf]
  %v59 = vld [vmem:[%s0 + $0x20] sm:$0xf]
  %v60 = vld [vmem:[%s0 + $0x24] sm:$0xf]
  %v61 = vld [vmem:[%s0 + $0x28] sm:$0xf]
  %v62 = vld [vmem:[%s0 + $0x2c] sm:$0xf]
  %v63 = vld [vmem:[%s0 + $0x30] sm:$0xf]
  %v64 = vld [vmem:[%s0 + $0x34] sm:$0xf]
  %v65 = vld [vmem:[%s0 + $0x38] sm:$0xf]
  %v66 = vld [vmem:[%s0 + $0x3c] sm:$0xf]
  %v67 = vld [vmem:[%s1] sm:$0xf]
  %v68 = vld [vmem:[%s1 + $0x4] sm:$0xf]
  %v69 = vld [vmem:[%s1 + $0x8] sm:$0xf]
  %v70 = vld [vmem:[%s1 + $0xc] sm:$0xf]
  %v87 = vunpack.c.l.b16 %v51
  %v88 = vunpack.c.l.b16 %v52
  %v89 = vunpack.c.l.b16 %v53
  %v90 = vunpack.c.l.b16 %v54
  %v91 = vunpack.c.l.b16 %v55
  %v92 = vunpack.c.l.b16 %v56
  %v93 = vunpack.c.l.b16 %v57
  %v94 = vunpack.c.l.b16 %v58
  %v95 = vunpack.c.l.b16 %v59
  %v96 = vunpack.c.l.b16 %v60
  %v97 = vunpack.c.l.b16 %v61
  %v98 = vunpack.c.l.b16 %v62
  %v99 = vunpack.c.l.b16 %v63
  %v100 = vunpack.c.l.b16 %v64
  %v101 = vunpack.c.l.b16 %v65
  %v102 = vunpack.c.l.b16 %v66
  %v103 = vpack.c.b16 %v88, %v87
  %v104 = vpack.c.b16 %v90, %v89
  %v105 = vpack.c.b16 %v92, %v91
  %v106 = vpack.c.b16 %v94, %v93
  %v107 = vpack.c.b16 %v96, %v95
  %v108 = vpack.c.b16 %v98, %v97
  %v109 = vpack.c.b16 %v100, %v99
  %v110 = vpack.c.b16 %v102, %v101
  %v115 = vunpack.c.l.b16 %v67
  %v116 = vunpack.c.l.b16 %v68
  %v117 = vunpack.c.l.b16 %v69
  %v118 = vunpack.c.l.b16 %v70
  %v119 = vpack.c.b16 %v116, %v115
  %v120 = vpack.c.b16 %v118, %v117
  %vm123 = vcmask 261120
  %v125 = vsel %vm123, %v103, 0
  %v128 = vsel %vm123, %v104, 0
  %v131 = vsel %vm123, %v105, 0
  %v134 = vsel %vm123, %v106, 0
  %v137 = vsel %vm123, %v107, 0
  %v140 = vsel %vm123, %v108, 0
  %v143 = vsel %vm123, %v109, 0
  %v146 = vsel %vm123, %v110, 0
  %148 = vmatprep.subr.bf16.mxu0 0
  %149 = vmatpush1.bf16.msra.mxu0 %v119
  %150 = vmatprep.subr.bf16.mxu0 0
  %151 = vmatpush1.bf16.msra.mxu0 %v120
  %152 = vmatprep.subr.bf16.mxu0 0
  %153 = vmatpush1.bf16.msra.mxu0 0
  %154 = vmatprep.subr.bf16.mxu0 0
  %155 = vmatpush1.bf16.msra.mxu0 0
  %156 = vmatprep.subr.bf16.mxu0 0
  %157 = vmatpush1.bf16.msra.mxu0 0
  %158 = vmatprep.subr.bf16.mxu0 0
  %159 = vmatpush1.bf16.msra.mxu0 0
  %160 = vmatprep.subr.bf16.mxu0 0
  %161 = vmatpush1.bf16.msra.mxu0 0
  %162 = vmatprep.subr.bf16.mxu0 0
  %163 = vmatpush1.bf16.msra.mxu0 0
  %164 = vmatprep.subr.bf16.mxu0 0
  %165 = vmatpush1.bf16.msra.mxu0 0
  %166 = vmatprep.subr.bf16.mxu0 0
  %167 = vmatpush1.bf16.msra.mxu0 0
  %168 = vmatprep.subr.bf16.mxu0 0
  %169 = vmatpush1.bf16.msra.mxu0 0
  %170 = vmatprep.subr.bf16.mxu0 0
  %171 = vmatpush1.bf16.msra.mxu0 0
  %172 = vmatprep.subr.bf16.mxu0 0
  %173 = vmatpush1.bf16.msra.mxu0 0
  %174 = vmatprep.subr.bf16.mxu0 0
  %175 = vmatpush1.bf16.msra.mxu0 0
  %176 = vmatprep.subr.bf16.mxu0 0
  %177 = vmatpush1.bf16.msra.mxu0 0
  %178 = vmatprep.subr.bf16.mxu0 0
  %179 = vmatpush1.bf16.msra.mxu0 0
  %180 = vmatprep.mubr.bf16.mxu0 0
  %181 = vmatmul.mubr.bf16.gmra.mrb[0].mxu0 %v125
  %v182 = vpop.f32.mrb[0].mxu0
  %v183 = vadd.f32 0.0, %v182
  %v184 = vpop.f32.mrb[0].mxu0
  %v185 = vpop.f32.mrb[0].mxu0
  %v186 = vadd.f32 0.0, %v185
  %v187 = vpop.f32.mrb[0].mxu0
  %188 = vmatprep.mubr.bf16.mxu0 0
  %189 = vmatmul.mubr.bf16.gmra.mrb[0].mxu0 %v128
  %v190 = vpop.f32.mrb[0].mxu0
  %v191 = vadd.f32 0.0, %v190
  %v192 = vpop.f32.mrb[0].mxu0
  %v193 = vpop.f32.mrb[0].mxu0
  %v194 = vadd.f32 0.0, %v193
  %v195 = vpop.f32.mrb[0].mxu0
  %196 = vmatprep.mubr.bf16.mxu0 0
  %197 = vmatmul.mubr.bf16.gmra.mrb[0].mxu0 %v131
  %v198 = vpop.f32.mrb[0].mxu0
  %v199 = vadd.f32 0.0, %v198
  %v200 = vpop.f32.mrb[0].mxu0
  %v201 = vpop.f32.mrb[0].mxu0
  %v202 = vadd.f32 0.0, %v201
  %v203 = vpop.f32.mrb[0].mxu0
  %204 = vmatprep.mubr.bf16.mxu0 0
  %205 = vmatmul.mubr.bf16.gmra.mrb[0].mxu0 %v134
  %v206 = vpop.f32.mrb[0].mxu0
  %v207 = vadd.f32 0.0, %v206
  %v208 = vpop.f32.mrb[0].mxu0
  %v209 = vpop.f32.mrb[0].mxu0
  %v210 = vadd.f32 0.0, %v209
  %v211 = vpop.f32.mrb[0].mxu0
  %212 = vmatprep.mubr.bf16.mxu0 0
  %213 = vmatmul.mubr.bf16.gmra.mrb[0].mxu0 %v137
  %v214 = vpop.f32.mrb[0].mxu0
  %v215 = vadd.f32 0.0, %v214
  %v216 = vpop.f32.mrb[0].mxu0
  %v217 = vpop.f32.mrb[0].mxu0
  %v218 = vadd.f32 0.0, %v217
  %v219 = vpop.f32.mrb[0].mxu0
  %220 = vmatprep.mubr.bf16.mxu0 0
  %221 = vmatmul.mubr.bf16.gmra.mrb[0].mxu0 %v140
  %v222 = vpop.f32.mrb[0].mxu0
  %v223 = vadd.f32 0.0, %v222
  %v224 = vpop.f32.mrb[0].mxu0
  %v225 = vpop.f32.mrb[0].mxu0
  %v226 = vadd.f32 0.0, %v225
  %v227 = vpop.f32.mrb[0].mxu0
  %228 = vmatprep.mubr.bf16.mxu0 0
  %229 = vmatmul.mubr.bf16.gmra.mrb[0].mxu0 %v143
  %v230 = vpop.f32.mrb[0].mxu0
  %v231 = vadd.f32 0.0, %v230
  %v232 = vpop.f32.mrb[0].mxu0
  %v233 = vpop.f32.mrb[0].mxu0
  %v234 = vadd.f32 0.0, %v233
  %v235 = vpop.f32.mrb[0].mxu0
  %236 = vmatprep.mubr.bf16.mxu0 0
  %237 = vmatmul.mubr.bf16.gmra.mrb[0].mxu0 %v146
  %v238 = vpop.f32.mrb[0].mxu0
  %v239 = vadd.f32 0.0, %v238
  %v240 = vpop.f32.mrb[0].mxu0
  %v241 = vpop.f32.mrb[0].mxu0
  %v242 = vadd.f32 0.0, %v241
  %v243 = vpop.f32.mrb[0].mxu0
  %244 = vdwg.mxu0
  %v245 = vadd.f32 %v35, %v183
  %v246 = vadd.f32 %v36, %v186
  %v247 = vadd.f32 %v37, %v191
  %v248 = vadd.f32 %v38, %v194
  %v249 = vadd.f32 %v39, %v199
  %v250 = vadd.f32 %v40, %v202
  %v251 = vadd.f32 %v41, %v207
  %v252 = vadd.f32 %v42, %v210
  %v253 = vadd.f32 %v43, %v215
  %v254 = vadd.f32 %v44, %v218
  %v255 = vadd.f32 %v45, %v223
  %v256 = vadd.f32 %v46, %v226
  %v257 = vadd.f32 %v47, %v231
  %v258 = vadd.f32 %v48, %v234
  %v259 = vadd.f32 %v49, %v239
  %v260 = vadd.f32 %v50, %v242
  %261 = vst [vmem:[#allocation2] sm:$0xff] %v245
  %262 = vst [vmem:[#allocation2 + $0x8] sm:$0xff] %v246
  %263 = vst [vmem:[#allocation2 + $0x10] sm:$0xff] %v247
  %264 = vst [vmem:[#allocation2 + $0x18] sm:$0xff] %v248
  %265 = vst [vmem:[#allocation2 + $0x20] sm:$0xff] %v249
  %266 = vst [vmem:[#allocation2 + $0x28] sm:$0xff] %v250
  %267 = vst [vmem:[#allocation2 + $0x30] sm:$0xff] %v251
  %268 = vst [vmem:[#allocation2 + $0x38] sm:$0xff] %v252
  %269 = vst [vmem:[#allocation2 + $0x40] sm:$0xff] %v253
  %270 = vst [vmem:[#allocation2 + $0x48] sm:$0xff] %v254
  %271 = vst [vmem:[#allocation2 + $0x50] sm:$0xff] %v255
  %272 = vst [vmem:[#allocation2 + $0x58] sm:$0xff] %v256
  %273 = vst [vmem:[#allocation2 + $0x60] sm:$0xff] %v257
  %274 = vst [vmem:[#allocation2 + $0x68] sm:$0xff] %v258
  %275 = vst [vmem:[#allocation2 + $0x70] sm:$0xff] %v259
  %276 = vst [vmem:[#allocation2 + $0x78] sm:$0xff] %v260
  // Predicated region
  $region18: #{tcformer_forward.38} parent=0 // pred_check
    %p277 = pneg %p15
  $region19: #{tcformer_forward.38} parent=0 // pred_check_branch
    %279 = sbr.rel (%p277) target = $region21
  $region20: #{tcformer_forward.38} parent=0 // pred_region
    %v280 = vld [vmem:[#allocation2] sm:$0xff]
    %v281 = vld [vmem:[#allocation2 + $0x8] sm:$0xff]
    %v282 = vld [vmem:[#allocation2 + $0x10] sm:$0xff]
    %v283 = vld [vmem:[#allocation2 + $0x18] sm:$0xff]
    %v284 = vld [vmem:[#allocation2 + $0x20] sm:$0xff]
    %v285 = vld [vmem:[#allocation2 + $0x28] sm:$0xff]
    %v286 = vld [vmem:[#allocation2 + $0x30] sm:$0xff]
    %v287 = vld [vmem:[#allocation2 + $0x38] sm:$0xff]
    %v288 = vld [vmem:[#allocation2 + $0x40] sm:$0xff]
    %v289 = vld [vmem:[#allocation2 + $0x48] sm:$0xff]
    %v290 = vld [vmem:[#allocation2 + $0x50] sm:$0xff]
    %v291 = vld [vmem:[#allocation2 + $0x58] sm:$0xff]
    %v292 = vld [vmem:[#allocation2 + $0x60] sm:$0xff]
    %v293 = vld [vmem:[#allocation2 + $0x68] sm:$0xff]
    %v294 = vld [vmem:[#allocation2 + $0x70] sm:$0xff]
    %v295 = vld [vmem:[#allocation2 + $0x78] sm:$0xff]
    %v296 = vld [vmem:[%s2] sm:$0x1]
    %v298 = vlaneseq
    %v299 = vshrl.u32 %v298, 7
    %v300 = vsub.s32 0, %v299
    %v301 = vrot.slane %v296, %v300
    %v303 = vadd.f32 %v280, %v301
    %v304 = vadd.f32 %v281, %v301
    %v305 = vadd.f32 %v282, %v301
    %v306 = vadd.f32 %v283, %v301
    %v307 = vadd.f32 %v284, %v301
    %v308 = vadd.f32 %v285, %v301
    %v309 = vadd.f32 %v286, %v301
    %v310 = vadd.f32 %v287, %v301
    %v311 = vadd.f32 %v288, %v301
    %v312 = vadd.f32 %v289, %v301
    %v313 = vadd.f32 %v290, %v301
    %v314 = vadd.f32 %v291, %v301
    %v315 = vadd.f32 %v292, %v301
    %v316 = vadd.f32 %v293, %v301
    %v317 = vadd.f32 %v294, %v301
    %v318 = vadd.f32 %v295, %v301
    %v319 = vpack.c.bf16 %v304, %v303
    %v320 = vpack.c.bf16 %v306, %v305
    %v321 = vpack.c.bf16 %v308, %v307
    %v322 = vpack.c.bf16 %v310, %v309
    %v323 = vpack.c.bf16 %v312, %v311
    %v324 = vpack.c.bf16 %v314, %v313
    %v325 = vpack.c.bf16 %v316, %v315
    %v326 = vpack.c.bf16 %v318, %v317
    %v335 = vunpack.c.l.b16 %v319
    %v336 = vunpack.c.h.b16 %v319
    %v337 = vunpack.c.l.b16 %v320
    %v338 = vunpack.c.h.b16 %v320
    %v339 = vunpack.c.l.b16 %v321
    %v340 = vunpack.c.h.b16 %v321
    %v341 = vunpack.c.l.b16 %v322
    %v342 = vunpack.c.h.b16 %v322
    %v343 = vunpack.c.l.b16 %v323
    %v344 = vunpack.c.h.b16 %v323
    %v345 = vunpack.c.l.b16 %v324
    %v346 = vunpack.c.h.b16 %v324
    %v347 = vunpack.c.l.b16 %v325
    %v348 = vunpack.c.h.b16 %v325
    %v349 = vunpack.c.l.b16 %v326
    %v350 = vunpack.c.h.b16 %v326
    %v351 = vpack.c.b16 %v335, %v335
    %v352 = vpack.c.b16 %v336, %v336
    %v353 = vpack.c.b16 %v337, %v337
    %v354 = vpack.c.b16 %v338, %v338
    %v355 = vpack.c.b16 %v339, %v339
    %v356 = vpack.c.b16 %v340, %v340
    %v357 = vpack.c.b16 %v341, %v341
    %v358 = vpack.c.b16 %v342, %v342
    %v359 = vpack.c.b16 %v343, %v343
    %v360 = vpack.c.b16 %v344, %v344
    %v361 = vpack.c.b16 %v345, %v345
    %v362 = vpack.c.b16 %v346, %v346
    %v363 = vpack.c.b16 %v347, %v347
    %v364 = vpack.c.b16 %v348, %v348
    %v365 = vpack.c.b16 %v349, %v349
    %v366 = vpack.c.b16 %v350, %v350
    %383 = vst [vmem:[%s3] sm:$0xf] %v351
    %384 = vst [vmem:[%s3 + $0x4] sm:$0xf] %v352
    %385 = vst [vmem:[%s3 + $0x8] sm:$0xf] %v353
    %386 = vst [vmem:[%s3 + $0xc] sm:$0xf] %v354
    %387 = vst [vmem:[%s3 + $0x10] sm:$0xf] %v355
    %388 = vst [vmem:[%s3 + $0x14] sm:$0xf] %v356
    %389 = vst [vmem:[%s3 + $0x18] sm:$0xf] %v357
    %390 = vst [vmem:[%s3 + $0x1c] sm:$0xf] %v358
    %391 = vst [vmem:[%s3 + $0x20] sm:$0xf] %v359
    %392 = vst [vmem:[%s3 + $0x24] sm:$0xf] %v360
    %393 = vst [vmem:[%s3 + $0x28] sm:$0xf] %v361
    %394 = vst [vmem:[%s3 + $0x2c] sm:$0xf] %v362
    %395 = vst [vmem:[%s3 + $0x30] sm:$0xf] %v363
    %396 = vst [vmem:[%s3 + $0x34] sm:$0xf] %v364
    %397 = vst [vmem:[%s3 + $0x38] sm:$0xf] %v365
    %398 = vst [vmem:[%s3 + $0x3c] sm:$0xf] %v366
  $region21: #{tcformer_forward.38} parent=0 // pred_fallthru
    _
  // Predicated region
  $region22: #{tcformer_forward.38} parent=0 // pred_check
    _
  $region23: #{tcformer_forward.38} parent=0 // pred_check_branch
    %400 = sbr.rel (0) target = $region25
  $region24: #{tcformer_forward.38} parent=0 // pred_region
    _
  $region25: #{tcformer_forward.38} parent=0 // pred_fallthru
    _
  // Predicated region
  $region26: #{tcformer_forward.38} parent=0 // pred_check
    _
  $region27: #{tcformer_forward.38} parent=0 // pred_check_branch
    %402 = sbr.rel (0) target = $region29
  $region28: #{tcformer_forward.38} parent=0 // pred_region
    _
  $region29: #{tcformer_forward.38} parent=0 // pred_fallthru
    _

// kernel: tcformer_forward.39
$region0: #{tcformer_forward.39}
  #allocation0 [shape = 'u32[]', space=smem, size = 0x4, offset = 0x4, fixed_abs, tag = 'smem constant byte address 0x4 - core index']
  #allocation1 [shape = 'u32[144,128]{1,0:T(1,128)}', space=vmem, size = 0x12000, scoped, tag = 'internal scratch']
  #allocation2 [shape = 'f32[8,8,128]{2,1,0:T(8,128)}', space=vmem, size = 0x8000, scoped, tag = 'scratch operand']
  %s0 = inlined_call_operand.vmem [shape: bf16[2,8,8,128], index: 0, kind: input, shape index: {}]
  %s1 = inlined_call_operand.vmem [shape: f32[9,128], index: 1, kind: input, shape index: {}]
  %s2 = inlined_call_operand.vmem [shape: f32[1,128], index: 2, kind: input, shape index: {}]
  %s3 = inlined_call_operand.vmem [shape: bf16[2,8,8,128], index: 3, kind: output, shape index: {}]
  %s4 = sld [smem:[#allocation0]]
  $region45: #{tcformer_forward.39} parent=0
    _
  %s6 = ssub.s32 1, %s4
  %s7 = scalar_select 0, %s6, %s4
  loop: start=0, step=1, limit=4
  $region2: #{tcformer_forward.39} parent=0 // loop_pre_header
    _
  $region3: #{tcformer_forward.39} parent=0 // loop_header
    %s9 = sphi 0, %s13
    %p10 = scmp.ge.s32.totalorder %s9, 4
    %s19 = sphi 0, %s21
    %s22 = sphi 0, %s19
    %s23 = sphi 0, %s22
    %s39 = sphi 0, %s23
    %s43 = sphi 0, %s43
    %s45 = sphi 0, %s43
    %s46 = sphi 0, %s45
    %s60 = sphi 0, %s46
    %s64 = sphi 0, %s64
    %s66 = sphi 0, %s64
    %s67 = sphi 0, %s66
    %s81 = sphi 0, %s67
    %s87 = sphi 0, %s89
    %s90 = sphi 0, %s87
    %s91 = sphi 0, %s90
    %s107 = sphi 0, %s91
  $region4: #{tcformer_forward.39} parent=0 // loop_header_branch
    %12 = sbr.rel (%p10) target = $region8
  $region5: #{tcformer_forward.39} parent=0 // loop_body
    %s14 = ssub.s32 %s9, 1
    %s15 = ssub.s32 %s9, 2
    %s16 = sadd.s32 %s9, 1
    %s17 = ssub.s32 %s9, %s16
    %p18 = scmp.eq.s32.totalorder %s17, 0
    %s20 = sadd.s32 %s19, 1
    %s21 = scalar_select %p18, %s19, %s20
    %p24 = pneg %p18
    %p25 = scmp.eq.s32.totalorder %s9, 1
    %p26 = por %p24, %p25
    %p27 = scmp.ne.s32.totalorder %s19, %s22
    %p28 = scmp.eq.s32.totalorder %s9, 0
    %p29 = por %p27, %p28
    %p30 = scmp.ne.s32.totalorder %s19, %s22
    %p31 = scmp.eq.s32.totalorder %s14, 1
    %p32 = por %p30, %p31
    %p33 = scmp.ne.s32.totalorder %s22, %s23
    %p34 = scmp.eq.s32.totalorder %s14, 0
    %p35 = por %p33, %p34
    %p36 = scmp.ne.s32.totalorder %s22, %s23
    %p37 = scmp.eq.s32.totalorder %s15, 1
    %p38 = por %p36, %p37
    %p40 = scmp.ne.s32.totalorder %s23, %s39
    %p41 = scmp.eq.s32.totalorder %s15, 0
    %p42 = por %p40, %p41
    %s44 = sadd.s32 %s43, 1
    %p47 = scmp.eq.s32.totalorder %s9, 1
    %p48 = scmp.ne.s32.totalorder %s43, %s45
    %p49 = scmp.eq.s32.totalorder %s9, 0
    %p50 = por %p48, %p49
    %p51 = scmp.ne.s32.totalorder %s43, %s45
    %p52 = scmp.eq.s32.totalorder %s14, 1
    %p53 = por %p51, %p52
    %p54 = scmp.ne.s32.totalorder %s45, %s46
    %p55 = scmp.eq.s32.totalorder %s14, 0
    %p56 = por %p54, %p55
    %p57 = scmp.ne.s32.totalorder %s45, %s46
    %p58 = scmp.eq.s32.totalorder %s15, 1
    %p59 = por %p57, %p58
    %p61 = scmp.ne.s32.totalorder %s46, %s60
    %p62 = scmp.eq.s32.totalorder %s15, 0
    %p63 = por %p61, %p62
    %s65 = sadd.s32 %s64, 1
    %p68 = scmp.eq.s32.totalorder %s9, 1
    %p69 = scmp.ne.s32.totalorder %s64, %s66
    %p70 = scmp.eq.s32.totalorder %s9, 0
    %p71 = por %p69, %p70
    %p72 = scmp.ne.s32.totalorder %s64, %s66
    %p73 = scmp.eq.s32.totalorder %s14, 1
    %p74 = por %p72, %p73
    %p75 = scmp.ne.s32.totalorder %s66, %s67
    %p76 = scmp.eq.s32.totalorder %s14, 0
    %p77 = por %p75, %p76
    %p78 = scmp.ne.s32.totalorder %s66, %s67
    %p79 = scmp.eq.s32.totalorder %s15, 1
    %p80 = por %p78, %p79
    %p82 = scmp.ne.s32.totalorder %s67, %s81
    %p83 = scmp.eq.s32.totalorder %s15, 0
    %p84 = por %p82, %p83
    %s85 = ssub.s32 %s9, %s16
    %p86 = scmp.eq.s32.totalorder %s85, 0
    %s88 = sadd.s32 %s87, 1
    %s89 = scalar_select %p86, %s87, %s88
    %p92 = pneg %p86
    %p93 = scmp.eq.s32.totalorder %s9, 1
    %p94 = por %p92, %p93
    %p95 = scmp.ne.s32.totalorder %s87, %s90
    %p96 = scmp.eq.s32.totalorder %s9, 0
    %p97 = por %p95, %p96
    %p98 = scmp.ne.s32.totalorder %s87, %s90
    %p99 = scmp.eq.s32.totalorder %s14, 1
    %p100 = por %p98, %p99
    %p101 = scmp.ne.s32.totalorder %s90, %s91
    %p102 = scmp.eq.s32.totalorder %s14, 0
    %p103 = por %p101, %p102
    %p104 = scmp.ne.s32.totalorder %s90, %s91
    %p105 = scmp.eq.s32.totalorder %s15, 1
    %p106 = por %p104, %p105
    %p108 = scmp.ne.s32.totalorder %s91, %s107
    %p109 = scmp.eq.s32.totalorder %s15, 0
    %p110 = por %p108, %p109
    %p111 = scmp.le.s32.totalorder 1, %s9
    %p112 = scmp.lt.s32.totalorder %s9, 3
    %p113 = pnand %p111, %p112
    %p114 = pneg %p113
    // Predicated region
    $region9: #{tcformer_forward.39} parent=5 // pred_check
      _
    $region10: #{tcformer_forward.39} parent=5 // pred_check_branch
      %116 = sbr.rel (%p113) target = $region12
    $region11: #{tcformer_forward.39} parent=5 // pred_region
      %s117 = ssub.s32 %s9, 1
      // Predicated region
      $region13: #{tcformer_forward.39} parent=11 // pred_check
        %p118 = pneg %p56
      $region14: #{tcformer_forward.39} parent=11 // pred_check_branch
        %120 = sbr.rel (%p118) target = $region16
      $region15: #{tcformer_forward.39} parent=11 // pred_region
        _
      $region16: #{tcformer_forward.39} parent=11 // pred_fallthru
        _
      // Predicated region
      $region17: #{tcformer_forward.39} parent=11 // pred_check
        %p121 = pneg %p77
      $region18: #{tcformer_forward.39} parent=11 // pred_check_branch
        %123 = sbr.rel (%p121) target = $region20
      $region19: #{tcformer_forward.39} parent=11 // pred_region
        _
      $region20: #{tcformer_forward.39} parent=11 // pred_fallthru
        _
    $region12: #{tcformer_forward.39} parent=5 // pred_fallthru
      _
    %p124 = scmp.lt.s32.totalorder %s9, 2
    // Predicated region
    $region21: #{tcformer_forward.39} parent=5 // pred_check
      %p125 = pneg %p124
    $region22: #{tcformer_forward.39} parent=5 // pred_check_branch
      %127 = sbr.rel (%p125) target = $region24
    $region23: #{tcformer_forward.39} parent=5 // pred_region
      // Predicated region
      $region25: #{tcformer_forward.39} parent=23 // pred_check
        %p128 = pneg %p29
      $region26: #{tcformer_forward.39} parent=23 // pred_check_branch
        %130 = sbr.rel (%p128) target = $region28
      $region27: #{tcformer_forward.39} parent=23 // pred_region
        %p131 = scmp.lt.s32.totalorder %s9, 1
        %s132 = scalar_select %p131, %s9, 1
        %s133 = smul.addr %s132, 8
        %s134 = smul.addr %s133, 4
        %s135 = scalar_lea.vmem %s0, %s134
      $region28: #{tcformer_forward.39} parent=23 // pred_fallthru
        _
    $region24: #{tcformer_forward.39} parent=5 // pred_fallthru
      _
    %p136 = scmp.le.s32.totalorder 1, %s9
    %p137 = scmp.lt.s32.totalorder %s9, 3
    %p138 = pnand %p136, %p137
    %p139 = pneg %p138
    // Predicated region
    $region29: #{tcformer_forward.39} parent=5 // pred_check
      _
    $region30: #{tcformer_forward.39} parent=5 // pred_check_branch
      %141 = sbr.rel (%p138) target = $region32
    $region31: #{tcformer_forward.39} parent=5 // pred_region
      %s142 = ssub.s32 %s9, 1
      %p143 = scmp.lt.s32.totalorder %s14, 1
      %s144 = scalar_select %p143, %s14, 1
      %s145 = smul.addr %s144, 8
      %s146 = smul.addr %s145, 4
      %s147 = scalar_lea.vmem %s0, %s146
      %p148 = pneg %p35
      %p149 = pneg %p32
      %p150 = pneg %p56
      %p151 = pneg %p53
      %p152 = pneg %p77
      %p153 = pneg %p74
      %p154 = pneg %p103
      %p155 = pneg %p100
      %p156 = scmp.lt.s32.totalorder %s14, 1
      %s157 = scalar_select %p156, %s14, 1
      %s158 = smul.addr %s157, 8
      %s159 = smul.addr %s158, 4
      %s160 = scalar_lea.vmem %s3, %s159
      %p161 = scmp.lt.s32.totalorder %s14, 1
      %s162 = scalar_select %p161, %s14, 1
      %s163 = smul.addr %s162, 8
      %s164 = smul.addr %s163, 4
      %s165 = scalar_lea.vmem %s0, %s164
      %p166 = scmp.lt.s32.totalorder %s14, 1
      %s167 = scalar_select %p166, %s14, 1
      %s168 = smul.addr %s167, 8
      %s169 = smul.addr %s168, 4
      %s170 = scalar_lea.vmem %s3, %s169
      %v171 = vld [vmem:[%s165] sm:$0xf]
      %v172 = vld [vmem:[%s165 + $0x4] sm:$0xf]
      %v173 = vld [vmem:[%s165 + $0x8] sm:$0xf]
      %v174 = vld [vmem:[%s165 + $0xc] sm:$0xf]
      %v175 = vld [vmem:[%s165 + $0x10] sm:$0xf]
      %v176 = vld [vmem:[%s165 + $0x14] sm:$0xf]
      %v177 = vld [vmem:[%s165 + $0x18] sm:$0xf]
      %v178 = vld [vmem:[%s165 + $0x1c] sm:$0xf]
      %v179 = vunpack.c.l.bf16 %v171
      %v180 = vunpack.c.l.bf16 %v172
      %v181 = vunpack.c.l.bf16 %v173
      %v182 = vunpack.c.l.bf16 %v174
      %v183 = vunpack.c.l.bf16 %v175
      %v184 = vunpack.c.l.bf16 %v176
      %v185 = vunpack.c.l.bf16 %v177
      %v186 = vunpack.c.l.bf16 %v178
      %v187 = vld [vmem:[%s1] sm:$0xff]
      %v188 = vld [vmem:[%s1 + $0x8] sm:$0x1]
      %v189 = vlaneseq
      %v190 = vshrl.u32 %v189, 7
      %191 = vst [vmem:[#allocation2] sm:$0xff] 0.0
      %192 = vst [vmem:[#allocation2 + $0x8] sm:$0xff] 0.0
      %193 = vst [vmem:[#allocation2 + $0x10] sm:$0xff] 0.0
      %194 = vst [vmem:[#allocation2 + $0x18] sm:$0xff] 0.0
      %195 = vst [vmem:[#allocation2 + $0x20] sm:$0xff] 0.0
      %196 = vst [vmem:[#allocation2 + $0x28] sm:$0xff] 0.0
      %197 = vst [vmem:[#allocation2 + $0x30] sm:$0xff] 0.0
      %198 = vst [vmem:[#allocation2 + $0x38] sm:$0xff] 0.0
      %v199 = vrot.slane %v179, 7
      %v200 = vrot.slane %v180, 7
      %v201 = vrot.slane %v181, 7
      %v202 = vrot.slane %v182, 7
      %v203 = vrot.slane %v183, 7
      %v204 = vrot.slane %v184, 7
      %v205 = vrot.slane %v185, 7
      %vm206 = vcmp.ge.s32.totalorder %v190, 1
      %v207 = vsel %vm206, 1, 0
      %vm208 = vcmp.eq.s32.totalorder %v207, 1
      %v209 = vsel %vm208, %v199, 0.0
      %v210 = vsel %vm208, %v200, 0.0
      %v211 = vsel %vm208, %v201, 0.0
      %v212 = vsel %vm208, %v202, 0.0
      %v213 = vsel %vm208, %v203, 0.0
      %v214 = vsel %vm208, %v204, 0.0
      %v215 = vsel %vm208, %v205, 0.0
      %s216 = scalar_lea.vmem [#allocation2], 8
      %v217 = vld [vmem:[%s216] sm:$0xff]
      %v218 = vld [vmem:[%s216 + $0x8] sm:$0xff]
      %v219 = vld [vmem:[%s216 + $0x10] sm:$0xff]
      %v220 = vld [vmem:[%s216 + $0x18] sm:$0xff]
      %v221 = vld [vmem:[%s216 + $0x20] sm:$0xff]
      %v222 = vld [vmem:[%s216 + $0x28] sm:$0xff]
      %v223 = vld [vmem:[%s216 + $0x30] sm:$0xff]
      %v224 = vlaneseq
      %v225 = vshrl.u32 %v224, 7
      %v226 = vsub.s32 0, %v225
      %v227 = vrot.slane %v187, %v226
      %v228 = vmul.f32 %v209, %v227
      %v229 = vmul.f32 %v210, %v227
      %v230 = vmul.f32 %v211, %v227
      %v231 = vmul.f32 %v212, %v227
      %v232 = vmul.f32 %v213, %v227
      %v233 = vmul.f32 %v214, %v227
      %v234 = vmul.f32 %v215, %v227
      %v235 = vadd.f32 %v217, %v228
      %v236 = vadd.f32 %v218, %v229
      %v237 = vadd.f32 %v219, %v230
      %v238 = vadd.f32 %v220, %v231
      %v239 = vadd.f32 %v221, %v232
      %v240 = vadd.f32 %v222, %v233
      %v241 = vadd.f32 %v223, %v234
      %242 = vst [vmem:[%s216] sm:$0xff] %v235
      %243 = vst [vmem:[%s216 + $0x8] sm:$0xff] %v236
      %244 = vst [vmem:[%s216 + $0x10] sm:$0xff] %v237
      %245 = vst [vmem:[%s216 + $0x18] sm:$0xff] %v238
      %246 = vst [vmem:[%s216 + $0x20] sm:$0xff] %v239
      %247 = vst [vmem:[%s216 + $0x28] sm:$0xff] %v240
      %248 = vst [vmem:[%s216 + $0x30] sm:$0xff] %v241
      %v249 = vld [vmem:[%s216] sm:$0xff]
      %v250 = vld [vmem:[%s216 + $0x8] sm:$0xff]
      %v251 = vld [vmem:[%s216 + $0x10] sm:$0xff]
      %v252 = vld [vmem:[%s216 + $0x18] sm:$0xff]
      %v253 = vld [vmem:[%s216 + $0x20] sm:$0xff]
      %v254 = vld [vmem:[%s216 + $0x28] sm:$0xff]
      %v255 = vld [vmem:[%s216 + $0x30] sm:$0xff]
      %v256 = vlaneseq
      %v257 = vshrl.u32 %v256, 7
      %v258 = vsub.s32 1, %v257
      %v259 = vrot.slane %v187, %v258
      %v260 = vmul.f32 %v179, %v259
      %v261 = vmul.f32 %v180, %v259
      %v262 = vmul.f32 %v181, %v259
      %v263 = vmul.f32 %v182, %v259
      %v264 = vmul.f32 %v183, %v259
      %v265 = vmul.f32 %v184, %v259
      %v266 = vmul.f32 %v185, %v259
      %v267 = vadd.f32 %v249, %v260
      %v268 = vadd.f32 %v250, %v261
      %v269 = vadd.f32 %v251, %v262
      %v270 = vadd.f32 %v252, %v263
      %v271 = vadd.f32 %v253, %v264
      %v272 = vadd.f32 %v254, %v265
      %v273 = vadd.f32 %v255, %v266
      %274 = vst [vmem:[%s216] sm:$0xff] %v267
      %275 = vst [vmem:[%s216 + $0x8] sm:$0xff] %v268
      %276 = vst [vmem:[%s216 + $0x10] sm:$0xff] %v269
      %277 = vst [vmem:[%s216 + $0x18] sm:$0xff] %v270
      %278 = vst [vmem:[%s216 + $0x20] sm:$0xff] %v271
      %279 = vst [vmem:[%s216 + $0x28] sm:$0xff] %v272
      %280 = vst [vmem:[%s216 + $0x30] sm:$0xff] %v273
      %v281 = vrot.slane %v179, 1
      %v282 = vrot.slane %v180, 1
      %v283 = vrot.slane %v181, 1
      %v284 = vrot.slane %v182, 1
      %v285 = vrot.slane %v183, 1
      %v286 = vrot.slane %v184, 1
      %v287 = vrot.slane %v185, 1
      %vm288 = vcmp.le.s32.totalorder %v190, 6
      %v289 = vsel %vm288, 1, 0
      %vm290 = vcmp.eq.s32.totalorder %v289, 1
      %v291 = vsel %vm290, %v281, 0.0
      %v292 = vsel %vm290, %v282, 0.0
      %v293 = vsel %vm290, %v283, 0.0
      %v294 = vsel %vm290, %v284, 0.0
      %v295 = vsel %vm290, %v285, 0.0
      %v296 = vsel %vm290, %v286, 0.0
      %v297 = vsel %vm290, %v287, 0.0
      %v298 = vld [vmem:[%s216] sm:$0xff]
      %v299 = vld [vmem:[%s216 + $0x8] sm:$0xff]
      %v300 = vld [vmem:[%s216 + $0x10] sm:$0xff]
      %v301 = vld [vmem:[%s216 + $0x18] sm:$0xff]
      %v302 = vld [vmem:[%s216 + $0x20] sm:$0xff]
      %v303 = vld [vmem:[%s216 + $0x28] sm:$0xff]
      %v304 = vld [vmem:[%s216 + $0x30] sm:$0xff]
      %v305 = vlaneseq
      %v306 = vshrl.u32 %v305, 7
      %v307 = vsub.s32 2, %v306
      %v308 = vrot.slane %v187, %v307
      %v309 = vmul.f32 %v291, %v308
      %v310 = vmul.f32 %v292, %v308
      %v311 = vmul.f32 %v293, %v308
      %v312 = vmul.f32 %v294, %v308
      %v313 = vmul.f32 %v295, %v308
      %v314 = vmul.f32 %v296, %v308
      %v315 = vmul.f32 %v297, %v308
      %v316 = vadd.f32 %v298, %v309
      %v317 = vadd.f32 %v299, %v310
      %v318 = vadd.f32 %v300, %v311
      %v319 = vadd.f32 %v301, %v312
      %v320 = vadd.f32 %v302, %v313
      %v321 = vadd.f32 %v303, %v314
      %v322 = vadd.f32 %v304, %v315
      %323 = vst [vmem:[%s216] sm:$0xff] %v316
      %324 = vst [vmem:[%s216 + $0x8] sm:$0xff] %v317
      %325 = vst [vmem:[%s216 + $0x10] sm:$0xff] %v318
      %326 = vst [vmem:[%s216 + $0x18] sm:$0xff] %v319
      %327 = vst [vmem:[%s216 + $0x20] sm:$0xff] %v320
      %328 = vst [vmem:[%s216 + $0x28] sm:$0xff] %v321
      %329 = vst [vmem:[%s216 + $0x30] sm:$0xff] %v322
      %v330 = vrot.slane %v186, 7
      %v331 = vsel %vm208, %v330, 0.0
      %v332 = vld [vmem:[#allocation2] sm:$0xff]
      %v333 = vld [vmem:[#allocation2 + $0x8] sm:$0xff]
      %v334 = vld [vmem:[#allocation2 + $0x10] sm:$0xff]
      %v335 = vld [vmem:[#allocation2 + $0x18] sm:$0xff]
      %v336 = vld [vmem:[#allocation2 + $0x20] sm:$0xff]
      %v337 = vld [vmem:[#allocation2 + $0x28] sm:$0xff]
      %v338 = vld [vmem:[#allocation2 + $0x30] sm:$0xff]
      %v339 = vld [vmem:[#allocation2 + $0x38] sm:$0xff]
      %v340 = vlaneseq
      %v341 = vshrl.u32 %v340, 7
      %v342 = vsub.s32 3, %v341
      %v343 = vrot.slane %v187, %v342
      %v344 = vmul.f32 %v209, %v343
      %v345 = vmul.f32 %v210, %v343
      %v346 = vmul.f32 %v211, %v343
      %v347 = vmul.f32 %v212, %v343
      %v348 = vmul.f32 %v213, %v343
      %v349 = vmul.f32 %v214, %v343
      %v350 = vmul.f32 %v215, %v343
      %v351 = vmul.f32 %v331, %v343
      %v352 = vadd.f32 %v332, %v344
      %v353 = vadd.f32 %v333, %v345
      %v354 = vadd.f32 %v334, %v346
      %v355 = vadd.f32 %v335, %v347
      %v356 = vadd.f32 %v336, %v348
      %v357 = vadd.f32 %v337, %v349
      %v358 = vadd.f32 %v338, %v350
      %v359 = vadd.f32 %v339, %v351
      %360 = vst [vmem:[#allocation2] sm:$0xff] %v352
      %361 = vst [vmem:[#allocation2 + $0x8] sm:$0xff] %v353
      %362 = vst [vmem:[#allocation2 + $0x10] sm:$0xff] %v354
      %363 = vst [vmem:[#allocation2 + $0x18] sm:$0xff] %v355
      %364 = vst [vmem:[#allocation2 + $0x20] sm:$0xff] %v356
      %365 = vst [vmem:[#allocation2 + $0x28] sm:$0xff] %v357
      %366 = vst [vmem:[#allocation2 + $0x30] sm:$0xff] %v358
      %367 = vst [vmem:[#allocation2 + $0x38] sm:$0xff] %v359
      %v368 = vld [vmem:[#allocation2] sm:$0xff]
      %v369 = vld [vmem:[#allocation2 + $0x8] sm:$0xff]
      %v370 = vld [vmem:[#allocation2 + $0x10] sm:$0xff]
      %v371 = vld [vmem:[#allocation2 + $0x18] sm:$0xff]
      %v372 = vld [vmem:[#allocation2 + $0x20] sm:$0xff]
      %v373 = vld [vmem:[#allocation2 + $0x28] sm:$0xff]
      %v374 = vld [vmem:[#allocation2 + $0x30] sm:$0xff]
      %v375 = vld [vmem:[#allocation2 + $0x38] sm:$0xff]
      %v376 = vlaneseq
      %v377 = vshrl.u32 %v376, 7
      %v378 = vsub.s32 4, %v377
      %v379 = vrot.slane %v187, %v378
      %v380 = vmul.f32 %v179, %v379
      %v381 = vmul.f32 %v180, %v379
      %v382 = vmul.f32 %v181, %v379
      %v383 = vmul.f32 %v182, %v379
      %v384 = vmul.f32 %v183, %v379
      %v385 = vmul.f32 %v184, %v379
      %v386 = vmul.f32 %v185, %v379
      %v387 = vmul.f32 %v186, %v379
      %v388 = vadd.f32 %v368, %v380
      %v389 = vadd.f32 %v369, %v381
      %v390 = vadd.f32 %v370, %v382
      %v391 = vadd.f32 %v371, %v383
      %v392 = vadd.f32 %v372, %v384
      %v393 = vadd.f32 %v373, %v385
      %v394 = vadd.f32 %v374, %v386
      %v395 = vadd.f32 %v375, %v387
      %396 = vst [vmem:[#allocation2] sm:$0xff] %v388
      %397 = vst [vmem:[#allocation2 + $0x8] sm:$0xff] %v389
      %398 = vst [vmem:[#allocation2 + $0x10] sm:$0xff] %v390
      %399 = vst [vmem:[#allocation2 + $0x18] sm:$0xff] %v391
      %400 = vst [vmem:[#allocation2 + $0x20] sm:$0xff] %v392
      %401 = vst [vmem:[#allocation2 + $0x28] sm:$0xff] %v393
      %402 = vst [vmem:[#allocation2 + $0x30] sm:$0xff] %v394
      %403 = vst [vmem:[#allocation2 + $0x38] sm:$0xff] %v395
      %v404 = vrot.slane %v186, 1
      %v405 = vsel %vm290, %v404, 0.0
      %v406 = vld [vmem:[#allocation2] sm:$0xff]
      %v407 = vld [vmem:[#allocation2 + $0x8] sm:$0xff]
      %v408 = vld [vmem:[#allocation2 + $0x10] sm:$0xff]
      %v409 = vld [vmem:[#allocation2 + $0x18] sm:$0xff]
      %v410 = vld [vmem:[#allocation2 + $0x20] sm:$0xff]
      %v411 = vld [vmem:[#allocation2 + $0x28] sm:$0xff]
      %v412 = vld [vmem:[#allocation2 + $0x30] sm:$0xff]
      %v413 = vld [vmem:[#allocation2 + $0x38] sm:$0xff]
      %v414 = vlaneseq
      %v415 = vshrl.u32 %v414, 7
      %v416 = vsub.s32 5, %v415
      %v417 = vrot.slane %v187, %v416
      %v418 = vmul.f32 %v291, %v417
      %v419 = vmul.f32 %v292, %v417
      %v420 = vmul.f32 %v293, %v417
      %v421 = vmul.f32 %v294, %v417
      %v422 = vmul.f32 %v295, %v417
      %v423 = vmul.f32 %v296, %v417
      %v424 = vmul.f32 %v297, %v417
      %v425 = vmul.f32 %v405, %v417
      %v426 = vadd.f32 %v406, %v418
      %v427 = vadd.f32 %v407, %v419
      %v428 = vadd.f32 %v408, %v420
      %v429 = vadd.f32 %v409, %v421
      %v430 = vadd.f32 %v410, %v422
      %v431 = vadd.f32 %v411, %v423
      %v432 = vadd.f32 %v412, %v424
      %v433 = vadd.f32 %v413, %v425
      %434 = vst [vmem:[#allocation2] sm:$0xff] %v426
      %435 = vst [vmem:[#allocation2 + $0x8] sm:$0xff] %v427
      %436 = vst [vmem:[#allocation2 + $0x10] sm:$0xff] %v428
      %437 = vst [vmem:[#allocation2 + $0x18] sm:$0xff] %v429
      %438 = vst [vmem:[#allocation2 + $0x20] sm:$0xff] %v430
      %439 = vst [vmem:[#allocation2 + $0x28] sm:$0xff] %v431
      %440 = vst [vmem:[#allocation2 + $0x30] sm:$0xff] %v432
      %441 = vst [vmem:[#allocation2 + $0x38] sm:$0xff] %v433
      %v442 = vld [vmem:[#allocation2] sm:$0xff]
      %v443 = vld [vmem:[#allocation2 + $0x8] sm:$0xff]
      %v444 = vld [vmem:[#allocation2 + $0x10] sm:$0xff]
      %v445 = vld [vmem:[#allocation2 + $0x18] sm:$0xff]
      %v446 = vld [vmem:[#allocation2 + $0x20] sm:$0xff]
      %v447 = vld [vmem:[#allocation2 + $0x28] sm:$0xff]
      %v448 = vld [vmem:[#allocation2 + $0x30] sm:$0xff]
      %v449 = vlaneseq
      %v450 = vshrl.u32 %v449, 7
      %v451 = vsub.s32 6, %v450
      %v452 = vrot.slane %v187, %v451
      %v453 = vmul.f32 %v210, %v452
      %v454 = vmul.f32 %v211, %v452
      %v455 = vmul.f32 %v212, %v452
      %v456 = vmul.f32 %v213, %v452
      %v457 = vmul.f32 %v214, %v452
      %v458 = vmul.f32 %v215, %v452
      %v459 = vmul.f32 %v331, %v452
      %v460 = vadd.f32 %v442, %v453
      %v461 = vadd.f32 %v443, %v454
      %v462 = vadd.f32 %v444, %v455
      %v463 = vadd.f32 %v445, %v456
      %v464 = vadd.f32 %v446, %v457
      %v465 = vadd.f32 %v447, %v458
      %v466 = vadd.f32 %v448, %v459
      %467 = vst [vmem:[#allocation2] sm:$0xff] %v460
      %468 = vst [vmem:[#allocation2 + $0x8] sm:$0xff] %v461
      %469 = vst [vmem:[#allocation2 + $0x10] sm:$0xff] %v462
      %470 = vst [vmem:[#allocation2 + $0x18] sm:$0xff] %v463
      %471 = vst [vmem:[#allocation2 + $0x20] sm:$0xff] %v464
      %472 = vst [vmem:[#allocation2 + $0x28] sm:$0xff] %v465
      %473 = vst [vmem:[#allocation2 + $0x30] sm:$0xff] %v466
      %v474 = vld [vmem:[#allocation2] sm:$0xff]
      %v475 = vld [vmem:[#allocation2 + $0x8] sm:$0xff]
      %v476 = vld [vmem:[#allocation2 + $0x10] sm:$0xff]
      %v477 = vld [vmem:[#allocation2 + $0x18] sm:$0xff]
      %v478 = vld [vmem:[#allocation2 + $0x20] sm:$0xff]
      %v479 = vld [vmem:[#allocation2 + $0x28] sm:$0xff]
      %v480 = vld [vmem:[#allocation2 + $0x30] sm:$0xff]
      %v481 = vlaneseq
      %v482 = vshrl.u32 %v481, 7
      %v483 = vsub.s32 7, %v482
      %v484 = vrot.slane %v187, %v483
      %v485 = vmul.f32 %v180, %v484
      %v486 = vmul.f32 %v181, %v484
      %v487 = vmul.f32 %v182, %v484
      %v488 = vmul.f32 %v183, %v484
      %v489 = vmul.f32 %v184, %v484
      %v490 = vmul.f32 %v185, %v484
      %v491 = vmul.f32 %v186, %v484
      %v492 = vadd.f32 %v474, %v485
      %v493 = vadd.f32 %v475, %v486
      %v494 = vadd.f32 %v476, %v487
      %v495 = vadd.f32 %v477, %v488
      %v496 = vadd.f32 %v478, %v489
      %v497 = vadd.f32 %v479, %v490
      %v498 = vadd.f32 %v480, %v491
      %499 = vst [vmem:[#allocation2] sm:$0xff] %v492
      %500 = vst [vmem:[#allocation2 + $0x8] sm:$0xff] %v493
      %501 = vst [vmem:[#allocation2 + $0x10] sm:$0xff] %v494
      %502 = vst [vmem:[#allocation2 + $0x18] sm:$0xff] %v495
      %503 = vst [vmem:[#allocation2 + $0x20] sm:$0xff] %v496
      %504 = vst [vmem:[#allocation2 + $0x28] sm:$0xff] %v497
      %505 = vst [vmem:[#allocation2 + $0x30] sm:$0xff] %v498
      %v506 = vld [vmem:[#allocation2] sm:$0xff]
      %v507 = vld [vmem:[#allocation2 + $0x8] sm:$0xff]
      %v508 = vld [vmem:[#allocation2 + $0x10] sm:$0xff]
      %v509 = vld [vmem:[#allocation2 + $0x18] sm:$0xff]
      %v510 = vld [vmem:[#allocation2 + $0x20] sm:$0xff]
      %v511 = vld [vmem:[#allocation2 + $0x28] sm:$0xff]
      %v512 = vld [vmem:[#allocation2 + $0x30] sm:$0xff]
      %v513 = vlaneseq
      %v514 = vshrl.u32 %v513, 7
      %v515 = vsub.s32 0, %v514
      %v516 = vrot.slane %v188, %v515
      %v517 = vmul.f32 %v292, %v516
      %v518 = vmul.f32 %v293, %v516
      %v519 = vmul.f32 %v294, %v516
      %v520 = vmul.f32 %v295, %v516
      %v521 = vmul.f32 %v296, %v516
      %v522 = vmul.f32 %v297, %v516
      %v523 = vmul.f32 %v405, %v516
      %v524 = vadd.f32 %v506, %v517
      %v525 = vadd.f32 %v507, %v518
      %v526 = vadd.f32 %v508, %v519
      %v527 = vadd.f32 %v509, %v520
      %v528 = vadd.f32 %v510, %v521
      %v529 = vadd.f32 %v511, %v522
      %v530 = vadd.f32 %v512, %v523
      %531 = vst [vmem:[#allocation2] sm:$0xff] %v524
      %532 = vst [vmem:[#allocation2 + $0x8] sm:$0xff] %v525
      %533 = vst [vmem:[#allocation2 + $0x10] sm:$0xff] %v526
      %534 = vst [vmem:[#allocation2 + $0x18] sm:$0xff] %v527
      %535 = vst [vmem:[#allocation2 + $0x20] sm:$0xff] %v528
      %536 = vst [vmem:[#allocation2 + $0x28] sm:$0xff] %v529
      %537 = vst [vmem:[#allocation2 + $0x30] sm:$0xff] %v530
      %v538 = vld [vmem:[#allocation2] sm:$0xff]
      %v539 = vld [vmem:[#allocation2 + $0x8] sm:$0xff]
      %v540 = vld [vmem:[#allocation2 + $0x10] sm:$0xff]
      %v541 = vld [vmem:[#allocation2 + $0x18] sm:$0xff]
      %v542 = vld [vmem:[#allocation2 + $0x20] sm:$0xff]
      %v543 = vld [vmem:[#allocation2 + $0x28] sm:$0xff]
      %v544 = vld [vmem:[#allocation2 + $0x30] sm:$0xff]
      %v545 = vld [vmem:[#allocation2 + $0x38] sm:$0xff]
      %v546 = vld [vmem:[%s2] sm:$0x1]
      %v548 = vlaneseq
      %v549 = vshrl.u32 %v548, 7
      %v550 = vsub.s32 0, %v549
      %v551 = vrot.slane %v546, %v550
      %v553 = vadd.f32 %v538, %v551
      %v554 = vadd.f32 %v539, %v551
      %v555 = vadd.f32 %v540, %v551
      %v556 = vadd.f32 %v541, %v551
      %v557 = vadd.f32 %v542, %v551
      %v558 = vadd.f32 %v543, %v551
      %v559 = vadd.f32 %v544, %v551
      %v560 = vadd.f32 %v545, %v551
      %v561 = vmul.f32 %v553, 0.5
      %v562 = vmul.f32 %v554, 0.5
      %v563 = vmul.f32 %v555, 0.5
      %v564 = vmul.f32 %v556, 0.5
      %v565 = vmul.f32 %v557, 0.5
      %v566 = vmul.f32 %v558, 0.5
      %v567 = vmul.f32 %v559, 0.5
      %v568 = vmul.f32 %v560, 0.5
      %v569 = vmul.f32 %v553, 0.70710677
      %v570 = vmul.f32 %v554, 0.70710677
      %v571 = vmul.f32 %v555, 0.70710677
      %v572 = vmul.f32 %v556, 0.70710677
      %v573 = vmul.f32 %v557, 0.70710677
      %v574 = vmul.f32 %v558, 0.70710677
      %v575 = vmul.f32 %v559, 0.70710677
      %v576 = vmul.f32 %v560, 0.70710677
      %v577 = verf.f32.pop %v569
      %v578 = verf.f32.pop %v570
      %v579 = verf.f32.pop %v571
      %v580 = verf.f32.pop %v572
      %v581 = verf.f32.pop %v573
      %v582 = verf.f32.pop %v574
      %v583 = verf.f32.pop %v575
      %v584 = verf.f32.pop %v576
      %v585 = vadd.f32 %v577, 1.0
      %v586 = vadd.f32 %v578, 1.0
      %v587 = vadd.f32 %v579, 1.0
      %v588 = vadd.f32 %v580, 1.0
      %v589 = vadd.f32 %v581, 1.0
      %v590 = vadd.f32 %v582, 1.0
      %v591 = vadd.f32 %v583, 1.0
      %v592 = vadd.f32 %v584, 1.0
      %v593 = vmul.f32 %v561, %v585
      %v594 = vmul.f32 %v562, %v586
      %v595 = vmul.f32 %v563, %v587
      %v596 = vmul.f32 %v564, %v588
      %v597 = vmul.f32 %v565, %v589
      %v598 = vmul.f32 %v566, %v590
      %v599 = vmul.f32 %v567, %v591
      %v600 = vmul.f32 %v568, %v592
      %v601 = vpack.c.bf16 %v593, %v593
      %v602 = vpack.c.bf16 %v594, %v594
      %v603 = vpack.c.bf16 %v595, %v595
      %v604 = vpack.c.bf16 %v596, %v596
      %v605 = vpack.c.bf16 %v597, %v597
      %v606 = vpack.c.bf16 %v598, %v598
      %v607 = vpack.c.bf16 %v599, %v599
      %v608 = vpack.c.bf16 %v600, %v600
      %609 = vst [vmem:[%s170] sm:$0xf] %v601
      %610 = vst [vmem:[%s170 + $0x4] sm:$0xf] %v602
      %611 = vst [vmem:[%s170 + $0x8] sm:$0xf] %v603
      %612 = vst [vmem:[%s170 + $0xc] sm:$0xf] %v604
      %613 = vst [vmem:[%s170 + $0x10] sm:$0xf] %v605
      %614 = vst [vmem:[%s170 + $0x14] sm:$0xf] %v606
      %615 = vst [vmem:[%s170 + $0x18] sm:$0xf] %v607
      %616 = vst [vmem:[%s170 + $0x1c] sm:$0xf] %v608
      %p617 = scmp.lt.s32.totalorder %s14, 1
      %s618 = scalar_select %p617, %s14, 1
      %s619 = smul.addr %s618, 8
      %s620 = smul.addr %s619, 4
      %s621 = scalar_lea.vmem %s3, %s620
      // Predicated region
      $region33: #{tcformer_forward.39} parent=31 // pred_check
        %p622 = pneg %p100
      $region34: #{tcformer_forward.39} parent=31 // pred_check_branch
        %624 = sbr.rel (%p622) target = $region36
      $region35: #{tcformer_forward.39} parent=31 // pred_region
        _
      $region36: #{tcformer_forward.39} parent=31 // pred_fallthru
        _
    $region32: #{tcformer_forward.39} parent=5 // pred_fallthru
      _
    %p625 = scmp.le.s32.totalorder 2, %s9
    // Predicated region
    $region37: #{tcformer_forward.39} parent=5 // pred_check
      %p626 = pneg %p625
    $region38: #{tcformer_forward.39} parent=5 // pred_check_branch
      %628 = sbr.rel (%p626) target = $region40
    $region39: #{tcformer_forward.39} parent=5 // pred_region
      %s629 = ssub.s32 %s9, 2
      // Predicated region
      $region41: #{tcformer_forward.39} parent=39 // pred_check
        %p630 = pneg %p106
      $region42: #{tcformer_forward.39} parent=39 // pred_check_branch
        %632 = sbr.rel (%p630) target = $region44
      $region43: #{tcformer_forward.39} parent=39 // pred_region
        %p633 = scmp.lt.s32.totalorder %s15, 1
        %s634 = scalar_select %p633, %s15, 1
        %s635 = smul.addr %s634, 8
        %s636 = smul.addr %s635, 4
        %s637 = scalar_lea.vmem %s3, %s636
      $region44: #{tcformer_forward.39} parent=39 // pred_fallthru
        _
    $region40: #{tcformer_forward.39} parent=5 // pred_fallthru
      _
  $region6: #{tcformer_forward.39} parent=0 // loop_footer
    %s13 = sadd.s32 1, %s9
  $region7: #{tcformer_forward.39} parent=0 // loop_footer_branch
    %8 = sbr.rel target = $region3
  $region8: #{tcformer_forward.39} parent=0 // loop_exit
    _

// kernel: tcformer_forward.40
$region0: #{tcformer_forward.40}
  #allocation0 [shape = 'u32[]', space=smem, size = 0x4, offset = 0x4, fixed_abs, tag = 'smem constant byte address 0x4 - core index']
  #allocation1 [shape = 'u32[144,128]{1,0:T(1,128)}', space=vmem, size = 0x12000, scoped, tag = 'internal scratch']
  #allocation2 [shape = 'f32[128,32]{1,0:T(8,128)}', space=vmem, size = 0x10000, scoped, tag = 'scratch operand']
  %s0 = inlined_call_operand.vmem [shape: bf16[128,128], index: 0, kind: input, shape index: {}]
  %s1 = inlined_call_operand.vmem [shape: bf16[128,32], index: 1, kind: input, shape index: {}]
  %s2 = inlined_call_operand.vmem [shape: f32[1,32], index: 2, kind: input, shape index: {}]
  %s3 = inlined_call_operand.vmem [shape: bf16[128,32], index: 3, kind: input, shape index: {}]
  %s4 = inlined_call_operand.vmem [shape: bf16[128,32], index: 4, kind: output, shape index: {}]
  %s5 = sld [smem:[#allocation0]]
  $region34: #{tcformer_forward.40} parent=0
    _
  %s7 = ssub.s32 1, %s5
  %s8 = scalar_select 0, %s7, %s5
  // Predicated region
  $region2: #{tcformer_forward.40} parent=0 // pred_check
    _
  $region3: #{tcformer_forward.40} parent=0 // pred_check_branch
    %10 = sbr.rel (0) target = $region5
  $region4: #{tcformer_forward.40} parent=0 // pred_region
    _
  $region5: #{tcformer_forward.40} parent=0 // pred_fallthru
    _
  // Predicated region
  $region6: #{tcformer_forward.40} parent=0 // pred_check
    _
  $region7: #{tcformer_forward.40} parent=0 // pred_check_branch
    %12 = sbr.rel (0) target = $region9
  $region8: #{tcformer_forward.40} parent=0 // pred_region
    _
  $region9: #{tcformer_forward.40} parent=0 // pred_fallthru
    _
  // Predicated region
  $region10: #{tcformer_forward.40} parent=0 // pred_check
    _
  $region11: #{tcformer_forward.40} parent=0 // pred_check_branch
    %14 = sbr.rel (0) target = $region13
  $region12: #{tcformer_forward.40} parent=0 // pred_region
    _
  $region13: #{tcformer_forward.40} parent=0 // pred_fallthru
    _
  // Predicated region
  $region14: #{tcformer_forward.40} parent=0 // pred_check
    _
  $region15: #{tcformer_forward.40} parent=0 // pred_check_branch
    %16 = sbr.rel (0) target = $region17
  $region16: #{tcformer_forward.40} parent=0 // pred_region
    _
  $region17: #{tcformer_forward.40} parent=0 // pred_fallthru
    _
  %p18 = scmp.eq.s32.totalorder 0, 0
  // Predicated region
  $region18: #{tcformer_forward.40} parent=0 // pred_check
    %p19 = pneg %p18
  $region19: #{tcformer_forward.40} parent=0 // pred_check_branch
    %21 = sbr.rel (%p19) target = $region21
  $region20: #{tcformer_forward.40} parent=0 // pred_region
    %vm22 = vcmask 261120
    %23 = vst.msk [vmem:[#allocation2] sm:$0xff] %vm22, 0.0
    %24 = vst.msk [vmem:[#allocation2 + $0x8] sm:$0xff] %vm22, 0.0
    %25 = vst.msk [vmem:[#allocation2 + $0x10] sm:$0xff] %vm22, 0.0
    %26 = vst.msk [vmem:[#allocation2 + $0x18] sm:$0xff] %vm22, 0.0
    %27 = vst.msk [vmem:[#allocation2 + $0x20] sm:$0xff] %vm22, 0.0
    %28 = vst.msk [vmem:[#allocation2 + $0x28] sm:$0xff] %vm22, 0.0
    %29 = vst.msk [vmem:[#allocation2 + $0x30] sm:$0xff] %vm22, 0.0
    %30 = vst.msk [vmem:[#allocation2 + $0x38] sm:$0xff] %vm22, 0.0
    %31 = vst.msk [vmem:[#allocation2 + $0x40] sm:$0xff] %vm22, 0.0
    %32 = vst.msk [vmem:[#allocation2 + $0x48] sm:$0xff] %vm22, 0.0
    %33 = vst.msk [vmem:[#allocation2 + $0x50] sm:$0xff] %vm22, 0.0
    %34 = vst.msk [vmem:[#allocation2 + $0x58] sm:$0xff] %vm22, 0.0
    %35 = vst.msk [vmem:[#allocation2 + $0x60] sm:$0xff] %vm22, 0.0
    %36 = vst.msk [vmem:[#allocation2 + $0x68] sm:$0xff] %vm22, 0.0
    %37 = vst.msk [vmem:[#allocation2 + $0x70] sm:$0xff] %vm22, 0.0
    %38 = vst.msk [vmem:[#allocation2 + $0x78] sm:$0xff] %vm22, 0.0
  $region21: #{tcformer_forward.40} parent=0 // pred_fallthru
    _
  %v39 = vld [vmem:[#allocation2] sm:$0xff]
  %v40 = vld [vmem:[#allocation2 + $0x8] sm:$0xff]
  %v41 = vld [vmem:[#allocation2 + $0x10] sm:$0xff]
  %v42 = vld [vmem:[#allocation2 + $0x18] sm:$0xff]
  %v43 = vld [vmem:[#allocation2 + $0x20] sm:$0xff]
  %v44 = vld [vmem:[#allocation2 + $0x28] sm:$0xff]
  %v45 = vld [vmem:[#allocation2 + $0x30] sm:$0xff]
  %v46 = vld [vmem:[#allocation2 + $0x38] sm:$0xff]
  %v47 = vld [vmem:[#allocation2 + $0x40] sm:$0xff]
  %v48 = vld [vmem:[#allocation2 + $0x48] sm:$0xff]
  %v49 = vld [vmem:[#allocation2 + $0x50] sm:$0xff]
  %v50 = vld [vmem:[#allocation2 + $0x58] sm:$0xff]
  %v51 = vld [vmem:[#allocation2 + $0x60] sm:$0xff]
  %v52 = vld [vmem:[#allocation2 + $0x68] sm:$0xff]
  %v53 = vld [vmem:[#allocation2 + $0x70] sm:$0xff]
  %v54 = vld [vmem:[#allocation2 + $0x78] sm:$0xff]
  %v55 = vld [vmem:[%s0] sm:$0xf]
  %v56 = vld [vmem:[%s0 + $0x4] sm:$0xf]
  %v57 = vld [vmem:[%s0 + $0x8] sm:$0xf]
  %v58 = vld [vmem:[%s0 + $0xc] sm:$0xf]
  %v59 = vld [vmem:[%s0 + $0x10] sm:$0xf]
  %v60 = vld [vmem:[%s0 + $0x14] sm:$0xf]
  %v61 = vld [vmem:[%s0 + $0x18] sm:$0xf]
  %v62 = vld [vmem:[%s0 + $0x1c] sm:$0xf]
  %v63 = vld [vmem:[%s0 + $0x20] sm:$0xf]
  %v64 = vld [vmem:[%s0 + $0x24] sm:$0xf]
  %v65 = vld [vmem:[%s0 + $0x28] sm:$0xf]
  %v66 = vld [vmem:[%s0 + $0x2c] sm:$0xf]
  %v67 = vld [vmem:[%s0 + $0x30] sm:$0xf]
  %v68 = vld [vmem:[%s0 + $0x34] sm:$0xf]
  %v69 = vld [vmem:[%s0 + $0x38] sm:$0xf]
  %v70 = vld [vmem:[%s0 + $0x3c] sm:$0xf]
  %v71 = vld [vmem:[%s1] sm:$0xf]
  %v72 = vld [vmem:[%s1 + $0x4] sm:$0xf]
  %v73 = vld [vmem:[%s1 + $0x8] sm:$0xf]
  %v74 = vld [vmem:[%s1 + $0xc] sm:$0xf]
  %v75 = vld [vmem:[%s1 + $0x10] sm:$0xf]
  %v76 = vld [vmem:[%s1 + $0x14] sm:$0xf]
  %v77 = vld [vmem:[%s1 + $0x18] sm:$0xf]
  %v78 = vld [vmem:[%s1 + $0x1c] sm:$0xf]
  %v79 = vld [vmem:[%s1 + $0x20] sm:$0xf]
  %v80 = vld [vmem:[%s1 + $0x24] sm:$0xf]
  %v81 = vld [vmem:[%s1 + $0x28] sm:$0xf]
  %v82 = vld [vmem:[%s1 + $0x2c] sm:$0xf]
  %v83 = vld [vmem:[%s1 + $0x30] sm:$0xf]
  %v84 = vld [vmem:[%s1 + $0x34] sm:$0xf]
  %v85 = vld [vmem:[%s1 + $0x38] sm:$0xf]
  %v86 = vld [vmem:[%s1 + $0x3c] sm:$0xf]
  %v103 = vunpack.c.l.b16 %v55
  %v104 = vunpack.c.l.b16 %v56
  %v105 = vunpack.c.l.b16 %v57
  %v106 = vunpack.c.l.b16 %v58
  %v107 = vunpack.c.l.b16 %v59
  %v108 = vunpack.c.l.b16 %v60
  %v109 = vunpack.c.l.b16 %v61
  %v110 = vunpack.c.l.b16 %v62
  %v111 = vunpack.c.l.b16 %v63
  %v112 = vunpack.c.l.b16 %v64
  %v113 = vunpack.c.l.b16 %v65
  %v114 = vunpack.c.l.b16 %v66
  %v115 = vunpack.c.l.b16 %v67
  %v116 = vunpack.c.l.b16 %v68
  %v117 = vunpack.c.l.b16 %v69
  %v118 = vunpack.c.l.b16 %v70
  %v119 = vpack.c.b16 %v104, %v103
  %v120 = vpack.c.b16 %v106, %v105
  %v121 = vpack.c.b16 %v108, %v107
  %v122 = vpack.c.b16 %v110, %v109
  %v123 = vpack.c.b16 %v112, %v111
  %v124 = vpack.c.b16 %v114, %v113
  %v125 = vpack.c.b16 %v116, %v115
  %v126 = vpack.c.b16 %v118, %v117
  %v151 = vunpack.c.l.b16 %v71
  %v152 = vunpack.c.l.b16 %v72
  %v153 = vunpack.c.l.b16 %v73
  %v154 = vunpack.c.l.b16 %v74
  %v155 = vunpack.c.l.b16 %v75
  %v156 = vunpack.c.l.b16 %v76
  %v157 = vunpack.c.l.b16 %v77
  %v158 = vunpack.c.l.b16 %v78
  %v159 = vunpack.c.l.b16 %v79
  %v160 = vunpack.c.l.b16 %v80
  %v161 = vunpack.c.l.b16 %v81
  %v162 = vunpack.c.l.b16 %v82
  %v163 = vunpack.c.l.b16 %v83
  %v164 = vunpack.c.l.b16 %v84
  %v165 = vunpack.c.l.b16 %v85
  %v166 = vunpack.c.l.b16 %v86
  %v167 = vpack.c.b16 %v152, %v151
  %v168 = vpack.c.b16 %v154, %v153
  %v169 = vpack.c.b16 %v156, %v155
  %v170 = vpack.c.b16 %v158, %v157
  %v171 = vpack.c.b16 %v160, %v159
  %v172 = vpack.c.b16 %v162, %v161
  %v173 = vpack.c.b16 %v164, %v163
  %v174 = vpack.c.b16 %v166, %v165
  %183 = vmatprep.subr.bf16.mxu0 0
  %184 = vmatpush1.bf16.msra.mxu0 %v167
  %185 = vmatprep.subr.bf16.mxu0 0
  %186 = vmatpush1.bf16.msra.mxu0 %v168
  %187 = vmatprep.subr.bf16.mxu0 0
  %188 = vmatpush1.bf16.msra.mxu0 %v169
  %189 = vmatprep.subr.bf16.mxu0 0
  %190 = vmatpush1.bf16.msra.mxu0 %v170
  %191 = vmatprep.subr.bf16.mxu0 0
  %192 = vmatpush1.bf16.msra.mxu0 %v171
  %193 = vmatprep.subr.bf16.mxu0 0
  %194 = vmatpush1.bf16.msra.mxu0 %v172
  %195 = vmatprep.subr.bf16.mxu0 0
  %196 = vmatpush1.bf16.msra.mxu0 %v173
  %197 = vmatprep.subr.bf16.mxu0 0
  %198 = vmatpush1.bf16.msra.mxu0 %v174
  %199 = vmatprep.subr.bf16.mxu0 0
  %200 = vmatpush1.bf16.msra.mxu0 0
  %201 = vmatprep.subr.bf16.mxu0 0
  %202 = vmatpush1.bf16.msra.mxu0 0
  %203 = vmatprep.subr.bf16.mxu0 0
  %204 = vmatpush1.bf16.msra.mxu0 0
  %205 = vmatprep.subr.bf16.mxu0 0
  %206 = vmatpush1.bf16.msra.mxu0 0
  %207 = vmatprep.subr.bf16.mxu0 0
  %208 = vmatpush1.bf16.msra.mxu0 0
  %209 = vmatprep.subr.bf16.mxu0 0
  %210 = vmatpush1.bf16.msra.mxu0 0
  %211 = vmatprep.subr.bf16.mxu0 0
  %212 = vmatpush1.bf16.msra.mxu0 0
  %213 = vmatprep.subr.bf16.mxu0 0
  %214 = vmatpush1.bf16.msra.mxu0 0
  %215 = vmatprep.mubr.bf16.mxu0 0
  %216 = vmatmul.mubr.bf16.gmra.mrb[0].mxu0 %v119
  %v217 = vpop.f32.mrb[0].mxu0
  %v218 = vadd.f32 0.0, %v217
  %v219 = vpop.f32.mrb[0].mxu0
  %v220 = vpop.f32.mrb[0].mxu0
  %v221 = vadd.f32 0.0, %v220
  %v222 = vpop.f32.mrb[0].mxu0
  %223 = vmatprep.mubr.bf16.mxu0 0
  %224 = vmatmul.mubr.bf16.gmra.mrb[0].mxu0 %v120
  %v225 = vpop.f32.mrb[0].mxu0
  %v226 = vadd.f32 0.0, %v225
  %v227 = vpop.f32.mrb[0].mxu0
  %v228 = vpop.f32.mrb[0].mxu0
  %v229 = vadd.f32 0.0, %v228
  %v230 = vpop.f32.mrb[0].mxu0
  %231 = vmatprep.mubr.bf16.mxu0 0
  %232 = vmatmul.mubr.bf16.gmra.mrb[0].mxu0 %v121
  %v233 = vpop.f32.mrb[0].mxu0
  %v234 = vadd.f32 0.0, %v233
  %v235 = vpop.f32.mrb[0].mxu0
  %v236 = vpop.f32.mrb[0].mxu0
  %v237 = vadd.f32 0.0, %v236
  %v238 = vpop.f32.mrb[0].mxu0
  %239 = vmatprep.mubr.bf16.mxu0 0
  %240 = vmatmul.mubr.bf16.gmra.mrb[0].mxu0 %v122
  %v241 = vpop.f32.mrb[0].mxu0
  %v242 = vadd.f32 0.0, %v241
  %v243 = vpop.f32.mrb[0].mxu0
  %v244 = vpop.f32.mrb[0].mxu0
  %v245 = vadd.f32 0.0, %v244
  %v246 = vpop.f32.mrb[0].mxu0
  %247 = vmatprep.mubr.bf16.mxu0 0
  %248 = vmatmul.mubr.bf16.gmra.mrb[0].mxu0 %v123
  %v249 = vpop.f32.mrb[0].mxu0
  %v250 = vadd.f32 0.0, %v249
  %v251 = vpop.f32.mrb[0].mxu0
  %v252 = vpop.f32.mrb[0].mxu0
  %v253 = vadd.f32 0.0, %v252
  %v254 = vpop.f32.mrb[0].mxu0
  %255 = vmatprep.mubr.bf16.mxu0 0
  %256 = vmatmul.mubr.bf16.gmra.mrb[0].mxu0 %v124
  %v257 = vpop.f32.mrb[0].mxu0
  %v258 = vadd.f32 0.0, %v257
  %v259 = vpop.f32.mrb[0].mxu0
  %v260 = vpop.f32.mrb[0].mxu0
  %v261 = vadd.f32 0.0, %v260
  %v262 = vpop.f32.mrb[0].mxu0
  %263 = vmatprep.mubr.bf16.mxu0 0
  %264 = vmatmul.mubr.bf16.gmra.mrb[0].mxu0 %v125
  %v265 = vpop.f32.mrb[0].mxu0
  %v266 = vadd.f32 0.0, %v265
  %v267 = vpop.f32.mrb[0].mxu0
  %v268 = vpop.f32.mrb[0].mxu0
  %v269 = vadd.f32 0.0, %v268
  %v270 = vpop.f32.mrb[0].mxu0
  %271 = vmatprep.mubr.bf16.mxu0 0
  %272 = vmatmul.mubr.bf16.gmra.mrb[0].mxu0 %v126
  %v273 = vpop.f32.mrb[0].mxu0
  %v274 = vadd.f32 0.0, %v273
  %v275 = vpop.f32.mrb[0].mxu0
  %v276 = vpop.f32.mrb[0].mxu0
  %v277 = vadd.f32 0.0, %v276
  %v278 = vpop.f32.mrb[0].mxu0
  %279 = vdwg.mxu0
  %v280 = vadd.f32 %v39, %v218
  %v281 = vadd.f32 %v40, %v221
  %v282 = vadd.f32 %v41, %v226
  %v283 = vadd.f32 %v42, %v229
  %v284 = vadd.f32 %v43, %v234
  %v285 = vadd.f32 %v44, %v237
  %v286 = vadd.f32 %v45, %v242
  %v287 = vadd.f32 %v46, %v245
  %v288 = vadd.f32 %v47, %v250
  %v289 = vadd.f32 %v48, %v253
  %v290 = vadd.f32 %v49, %v258
  %v291 = vadd.f32 %v50, %v261
  %v292 = vadd.f32 %v51, %v266
  %v293 = vadd.f32 %v52, %v269
  %v294 = vadd.f32 %v53, %v274
  %v295 = vadd.f32 %v54, %v277
  %vm296 = vcmask 261120
  %297 = vst.msk [vmem:[#allocation2] sm:$0xff] %vm296, %v280
  %298 = vst.msk [vmem:[#allocation2 + $0x8] sm:$0xff] %vm296, %v281
  %299 = vst.msk [vmem:[#allocation2 + $0x10] sm:$0xff] %vm296, %v282
  %300 = vst.msk [vmem:[#allocation2 + $0x18] sm:$0xff] %vm296, %v283
  %301 = vst.msk [vmem:[#allocation2 + $0x20] sm:$0xff] %vm296, %v284
  %302 = vst.msk [vmem:[#allocation2 + $0x28] sm:$0xff] %vm296, %v285
  %303 = vst.msk [vmem:[#allocation2 + $0x30] sm:$0xff] %vm296, %v286
  %304 = vst.msk [vmem:[#allocation2 + $0x38] sm:$0xff] %vm296, %v287
  %305 = vst.msk [vmem:[#allocation2 + $0x40] sm:$0xff] %vm296, %v288
  %306 = vst.msk [vmem:[#allocation2 + $0x48] sm:$0xff] %vm296, %v289
  %307 = vst.msk [vmem:[#allocation2 + $0x50] sm:$0xff] %vm296, %v290
  %308 = vst.msk [vmem:[#allocation2 + $0x58] sm:$0xff] %vm296, %v291
  %309 = vst.msk [vmem:[#allocation2 + $0x60] sm:$0xff] %vm296, %v292
  %310 = vst.msk [vmem:[#allocation2 + $0x68] sm:$0xff] %vm296, %v293
  %311 = vst.msk [vmem:[#allocation2 + $0x70] sm:$0xff] %vm296, %v294
  %312 = vst.msk [vmem:[#allocation2 + $0x78] sm:$0xff] %vm296, %v295
  // Predicated region
  $region22: #{tcformer_forward.40} parent=0 // pred_check
    %p313 = pneg %p18
  $region23: #{tcformer_forward.40} parent=0 // pred_check_branch
    %315 = sbr.rel (%p313) target = $region25
  $region24: #{tcformer_forward.40} parent=0 // pred_region
    %v316 = vld [vmem:[#allocation2] sm:$0xff]
    %v317 = vld [vmem:[#allocation2 + $0x8] sm:$0xff]
    %v318 = vld [vmem:[#allocation2 + $0x10] sm:$0xff]
    %v319 = vld [vmem:[#allocation2 + $0x18] sm:$0xff]
    %v320 = vld [vmem:[#allocation2 + $0x20] sm:$0xff]
    %v321 = vld [vmem:[#allocation2 + $0x28] sm:$0xff]
    %v322 = vld [vmem:[#allocation2 + $0x30] sm:$0xff]
    %v323 = vld [vmem:[#allocation2 + $0x38] sm:$0xff]
    %v324 = vld [vmem:[#allocation2 + $0x40] sm:$0xff]
    %v325 = vld [vmem:[#allocation2 + $0x48] sm:$0xff]
    %v326 = vld [vmem:[#allocation2 + $0x50] sm:$0xff]
    %v327 = vld [vmem:[#allocation2 + $0x58] sm:$0xff]
    %v328 = vld [vmem:[#allocation2 + $0x60] sm:$0xff]
    %v329 = vld [vmem:[#allocation2 + $0x68] sm:$0xff]
    %v330 = vld [vmem:[#allocation2 + $0x70] sm:$0xff]
    %v331 = vld [vmem:[#allocation2 + $0x78] sm:$0xff]
    %v332 = vld [vmem:[%s2] sm:$0x1]
    %v334 = vlaneseq
    %v335 = vshrl.u32 %v334, 7
    %v336 = vsub.s32 0, %v335
    %v337 = vrot.slane %v332, %v336
    %v339 = vadd.f32 %v316, %v337
    %v340 = vadd.f32 %v317, %v337
    %v341 = vadd.f32 %v318, %v337
    %v342 = vadd.f32 %v319, %v337
    %v343 = vadd.f32 %v320, %v337
    %v344 = vadd.f32 %v321, %v337
    %v345 = vadd.f32 %v322, %v337
    %v346 = vadd.f32 %v323, %v337
    %v347 = vadd.f32 %v324, %v337
    %v348 = vadd.f32 %v325, %v337
    %v349 = vadd.f32 %v326, %v337
    %v350 = vadd.f32 %v327, %v337
    %v351 = vadd.f32 %v328, %v337
    %v352 = vadd.f32 %v329, %v337
    %v353 = vadd.f32 %v330, %v337
    %v354 = vadd.f32 %v331, %v337
    %v355 = vld [vmem:[%s3] sm:$0xf]
    %v356 = vld [vmem:[%s3 + $0x4] sm:$0xf]
    %v357 = vld [vmem:[%s3 + $0x8] sm:$0xf]
    %v358 = vld [vmem:[%s3 + $0xc] sm:$0xf]
    %v359 = vld [vmem:[%s3 + $0x10] sm:$0xf]
    %v360 = vld [vmem:[%s3 + $0x14] sm:$0xf]
    %v361 = vld [vmem:[%s3 + $0x18] sm:$0xf]
    %v362 = vld [vmem:[%s3 + $0x1c] sm:$0xf]
    %v363 = vld [vmem:[%s3 + $0x20] sm:$0xf]
    %v364 = vld [vmem:[%s3 + $0x24] sm:$0xf]
    %v365 = vld [vmem:[%s3 + $0x28] sm:$0xf]
    %v366 = vld [vmem:[%s3 + $0x2c] sm:$0xf]
    %v367 = vld [vmem:[%s3 + $0x30] sm:$0xf]
    %v368 = vld [vmem:[%s3 + $0x34] sm:$0xf]
    %v369 = vld [vmem:[%s3 + $0x38] sm:$0xf]
    %v370 = vld [vmem:[%s3 + $0x3c] sm:$0xf]
    %v371 = vunpack.c.l.bf16 %v355
    %v372 = vunpack.c.l.bf16 %v356
    %v373 = vunpack.c.l.bf16 %v357
    %v374 = vunpack.c.l.bf16 %v358
    %v375 = vunpack.c.l.bf16 %v359
    %v376 = vunpack.c.l.bf16 %v360
    %v377 = vunpack.c.l.bf16 %v361
    %v378 = vunpack.c.l.bf16 %v362
    %v379 = vunpack.c.l.bf16 %v363
    %v380 = vunpack.c.l.bf16 %v364
    %v381 = vunpack.c.l.bf16 %v365
    %v382 = vunpack.c.l.bf16 %v366
    %v383 = vunpack.c.l.bf16 %v367
    %v384 = vunpack.c.l.bf16 %v368
    %v385 = vunpack.c.l.bf16 %v369
    %v386 = vunpack.c.l.bf16 %v370
    %v387 = vadd.f32 %v339, %v371
    %v388 = vadd.f32 %v340, %v372
    %v389 = vadd.f32 %v341, %v373
    %v390 = vadd.f32 %v342, %v374
    %v391 = vadd.f32 %v343, %v375
    %v392 = vadd.f32 %v344, %v376
    %v393 = vadd.f32 %v345, %v377
    %v394 = vadd.f32 %v346, %v378
    %v395 = vadd.f32 %v347, %v379
    %v396 = vadd.f32 %v348, %v380
    %v397 = vadd.f32 %v349, %v381
    %v398 = vadd.f32 %v350, %v382
    %v399 = vadd.f32 %v351, %v383
    %v400 = vadd.f32 %v352, %v384
    %v401 = vadd.f32 %v353, %v385
    %v402 = vadd.f32 %v354, %v386
    %v403 = vpack.c.bf16 %v388, %v387
    %v404 = vpack.c.bf16 %v390, %v389
    %v405 = vpack.c.bf16 %v392, %v391
    %v406 = vpack.c.bf16 %v394, %v393
    %v407 = vpack.c.bf16 %v396, %v395
    %v408 = vpack.c.bf16 %v398, %v397
    %v409 = vpack.c.bf16 %v400, %v399
    %v410 = vpack.c.bf16 %v402, %v401
    %v419 = vunpack.c.l.b16 %v403
    %v420 = vunpack.c.h.b16 %v403
    %v421 = vunpack.c.l.b16 %v404
    %v422 = vunpack.c.h.b16 %v404
    %v423 = vunpack.c.l.b16 %v405
    %v424 = vunpack.c.h.b16 %v405
    %v425 = vunpack.c.l.b16 %v406
    %v426 = vunpack.c.h.b16 %v406
    %v427 = vunpack.c.l.b16 %v407
    %v428 = vunpack.c.h.b16 %v407
    %v429 = vunpack.c.l.b16 %v408
    %v430 = vunpack.c.h.b16 %v408
    %v431 = vunpack.c.l.b16 %v409
    %v432 = vunpack.c.h.b16 %v409
    %v433 = vunpack.c.l.b16 %v410
    %v434 = vunpack.c.h.b16 %v410
    %v435 = vpack.c.b16 %v419, %v419
    %v436 = vpack.c.b16 %v420, %v420
    %v437 = vpack.c.b16 %v421, %v421
    %v438 = vpack.c.b16 %v422, %v422
    %v439 = vpack.c.b16 %v423, %v423
    %v440 = vpack.c.b16 %v424, %v424
    %v441 = vpack.c.b16 %v425, %v425
    %v442 = vpack.c.b16 %v426, %v426
    %v443 = vpack.c.b16 %v427, %v427
    %v444 = vpack.c.b16 %v428, %v428
    %v445 = vpack.c.b16 %v429, %v429
    %v446 = vpack.c.b16 %v430, %v430
    %v447 = vpack.c.b16 %v431, %v431
    %v448 = vpack.c.b16 %v432, %v432
    %v449 = vpack.c.b16 %v433, %v433
    %v450 = vpack.c.b16 %v434, %v434
    %vm467 = vcmask 257024
    %468 = vst.msk [vmem:[%s4] sm:$0xf] %vm467, %v435
    %469 = vst.msk [vmem:[%s4 + $0x4] sm:$0xf] %vm467, %v436
    %470 = vst.msk [vmem:[%s4 + $0x8] sm:$0xf] %vm467, %v437
    %471 = vst.msk [vmem:[%s4 + $0xc] sm:$0xf] %vm467, %v438
    %472 = vst.msk [vmem:[%s4 + $0x10] sm:$0xf] %vm467, %v439
    %473 = vst.msk [vmem:[%s4 + $0x14] sm:$0xf] %vm467, %v440
    %474 = vst.msk [vmem:[%s4 + $0x18] sm:$0xf] %vm467, %v441
    %475 = vst.msk [vmem:[%s4 + $0x1c] sm:$0xf] %vm467, %v442
    %476 = vst.msk [vmem:[%s4 + $0x20] sm:$0xf] %vm467, %v443
    %477 = vst.msk [vmem:[%s4 + $0x24] sm:$0xf] %vm467, %v444
    %478 = vst.msk [vmem:[%s4 + $0x28] sm:$0xf] %vm467, %v445
    %479 = vst.msk [vmem:[%s4 + $0x2c] sm:$0xf] %vm467, %v446
    %480 = vst.msk [vmem:[%s4 + $0x30] sm:$0xf] %vm467, %v447
    %481 = vst.msk [vmem:[%s4 + $0x34] sm:$0xf] %vm467, %v448
    %482 = vst.msk [vmem:[%s4 + $0x38] sm:$0xf] %vm467, %v449
    %483 = vst.msk [vmem:[%s4 + $0x3c] sm:$0xf] %vm467, %v450
  $region25: #{tcformer_forward.40} parent=0 // pred_fallthru
    _
  // Predicated region
  $region26: #{tcformer_forward.40} parent=0 // pred_check
    _
  $region27: #{tcformer_forward.40} parent=0 // pred_check_branch
    %485 = sbr.rel (0) target = $region29
  $region28: #{tcformer_forward.40} parent=0 // pred_region
    _
  $region29: #{tcformer_forward.40} parent=0 // pred_fallthru
    _
  // Predicated region
  $region30: #{tcformer_forward.40} parent=0 // pred_check
    _
  $region31: #{tcformer_forward.40} parent=0 // pred_check_branch
    %487 = sbr.rel (0) target = $region33
  $region32: #{tcformer_forward.40} parent=0 // pred_region
    _
  $region33: #{tcformer_forward.40} parent=0 // pred_fallthru
    _

</llo_original>
